<compile_context>
chip_gen: v5e
topology: v5e:2x2
jax: 0.10.0
libtpu: 0.0.40
codegen_flags: <defaults>
</compile_context>

<pallas_src>
import functools

import jax
import jax.numpy as jnp
from jax.experimental import pallas as pl
from jax.experimental.pallas import tpu as pltpu

EPS = 1e-5           # BatchNorm2d default eps
NEG_SLOPE = 0.2      # leaky relu slope
LANE = 128
VMEM_LIMIT = 32 * 1024 * 1024


# ------------------------------ helpers -------------------------------------

def _round_up_lane(c):
    return max(LANE, ((c + LANE - 1) // LANE) * LANE)


def _pick_sample_tile(n, s_spatial, target=1024):
    """Largest tb dividing n with tb * s_spatial <= target (fallback tb=1)."""
    cap = max(1, target // max(1, s_spatial))
    tb = 1
    for t in range(1, min(n, cap) + 1):
        if n % t == 0:
            tb = t
    return tb


def _pick_row_tile(m, target=1024):
    """Largest t <= target dividing m with t % 8 == 0 (or t == m)."""
    t = min(m, target)
    while t > 0:
        if m % t == 0 and (t % 8 == 0 or t == m):
            return t
        t -= 1
    return m


def _pick_head_tile(n, s_spatial, target=1024):
    """Largest tb2 dividing n with (tb2 * s) % 8 == 0 and <= target, else n."""
    best = None
    for t in range(1, n + 1):
        if n % t:
            continue
        tm = s_spatial * t
        if tm <= target and tm % 8 == 0:
            best = t
    return best if best is not None else n


def _space_to_depth(x):
    """[N,H,W,C] -> phase-folded [N, H/2+1, W/2+1, 4*C] bf16 (pad=1, stride=2).

    Channel order of the folded dim is (ph, pw, c) with
    xs[..., (ph, pw, c)] = x_padded[:, ph::2, pw::2, c].
    One pass over the activation instead of ~4x im2col duplication.
    """
    n, h, w, c = x.shape
    xp = jnp.pad(x, ((0, 0), (1, 1), (1, 1), (0, 0)))
    h2, w2 = (h + 2) // 2, (w + 2) // 2
    xs = xp.reshape(n, h2, 2, w2, 2, c).transpose(0, 1, 3, 2, 4, 5)
    return xs.reshape(n, h2, w2, 4 * c).astype(jnp.bfloat16)


def _conv_weight_shift_matrix(w, cout_pad):
    """PyTorch Conv2d weight [Cout, Cin, 4, 4] -> [4, 4*Cin, Cout_pad] bf16.

    Index ab = 2*a + b selects the (a, b) in {0,1}^2 output shift; row order
    of the K dim is (ph, pw, cin), matching _space_to_depth's channel fold.
    """
    cout, cin, _, _ = w.shape
    mats = []
    for a in range(2):
        for b in range(2):
            blk = w[:, :, 2 * a:2 * a + 2, 2 * b:2 * b + 2]    # [co, ci, ph, pw]
            mats.append(blk.transpose(2, 3, 1, 0).reshape(4 * cin, cout))
    wm = jnp.stack(mats, axis=0)                               # [4, 4*Cin, Cout]
    wm = jnp.pad(wm, ((0, 0), (0, 0), (0, cout_pad - cout)))
    return wm.astype(jnp.bfloat16)


# ----------------------------- Pallas kernels --------------------------------

def _conv_accum(xs_ref, w_ref, oh, ow, tb):
    """Sum of 4 shifted-slice matmuls == 4x4 stride-2 conv on the block."""
    acc = None
    for a in range(2):
        for b in range(2):
            sl = xs_ref[:, a:a + oh, b:b + ow, :]              # (tb, OH, OW, 4*Cin)
            lhs = sl.reshape(tb * oh * ow, sl.shape[-1])
            p = jnp.dot(lhs, w_ref[2 * a + b],
                        preferred_element_type=jnp.float32)
            acc = p if acc is None else acc + p
    return acc                                                  # (tb*OH*OW, Coutp) f32


def _conv_leaky_kernel(xs_ref, w_ref, o_ref, *, oh, ow, tb):
    # conv1: Conv2d (no bias, no norm) + LeakyReLU(0.2)
    acc = _conv_accum(xs_ref, w_ref, oh, ow, tb)
    out = jnp.maximum(acc, NEG_SLOPE * acc)
    o_ref[...] = out.reshape(tb, oh, ow, -1).astype(o_ref.dtype)


def _conv_stats_kernel(xs_ref, w_ref, y_ref, s_ref, sq_ref, *, oh, ow, tb):
    # pass 1: conv matmuls + per-channel sum / sum-of-squares accumulated
    # across the "arbitrary" grid axis (per-split partials along the leading
    # "parallel" axis so both v7x TensorCores run the matmuls).
    acc = _conv_accum(xs_ref, w_ref, oh, ow, tb)
    y_ref[...] = acc.reshape(tb, oh, ow, -1).astype(y_ref.dtype)

    @pl.when(pl.program_id(1) == 0)
    def _():
        s_ref[...] = jnp.zeros_like(s_ref)
        sq_ref[...] = jnp.zeros_like(sq_ref)

    s_ref[...] += jnp.sum(acc, axis=0, keepdims=True)[None]
    sq_ref[...] += jnp.sum(acc * acc, axis=0, keepdims=True)[None]


def _bn_scale_shift(s_ref, sq_ref, g_ref, b_ref, m_total):
    mean = jnp.sum(s_ref[...], axis=0) * (1.0 / m_total)                # (1, Cp)
    var = jnp.maximum(
        jnp.sum(sq_ref[...], axis=0) * (1.0 / m_total) - mean * mean, 0.0)
    scale = jax.lax.rsqrt(var + EPS) * g_ref[...]
    shift = b_ref[...] - mean * scale
    return scale, shift


def _bn_leaky_kernel(y_ref, s_ref, sq_ref, g_ref, b_ref, o_ref, *, m_total):
    # pass 2: BatchNorm (batch stats, biased var) + gamma/beta + LeakyReLU(0.2)
    scale, shift = _bn_scale_shift(s_ref, sq_ref, g_ref, b_ref, m_total)
    x = y_ref[...].astype(jnp.float32) * scale + shift
    o_ref[...] = jnp.maximum(x, NEG_SLOPE * x).astype(o_ref.dtype)


def _bn_leaky_head_kernel(y_ref, s_ref, sq_ref, g_ref, b_ref, w5_ref, o_ref,
                          *, m_total, s_spatial, tb2):
    # layer-4 pass 2 fused with AdaptiveAvgPool2d(1) + 1x1 conv + sigmoid.
    scale, shift = _bn_scale_shift(s_ref, sq_ref, g_ref, b_ref, m_total)
    x = y_ref[...].astype(jnp.float32) * scale + shift
    h = jnp.maximum(x, NEG_SLOPE * x)                          # (tb2*S, Cp)
    h3 = h.reshape(tb2, s_spatial, h.shape[-1])
    pooled = jnp.sum(h3, axis=1) * (1.0 / s_spatial)           # (tb2, Cp) avg-pool
    logit = jnp.sum(pooled * w5_ref[...], axis=-1, keepdims=True)  # (tb2, 1)
    prob = 1.0 / (1.0 + jnp.exp(-logit))
    o_ref[...] = jnp.broadcast_to(prob, (tb2, LANE)).reshape(1, tb2, LANE)


# ------------------------------ layer wrappers --------------------------------

def _conv_leaky(x, wm):
    n, h, w, c = x.shape
    oh, ow = h // 2, w // 2
    coutp = wm.shape[-1]
    xs = _space_to_depth(x)
    c4 = xs.shape[-1]
    tb = _pick_sample_tile(n, oh * ow)
    nblk = n // tb
    flops = 2 * n * oh * ow * (16 * c) * coutp
    bytes_acc = xs.size * 2 + wm.size * 2 + n * oh * ow * coutp * 2
    return pl.pallas_call(
        functools.partial(_conv_leaky_kernel, oh=oh, ow=ow, tb=tb),
        out_shape=jax.ShapeDtypeStruct((n, oh, ow, coutp), jnp.bfloat16),
        grid=(nblk,),
        in_specs=[pl.BlockSpec((tb, oh + 1, ow + 1, c4), lambda i: (i, 0, 0, 0)),
                  pl.BlockSpec(wm.shape, lambda i: (0, 0, 0))],     # resident weight
        out_specs=pl.BlockSpec((tb, oh, ow, coutp), lambda i: (i, 0, 0, 0)),
        compiler_params=pltpu.CompilerParams(
            dimension_semantics=("parallel",), vmem_limit_bytes=VMEM_LIMIT),
        cost_estimate=pl.CostEstimate(flops=flops, transcendentals=0,
                                      bytes_accessed=bytes_acc),
    )(xs, wm)


def _conv_bn_stats(x, wm):
    n, h, w, c = x.shape
    oh, ow = h // 2, w // 2
    coutp = wm.shape[-1]
    xs = _space_to_depth(x)
    c4 = xs.shape[-1]
    tb = _pick_sample_tile(n, oh * ow)
    nblk = n // tb
    nsplit = 2 if nblk % 2 == 0 else 1      # v7x: both TCs run the heavy matmuls
    nper = nblk // nsplit
    flops = 2 * n * oh * ow * (16 * c) * coutp
    bytes_acc = xs.size * 2 + wm.size * 2 + n * oh * ow * coutp * 2
    y, ssum, ssq = pl.pallas_call(
        functools.partial(_conv_stats_kernel, oh=oh, ow=ow, tb=tb),
        out_shape=(jax.ShapeDtypeStruct((n, oh, ow, coutp), jnp.bfloat16),
                   jax.ShapeDtypeStruct((nsplit, 1, coutp), jnp.float32),
                   jax.ShapeDtypeStruct((nsplit, 1, coutp), jnp.float32)),
        grid=(nsplit, nper),
        in_specs=[pl.BlockSpec((tb, oh + 1, ow + 1, c4),
                               lambda s, i: (s * nper + i, 0, 0, 0)),
                  pl.BlockSpec(wm.shape, lambda s, i: (0, 0, 0))],  # resident weight
        out_specs=(pl.BlockSpec((tb, oh, ow, coutp),
                                lambda s, i: (s * nper + i, 0, 0, 0)),
                   pl.BlockSpec((1, 1, coutp), lambda s, i: (s, 0, 0)),
                   pl.BlockSpec((1, 1, coutp), lambda s, i: (s, 0, 0))),
        compiler_params=pltpu.CompilerParams(
            dimension_semantics=("parallel", "arbitrary"),
            vmem_limit_bytes=VMEM_LIMIT),
        cost_estimate=pl.CostEstimate(flops=flops, transcendentals=0,
                                      bytes_accessed=bytes_acc),
    )(xs, wm)
    return y, ssum, ssq


def _bn_leaky(y, ssum, ssq, gamma, beta):
    n, oh, ow, cp = y.shape
    m = n * oh * ow
    yf = y.reshape(m, cp)
    tm = _pick_row_tile(m, target=1024)
    out = pl.pallas_call(
        functools.partial(_bn_leaky_kernel, m_total=float(m)),
        out_shape=jax.ShapeDtypeStruct((m, cp), jnp.bfloat16),
        grid=(m // tm,),
        in_specs=[pl.BlockSpec((tm, cp), lambda i: (i, 0)),
                  pl.BlockSpec(ssum.shape, lambda i: (0, 0, 0)),
                  pl.BlockSpec(ssq.shape, lambda i: (0, 0, 0)),
                  pl.BlockSpec((1, cp), lambda i: (0, 0)),
                  pl.BlockSpec((1, cp), lambda i: (0, 0))],
        out_specs=pl.BlockSpec((tm, cp), lambda i: (i, 0)),
        compiler_params=pltpu.CompilerParams(
            dimension_semantics=("parallel",), vmem_limit_bytes=VMEM_LIMIT),
    )(yf, ssum, ssq, gamma, beta)
    return out.reshape(n, oh, ow, cp)


def _bn_leaky_head(y, ssum, ssq, gamma, beta, w5row):
    n, oh, ow, cp = y.shape
    s = oh * ow
    m = n * s
    tb2 = _pick_head_tile(n, s, target=1024)
    nblk = n // tb2
    tm = tb2 * s
    yf = y.reshape(m, cp)
    out = pl.pallas_call(
        functools.partial(_bn_leaky_head_kernel, m_total=float(m),
                          s_spatial=s, tb2=tb2),
        out_shape=jax.ShapeDtypeStruct((nblk, tb2, LANE), jnp.float32),
        grid=(nblk,),
        in_specs=[pl.BlockSpec((tm, cp), lambda i: (i, 0)),
                  pl.BlockSpec(ssum.shape, lambda i: (0, 0, 0)),
                  pl.BlockSpec(ssq.shape, lambda i: (0, 0, 0)),
                  pl.BlockSpec((1, cp), lambda i: (0, 0)),
                  pl.BlockSpec((1, cp), lambda i: (0, 0)),
                  pl.BlockSpec((1, cp), lambda i: (0, 0))],
        out_specs=pl.BlockSpec((1, tb2, LANE), lambda i: (i, 0, 0)),
        compiler_params=pltpu.CompilerParams(
            dimension_semantics=("parallel",), vmem_limit_bytes=VMEM_LIMIT),
    )(yf, ssum, ssq, gamma, beta, w5row)
    # out.view(N, -1).mean(1): single element per sample -> mean is identity.
    return out.reshape(n, LANE)[:, 0]


# --------------------------- params & forward --------------------------------

def init_params(key, conv_dim):
    ks = jax.random.split(key, 5)
    d = conv_dim

    def conv_w(k, cout, cin, ksize=4):
        scale = 1.0 / float(cin * ksize * ksize) ** 0.5
        return jax.random.uniform(k, (cout, cin, ksize, ksize), jnp.float32,
                                  -scale, scale)

    chans = [(3, d), (d, 2 * d), (2 * d, 4 * d), (4 * d, 8 * d)]
    params = {}
    for idx, (cin, cout) in enumerate(chans, start=1):
        cout_pad = _round_up_lane(cout)
        w = conv_w(ks[idx - 1], cout, cin)
        params[f"wmat{idx}"] = _conv_weight_shift_matrix(w, cout_pad)
        if idx > 1:   # conv2..conv4 carry BatchNorm (gamma=1, beta=0 init)
            params[f"g{idx}"] = jnp.pad(jnp.ones((1, cout), jnp.float32),
                                        ((0, 0), (0, cout_pad - cout)))
            params[f"b{idx}"] = jnp.zeros((1, cout_pad), jnp.float32)

    c8 = 8 * d
    c8_pad = _round_up_lane(c8)
    w5 = conv_w(ks[4], 1, c8, ksize=1)[:, :, 0, 0]              # [1, C8]
    params["w5row"] = jnp.pad(w5, ((0, 0), (0, c8_pad - c8)))   # [1, C8_pad]
    return params


@jax.jit
def dc_discriminator_forward(params, x):
    # x: [N, 3, H, W] NCHW like PyTorch. Returns [N] (sigmoid prob per sample).
    n, _, h, w = x.shape
    assert h % 16 == 0 and w % 16 == 0, "spatial dims must be multiples of 16"
    x = jnp.transpose(x, (0, 2, 3, 1))                          # NHWC, real 3 ch

    h1 = _conv_leaky(x, params["wmat1"])

    cin2 = params["wmat2"].shape[1] // 4      # real (un-padded) channel counts
    y, s2, q2 = _conv_bn_stats(h1[..., :cin2], params["wmat2"])
    h2 = _bn_leaky(y, s2, q2, params["g2"], params["b2"])

    cin3 = params["wmat3"].shape[1] // 4
    y, s3, q3 = _conv_bn_stats(h2[..., :cin3], params["wmat3"])
    h3 = _bn_leaky(y, s3, q3, params["g3"], params["b3"])

    cin4 = params["wmat4"].shape[1] // 4
    y, s4, q4 = _conv_bn_stats(h3[..., :cin4], params["wmat4"])
    # layer-4 BN + LeakyReLU fused with avg-pool + 1x1 conv + sigmoid head.
    return _bn_leaky_head(y, s4, q4, params["g4"], params["b4"], params["w5row"])


if __name__ == "__main__":
    key = jax.random.PRNGKey(0)
    kp, kx = jax.random.split(key)
    conv_dim, batch, hw = 8, 2, 32
    params = init_params(kp, conv_dim)
    x = jax.random.normal(kx, (batch, 3, hw, hw), jnp.float32)
    out = jax.block_until_ready(dc_discriminator_forward(params, x))
    assert out.shape == (batch,), out.shape
    assert bool(jnp.all(jnp.isfinite(out)))
    assert bool(jnp.all((out > 0.0) & (out < 1.0)))
    print("KERNEL_OK")
</pallas_src>

<mosaic_0001>
module attributes {stable_mosaic.version = 11 : i64} {
  func.func @_conv_leaky_kernel(%arg0: i32, %arg1: memref<2x17x17x12xbf16, #tpu.memory_space<vmem>>, %arg2: memref<4x12x128xbf16, #tpu.memory_space<vmem>>, %arg3: memref<2x16x16x128xbf16, #tpu.memory_space<vmem>>) attributes {dimension_semantics = [#tpu.dimension_semantics<parallel>], iteration_bounds = array<i64: 1>, scalar_prefetch = 0 : i64, scratch_operands = 0 : i64, tpu.core_type = #tpu.core_type<tc>, window_params = [{transform_indices = @transform_0, window_bounds = array<i64: 2, 17, 17, 12>}, {pipeline_mode = #tpu.pipeline_mode<synchronous>, transform_indices = @transform_1, window_bounds = array<i64: 4, 12, 128>}, {transform_indices = @transform_2, window_bounds = array<i64: 2, 16, 16, 128>}]} {
    %c0 = arith.constant 0 : index
    %c0_0 = arith.constant 0 : index
    %c0_1 = arith.constant 0 : index
    %c0_2 = arith.constant 0 : index
    %0 = vector.load %arg1[%c0, %c0_0, %c0_1, %c0_2] : memref<2x17x17x12xbf16, #tpu.memory_space<vmem>>, vector<2x16x16x12xbf16>
    %1 = vector.shape_cast %0 : vector<2x16x16x12xbf16> to vector<512x12xbf16>
    %c0_3 = arith.constant 0 : index
    %c0_4 = arith.constant 0 : index
    %c0_5 = arith.constant 0 : index
    %2 = vector.load %arg2[%c0_3, %c0_4, %c0_5] : memref<4x12x128xbf16, #tpu.memory_space<vmem>>, vector<1x12x128xbf16>
    %3 = vector.shape_cast %2 : vector<1x12x128xbf16> to vector<12x128xbf16>
    %cst = arith.constant dense<0.000000e+00> : vector<512x128xf32>
    %4 = tpu.matmul %1, %3, %cst {dimension_numbers = #tpu.dot_dimension_numbers<[1], [0], [0], [1], [0, 0, 1, 1], [], []>} : vector<512x12xbf16>, vector<12x128xbf16>, vector<512x128xf32> -> vector<512x128xf32>
    %c0_6 = arith.constant 0 : index
    %c0_7 = arith.constant 0 : index
    %c1 = arith.constant 1 : index
    %c0_8 = arith.constant 0 : index
    %5 = vector.load %arg1[%c0_6, %c0_7, %c1, %c0_8] : memref<2x17x17x12xbf16, #tpu.memory_space<vmem>>, vector<2x16x16x12xbf16>
    %6 = vector.shape_cast %5 : vector<2x16x16x12xbf16> to vector<512x12xbf16>
    %c1_9 = arith.constant 1 : index
    %c0_10 = arith.constant 0 : index
    %c0_11 = arith.constant 0 : index
    %7 = vector.load %arg2[%c1_9, %c0_10, %c0_11] : memref<4x12x128xbf16, #tpu.memory_space<vmem>>, vector<1x12x128xbf16>
    %8 = vector.shape_cast %7 : vector<1x12x128xbf16> to vector<12x128xbf16>
    %cst_12 = arith.constant dense<0.000000e+00> : vector<512x128xf32>
    %9 = tpu.matmul %6, %8, %cst_12 {dimension_numbers = #tpu.dot_dimension_numbers<[1], [0], [0], [1], [0, 0, 1, 1], [], []>} : vector<512x12xbf16>, vector<12x128xbf16>, vector<512x128xf32> -> vector<512x128xf32>
    %10 = arith.addf %4, %9 : vector<512x128xf32>
    %c0_13 = arith.constant 0 : index
    %c1_14 = arith.constant 1 : index
    %c0_15 = arith.constant 0 : index
    %c0_16 = arith.constant 0 : index
    %11 = vector.load %arg1[%c0_13, %c1_14, %c0_15, %c0_16] : memref<2x17x17x12xbf16, #tpu.memory_space<vmem>>, vector<2x16x16x12xbf16>
    %12 = vector.shape_cast %11 : vector<2x16x16x12xbf16> to vector<512x12xbf16>
    %c2 = arith.constant 2 : index
    %c0_17 = arith.constant 0 : index
    %c0_18 = arith.constant 0 : index
    %13 = vector.load %arg2[%c2, %c0_17, %c0_18] : memref<4x12x128xbf16, #tpu.memory_space<vmem>>, vector<1x12x128xbf16>
    %14 = vector.shape_cast %13 : vector<1x12x128xbf16> to vector<12x128xbf16>
    %cst_19 = arith.constant dense<0.000000e+00> : vector<512x128xf32>
    %15 = tpu.matmul %12, %14, %cst_19 {dimension_numbers = #tpu.dot_dimension_numbers<[1], [0], [0], [1], [0, 0, 1, 1], [], []>} : vector<512x12xbf16>, vector<12x128xbf16>, vector<512x128xf32> -> vector<512x128xf32>
    %16 = arith.addf %10, %15 : vector<512x128xf32>
    %c0_20 = arith.constant 0 : index
    %c1_21 = arith.constant 1 : index
    %c1_22 = arith.constant 1 : index
    %c0_23 = arith.constant 0 : index
    %17 = vector.load %arg1[%c0_20, %c1_21, %c1_22, %c0_23] : memref<2x17x17x12xbf16, #tpu.memory_space<vmem>>, vector<2x16x16x12xbf16>
    %18 = vector.shape_cast %17 : vector<2x16x16x12xbf16> to vector<512x12xbf16>
    %c3 = arith.constant 3 : index
    %c0_24 = arith.constant 0 : index
    %c0_25 = arith.constant 0 : index
    %19 = vector.load %arg2[%c3, %c0_24, %c0_25] : memref<4x12x128xbf16, #tpu.memory_space<vmem>>, vector<1x12x128xbf16>
    %20 = vector.shape_cast %19 : vector<1x12x128xbf16> to vector<12x128xbf16>
    %cst_26 = arith.constant dense<0.000000e+00> : vector<512x128xf32>
    %21 = tpu.matmul %18, %20, %cst_26 {dimension_numbers = #tpu.dot_dimension_numbers<[1], [0], [0], [1], [0, 0, 1, 1], [], []>} : vector<512x12xbf16>, vector<12x128xbf16>, vector<512x128xf32> -> vector<512x128xf32>
    %22 = arith.addf %16, %21 : vector<512x128xf32>
    %cst_27 = arith.constant 2.000000e-01 : f32
    %23 = vector.broadcast %cst_27 : f32 to vector<512x128xf32>
    %24 = arith.mulf %23, %22 : vector<512x128xf32>
    %25 = arith.maximumf %22, %24 : vector<512x128xf32>
    %26 = vector.shape_cast %25 : vector<512x128xf32> to vector<2x16x16x128xf32>
    %27 = arith.truncf %26 : vector<2x16x16x128xf32> to vector<2x16x16x128xbf16>
    %c0_28 = arith.constant 0 : index
    %c0_29 = arith.constant 0 : index
    %c0_30 = arith.constant 0 : index
    %c0_31 = arith.constant 0 : index
    %28 = vector.load %arg3[%c0_28, %c0_29, %c0_30, %c0_31] : memref<2x16x16x128xbf16, #tpu.memory_space<vmem>>, vector<2x16x16x128xbf16>
    tpu.vector_store %arg3[%c0_28, %c0_29, %c0_30, %c0_31], %27 {strides = array<i32>} : memref<2x16x16x128xbf16, #tpu.memory_space<vmem>>, vector<2x16x16x128xbf16>,
    return
  }
  func.func @transform_0(%arg0: i32) -> (i32, i32, i32, i32) {
    %c0_i32 = arith.constant 0 : i32
    %c0_i32_0 = arith.constant 0 : i32
    %c0_i32_1 = arith.constant 0 : i32
    %c0_i32_2 = arith.constant 0 : i32
    return %arg0, %c0_i32, %c0_i32_0, %c0_i32_1 : i32, i32, i32, i32
  }
  func.func @transform_1(%arg0: i32) -> (i32, i32, i32) {
    %c0_i32 = arith.constant 0 : i32
    %c0_i32_0 = arith.constant 0 : i32
    %c0_i32_1 = arith.constant 0 : i32
    %c0_i32_2 = arith.constant 0 : i32
    return %c0_i32, %c0_i32_0, %c0_i32_1 : i32, i32, i32
  }
  func.func @transform_2(%arg0: i32) -> (i32, i32, i32, i32) {
    %c0_i32 = arith.constant 0 : i32
    %c0_i32_0 = arith.constant 0 : i32
    %c0_i32_1 = arith.constant 0 : i32
    %c0_i32_2 = arith.constant 0 : i32
    return %arg0, %c0_i32, %c0_i32_0, %c0_i32_1 : i32, i32, i32, i32
  }
}

module attributes {stable_mosaic.version = 11 : i64} {
  func.func @_conv_stats_kernel(%arg0: i32, %arg1: i32, %arg2: memref<2x9x9x32xbf16, #tpu.memory_space<vmem>>, %arg3: memref<4x32x128xbf16, #tpu.memory_space<vmem>>, %arg4: memref<2x8x8x128xbf16, #tpu.memory_space<vmem>>, %arg5: memref<1x1x128xf32, #tpu.memory_space<vmem>>, %arg6: memref<1x1x128xf32, #tpu.memory_space<vmem>>) attributes {dimension_semantics = [#tpu.dimension_semantics<parallel>, #tpu.dimension_semantics<arbitrary>], iteration_bounds = array<i64: 1, 1>, scalar_prefetch = 0 : i64, scratch_operands = 0 : i64, tpu.core_type = #tpu.core_type<tc>, window_params = [{transform_indices = @transform_0, window_bounds = array<i64: 2, 9, 9, 32>}, {pipeline_mode = #tpu.pipeline_mode<synchronous>, transform_indices = @transform_1, window_bounds = array<i64: 4, 32, 128>}, {transform_indices = @transform_2, window_bounds = array<i64: 2, 8, 8, 128>}, {transform_indices = @transform_3, window_bounds = array<i64: 1, 1, 128>}, {transform_indices = @transform_4, window_bounds = array<i64: 1, 1, 128>}]} {
    %c0 = arith.constant 0 : index
    %c0_0 = arith.constant 0 : index
    %c0_1 = arith.constant 0 : index
    %c0_2 = arith.constant 0 : index
    %0 = vector.load %arg2[%c0, %c0_0, %c0_1, %c0_2] : memref<2x9x9x32xbf16, #tpu.memory_space<vmem>>, vector<2x8x8x32xbf16>
    %1 = vector.shape_cast %0 : vector<2x8x8x32xbf16> to vector<128x32xbf16>
    %c0_3 = arith.constant 0 : index
    %c0_4 = arith.constant 0 : index
    %c0_5 = arith.constant 0 : index
    %2 = vector.load %arg3[%c0_3, %c0_4, %c0_5] : memref<4x32x128xbf16, #tpu.memory_space<vmem>>, vector<1x32x128xbf16>
    %3 = vector.shape_cast %2 : vector<1x32x128xbf16> to vector<32x128xbf16>
    %cst = arith.constant dense<0.000000e+00> : vector<128x128xf32>
    %4 = tpu.matmul %1, %3, %cst {dimension_numbers = #tpu.dot_dimension_numbers<[1], [0], [0], [1], [0, 0, 1, 1], [], []>} : vector<128x32xbf16>, vector<32x128xbf16>, vector<128x128xf32> -> vector<128x128xf32>
    %c0_6 = arith.constant 0 : index
    %c0_7 = arith.constant 0 : index
    %c1 = arith.constant 1 : index
    %c0_8 = arith.constant 0 : index
    %5 = vector.load %arg2[%c0_6, %c0_7, %c1, %c0_8] : memref<2x9x9x32xbf16, #tpu.memory_space<vmem>>, vector<2x8x8x32xbf16>
    %6 = vector.shape_cast %5 : vector<2x8x8x32xbf16> to vector<128x32xbf16>
    %c1_9 = arith.constant 1 : index
    %c0_10 = arith.constant 0 : index
    %c0_11 = arith.constant 0 : index
    %7 = vector.load %arg3[%c1_9, %c0_10, %c0_11] : memref<4x32x128xbf16, #tpu.memory_space<vmem>>, vector<1x32x128xbf16>
    %8 = vector.shape_cast %7 : vector<1x32x128xbf16> to vector<32x128xbf16>
    %cst_12 = arith.constant dense<0.000000e+00> : vector<128x128xf32>
    %9 = tpu.matmul %6, %8, %cst_12 {dimension_numbers = #tpu.dot_dimension_numbers<[1], [0], [0], [1], [0, 0, 1, 1], [], []>} : vector<128x32xbf16>, vector<32x128xbf16>, vector<128x128xf32> -> vector<128x128xf32>
    %10 = arith.addf %4, %9 : vector<128x128xf32>
    %c0_13 = arith.constant 0 : index
    %c1_14 = arith.constant 1 : index
    %c0_15 = arith.constant 0 : index
    %c0_16 = arith.constant 0 : index
    %11 = vector.load %arg2[%c0_13, %c1_14, %c0_15, %c0_16] : memref<2x9x9x32xbf16, #tpu.memory_space<vmem>>, vector<2x8x8x32xbf16>
    %12 = vector.shape_cast %11 : vector<2x8x8x32xbf16> to vector<128x32xbf16>
    %c2 = arith.constant 2 : index
    %c0_17 = arith.constant 0 : index
    %c0_18 = arith.constant 0 : index
    %13 = vector.load %arg3[%c2, %c0_17, %c0_18] : memref<4x32x128xbf16, #tpu.memory_space<vmem>>, vector<1x32x128xbf16>
    %14 = vector.shape_cast %13 : vector<1x32x128xbf16> to vector<32x128xbf16>
    %cst_19 = arith.constant dense<0.000000e+00> : vector<128x128xf32>
    %15 = tpu.matmul %12, %14, %cst_19 {dimension_numbers = #tpu.dot_dimension_numbers<[1], [0], [0], [1], [0, 0, 1, 1], [], []>} : vector<128x32xbf16>, vector<32x128xbf16>, vector<128x128xf32> -> vector<128x128xf32>
    %16 = arith.addf %10, %15 : vector<128x128xf32>
    %c0_20 = arith.constant 0 : index
    %c1_21 = arith.constant 1 : index
    %c1_22 = arith.constant 1 : index
    %c0_23 = arith.constant 0 : index
    %17 = vector.load %arg2[%c0_20, %c1_21, %c1_22, %c0_23] : memref<2x9x9x32xbf16, #tpu.memory_space<vmem>>, vector<2x8x8x32xbf16>
    %18 = vector.shape_cast %17 : vector<2x8x8x32xbf16> to vector<128x32xbf16>
    %c3 = arith.constant 3 : index
    %c0_24 = arith.constant 0 : index
    %c0_25 = arith.constant 0 : index
    %19 = vector.load %arg3[%c3, %c0_24, %c0_25] : memref<4x32x128xbf16, #tpu.memory_space<vmem>>, vector<1x32x128xbf16>
    %20 = vector.shape_cast %19 : vector<1x32x128xbf16> to vector<32x128xbf16>
    %cst_26 = arith.constant dense<0.000000e+00> : vector<128x128xf32>
    %21 = tpu.matmul %18, %20, %cst_26 {dimension_numbers = #tpu.dot_dimension_numbers<[1], [0], [0], [1], [0, 0, 1, 1], [], []>} : vector<128x32xbf16>, vector<32x128xbf16>, vector<128x128xf32> -> vector<128x128xf32>
    %22 = arith.addf %16, %21 : vector<128x128xf32>
    %23 = vector.shape_cast %22 : vector<128x128xf32> to vector<2x8x8x128xf32>
    %24 = arith.truncf %23 : vector<2x8x8x128xf32> to vector<2x8x8x128xbf16>
    %c0_27 = arith.constant 0 : index
    %c0_28 = arith.constant 0 : index
    %c0_29 = arith.constant 0 : index
    %c0_30 = arith.constant 0 : index
    %25 = vector.load %arg4[%c0_27, %c0_28, %c0_29, %c0_30] : memref<2x8x8x128xbf16, #tpu.memory_space<vmem>>, vector<2x8x8x128xbf16>
    tpu.vector_store %arg4[%c0_27, %c0_28, %c0_29, %c0_30], %24 {strides = array<i32>} : memref<2x8x8x128xbf16, #tpu.memory_space<vmem>>, vector<2x8x8x128xbf16>,
    %c0_i32 = arith.constant 0 : i32
    %26 = arith.cmpi eq, %arg1, %c0_i32 : i32
    %27 = arith.extui %26 : i1 to i32
    %c0_i32_31 = arith.constant 0 : i32
    %28 = arith.cmpi ne, %27, %c0_i32_31 : i32
    scf.if %28 {
      %cst_46 = arith.constant 0.000000e+00 : f32
      %42 = vector.broadcast %cst_46 : f32 to vector<1x1x128xf32>
      %c0_47 = arith.constant 0 : index
      %c0_48 = arith.constant 0 : index
      %c0_49 = arith.constant 0 : index
      %43 = vector.load %arg5[%c0_47, %c0_48, %c0_49] : memref<1x1x128xf32, #tpu.memory_space<vmem>>, vector<1x1x128xf32>
      tpu.vector_store %arg5[%c0_47, %c0_48, %c0_49], %42 {strides = array<i32>} : memref<1x1x128xf32, #tpu.memory_space<vmem>>, vector<1x1x128xf32>,
      %cst_50 = arith.constant 0.000000e+00 : f32
      %44 = vector.broadcast %cst_50 : f32 to vector<1x1x128xf32>
      %c0_51 = arith.constant 0 : index
      %c0_52 = arith.constant 0 : index
      %c0_53 = arith.constant 0 : index
      %45 = vector.load %arg6[%c0_51, %c0_52, %c0_53] : memref<1x1x128xf32, #tpu.memory_space<vmem>>, vector<1x1x128xf32>
      tpu.vector_store %arg6[%c0_51, %c0_52, %c0_53], %44 {strides = array<i32>} : memref<1x1x128xf32, #tpu.memory_space<vmem>>, vector<1x1x128xf32>,
    } else {
    }
    %c0_32 = arith.constant 0 : index
    %c0_33 = arith.constant 0 : index
    %c0_34 = arith.constant 0 : index
    %29 = vector.load %arg5[%c0_32, %c0_33, %c0_34] : memref<1x1x128xf32, #tpu.memory_space<vmem>>, vector<1x1x128xf32>
    %cst_35 = arith.constant dense<0.000000e+00> : vector<128xf32>
    %30 = vector.multi_reduction <add>, %22, %cst_35 [0] : vector<128x128xf32> to vector<128xf32>
    %31 = vector.shape_cast %30 : vector<128xf32> to vector<1x128xf32>
    %32 = vector.shape_cast %31 : vector<1x128xf32> to vector<1x1x128xf32>
    %33 = arith.addf %29, %32 : vector<1x1x128xf32>
    %c0_36 = arith.constant 0 : index
    %c0_37 = arith.constant 0 : index
    %c0_38 = arith.constant 0 : index
    %34 = vector.load %arg5[%c0_36, %c0_37, %c0_38] : memref<1x1x128xf32, #tpu.memory_space<vmem>>, vector<1x1x128xf32>
    tpu.vector_store %arg5[%c0_36, %c0_37, %c0_38], %33 {strides = array<i32>} : memref<1x1x128xf32, #tpu.memory_space<vmem>>, vector<1x1x128xf32>,
    %c0_39 = arith.constant 0 : index
    %c0_40 = arith.constant 0 : index
    %c0_41 = arith.constant 0 : index
    %35 = vector.load %arg6[%c0_39, %c0_40, %c0_41] : memref<1x1x128xf32, #tpu.memory_space<vmem>>, vector<1x1x128xf32>
    %36 = arith.mulf %22, %22 : vector<128x128xf32>
    %cst_42 = arith.constant dense<0.000000e+00> : vector<128xf32>
    %37 = vector.multi_reduction <add>, %36, %cst_42 [0] : vector<128x128xf32> to vector<128xf32>
    %38 = vector.shape_cast %37 : vector<128xf32> to vector<1x128xf32>
    %39 = vector.shape_cast %38 : vector<1x128xf32> to vector<1x1x128xf32>
    %40 = arith.addf %35, %39 : vector<1x1x128xf32>
    %c0_43 = arith.constant 0 : index
    %c0_44 = arith.constant 0 : index
    %c0_45 = arith.constant 0 : index
    %41 = vector.load %arg6[%c0_43, %c0_44, %c0_45] : memref<1x1x128xf32, #tpu.memory_space<vmem>>, vector<1x1x128xf32>
    tpu.vector_store %arg6[%c0_43, %c0_44, %c0_45], %40 {strides = array<i32>} : memref<1x1x128xf32, #tpu.memory_space<vmem>>, vector<1x1x128xf32>,
    return
  }
  func.func @transform_0(%arg0: i32, %arg1: i32) -> (i32, i32, i32, i32) {
    %c1_i32 = arith.constant 1 : i32
    %0 = arith.muli %arg0, %c1_i32 : i32
    %1 = arith.addi %0, %arg1 : i32
    %c0_i32 = arith.constant 0 : i32
    %c0_i32_0 = arith.constant 0 : i32
    %c0_i32_1 = arith.constant 0 : i32
    %c0_i32_2 = arith.constant 0 : i32
    return %1, %c0_i32, %c0_i32_0, %c0_i32_1 : i32, i32, i32, i32
  }
  func.func @transform_1(%arg0: i32, %arg1: i32) -> (i32, i32, i32) {
    %c0_i32 = arith.constant 0 : i32
    %c0_i32_0 = arith.constant 0 : i32
    %c0_i32_1 = arith.constant 0 : i32
    %c0_i32_2 = arith.constant 0 : i32
    return %c0_i32, %c0_i32_0, %c0_i32_1 : i32, i32, i32
  }
  func.func @transform_2(%arg0: i32, %arg1: i32) -> (i32, i32, i32, i32) {
    %c1_i32 = arith.constant 1 : i32
    %0 = arith.muli %arg0, %c1_i32 : i32
    %1 = arith.addi %0, %arg1 : i32
    %c0_i32 = arith.constant 0 : i32
    %c0_i32_0 = arith.constant 0 : i32
    %c0_i32_1 = arith.constant 0 : i32
    %c0_i32_2 = arith.constant 0 : i32
    return %1, %c0_i32, %c0_i32_0, %c0_i32_1 : i32, i32, i32, i32
  }
  func.func @transform_3(%arg0: i32, %arg1: i32) -> (i32, i32, i32) {
    %c0_i32 = arith.constant 0 : i32
    %c0_i32_0 = arith.constant 0 : i32
    %c0_i32_1 = arith.constant 0 : i32
    return %arg0, %c0_i32, %c0_i32_0 : i32, i32, i32
  }
  func.func @transform_4(%arg0: i32, %arg1: i32) -> (i32, i32, i32) {
    %c0_i32 = arith.constant 0 : i32
    %c0_i32_0 = arith.constant 0 : i32
    %c0_i32_1 = arith.constant 0 : i32
    return %arg0, %c0_i32, %c0_i32_0 : i32, i32, i32
  }
}

module attributes {stable_mosaic.version = 11 : i64} {
  func.func @_bn_leaky_kernel(%arg0: i32, %arg1: memref<128x128xbf16, #tpu.memory_space<vmem>>, %arg2: memref<1x1x128xf32, #tpu.memory_space<vmem>>, %arg3: memref<1x1x128xf32, #tpu.memory_space<vmem>>, %arg4: memref<1x128xf32, #tpu.memory_space<vmem>>, %arg5: memref<1x128xf32, #tpu.memory_space<vmem>>, %arg6: memref<128x128xbf16, #tpu.memory_space<vmem>>) attributes {dimension_semantics = [#tpu.dimension_semantics<parallel>], iteration_bounds = array<i64: 1>, scalar_prefetch = 0 : i64, scratch_operands = 0 : i64, tpu.core_type = #tpu.core_type<tc>, window_params = [{transform_indices = @transform_0, window_bounds = array<i64: 128, 128>}, {pipeline_mode = #tpu.pipeline_mode<synchronous>, transform_indices = @transform_1, window_bounds = array<i64: 1, 1, 128>}, {pipeline_mode = #tpu.pipeline_mode<synchronous>, transform_indices = @transform_2, window_bounds = array<i64: 1, 1, 128>}, {pipeline_mode = #tpu.pipeline_mode<synchronous>, transform_indices = @transform_3, window_bounds = array<i64: 1, 128>}, {pipeline_mode = #tpu.pipeline_mode<synchronous>, transform_indices = @transform_4, window_bounds = array<i64: 1, 128>}, {transform_indices = @transform_5, window_bounds = array<i64: 128, 128>}]} {
    %c0 = arith.constant 0 : index
    %c0_0 = arith.constant 0 : index
    %c0_1 = arith.constant 0 : index
    %0 = vector.load %arg2[%c0, %c0_0, %c0_1] : memref<1x1x128xf32, #tpu.memory_space<vmem>>, vector<1x1x128xf32>
    %cst = arith.constant dense<0.000000e+00> : vector<1x128xf32>
    %1 = vector.multi_reduction <add>, %0, %cst [0] : vector<1x1x128xf32> to vector<1x128xf32>
    %cst_2 = arith.constant 7.812500e-03 : f32
    %2 = vector.broadcast %cst_2 : f32 to vector<1x128xf32>
    %3 = arith.mulf %1, %2 : vector<1x128xf32>
    %c0_3 = arith.constant 0 : index
    %c0_4 = arith.constant 0 : index
    %c0_5 = arith.constant 0 : index
    %4 = vector.load %arg3[%c0_3, %c0_4, %c0_5] : memref<1x1x128xf32, #tpu.memory_space<vmem>>, vector<1x1x128xf32>
    %cst_6 = arith.constant dense<0.000000e+00> : vector<1x128xf32>
    %5 = vector.multi_reduction <add>, %4, %cst_6 [0] : vector<1x1x128xf32> to vector<1x128xf32>
    %cst_7 = arith.constant 7.812500e-03 : f32
    %6 = vector.broadcast %cst_7 : f32 to vector<1x128xf32>
    %7 = arith.mulf %5, %6 : vector<1x128xf32>
    %8 = arith.mulf %3, %3 : vector<1x128xf32>
    %9 = arith.subf %7, %8 : vector<1x128xf32>
    %cst_8 = arith.constant 0.000000e+00 : f32
    %10 = vector.broadcast %cst_8 : f32 to vector<1x128xf32>
    %11 = arith.maximumf %9, %10 : vector<1x128xf32>
    %cst_9 = arith.constant 9.99999974E-6 : f32
    %12 = vector.broadcast %cst_9 : f32 to vector<1x128xf32>
    %13 = arith.addf %11, %12 : vector<1x128xf32>
    %14 = math.rsqrt %13 : vector<1x128xf32>
    %c0_10 = arith.constant 0 : index
    %c0_11 = arith.constant 0 : index
    %15 = vector.load %arg4[%c0_10, %c0_11] : memref<1x128xf32, #tpu.memory_space<vmem>>, vector<1x128xf32>
    %16 = arith.mulf %14, %15 : vector<1x128xf32>
    %c0_12 = arith.constant 0 : index
    %c0_13 = arith.constant 0 : index
    %17 = vector.load %arg5[%c0_12, %c0_13] : memref<1x128xf32, #tpu.memory_space<vmem>>, vector<1x128xf32>
    %18 = arith.mulf %3, %16 : vector<1x128xf32>
    %19 = arith.subf %17, %18 : vector<1x128xf32>
    %c0_14 = arith.constant 0 : index
    %c0_15 = arith.constant 0 : index
    %20 = vector.load %arg1[%c0_14, %c0_15] : memref<128x128xbf16, #tpu.memory_space<vmem>>, vector<128x128xbf16>
    %21 = arith.extf %20 : vector<128x128xbf16> to vector<128x128xf32>
    %22 = vector.broadcast %16 : vector<1x128xf32> to vector<128x128xf32>
    %23 = arith.mulf %21, %22 : vector<128x128xf32>
    %24 = vector.broadcast %19 : vector<1x128xf32> to vector<128x128xf32>
    %25 = arith.addf %23, %24 : vector<128x128xf32>
    %cst_16 = arith.constant 2.000000e-01 : f32
    %26 = vector.broadcast %cst_16 : f32 to vector<128x128xf32>
    %27 = arith.mulf %26, %25 : vector<128x128xf32>
    %28 = arith.maximumf %25, %27 : vector<128x128xf32>
    %29 = arith.truncf %28 : vector<128x128xf32> to vector<128x128xbf16>
    %c0_17 = arith.constant 0 : index
    %c0_18 = arith.constant 0 : index
    %30 = vector.load %arg6[%c0_17, %c0_18] : memref<128x128xbf16, #tpu.memory_space<vmem>>, vector<128x128xbf16>
    tpu.vector_store %arg6[%c0_17, %c0_18], %29 {strides = array<i32>} : memref<128x128xbf16, #tpu.memory_space<vmem>>, vector<128x128xbf16>,
    return
  }
  func.func @transform_0(%arg0: i32) -> (i32, i32) {
    %c0_i32 = arith.constant 0 : i32
    %c0_i32_0 = arith.constant 0 : i32
    return %arg0, %c0_i32 : i32, i32
  }
  func.func @transform_1(%arg0: i32) -> (i32, i32, i32) {
    %c0_i32 = arith.constant 0 : i32
    %c0_i32_0 = arith.constant 0 : i32
    %c0_i32_1 = arith.constant 0 : i32
    %c0_i32_2 = arith.constant 0 : i32
    return %c0_i32, %c0_i32_0, %c0_i32_1 : i32, i32, i32
  }
  func.func @transform_2(%arg0: i32) -> (i32, i32, i32) {
    %c0_i32 = arith.constant 0 : i32
    %c0_i32_0 = arith.constant 0 : i32
    %c0_i32_1 = arith.constant 0 : i32
    %c0_i32_2 = arith.constant 0 : i32
    return %c0_i32, %c0_i32_0, %c0_i32_1 : i32, i32, i32
  }
  func.func @transform_3(%arg0: i32) -> (i32, i32) {
    %c0_i32 = arith.constant 0 : i32
    %c0_i32_0 = arith.constant 0 : i32
    %c0_i32_1 = arith.constant 0 : i32
    return %c0_i32, %c0_i32_0 : i32, i32
  }
  func.func @transform_4(%arg0: i32) -> (i32, i32) {
    %c0_i32 = arith.constant 0 : i32
    %c0_i32_0 = arith.constant 0 : i32
    %c0_i32_1 = arith.constant 0 : i32
    return %c0_i32, %c0_i32_0 : i32, i32
  }
  func.func @transform_5(%arg0: i32) -> (i32, i32) {
    %c0_i32 = arith.constant 0 : i32
    %c0_i32_0 = arith.constant 0 : i32
    return %arg0, %c0_i32 : i32, i32
  }
}

module attributes {stable_mosaic.version = 11 : i64} {
  func.func @_conv_stats_kernel(%arg0: i32, %arg1: i32, %arg2: memref<2x5x5x64xbf16, #tpu.memory_space<vmem>>, %arg3: memref<4x64x128xbf16, #tpu.memory_space<vmem>>, %arg4: memref<2x4x4x128xbf16, #tpu.memory_space<vmem>>, %arg5: memref<1x1x128xf32, #tpu.memory_space<vmem>>, %arg6: memref<1x1x128xf32, #tpu.memory_space<vmem>>) attributes {dimension_semantics = [#tpu.dimension_semantics<parallel>, #tpu.dimension_semantics<arbitrary>], iteration_bounds = array<i64: 1, 1>, scalar_prefetch = 0 : i64, scratch_operands = 0 : i64, tpu.core_type = #tpu.core_type<tc>, window_params = [{transform_indices = @transform_0, window_bounds = array<i64: 2, 5, 5, 64>}, {pipeline_mode = #tpu.pipeline_mode<synchronous>, transform_indices = @transform_1, window_bounds = array<i64: 4, 64, 128>}, {transform_indices = @transform_2, window_bounds = array<i64: 2, 4, 4, 128>}, {transform_indices = @transform_3, window_bounds = array<i64: 1, 1, 128>}, {transform_indices = @transform_4, window_bounds = array<i64: 1, 1, 128>}]} {
    %c0 = arith.constant 0 : index
    %c0_0 = arith.constant 0 : index
    %c0_1 = arith.constant 0 : index
    %c0_2 = arith.constant 0 : index
    %0 = vector.load %arg2[%c0, %c0_0, %c0_1, %c0_2] : memref<2x5x5x64xbf16, #tpu.memory_space<vmem>>, vector<2x4x4x64xbf16>
    %1 = vector.shape_cast %0 : vector<2x4x4x64xbf16> to vector<32x64xbf16>
    %c0_3 = arith.constant 0 : index
    %c0_4 = arith.constant 0 : index
    %c0_5 = arith.constant 0 : index
    %2 = vector.load %arg3[%c0_3, %c0_4, %c0_5] : memref<4x64x128xbf16, #tpu.memory_space<vmem>>, vector<1x64x128xbf16>
    %3 = vector.shape_cast %2 : vector<1x64x128xbf16> to vector<64x128xbf16>
    %cst = arith.constant dense<0.000000e+00> : vector<32x128xf32>
    %4 = tpu.matmul %1, %3, %cst {dimension_numbers = #tpu.dot_dimension_numbers<[1], [0], [0], [1], [0, 0, 1, 1], [], []>} : vector<32x64xbf16>, vector<64x128xbf16>, vector<32x128xf32> -> vector<32x128xf32>
    %c0_6 = arith.constant 0 : index
    %c0_7 = arith.constant 0 : index
    %c1 = arith.constant 1 : index
    %c0_8 = arith.constant 0 : index
    %5 = vector.load %arg2[%c0_6, %c0_7, %c1, %c0_8] : memref<2x5x5x64xbf16, #tpu.memory_space<vmem>>, vector<2x4x4x64xbf16>
    %6 = vector.shape_cast %5 : vector<2x4x4x64xbf16> to vector<32x64xbf16>
    %c1_9 = arith.constant 1 : index
    %c0_10 = arith.constant 0 : index
    %c0_11 = arith.constant 0 : index
    %7 = vector.load %arg3[%c1_9, %c0_10, %c0_11] : memref<4x64x128xbf16, #tpu.memory_space<vmem>>, vector<1x64x128xbf16>
    %8 = vector.shape_cast %7 : vector<1x64x128xbf16> to vector<64x128xbf16>
    %cst_12 = arith.constant dense<0.000000e+00> : vector<32x128xf32>
    %9 = tpu.matmul %6, %8, %cst_12 {dimension_numbers = #tpu.dot_dimension_numbers<[1], [0], [0], [1], [0, 0, 1, 1], [], []>} : vector<32x64xbf16>, vector<64x128xbf16>, vector<32x128xf32> -> vector<32x128xf32>
    %10 = arith.addf %4, %9 : vector<32x128xf32>
    %c0_13 = arith.constant 0 : index
    %c1_14 = arith.constant 1 : index
    %c0_15 = arith.constant 0 : index
    %c0_16 = arith.constant 0 : index
    %11 = vector.load %arg2[%c0_13, %c1_14, %c0_15, %c0_16] : memref<2x5x5x64xbf16, #tpu.memory_space<vmem>>, vector<2x4x4x64xbf16>
    %12 = vector.shape_cast %11 : vector<2x4x4x64xbf16> to vector<32x64xbf16>
    %c2 = arith.constant 2 : index
    %c0_17 = arith.constant 0 : index
    %c0_18 = arith.constant 0 : index
    %13 = vector.load %arg3[%c2, %c0_17, %c0_18] : memref<4x64x128xbf16, #tpu.memory_space<vmem>>, vector<1x64x128xbf16>
    %14 = vector.shape_cast %13 : vector<1x64x128xbf16> to vector<64x128xbf16>
    %cst_19 = arith.constant dense<0.000000e+00> : vector<32x128xf32>
    %15 = tpu.matmul %12, %14, %cst_19 {dimension_numbers = #tpu.dot_dimension_numbers<[1], [0], [0], [1], [0, 0, 1, 1], [], []>} : vector<32x64xbf16>, vector<64x128xbf16>, vector<32x128xf32> -> vector<32x128xf32>
    %16 = arith.addf %10, %15 : vector<32x128xf32>
    %c0_20 = arith.constant 0 : index
    %c1_21 = arith.constant 1 : index
    %c1_22 = arith.constant 1 : index
    %c0_23 = arith.constant 0 : index
    %17 = vector.load %arg2[%c0_20, %c1_21, %c1_22, %c0_23] : memref<2x5x5x64xbf16, #tpu.memory_space<vmem>>, vector<2x4x4x64xbf16>
    %18 = vector.shape_cast %17 : vector<2x4x4x64xbf16> to vector<32x64xbf16>
    %c3 = arith.constant 3 : index
    %c0_24 = arith.constant 0 : index
    %c0_25 = arith.constant 0 : index
    %19 = vector.load %arg3[%c3, %c0_24, %c0_25] : memref<4x64x128xbf16, #tpu.memory_space<vmem>>, vector<1x64x128xbf16>
    %20 = vector.shape_cast %19 : vector<1x64x128xbf16> to vector<64x128xbf16>
    %cst_26 = arith.constant dense<0.000000e+00> : vector<32x128xf32>
    %21 = tpu.matmul %18, %20, %cst_26 {dimension_numbers = #tpu.dot_dimension_numbers<[1], [0], [0], [1], [0, 0, 1, 1], [], []>} : vector<32x64xbf16>, vector<64x128xbf16>, vector<32x128xf32> -> vector<32x128xf32>
    %22 = arith.addf %16, %21 : vector<32x128xf32>
    %23 = vector.shape_cast %22 : vector<32x128xf32> to vector<2x4x4x128xf32>
    %24 = arith.truncf %23 : vector<2x4x4x128xf32> to vector<2x4x4x128xbf16>
    %c0_27 = arith.constant 0 : index
    %c0_28 = arith.constant 0 : index
    %c0_29 = arith.constant 0 : index
    %c0_30 = arith.constant 0 : index
    %25 = vector.load %arg4[%c0_27, %c0_28, %c0_29, %c0_30] : memref<2x4x4x128xbf16, #tpu.memory_space<vmem>>, vector<2x4x4x128xbf16>
    tpu.vector_store %arg4[%c0_27, %c0_28, %c0_29, %c0_30], %24 {strides = array<i32>} : memref<2x4x4x128xbf16, #tpu.memory_space<vmem>>, vector<2x4x4x128xbf16>,
    %c0_i32 = arith.constant 0 : i32
    %26 = arith.cmpi eq, %arg1, %c0_i32 : i32
    %27 = arith.extui %26 : i1 to i32
    %c0_i32_31 = arith.constant 0 : i32
    %28 = arith.cmpi ne, %27, %c0_i32_31 : i32
    scf.if %28 {
      %cst_46 = arith.constant 0.000000e+00 : f32
      %42 = vector.broadcast %cst_46 : f32 to vector<1x1x128xf32>
      %c0_47 = arith.constant 0 : index
      %c0_48 = arith.constant 0 : index
      %c0_49 = arith.constant 0 : index
      %43 = vector.load %arg5[%c0_47, %c0_48, %c0_49] : memref<1x1x128xf32, #tpu.memory_space<vmem>>, vector<1x1x128xf32>
      tpu.vector_store %arg5[%c0_47, %c0_48, %c0_49], %42 {strides = array<i32>} : memref<1x1x128xf32, #tpu.memory_space<vmem>>, vector<1x1x128xf32>,
      %cst_50 = arith.constant 0.000000e+00 : f32
      %44 = vector.broadcast %cst_50 : f32 to vector<1x1x128xf32>
      %c0_51 = arith.constant 0 : index
      %c0_52 = arith.constant 0 : index
      %c0_53 = arith.constant 0 : index
      %45 = vector.load %arg6[%c0_51, %c0_52, %c0_53] : memref<1x1x128xf32, #tpu.memory_space<vmem>>, vector<1x1x128xf32>
      tpu.vector_store %arg6[%c0_51, %c0_52, %c0_53], %44 {strides = array<i32>} : memref<1x1x128xf32, #tpu.memory_space<vmem>>, vector<1x1x128xf32>,
    } else {
    }
    %c0_32 = arith.constant 0 : index
    %c0_33 = arith.constant 0 : index
    %c0_34 = arith.constant 0 : index
    %29 = vector.load %arg5[%c0_32, %c0_33, %c0_34] : memref<1x1x128xf32, #tpu.memory_space<vmem>>, vector<1x1x128xf32>
    %cst_35 = arith.constant dense<0.000000e+00> : vector<128xf32>
    %30 = vector.multi_reduction <add>, %22, %cst_35 [0] : vector<32x128xf32> to vector<128xf32>
    %31 = vector.shape_cast %30 : vector<128xf32> to vector<1x128xf32>
    %32 = vector.shape_cast %31 : vector<1x128xf32> to vector<1x1x128xf32>
    %33 = arith.addf %29, %32 : vector<1x1x128xf32>
    %c0_36 = arith.constant 0 : index
    %c0_37 = arith.constant 0 : index
    %c0_38 = arith.constant 0 : index
    %34 = vector.load %arg5[%c0_36, %c0_37, %c0_38] : memref<1x1x128xf32, #tpu.memory_space<vmem>>, vector<1x1x128xf32>
    tpu.vector_store %arg5[%c0_36, %c0_37, %c0_38], %33 {strides = array<i32>} : memref<1x1x128xf32, #tpu.memory_space<vmem>>, vector<1x1x128xf32>,
    %c0_39 = arith.constant 0 : index
    %c0_40 = arith.constant 0 : index
    %c0_41 = arith.constant 0 : index
    %35 = vector.load %arg6[%c0_39, %c0_40, %c0_41] : memref<1x1x128xf32, #tpu.memory_space<vmem>>, vector<1x1x128xf32>
    %36 = arith.mulf %22, %22 : vector<32x128xf32>
    %cst_42 = arith.constant dense<0.000000e+00> : vector<128xf32>
    %37 = vector.multi_reduction <add>, %36, %cst_42 [0] : vector<32x128xf32> to vector<128xf32>
    %38 = vector.shape_cast %37 : vector<128xf32> to vector<1x128xf32>
    %39 = vector.shape_cast %38 : vector<1x128xf32> to vector<1x1x128xf32>
    %40 = arith.addf %35, %39 : vector<1x1x128xf32>
    %c0_43 = arith.constant 0 : index
    %c0_44 = arith.constant 0 : index
    %c0_45 = arith.constant 0 : index
    %41 = vector.load %arg6[%c0_43, %c0_44, %c0_45] : memref<1x1x128xf32, #tpu.memory_space<vmem>>, vector<1x1x128xf32>
    tpu.vector_store %arg6[%c0_43, %c0_44, %c0_45], %40 {strides = array<i32>} : memref<1x1x128xf32, #tpu.memory_space<vmem>>, vector<1x1x128xf32>,
    return
  }
  func.func @transform_0(%arg0: i32, %arg1: i32) -> (i32, i32, i32, i32) {
    %c1_i32 = arith.constant 1 : i32
    %0 = arith.muli %arg0, %c1_i32 : i32
    %1 = arith.addi %0, %arg1 : i32
    %c0_i32 = arith.constant 0 : i32
    %c0_i32_0 = arith.constant 0 : i32
    %c0_i32_1 = arith.constant 0 : i32
    %c0_i32_2 = arith.constant 0 : i32
    return %1, %c0_i32, %c0_i32_0, %c0_i32_1 : i32, i32, i32, i32
  }
  func.func @transform_1(%arg0: i32, %arg1: i32) -> (i32, i32, i32) {
    %c0_i32 = arith.constant 0 : i32
    %c0_i32_0 = arith.constant 0 : i32
    %c0_i32_1 = arith.constant 0 : i32
    %c0_i32_2 = arith.constant 0 : i32
    return %c0_i32, %c0_i32_0, %c0_i32_1 : i32, i32, i32
  }
  func.func @transform_2(%arg0: i32, %arg1: i32) -> (i32, i32, i32, i32) {
    %c1_i32 = arith.constant 1 : i32
    %0 = arith.muli %arg0, %c1_i32 : i32
    %1 = arith.addi %0, %arg1 : i32
    %c0_i32 = arith.constant 0 : i32
    %c0_i32_0 = arith.constant 0 : i32
    %c0_i32_1 = arith.constant 0 : i32
    %c0_i32_2 = arith.constant 0 : i32
    return %1, %c0_i32, %c0_i32_0, %c0_i32_1 : i32, i32, i32, i32
  }
  func.func @transform_3(%arg0: i32, %arg1: i32) -> (i32, i32, i32) {
    %c0_i32 = arith.constant 0 : i32
    %c0_i32_0 = arith.constant 0 : i32
    %c0_i32_1 = arith.constant 0 : i32
    return %arg0, %c0_i32, %c0_i32_0 : i32, i32, i32
  }
  func.func @transform_4(%arg0: i32, %arg1: i32) -> (i32, i32, i32) {
    %c0_i32 = arith.constant 0 : i32
    %c0_i32_0 = arith.constant 0 : i32
    %c0_i32_1 = arith.constant 0 : i32
    return %arg0, %c0_i32, %c0_i32_0 : i32, i32, i32
  }
}

module attributes {stable_mosaic.version = 11 : i64} {
  func.func @_bn_leaky_kernel(%arg0: i32, %arg1: memref<32x128xbf16, #tpu.memory_space<vmem>>, %arg2: memref<1x1x128xf32, #tpu.memory_space<vmem>>, %arg3: memref<1x1x128xf32, #tpu.memory_space<vmem>>, %arg4: memref<1x128xf32, #tpu.memory_space<vmem>>, %arg5: memref<1x128xf32, #tpu.memory_space<vmem>>, %arg6: memref<32x128xbf16, #tpu.memory_space<vmem>>) attributes {dimension_semantics = [#tpu.dimension_semantics<parallel>], iteration_bounds = array<i64: 1>, scalar_prefetch = 0 : i64, scratch_operands = 0 : i64, tpu.core_type = #tpu.core_type<tc>, window_params = [{transform_indices = @transform_0, window_bounds = array<i64: 32, 128>}, {pipeline_mode = #tpu.pipeline_mode<synchronous>, transform_indices = @transform_1, window_bounds = array<i64: 1, 1, 128>}, {pipeline_mode = #tpu.pipeline_mode<synchronous>, transform_indices = @transform_2, window_bounds = array<i64: 1, 1, 128>}, {pipeline_mode = #tpu.pipeline_mode<synchronous>, transform_indices = @transform_3, window_bounds = array<i64: 1, 128>}, {pipeline_mode = #tpu.pipeline_mode<synchronous>, transform_indices = @transform_4, window_bounds = array<i64: 1, 128>}, {transform_indices = @transform_5, window_bounds = array<i64: 32, 128>}]} {
    %c0 = arith.constant 0 : index
    %c0_0 = arith.constant 0 : index
    %c0_1 = arith.constant 0 : index
    %0 = vector.load %arg2[%c0, %c0_0, %c0_1] : memref<1x1x128xf32, #tpu.memory_space<vmem>>, vector<1x1x128xf32>
    %cst = arith.constant dense<0.000000e+00> : vector<1x128xf32>
    %1 = vector.multi_reduction <add>, %0, %cst [0] : vector<1x1x128xf32> to vector<1x128xf32>
    %cst_2 = arith.constant 3.125000e-02 : f32
    %2 = vector.broadcast %cst_2 : f32 to vector<1x128xf32>
    %3 = arith.mulf %1, %2 : vector<1x128xf32>
    %c0_3 = arith.constant 0 : index
    %c0_4 = arith.constant 0 : index
    %c0_5 = arith.constant 0 : index
    %4 = vector.load %arg3[%c0_3, %c0_4, %c0_5] : memref<1x1x128xf32, #tpu.memory_space<vmem>>, vector<1x1x128xf32>
    %cst_6 = arith.constant dense<0.000000e+00> : vector<1x128xf32>
    %5 = vector.multi_reduction <add>, %4, %cst_6 [0] : vector<1x1x128xf32> to vector<1x128xf32>
    %cst_7 = arith.constant 3.125000e-02 : f32
    %6 = vector.broadcast %cst_7 : f32 to vector<1x128xf32>
    %7 = arith.mulf %5, %6 : vector<1x128xf32>
    %8 = arith.mulf %3, %3 : vector<1x128xf32>
    %9 = arith.subf %7, %8 : vector<1x128xf32>
    %cst_8 = arith.constant 0.000000e+00 : f32
    %10 = vector.broadcast %cst_8 : f32 to vector<1x128xf32>
    %11 = arith.maximumf %9, %10 : vector<1x128xf32>
    %cst_9 = arith.constant 9.99999974E-6 : f32
    %12 = vector.broadcast %cst_9 : f32 to vector<1x128xf32>
    %13 = arith.addf %11, %12 : vector<1x128xf32>
    %14 = math.rsqrt %13 : vector<1x128xf32>
    %c0_10 = arith.constant 0 : index
    %c0_11 = arith.constant 0 : index
    %15 = vector.load %arg4[%c0_10, %c0_11] : memref<1x128xf32, #tpu.memory_space<vmem>>, vector<1x128xf32>
    %16 = arith.mulf %14, %15 : vector<1x128xf32>
    %c0_12 = arith.constant 0 : index
    %c0_13 = arith.constant 0 : index
    %17 = vector.load %arg5[%c0_12, %c0_13] : memref<1x128xf32, #tpu.memory_space<vmem>>, vector<1x128xf32>
    %18 = arith.mulf %3, %16 : vector<1x128xf32>
    %19 = arith.subf %17, %18 : vector<1x128xf32>
    %c0_14 = arith.constant 0 : index
    %c0_15 = arith.constant 0 : index
    %20 = vector.load %arg1[%c0_14, %c0_15] : memref<32x128xbf16, #tpu.memory_space<vmem>>, vector<32x128xbf16>
    %21 = arith.extf %20 : vector<32x128xbf16> to vector<32x128xf32>
    %22 = vector.broadcast %16 : vector<1x128xf32> to vector<32x128xf32>
    %23 = arith.mulf %21, %22 : vector<32x128xf32>
    %24 = vector.broadcast %19 : vector<1x128xf32> to vector<32x128xf32>
    %25 = arith.addf %23, %24 : vector<32x128xf32>
    %cst_16 = arith.constant 2.000000e-01 : f32
    %26 = vector.broadcast %cst_16 : f32 to vector<32x128xf32>
    %27 = arith.mulf %26, %25 : vector<32x128xf32>
    %28 = arith.maximumf %25, %27 : vector<32x128xf32>
    %29 = arith.truncf %28 : vector<32x128xf32> to vector<32x128xbf16>
    %c0_17 = arith.constant 0 : index
    %c0_18 = arith.constant 0 : index
    %30 = vector.load %arg6[%c0_17, %c0_18] : memref<32x128xbf16, #tpu.memory_space<vmem>>, vector<32x128xbf16>
    tpu.vector_store %arg6[%c0_17, %c0_18], %29 {strides = array<i32>} : memref<32x128xbf16, #tpu.memory_space<vmem>>, vector<32x128xbf16>,
    return
  }
  func.func @transform_0(%arg0: i32) -> (i32, i32) {
    %c0_i32 = arith.constant 0 : i32
    %c0_i32_0 = arith.constant 0 : i32
    return %arg0, %c0_i32 : i32, i32
  }
  func.func @transform_1(%arg0: i32) -> (i32, i32, i32) {
    %c0_i32 = arith.constant 0 : i32
    %c0_i32_0 = arith.constant 0 : i32
    %c0_i32_1 = arith.constant 0 : i32
    %c0_i32_2 = arith.constant 0 : i32
    return %c0_i32, %c0_i32_0, %c0_i32_1 : i32, i32, i32
  }
  func.func @transform_2(%arg0: i32) -> (i32, i32, i32) {
    %c0_i32 = arith.constant 0 : i32
    %c0_i32_0 = arith.constant 0 : i32
    %c0_i32_1 = arith.constant 0 : i32
    %c0_i32_2 = arith.constant 0 : i32
    return %c0_i32, %c0_i32_0, %c0_i32_1 : i32, i32, i32
  }
  func.func @transform_3(%arg0: i32) -> (i32, i32) {
    %c0_i32 = arith.constant 0 : i32
    %c0_i32_0 = arith.constant 0 : i32
    %c0_i32_1 = arith.constant 0 : i32
    return %c0_i32, %c0_i32_0 : i32, i32
  }
  func.func @transform_4(%arg0: i32) -> (i32, i32) {
    %c0_i32 = arith.constant 0 : i32
    %c0_i32_0 = arith.constant 0 : i32
    %c0_i32_1 = arith.constant 0 : i32
    return %c0_i32, %c0_i32_0 : i32, i32
  }
  func.func @transform_5(%arg0: i32) -> (i32, i32) {
    %c0_i32 = arith.constant 0 : i32
    %c0_i32_0 = arith.constant 0 : i32
    return %arg0, %c0_i32 : i32, i32
  }
}

module attributes {stable_mosaic.version = 11 : i64} {
  func.func @_conv_stats_kernel(%arg0: i32, %arg1: i32, %arg2: memref<2x3x3x128xbf16, #tpu.memory_space<vmem>>, %arg3: memref<4x128x128xbf16, #tpu.memory_space<vmem>>, %arg4: memref<2x2x2x128xbf16, #tpu.memory_space<vmem>>, %arg5: memref<1x1x128xf32, #tpu.memory_space<vmem>>, %arg6: memref<1x1x128xf32, #tpu.memory_space<vmem>>) attributes {dimension_semantics = [#tpu.dimension_semantics<parallel>, #tpu.dimension_semantics<arbitrary>], iteration_bounds = array<i64: 1, 1>, scalar_prefetch = 0 : i64, scratch_operands = 0 : i64, tpu.core_type = #tpu.core_type<tc>, window_params = [{transform_indices = @transform_0, window_bounds = array<i64: 2, 3, 3, 128>}, {pipeline_mode = #tpu.pipeline_mode<synchronous>, transform_indices = @transform_1, window_bounds = array<i64: 4, 128, 128>}, {transform_indices = @transform_2, window_bounds = array<i64: 2, 2, 2, 128>}, {transform_indices = @transform_3, window_bounds = array<i64: 1, 1, 128>}, {transform_indices = @transform_4, window_bounds = array<i64: 1, 1, 128>}]} {
    %c0 = arith.constant 0 : index
    %c0_0 = arith.constant 0 : index
    %c0_1 = arith.constant 0 : index
    %c0_2 = arith.constant 0 : index
    %0 = vector.load %arg2[%c0, %c0_0, %c0_1, %c0_2] : memref<2x3x3x128xbf16, #tpu.memory_space<vmem>>, vector<2x2x2x128xbf16>
    %1 = vector.shape_cast %0 : vector<2x2x2x128xbf16> to vector<8x128xbf16>
    %c0_3 = arith.constant 0 : index
    %c0_4 = arith.constant 0 : index
    %c0_5 = arith.constant 0 : index
    %2 = vector.load %arg3[%c0_3, %c0_4, %c0_5] : memref<4x128x128xbf16, #tpu.memory_space<vmem>>, vector<1x128x128xbf16>
    %3 = vector.shape_cast %2 : vector<1x128x128xbf16> to vector<128x128xbf16>
    %cst = arith.constant dense<0.000000e+00> : vector<8x128xf32>
    %4 = tpu.matmul %1, %3, %cst {dimension_numbers = #tpu.dot_dimension_numbers<[1], [0], [0], [1], [0, 0, 1, 1], [], []>} : vector<8x128xbf16>, vector<128x128xbf16>, vector<8x128xf32> -> vector<8x128xf32>
    %c0_6 = arith.constant 0 : index
    %c0_7 = arith.constant 0 : index
    %c1 = arith.constant 1 : index
    %c0_8 = arith.constant 0 : index
    %5 = vector.load %arg2[%c0_6, %c0_7, %c1, %c0_8] : memref<2x3x3x128xbf16, #tpu.memory_space<vmem>>, vector<2x2x2x128xbf16>
    %6 = vector.shape_cast %5 : vector<2x2x2x128xbf16> to vector<8x128xbf16>
    %c1_9 = arith.constant 1 : index
    %c0_10 = arith.constant 0 : index
    %c0_11 = arith.constant 0 : index
    %7 = vector.load %arg3[%c1_9, %c0_10, %c0_11] : memref<4x128x128xbf16, #tpu.memory_space<vmem>>, vector<1x128x128xbf16>
    %8 = vector.shape_cast %7 : vector<1x128x128xbf16> to vector<128x128xbf16>
    %cst_12 = arith.constant dense<0.000000e+00> : vector<8x128xf32>
    %9 = tpu.matmul %6, %8, %cst_12 {dimension_numbers = #tpu.dot_dimension_numbers<[1], [0], [0], [1], [0, 0, 1, 1], [], []>} : vector<8x128xbf16>, vector<128x128xbf16>, vector<8x128xf32> -> vector<8x128xf32>
    %10 = arith.addf %4, %9 : vector<8x128xf32>
    %c0_13 = arith.constant 0 : index
    %c1_14 = arith.constant 1 : index
    %c0_15 = arith.constant 0 : index
    %c0_16 = arith.constant 0 : index
    %11 = vector.load %arg2[%c0_13, %c1_14, %c0_15, %c0_16] : memref<2x3x3x128xbf16, #tpu.memory_space<vmem>>, vector<2x2x2x128xbf16>
    %12 = vector.shape_cast %11 : vector<2x2x2x128xbf16> to vector<8x128xbf16>
    %c2 = arith.constant 2 : index
    %c0_17 = arith.constant 0 : index
    %c0_18 = arith.constant 0 : index
    %13 = vector.load %arg3[%c2, %c0_17, %c0_18] : memref<4x128x128xbf16, #tpu.memory_space<vmem>>, vector<1x128x128xbf16>
    %14 = vector.shape_cast %13 : vector<1x128x128xbf16> to vector<128x128xbf16>
    %cst_19 = arith.constant dense<0.000000e+00> : vector<8x128xf32>
    %15 = tpu.matmul %12, %14, %cst_19 {dimension_numbers = #tpu.dot_dimension_numbers<[1], [0], [0], [1], [0, 0, 1, 1], [], []>} : vector<8x128xbf16>, vector<128x128xbf16>, vector<8x128xf32> -> vector<8x128xf32>
    %16 = arith.addf %10, %15 : vector<8x128xf32>
    %c0_20 = arith.constant 0 : index
    %c1_21 = arith.constant 1 : index
    %c1_22 = arith.constant 1 : index
    %c0_23 = arith.constant 0 : index
    %17 = vector.load %arg2[%c0_20, %c1_21, %c1_22, %c0_23] : memref<2x3x3x128xbf16, #tpu.memory_space<vmem>>, vector<2x2x2x128xbf16>
    %18 = vector.shape_cast %17 : vector<2x2x2x128xbf16> to vector<8x128xbf16>
    %c3 = arith.constant 3 : index
    %c0_24 = arith.constant 0 : index
    %c0_25 = arith.constant 0 : index
    %19 = vector.load %arg3[%c3, %c0_24, %c0_25] : memref<4x128x128xbf16, #tpu.memory_space<vmem>>, vector<1x128x128xbf16>
    %20 = vector.shape_cast %19 : vector<1x128x128xbf16> to vector<128x128xbf16>
    %cst_26 = arith.constant dense<0.000000e+00> : vector<8x128xf32>
    %21 = tpu.matmul %18, %20, %cst_26 {dimension_numbers = #tpu.dot_dimension_numbers<[1], [0], [0], [1], [0, 0, 1, 1], [], []>} : vector<8x128xbf16>, vector<128x128xbf16>, vector<8x128xf32> -> vector<8x128xf32>
    %22 = arith.addf %16, %21 : vector<8x128xf32>
    %23 = vector.shape_cast %22 : vector<8x128xf32> to vector<2x2x2x128xf32>
    %24 = arith.truncf %23 : vector<2x2x2x128xf32> to vector<2x2x2x128xbf16>
    %c0_27 = arith.constant 0 : index
    %c0_28 = arith.constant 0 : index
    %c0_29 = arith.constant 0 : index
    %c0_30 = arith.constant 0 : index
    %25 = vector.load %arg4[%c0_27, %c0_28, %c0_29, %c0_30] : memref<2x2x2x128xbf16, #tpu.memory_space<vmem>>, vector<2x2x2x128xbf16>
    tpu.vector_store %arg4[%c0_27, %c0_28, %c0_29, %c0_30], %24 {strides = array<i32>} : memref<2x2x2x128xbf16, #tpu.memory_space<vmem>>, vector<2x2x2x128xbf16>,
    %c0_i32 = arith.constant 0 : i32
    %26 = arith.cmpi eq, %arg1, %c0_i32 : i32
    %27 = arith.extui %26 : i1 to i32
    %c0_i32_31 = arith.constant 0 : i32
    %28 = arith.cmpi ne, %27, %c0_i32_31 : i32
    scf.if %28 {
      %cst_46 = arith.constant 0.000000e+00 : f32
      %42 = vector.broadcast %cst_46 : f32 to vector<1x1x128xf32>
      %c0_47 = arith.constant 0 : index
      %c0_48 = arith.constant 0 : index
      %c0_49 = arith.constant 0 : index
      %43 = vector.load %arg5[%c0_47, %c0_48, %c0_49] : memref<1x1x128xf32, #tpu.memory_space<vmem>>, vector<1x1x128xf32>
      tpu.vector_store %arg5[%c0_47, %c0_48, %c0_49], %42 {strides = array<i32>} : memref<1x1x128xf32, #tpu.memory_space<vmem>>, vector<1x1x128xf32>,
      %cst_50 = arith.constant 0.000000e+00 : f32
      %44 = vector.broadcast %cst_50 : f32 to vector<1x1x128xf32>
      %c0_51 = arith.constant 0 : index
      %c0_52 = arith.constant 0 : index
      %c0_53 = arith.constant 0 : index
      %45 = vector.load %arg6[%c0_51, %c0_52, %c0_53] : memref<1x1x128xf32, #tpu.memory_space<vmem>>, vector<1x1x128xf32>
      tpu.vector_store %arg6[%c0_51, %c0_52, %c0_53], %44 {strides = array<i32>} : memref<1x1x128xf32, #tpu.memory_space<vmem>>, vector<1x1x128xf32>,
    } else {
    }
    %c0_32 = arith.constant 0 : index
    %c0_33 = arith.constant 0 : index
    %c0_34 = arith.constant 0 : index
    %29 = vector.load %arg5[%c0_32, %c0_33, %c0_34] : memref<1x1x128xf32, #tpu.memory_space<vmem>>, vector<1x1x128xf32>
    %cst_35 = arith.constant dense<0.000000e+00> : vector<128xf32>
    %30 = vector.multi_reduction <add>, %22, %cst_35 [0] : vector<8x128xf32> to vector<128xf32>
    %31 = vector.shape_cast %30 : vector<128xf32> to vector<1x128xf32>
    %32 = vector.shape_cast %31 : vector<1x128xf32> to vector<1x1x128xf32>
    %33 = arith.addf %29, %32 : vector<1x1x128xf32>
    %c0_36 = arith.constant 0 : index
    %c0_37 = arith.constant 0 : index
    %c0_38 = arith.constant 0 : index
    %34 = vector.load %arg5[%c0_36, %c0_37, %c0_38] : memref<1x1x128xf32, #tpu.memory_space<vmem>>, vector<1x1x128xf32>
    tpu.vector_store %arg5[%c0_36, %c0_37, %c0_38], %33 {strides = array<i32>} : memref<1x1x128xf32, #tpu.memory_space<vmem>>, vector<1x1x128xf32>,
    %c0_39 = arith.constant 0 : index
    %c0_40 = arith.constant 0 : index
    %c0_41 = arith.constant 0 : index
    %35 = vector.load %arg6[%c0_39, %c0_40, %c0_41] : memref<1x1x128xf32, #tpu.memory_space<vmem>>, vector<1x1x128xf32>
    %36 = arith.mulf %22, %22 : vector<8x128xf32>
    %cst_42 = arith.constant dense<0.000000e+00> : vector<128xf32>
    %37 = vector.multi_reduction <add>, %36, %cst_42 [0] : vector<8x128xf32> to vector<128xf32>
    %38 = vector.shape_cast %37 : vector<128xf32> to vector<1x128xf32>
    %39 = vector.shape_cast %38 : vector<1x128xf32> to vector<1x1x128xf32>
    %40 = arith.addf %35, %39 : vector<1x1x128xf32>
    %c0_43 = arith.constant 0 : index
    %c0_44 = arith.constant 0 : index
    %c0_45 = arith.constant 0 : index
    %41 = vector.load %arg6[%c0_43, %c0_44, %c0_45] : memref<1x1x128xf32, #tpu.memory_space<vmem>>, vector<1x1x128xf32>
    tpu.vector_store %arg6[%c0_43, %c0_44, %c0_45], %40 {strides = array<i32>} : memref<1x1x128xf32, #tpu.memory_space<vmem>>, vector<1x1x128xf32>,
    return
  }
  func.func @transform_0(%arg0: i32, %arg1: i32) -> (i32, i32, i32, i32) {
    %c1_i32 = arith.constant 1 : i32
    %0 = arith.muli %arg0, %c1_i32 : i32
    %1 = arith.addi %0, %arg1 : i32
    %c0_i32 = arith.constant 0 : i32
    %c0_i32_0 = arith.constant 0 : i32
    %c0_i32_1 = arith.constant 0 : i32
    %c0_i32_2 = arith.constant 0 : i32
    return %1, %c0_i32, %c0_i32_0, %c0_i32_1 : i32, i32, i32, i32
  }
  func.func @transform_1(%arg0: i32, %arg1: i32) -> (i32, i32, i32) {
    %c0_i32 = arith.constant 0 : i32
    %c0_i32_0 = arith.constant 0 : i32
    %c0_i32_1 = arith.constant 0 : i32
    %c0_i32_2 = arith.constant 0 : i32
    return %c0_i32, %c0_i32_0, %c0_i32_1 : i32, i32, i32
  }
  func.func @transform_2(%arg0: i32, %arg1: i32) -> (i32, i32, i32, i32) {
    %c1_i32 = arith.constant 1 : i32
    %0 = arith.muli %arg0, %c1_i32 : i32
    %1 = arith.addi %0, %arg1 : i32
    %c0_i32 = arith.constant 0 : i32
    %c0_i32_0 = arith.constant 0 : i32
    %c0_i32_1 = arith.constant 0 : i32
    %c0_i32_2 = arith.constant 0 : i32
    return %1, %c0_i32, %c0_i32_0, %c0_i32_1 : i32, i32, i32, i32
  }
  func.func @transform_3(%arg0: i32, %arg1: i32) -> (i32, i32, i32) {
    %c0_i32 = arith.constant 0 : i32
    %c0_i32_0 = arith.constant 0 : i32
    %c0_i32_1 = arith.constant 0 : i32
    return %arg0, %c0_i32, %c0_i32_0 : i32, i32, i32
  }
  func.func @transform_4(%arg0: i32, %arg1: i32) -> (i32, i32, i32) {
    %c0_i32 = arith.constant 0 : i32
    %c0_i32_0 = arith.constant 0 : i32
    %c0_i32_1 = arith.constant 0 : i32
    return %arg0, %c0_i32, %c0_i32_0 : i32, i32, i32
  }
}

module attributes {stable_mosaic.version = 11 : i64} {
  func.func @_bn_leaky_head_kernel(%arg0: i32, %arg1: memref<8x128xbf16, #tpu.memory_space<vmem>>, %arg2: memref<1x1x128xf32, #tpu.memory_space<vmem>>, %arg3: memref<1x1x128xf32, #tpu.memory_space<vmem>>, %arg4: memref<1x128xf32, #tpu.memory_space<vmem>>, %arg5: memref<1x128xf32, #tpu.memory_space<vmem>>, %arg6: memref<1x128xf32, #tpu.memory_space<vmem>>, %arg7: memref<1x2x128xf32, #tpu.memory_space<vmem>>) attributes {dimension_semantics = [#tpu.dimension_semantics<parallel>], iteration_bounds = array<i64: 1>, scalar_prefetch = 0 : i64, scratch_operands = 0 : i64, tpu.core_type = #tpu.core_type<tc>, window_params = [{transform_indices = @transform_0, window_bounds = array<i64: 8, 128>}, {pipeline_mode = #tpu.pipeline_mode<synchronous>, transform_indices = @transform_1, window_bounds = array<i64: 1, 1, 128>}, {pipeline_mode = #tpu.pipeline_mode<synchronous>, transform_indices = @transform_2, window_bounds = array<i64: 1, 1, 128>}, {pipeline_mode = #tpu.pipeline_mode<synchronous>, transform_indices = @transform_3, window_bounds = array<i64: 1, 128>}, {pipeline_mode = #tpu.pipeline_mode<synchronous>, transform_indices = @transform_4, window_bounds = array<i64: 1, 128>}, {pipeline_mode = #tpu.pipeline_mode<synchronous>, transform_indices = @transform_5, window_bounds = array<i64: 1, 128>}, {transform_indices = @transform_6, window_bounds = array<i64: 1, 2, 128>}]} {
    %c0 = arith.constant 0 : index
    %c0_0 = arith.constant 0 : index
    %c0_1 = arith.constant 0 : index
    %0 = vector.load %arg2[%c0, %c0_0, %c0_1] : memref<1x1x128xf32, #tpu.memory_space<vmem>>, vector<1x1x128xf32>
    %cst = arith.constant dense<0.000000e+00> : vector<1x128xf32>
    %1 = vector.multi_reduction <add>, %0, %cst [0] : vector<1x1x128xf32> to vector<1x128xf32>
    %cst_2 = arith.constant 1.250000e-01 : f32
    %2 = vector.broadcast %cst_2 : f32 to vector<1x128xf32>
    %3 = arith.mulf %1, %2 : vector<1x128xf32>
    %c0_3 = arith.constant 0 : index
    %c0_4 = arith.constant 0 : index
    %c0_5 = arith.constant 0 : index
    %4 = vector.load %arg3[%c0_3, %c0_4, %c0_5] : memref<1x1x128xf32, #tpu.memory_space<vmem>>, vector<1x1x128xf32>
    %cst_6 = arith.constant dense<0.000000e+00> : vector<1x128xf32>
    %5 = vector.multi_reduction <add>, %4, %cst_6 [0] : vector<1x1x128xf32> to vector<1x128xf32>
    %cst_7 = arith.constant 1.250000e-01 : f32
    %6 = vector.broadcast %cst_7 : f32 to vector<1x128xf32>
    %7 = arith.mulf %5, %6 : vector<1x128xf32>
    %8 = arith.mulf %3, %3 : vector<1x128xf32>
    %9 = arith.subf %7, %8 : vector<1x128xf32>
    %cst_8 = arith.constant 0.000000e+00 : f32
    %10 = vector.broadcast %cst_8 : f32 to vector<1x128xf32>
    %11 = arith.maximumf %9, %10 : vector<1x128xf32>
    %cst_9 = arith.constant 9.99999974E-6 : f32
    %12 = vector.broadcast %cst_9 : f32 to vector<1x128xf32>
    %13 = arith.addf %11, %12 : vector<1x128xf32>
    %14 = math.rsqrt %13 : vector<1x128xf32>
    %c0_10 = arith.constant 0 : index
    %c0_11 = arith.constant 0 : index
    %15 = vector.load %arg4[%c0_10, %c0_11] : memref<1x128xf32, #tpu.memory_space<vmem>>, vector<1x128xf32>
    %16 = arith.mulf %14, %15 : vector<1x128xf32>
    %c0_12 = arith.constant 0 : index
    %c0_13 = arith.constant 0 : index
    %17 = vector.load %arg5[%c0_12, %c0_13] : memref<1x128xf32, #tpu.memory_space<vmem>>, vector<1x128xf32>
    %18 = arith.mulf %3, %16 : vector<1x128xf32>
    %19 = arith.subf %17, %18 : vector<1x128xf32>
    %c0_14 = arith.constant 0 : index
    %c0_15 = arith.constant 0 : index
    %20 = vector.load %arg1[%c0_14, %c0_15] : memref<8x128xbf16, #tpu.memory_space<vmem>>, vector<8x128xbf16>
    %21 = arith.extf %20 : vector<8x128xbf16> to vector<8x128xf32>
    %22 = vector.broadcast %16 : vector<1x128xf32> to vector<8x128xf32>
    %23 = arith.mulf %21, %22 : vector<8x128xf32>
    %24 = vector.broadcast %19 : vector<1x128xf32> to vector<8x128xf32>
    %25 = arith.addf %23, %24 : vector<8x128xf32>
    %cst_16 = arith.constant 2.000000e-01 : f32
    %26 = vector.broadcast %cst_16 : f32 to vector<8x128xf32>
    %27 = arith.mulf %26, %25 : vector<8x128xf32>
    %28 = arith.maximumf %25, %27 : vector<8x128xf32>
    %29 = vector.shape_cast %28 : vector<8x128xf32> to vector<2x4x128xf32>
    %cst_17 = arith.constant dense<0.000000e+00> : vector<2x128xf32>
    %30 = vector.multi_reduction <add>, %29, %cst_17 [1] : vector<2x4x128xf32> to vector<2x128xf32>
    %cst_18 = arith.constant 2.500000e-01 : f32
    %31 = vector.broadcast %cst_18 : f32 to vector<2x128xf32>
    %32 = arith.mulf %30, %31 : vector<2x128xf32>
    %c0_19 = arith.constant 0 : index
    %c0_20 = arith.constant 0 : index
    %33 = vector.load %arg6[%c0_19, %c0_20] : memref<1x128xf32, #tpu.memory_space<vmem>>, vector<1x128xf32>
    %34 = vector.broadcast %33 : vector<1x128xf32> to vector<2x128xf32>
    %35 = arith.mulf %32, %34 : vector<2x128xf32>
    %cst_21 = arith.constant dense<0.000000e+00> : vector<2xf32>
    %36 = vector.multi_reduction <add>, %35, %cst_21 [1] : vector<2x128xf32> to vector<2xf32>
    %37 = vector.shape_cast %36 : vector<2xf32> to vector<2x1xf32>
    %cst_22 = arith.constant 0.000000e+00 : f32
    %38 = vector.broadcast %cst_22 : f32 to vector<2x1xf32>
    %39 = arith.subf %38, %37 : vector<2x1xf32>
    %40 = math.exp %39 : vector<2x1xf32>
    %cst_23 = arith.constant 1.000000e+00 : f32
    %41 = vector.broadcast %cst_23 : f32 to vector<2x1xf32>
    %42 = arith.addf %41, %40 : vector<2x1xf32>
    %cst_24 = arith.constant 1.000000e+00 : f32
    %43 = vector.broadcast %cst_24 : f32 to vector<2x1xf32>
    %44 = arith.divf %43, %42 : vector<2x1xf32>
    %45 = vector.shape_cast %44 : vector<2x1xf32> to vector<2x1xf32>
    %46 = vector.broadcast %45 : vector<2x1xf32> to vector<2x128xf32>
    %47 = vector.shape_cast %46 : vector<2x128xf32> to vector<1x2x128xf32>
    %c0_25 = arith.constant 0 : index
    %c0_26 = arith.constant 0 : index
    %c0_27 = arith.constant 0 : index
    %48 = vector.load %arg7[%c0_25, %c0_26, %c0_27] : memref<1x2x128xf32, #tpu.memory_space<vmem>>, vector<1x2x128xf32>
    tpu.vector_store %arg7[%c0_25, %c0_26, %c0_27], %47 {strides = array<i32>} : memref<1x2x128xf32, #tpu.memory_space<vmem>>, vector<1x2x128xf32>,
    return
  }
  func.func @transform_0(%arg0: i32) -> (i32, i32) {
    %c0_i32 = arith.constant 0 : i32
    %c0_i32_0 = arith.constant 0 : i32
    return %arg0, %c0_i32 : i32, i32
  }
  func.func @transform_1(%arg0: i32) -> (i32, i32, i32) {
    %c0_i32 = arith.constant 0 : i32
    %c0_i32_0 = arith.constant 0 : i32
    %c0_i32_1 = arith.constant 0 : i32
    %c0_i32_2 = arith.constant 0 : i32
    return %c0_i32, %c0_i32_0, %c0_i32_1 : i32, i32, i32
  }
  func.func @transform_2(%arg0: i32) -> (i32, i32, i32) {
    %c0_i32 = arith.constant 0 : i32
    %c0_i32_0 = arith.constant 0 : i32
    %c0_i32_1 = arith.constant 0 : i32
    %c0_i32_2 = arith.constant 0 : i32
    return %c0_i32, %c0_i32_0, %c0_i32_1 : i32, i32, i32
  }
  func.func @transform_3(%arg0: i32) -> (i32, i32) {
    %c0_i32 = arith.constant 0 : i32
    %c0_i32_0 = arith.constant 0 : i32
    %c0_i32_1 = arith.constant 0 : i32
    return %c0_i32, %c0_i32_0 : i32, i32
  }
  func.func @transform_4(%arg0: i32) -> (i32, i32) {
    %c0_i32 = arith.constant 0 : i32
    %c0_i32_0 = arith.constant 0 : i32
    %c0_i32_1 = arith.constant 0 : i32
    return %c0_i32, %c0_i32_0 : i32, i32
  }
  func.func @transform_5(%arg0: i32) -> (i32, i32) {
    %c0_i32 = arith.constant 0 : i32
    %c0_i32_0 = arith.constant 0 : i32
    %c0_i32_1 = arith.constant 0 : i32
    return %c0_i32, %c0_i32_0 : i32, i32
  }
  func.func @transform_6(%arg0: i32) -> (i32, i32, i32) {
    %c0_i32 = arith.constant 0 : i32
    %c0_i32_0 = arith.constant 0 : i32
    %c0_i32_1 = arith.constant 0 : i32
    return %arg0, %c0_i32, %c0_i32_0 : i32, i32, i32
  }
}

</mosaic_0001>

<llo_original>
// kernel: dc_discriminator_forward.8
$region0: #{dc_discriminator_forward.8}
  #allocation0 [shape = 'u32[]', space=smem, size = 0x4, offset = 0x4, fixed_abs, tag = 'smem constant byte address 0x4 - core index']
  #allocation1 [shape = 'u32[72,128]{1,0:T(1,128)}', space=vmem, size = 0x9000, scoped, tag = 'internal scratch']
  %s0 = inlined_call_operand.vmem [shape: bf16[2,9,9,32], index: 0, kind: input, shape index: {}]
  %s1 = inlined_call_operand.vmem [shape: bf16[4,32,128], index: 1, kind: input, shape index: {}]
  %s2 = inlined_call_operand.vmem [shape: bf16[2,8,8,128], index: 2, kind: output, shape index: {0}]
  %s3 = inlined_call_operand.vmem [shape: f32[1,1,128], index: 3, kind: output, shape index: {1}]
  %s4 = inlined_call_operand.vmem [shape: f32[1,1,128], index: 4, kind: output, shape index: {2}]
  %5 = xla_tuple %s2, %s3, %s4
  %s6 = sld [smem:[#allocation0]]
  $region38: #{dc_discriminator_forward.8} parent=0
    _
  %s8 = ssub.s32 1, %s6
  %s9 = scalar_select 0, %s8, %s6
  // Predicated region
  $region2: #{dc_discriminator_forward.8} parent=0 // pred_check
    _
  $region3: #{dc_discriminator_forward.8} parent=0 // pred_check_branch
    %11 = sbr.rel (0) target = $region5
  $region4: #{dc_discriminator_forward.8} parent=0 // pred_region
    %s12 = sadd.s32 0, 0
    %s13 = smul.u32 2, %s12
    %p14 = scmp.lt.s32.totalorder %s13, 1
    %s15 = scalar_select %p14, %s13, 1
    %s16 = smul.addr %s15, 18
    %s17 = smul.addr %s16, 4
    %s18 = scalar_lea.vmem %s0, %s17
    %s19 = sadd.s32 0, 0
    %s20 = smul.u32 2, %s19
  $region5: #{dc_discriminator_forward.8} parent=0 // pred_fallthru
    _
  // Predicated region
  $region6: #{dc_discriminator_forward.8} parent=0 // pred_check
    _
  $region7: #{dc_discriminator_forward.8} parent=0 // pred_check_branch
    %22 = sbr.rel (0) target = $region9
  $region8: #{dc_discriminator_forward.8} parent=0 // pred_region
    _
  $region9: #{dc_discriminator_forward.8} parent=0 // pred_fallthru
    _
  %s23 = sadd.s32 0, 0
  %s24 = smul.u32 2, %s23
  %p25 = scmp.lt.s32.totalorder %s24, 1
  %s26 = scalar_select %p25, %s24, 1
  %s27 = smul.addr %s26, 18
  %s28 = smul.addr %s27, 4
  %s29 = scalar_lea.vmem %s0, %s28
  %s30 = sadd.s32 0, 0
  %s31 = smul.u32 2, %s30
  %p32 = scmp.lt.s32.totalorder %s31, 1
  %s33 = scalar_select %p32, %s31, 1
  %s34 = smul.addr %s33, 8
  %s35 = smul.addr %s34, 4
  %s36 = scalar_lea.vmem %s2, %s35
  %s37 = sadd.s32 0, 0
  %s38 = smul.u32 2, %s37
  %p39 = scmp.lt.s32.totalorder %s38, 1
  %s40 = scalar_select %p39, %s38, 1
  %s41 = smul.addr %s40, 18
  %s42 = smul.addr %s41, 4
  %s43 = scalar_lea.vmem %s0, %s42
  %s44 = sadd.s32 0, 0
  %s45 = smul.u32 2, %s44
  %s46 = sadd.s32 0, 0
  %s47 = smul.u32 2, %s46
  %p48 = scmp.lt.s32.totalorder %s47, 1
  %s49 = scalar_select %p48, %s47, 1
  %s50 = smul.addr %s49, 8
  %s51 = smul.addr %s50, 4
  %s52 = scalar_lea.vmem %s2, %s51
  %s53 = sadd.s32 0, 0
  %s54 = smul.u32 2, %s53
  %v56 = vld [vmem:[%s43] sm:$0xf]
  %v57 = vld [vmem:[%s43 + $0x8] sm:$0xf]
  %v58 = vld [vmem:[%s43 + $0x10] sm:$0xf]
  %v59 = vld [vmem:[%s43 + $0x18] sm:$0xf]
  %v60 = vld [vmem:[%s43 + $0x20] sm:$0xf]
  %v61 = vld [vmem:[%s43 + $0x28] sm:$0xf]
  %v62 = vld [vmem:[%s43 + $0x30] sm:$0xf]
  %v63 = vld [vmem:[%s43 + $0x38] sm:$0xf]
  %v64 = vld [vmem:[%s43 + $0x48] sm:$0xf]
  %v65 = vld [vmem:[%s43 + $0x50] sm:$0xf]
  %v66 = vld [vmem:[%s43 + $0x58] sm:$0xf]
  %v67 = vld [vmem:[%s43 + $0x60] sm:$0xf]
  %v68 = vld [vmem:[%s43 + $0x68] sm:$0xf]
  %v69 = vld [vmem:[%s43 + $0x70] sm:$0xf]
  %v70 = vld [vmem:[%s43 + $0x78] sm:$0xf]
  %v71 = vld [vmem:[%s43 + $0x80] sm:$0xf]
  %v72 = vld [vmem:[%s1] sm:$0xf]
  %v73 = vld [vmem:[%s1 + $0x4] sm:$0xf]
  %v74 = vld [vmem:[%s1 + $0x8] sm:$0xf]
  %v75 = vld [vmem:[%s1 + $0xc] sm:$0xf]
  %v76 = vld [vmem:[%s43 + $0x4] sm:$0x1]
  %v77 = vld [vmem:[%s43 + $0xc] sm:$0x1]
  %v78 = vld [vmem:[%s43 + $0x14] sm:$0x1]
  %v79 = vld [vmem:[%s43 + $0x1c] sm:$0x1]
  %v80 = vld [vmem:[%s43 + $0x24] sm:$0x1]
  %v81 = vld [vmem:[%s43 + $0x2c] sm:$0x1]
  %v82 = vld [vmem:[%s43 + $0x34] sm:$0x1]
  %v83 = vld [vmem:[%s43 + $0x3c] sm:$0x1]
  %v84 = vld [vmem:[%s43 + $0x4c] sm:$0x1]
  %v85 = vld [vmem:[%s43 + $0x54] sm:$0x1]
  %v86 = vld [vmem:[%s43 + $0x5c] sm:$0x1]
  %v87 = vld [vmem:[%s43 + $0x64] sm:$0x1]
  %v88 = vld [vmem:[%s43 + $0x6c] sm:$0x1]
  %v89 = vld [vmem:[%s43 + $0x74] sm:$0x1]
  %v90 = vld [vmem:[%s43 + $0x7c] sm:$0x1]
  %v91 = vld [vmem:[%s43 + $0x84] sm:$0x1]
  %vm92 = vsmask.f32 3328
  %vm93 = vsmask.f32 7440
  %vm94 = vmor %vm92, %vm93
  %v96 = vshrl.u32 %v56, 16
  %v98 = vrot.slane %v96, 4
  %v99 = vshll.u32 %v56, 16
  %v101 = vrot.slane %v99, 5
  %v102 = vor.u32 %v98, %v101
  %v103 = vrot.slane %v102, 4
  %v105 = vshll.u32 %v76, 16
  %v107 = vrot.slane %v105, 5
  %v108 = vsel %vm94, %v103, %v107
  %v110 = vshrl.u32 %v57, 16
  %v112 = vrot.slane %v110, 4
  %v113 = vshll.u32 %v57, 16
  %v115 = vrot.slane %v113, 5
  %v116 = vor.u32 %v112, %v115
  %v117 = vrot.slane %v116, 4
  %v119 = vshll.u32 %v77, 16
  %v121 = vrot.slane %v119, 5
  %v122 = vsel %vm94, %v117, %v121
  %v124 = vshrl.u32 %v58, 16
  %v126 = vrot.slane %v124, 4
  %v127 = vshll.u32 %v58, 16
  %v129 = vrot.slane %v127, 5
  %v130 = vor.u32 %v126, %v129
  %v131 = vrot.slane %v130, 4
  %v133 = vshll.u32 %v78, 16
  %v135 = vrot.slane %v133, 5
  %v136 = vsel %vm94, %v131, %v135
  %v138 = vshrl.u32 %v59, 16
  %v140 = vrot.slane %v138, 4
  %v141 = vshll.u32 %v59, 16
  %v143 = vrot.slane %v141, 5
  %v144 = vor.u32 %v140, %v143
  %v145 = vrot.slane %v144, 4
  %v147 = vshll.u32 %v79, 16
  %v149 = vrot.slane %v147, 5
  %v150 = vsel %vm94, %v145, %v149
  %v152 = vshrl.u32 %v60, 16
  %v154 = vrot.slane %v152, 4
  %v155 = vshll.u32 %v60, 16
  %v157 = vrot.slane %v155, 5
  %v158 = vor.u32 %v154, %v157
  %v159 = vrot.slane %v158, 4
  %v161 = vshll.u32 %v80, 16
  %v163 = vrot.slane %v161, 5
  %v164 = vsel %vm94, %v159, %v163
  %v166 = vshrl.u32 %v61, 16
  %v168 = vrot.slane %v166, 4
  %v169 = vshll.u32 %v61, 16
  %v171 = vrot.slane %v169, 5
  %v172 = vor.u32 %v168, %v171
  %v173 = vrot.slane %v172, 4
  %v175 = vshll.u32 %v81, 16
  %v177 = vrot.slane %v175, 5
  %v178 = vsel %vm94, %v173, %v177
  %v180 = vshrl.u32 %v62, 16
  %v182 = vrot.slane %v180, 4
  %v183 = vshll.u32 %v62, 16
  %v185 = vrot.slane %v183, 5
  %v186 = vor.u32 %v182, %v185
  %v187 = vrot.slane %v186, 4
  %v189 = vshll.u32 %v82, 16
  %v191 = vrot.slane %v189, 5
  %v192 = vsel %vm94, %v187, %v191
  %v194 = vshrl.u32 %v63, 16
  %v196 = vrot.slane %v194, 4
  %v197 = vshll.u32 %v63, 16
  %v199 = vrot.slane %v197, 5
  %v200 = vor.u32 %v196, %v199
  %v201 = vrot.slane %v200, 4
  %v203 = vshll.u32 %v83, 16
  %v205 = vrot.slane %v203, 5
  %v206 = vsel %vm94, %v201, %v205
  %v208 = vshrl.u32 %v64, 16
  %v210 = vrot.slane %v208, 4
  %v211 = vshll.u32 %v64, 16
  %v213 = vrot.slane %v211, 5
  %v214 = vor.u32 %v210, %v213
  %v215 = vrot.slane %v214, 4
  %v217 = vshll.u32 %v84, 16
  %v219 = vrot.slane %v217, 5
  %v220 = vsel %vm94, %v215, %v219
  %v222 = vshrl.u32 %v65, 16
  %v224 = vrot.slane %v222, 4
  %v225 = vshll.u32 %v65, 16
  %v227 = vrot.slane %v225, 5
  %v228 = vor.u32 %v224, %v227
  %v229 = vrot.slane %v228, 4
  %v231 = vshll.u32 %v85, 16
  %v233 = vrot.slane %v231, 5
  %v234 = vsel %vm94, %v229, %v233
  %v236 = vshrl.u32 %v66, 16
  %v238 = vrot.slane %v236, 4
  %v239 = vshll.u32 %v66, 16
  %v241 = vrot.slane %v239, 5
  %v242 = vor.u32 %v238, %v241
  %v243 = vrot.slane %v242, 4
  %v245 = vshll.u32 %v86, 16
  %v247 = vrot.slane %v245, 5
  %v248 = vsel %vm94, %v243, %v247
  %v250 = vshrl.u32 %v67, 16
  %v252 = vrot.slane %v250, 4
  %v253 = vshll.u32 %v67, 16
  %v255 = vrot.slane %v253, 5
  %v256 = vor.u32 %v252, %v255
  %v257 = vrot.slane %v256, 4
  %v259 = vshll.u32 %v87, 16
  %v261 = vrot.slane %v259, 5
  %v262 = vsel %vm94, %v257, %v261
  %v264 = vshrl.u32 %v68, 16
  %v266 = vrot.slane %v264, 4
  %v267 = vshll.u32 %v68, 16
  %v269 = vrot.slane %v267, 5
  %v270 = vor.u32 %v266, %v269
  %v271 = vrot.slane %v270, 4
  %v273 = vshll.u32 %v88, 16
  %v275 = vrot.slane %v273, 5
  %v276 = vsel %vm94, %v271, %v275
  %v278 = vshrl.u32 %v69, 16
  %v280 = vrot.slane %v278, 4
  %v281 = vshll.u32 %v69, 16
  %v283 = vrot.slane %v281, 5
  %v284 = vor.u32 %v280, %v283
  %v285 = vrot.slane %v284, 4
  %v287 = vshll.u32 %v89, 16
  %v289 = vrot.slane %v287, 5
  %v290 = vsel %vm94, %v285, %v289
  %v292 = vshrl.u32 %v70, 16
  %v294 = vrot.slane %v292, 4
  %v295 = vshll.u32 %v70, 16
  %v297 = vrot.slane %v295, 5
  %v298 = vor.u32 %v294, %v297
  %v299 = vrot.slane %v298, 4
  %v301 = vshll.u32 %v90, 16
  %v303 = vrot.slane %v301, 5
  %v304 = vsel %vm94, %v299, %v303
  %v306 = vshrl.u32 %v71, 16
  %v308 = vrot.slane %v306, 4
  %v309 = vshll.u32 %v71, 16
  %v311 = vrot.slane %v309, 5
  %v312 = vor.u32 %v308, %v311
  %v313 = vrot.slane %v312, 4
  %v315 = vshll.u32 %v91, 16
  %v317 = vrot.slane %v315, 5
  %v318 = vsel %vm94, %v313, %v317
  %s319 = scalar_lea.vmem %s1, 16
  %v320 = vld [vmem:[%s319] sm:$0xf]
  %v321 = vld [vmem:[%s319 + $0x4] sm:$0xf]
  %v322 = vld [vmem:[%s319 + $0x8] sm:$0xf]
  %v323 = vld [vmem:[%s319 + $0xc] sm:$0xf]
  %v324 = vunpack.c.l.b16 %v108
  %v325 = vunpack.c.l.b16 %v122
  %v326 = vunpack.c.l.b16 %v136
  %v327 = vunpack.c.l.b16 %v150
  %v328 = vunpack.c.l.b16 %v164
  %v329 = vunpack.c.l.b16 %v178
  %v330 = vunpack.c.l.b16 %v192
  %v331 = vunpack.c.l.b16 %v206
  %v332 = vunpack.c.l.b16 %v220
  %v333 = vunpack.c.l.b16 %v234
  %v334 = vunpack.c.l.b16 %v248
  %v335 = vunpack.c.l.b16 %v262
  %v336 = vunpack.c.l.b16 %v276
  %v337 = vunpack.c.l.b16 %v290
  %v338 = vunpack.c.l.b16 %v304
  %v339 = vunpack.c.l.b16 %v318
  %v340 = vpack.c.b16 %v325, %v324
  %v341 = vpack.c.b16 %v327, %v326
  %v342 = vpack.c.b16 %v329, %v328
  %v343 = vpack.c.b16 %v331, %v330
  %v344 = vpack.c.b16 %v333, %v332
  %v345 = vpack.c.b16 %v335, %v334
  %v346 = vpack.c.b16 %v337, %v336
  %v347 = vpack.c.b16 %v339, %v338
  %v352 = vunpack.c.l.b16 %v320
  %v353 = vunpack.c.l.b16 %v321
  %v354 = vunpack.c.l.b16 %v322
  %v355 = vunpack.c.l.b16 %v323
  %v356 = vpack.c.b16 %v353, %v352
  %v357 = vpack.c.b16 %v355, %v354
  %vm360 = vcmask 261120
  %v362 = vsel %vm360, %v340, 0
  %v365 = vsel %vm360, %v341, 0
  %v368 = vsel %vm360, %v342, 0
  %v371 = vsel %vm360, %v343, 0
  %v374 = vsel %vm360, %v344, 0
  %v377 = vsel %vm360, %v345, 0
  %v380 = vsel %vm360, %v346, 0
  %v383 = vsel %vm360, %v347, 0
  %385 = vmatpush.bf16.msra.mxu0 0
  %386 = vmatpush.bf16.msra.mxu0 0
  %387 = vmatpush.bf16.msra.mxu0 0
  %388 = vmatpush.bf16.msra.mxu0 0
  %389 = vmatpush.bf16.msra.mxu0 0
  %390 = vmatpush.bf16.msra.mxu0 0
  %391 = vmatpush.bf16.msra.mxu0 %v357
  %392 = vmatpush.bf16.msra.mxu0 %v356
  %393 = vmatmul.bf16.gmra.mxu0 %v362
  %v394 = vpop.f32.mrf.mxu0
  %v395 = vadd.f32 0.0, %v394
  %v396 = vpop.f32.mrf.mxu0
  %v397 = vadd.f32 0.0, %v396
  %398 = vmatmul.bf16.gmra.mxu0 %v365
  %v399 = vpop.f32.mrf.mxu0
  %v400 = vadd.f32 0.0, %v399
  %v401 = vpop.f32.mrf.mxu0
  %v402 = vadd.f32 0.0, %v401
  %403 = vmatmul.bf16.gmra.mxu0 %v368
  %v404 = vpop.f32.mrf.mxu0
  %v405 = vadd.f32 0.0, %v404
  %v406 = vpop.f32.mrf.mxu0
  %v407 = vadd.f32 0.0, %v406
  %408 = vmatmul.bf16.gmra.mxu0 %v371
  %v409 = vpop.f32.mrf.mxu0
  %v410 = vadd.f32 0.0, %v409
  %v411 = vpop.f32.mrf.mxu0
  %v412 = vadd.f32 0.0, %v411
  %413 = vmatmul.bf16.gmra.mxu0 %v374
  %v414 = vpop.f32.mrf.mxu0
  %v415 = vadd.f32 0.0, %v414
  %v416 = vpop.f32.mrf.mxu0
  %v417 = vadd.f32 0.0, %v416
  %418 = vmatmul.bf16.gmra.mxu0 %v377
  %v419 = vpop.f32.mrf.mxu0
  %v420 = vadd.f32 0.0, %v419
  %v421 = vpop.f32.mrf.mxu0
  %v422 = vadd.f32 0.0, %v421
  %423 = vmatmul.bf16.gmra.mxu0 %v380
  %v424 = vpop.f32.mrf.mxu0
  %v425 = vadd.f32 0.0, %v424
  %v426 = vpop.f32.mrf.mxu0
  %v427 = vadd.f32 0.0, %v426
  %428 = vmatmul.bf16.gmra.mxu0 %v383
  %v429 = vpop.f32.mrf.mxu0
  %v430 = vadd.f32 0.0, %v429
  %v431 = vpop.f32.mrf.mxu0
  %v432 = vadd.f32 0.0, %v431
  %433 = vdwg.mxu0
  %v450 = vunpack.c.l.b16 %v56
  %v451 = vunpack.c.l.b16 %v57
  %v452 = vunpack.c.l.b16 %v58
  %v453 = vunpack.c.l.b16 %v59
  %v454 = vunpack.c.l.b16 %v60
  %v455 = vunpack.c.l.b16 %v61
  %v456 = vunpack.c.l.b16 %v62
  %v457 = vunpack.c.l.b16 %v63
  %v458 = vunpack.c.l.b16 %v64
  %v459 = vunpack.c.l.b16 %v65
  %v460 = vunpack.c.l.b16 %v66
  %v461 = vunpack.c.l.b16 %v67
  %v462 = vunpack.c.l.b16 %v68
  %v463 = vunpack.c.l.b16 %v69
  %v464 = vunpack.c.l.b16 %v70
  %v465 = vunpack.c.l.b16 %v71
  %v466 = vpack.c.b16 %v451, %v450
  %v467 = vpack.c.b16 %v453, %v452
  %v468 = vpack.c.b16 %v455, %v454
  %v469 = vpack.c.b16 %v457, %v456
  %v470 = vpack.c.b16 %v459, %v458
  %v471 = vpack.c.b16 %v461, %v460
  %v472 = vpack.c.b16 %v463, %v462
  %v473 = vpack.c.b16 %v465, %v464
  %v478 = vunpack.c.l.b16 %v72
  %v479 = vunpack.c.l.b16 %v73
  %v480 = vunpack.c.l.b16 %v74
  %v481 = vunpack.c.l.b16 %v75
  %v482 = vpack.c.b16 %v479, %v478
  %v483 = vpack.c.b16 %v481, %v480
  %v487 = vsel %vm360, %v466, 0
  %v490 = vsel %vm360, %v467, 0
  %v493 = vsel %vm360, %v468, 0
  %v496 = vsel %vm360, %v469, 0
  %v499 = vsel %vm360, %v470, 0
  %v502 = vsel %vm360, %v471, 0
  %v505 = vsel %vm360, %v472, 0
  %v508 = vsel %vm360, %v473, 0
  %510 = vmatpush.bf16.msra.mxu0 0
  %511 = vmatpush.bf16.msra.mxu0 0
  %512 = vmatpush.bf16.msra.mxu0 0
  %513 = vmatpush.bf16.msra.mxu0 0
  %514 = vmatpush.bf16.msra.mxu0 0
  %515 = vmatpush.bf16.msra.mxu0 0
  %516 = vmatpush.bf16.msra.mxu0 %v483
  %517 = vmatpush.bf16.msra.mxu0 %v482
  %518 = vmatmul.bf16.gmra.mxu0 %v487
  %v519 = vpop.f32.mrf.mxu0
  %v520 = vadd.f32 %v395, %v519
  %v521 = vpop.f32.mrf.mxu0
  %v522 = vadd.f32 %v397, %v521
  %523 = vmatmul.bf16.gmra.mxu0 %v490
  %v524 = vpop.f32.mrf.mxu0
  %v525 = vadd.f32 %v400, %v524
  %v526 = vpop.f32.mrf.mxu0
  %v527 = vadd.f32 %v402, %v526
  %528 = vmatmul.bf16.gmra.mxu0 %v493
  %v529 = vpop.f32.mrf.mxu0
  %v530 = vadd.f32 %v405, %v529
  %v531 = vpop.f32.mrf.mxu0
  %v532 = vadd.f32 %v407, %v531
  %533 = vmatmul.bf16.gmra.mxu0 %v496
  %v534 = vpop.f32.mrf.mxu0
  %v535 = vadd.f32 %v410, %v534
  %v536 = vpop.f32.mrf.mxu0
  %v537 = vadd.f32 %v412, %v536
  %538 = vmatmul.bf16.gmra.mxu0 %v499
  %v539 = vpop.f32.mrf.mxu0
  %v540 = vadd.f32 %v415, %v539
  %v541 = vpop.f32.mrf.mxu0
  %v542 = vadd.f32 %v417, %v541
  %543 = vmatmul.bf16.gmra.mxu0 %v502
  %v544 = vpop.f32.mrf.mxu0
  %v545 = vadd.f32 %v420, %v544
  %v546 = vpop.f32.mrf.mxu0
  %v547 = vadd.f32 %v422, %v546
  %548 = vmatmul.bf16.gmra.mxu0 %v505
  %v549 = vpop.f32.mrf.mxu0
  %v550 = vadd.f32 %v425, %v549
  %v551 = vpop.f32.mrf.mxu0
  %v552 = vadd.f32 %v427, %v551
  %553 = vmatmul.bf16.gmra.mxu0 %v508
  %v554 = vpop.f32.mrf.mxu0
  %v555 = vadd.f32 %v430, %v554
  %v556 = vpop.f32.mrf.mxu0
  %v557 = vadd.f32 %v432, %v556
  %558 = vdwg.mxu0
  %s559 = scalar_lea.vmem %s43, 8
  %v560 = vld [vmem:[%s559] sm:$0xf]
  %v561 = vld [vmem:[%s559 + $0x8] sm:$0xf]
  %v562 = vld [vmem:[%s559 + $0x10] sm:$0xf]
  %v563 = vld [vmem:[%s559 + $0x18] sm:$0xf]
  %v564 = vld [vmem:[%s559 + $0x20] sm:$0xf]
  %v565 = vld [vmem:[%s559 + $0x28] sm:$0xf]
  %v566 = vld [vmem:[%s559 + $0x30] sm:$0xf]
  %v567 = vld [vmem:[%s559 + $0x38] sm:$0xf]
  %v568 = vld [vmem:[%s559 + $0x48] sm:$0xf]
  %v569 = vld [vmem:[%s559 + $0x50] sm:$0xf]
  %v570 = vld [vmem:[%s559 + $0x58] sm:$0xf]
  %v571 = vld [vmem:[%s559 + $0x60] sm:$0xf]
  %v572 = vld [vmem:[%s559 + $0x68] sm:$0xf]
  %v573 = vld [vmem:[%s559 + $0x70] sm:$0xf]
  %v574 = vld [vmem:[%s559 + $0x78] sm:$0xf]
  %v575 = vld [vmem:[%s559 + $0x80] sm:$0xf]
  %s576 = scalar_lea.vmem %s1, 32
  %v577 = vld [vmem:[%s576] sm:$0xf]
  %v578 = vld [vmem:[%s576 + $0x4] sm:$0xf]
  %v579 = vld [vmem:[%s576 + $0x8] sm:$0xf]
  %v580 = vld [vmem:[%s576 + $0xc] sm:$0xf]
  %v597 = vunpack.c.l.b16 %v560
  %v598 = vunpack.c.l.b16 %v561
  %v599 = vunpack.c.l.b16 %v562
  %v600 = vunpack.c.l.b16 %v563
  %v601 = vunpack.c.l.b16 %v564
  %v602 = vunpack.c.l.b16 %v565
  %v603 = vunpack.c.l.b16 %v566
  %v604 = vunpack.c.l.b16 %v567
  %v605 = vunpack.c.l.b16 %v568
  %v606 = vunpack.c.l.b16 %v569
  %v607 = vunpack.c.l.b16 %v570
  %v608 = vunpack.c.l.b16 %v571
  %v609 = vunpack.c.l.b16 %v572
  %v610 = vunpack.c.l.b16 %v573
  %v611 = vunpack.c.l.b16 %v574
  %v612 = vunpack.c.l.b16 %v575
  %v613 = vpack.c.b16 %v598, %v597
  %v614 = vpack.c.b16 %v600, %v599
  %v615 = vpack.c.b16 %v602, %v601
  %v616 = vpack.c.b16 %v604, %v603
  %v617 = vpack.c.b16 %v606, %v605
  %v618 = vpack.c.b16 %v608, %v607
  %v619 = vpack.c.b16 %v610, %v609
  %v620 = vpack.c.b16 %v612, %v611
  %v625 = vunpack.c.l.b16 %v577
  %v626 = vunpack.c.l.b16 %v578
  %v627 = vunpack.c.l.b16 %v579
  %v628 = vunpack.c.l.b16 %v580
  %v629 = vpack.c.b16 %v626, %v625
  %v630 = vpack.c.b16 %v628, %v627
  %v634 = vsel %vm360, %v613, 0
  %v637 = vsel %vm360, %v614, 0
  %v640 = vsel %vm360, %v615, 0
  %v643 = vsel %vm360, %v616, 0
  %v646 = vsel %vm360, %v617, 0
  %v649 = vsel %vm360, %v618, 0
  %v652 = vsel %vm360, %v619, 0
  %v655 = vsel %vm360, %v620, 0
  %657 = vmatpush.bf16.msra.mxu0 0
  %658 = vmatpush.bf16.msra.mxu0 0
  %659 = vmatpush.bf16.msra.mxu0 0
  %660 = vmatpush.bf16.msra.mxu0 0
  %661 = vmatpush.bf16.msra.mxu0 0
  %662 = vmatpush.bf16.msra.mxu0 0
  %663 = vmatpush.bf16.msra.mxu0 %v630
  %664 = vmatpush.bf16.msra.mxu0 %v629
  %665 = vmatmul.bf16.gmra.mxu0 %v634
  %v666 = vpop.f32.mrf.mxu0
  %v667 = vadd.f32 0.0, %v666
  %v668 = vpop.f32.mrf.mxu0
  %v669 = vadd.f32 0.0, %v668
  %670 = vmatmul.bf16.gmra.mxu0 %v637
  %v671 = vpop.f32.mrf.mxu0
  %v672 = vadd.f32 0.0, %v671
  %v673 = vpop.f32.mrf.mxu0
  %v674 = vadd.f32 0.0, %v673
  %675 = vmatmul.bf16.gmra.mxu0 %v640
  %v676 = vpop.f32.mrf.mxu0
  %v677 = vadd.f32 0.0, %v676
  %v678 = vpop.f32.mrf.mxu0
  %v679 = vadd.f32 0.0, %v678
  %680 = vmatmul.bf16.gmra.mxu0 %v643
  %v681 = vpop.f32.mrf.mxu0
  %v682 = vadd.f32 0.0, %v681
  %v683 = vpop.f32.mrf.mxu0
  %v684 = vadd.f32 0.0, %v683
  %685 = vmatmul.bf16.gmra.mxu0 %v646
  %v686 = vpop.f32.mrf.mxu0
  %v687 = vadd.f32 0.0, %v686
  %v688 = vpop.f32.mrf.mxu0
  %v689 = vadd.f32 0.0, %v688
  %690 = vmatmul.bf16.gmra.mxu0 %v649
  %v691 = vpop.f32.mrf.mxu0
  %v692 = vadd.f32 0.0, %v691
  %v693 = vpop.f32.mrf.mxu0
  %v694 = vadd.f32 0.0, %v693
  %695 = vmatmul.bf16.gmra.mxu0 %v652
  %v696 = vpop.f32.mrf.mxu0
  %v697 = vadd.f32 0.0, %v696
  %v698 = vpop.f32.mrf.mxu0
  %v699 = vadd.f32 0.0, %v698
  %700 = vmatmul.bf16.gmra.mxu0 %v655
  %v701 = vpop.f32.mrf.mxu0
  %v702 = vadd.f32 0.0, %v701
  %v703 = vpop.f32.mrf.mxu0
  %v704 = vadd.f32 0.0, %v703
  %705 = vdwg.mxu0
  %v706 = vadd.f32 %v520, %v667
  %v707 = vadd.f32 %v522, %v669
  %v708 = vadd.f32 %v525, %v672
  %v709 = vadd.f32 %v527, %v674
  %v710 = vadd.f32 %v530, %v677
  %v711 = vadd.f32 %v532, %v679
  %v712 = vadd.f32 %v535, %v682
  %v713 = vadd.f32 %v537, %v684
  %v714 = vadd.f32 %v540, %v687
  %v715 = vadd.f32 %v542, %v689
  %v716 = vadd.f32 %v545, %v692
  %v717 = vadd.f32 %v547, %v694
  %v718 = vadd.f32 %v550, %v697
  %v719 = vadd.f32 %v552, %v699
  %v720 = vadd.f32 %v555, %v702
  %v721 = vadd.f32 %v557, %v704
  %v722 = vld [vmem:[%s559] sm:$0xf]
  %v723 = vld [vmem:[%s559 + $0x4] sm:$0x1]
  %v724 = vld [vmem:[%s559 + $0x8] sm:$0xf]
  %v725 = vld [vmem:[%s559 + $0xc] sm:$0x1]
  %v726 = vld [vmem:[%s559 + $0x10] sm:$0xf]
  %v727 = vld [vmem:[%s559 + $0x14] sm:$0x1]
  %v728 = vld [vmem:[%s559 + $0x18] sm:$0xf]
  %v729 = vld [vmem:[%s559 + $0x1c] sm:$0x1]
  %v730 = vld [vmem:[%s559 + $0x20] sm:$0xf]
  %v731 = vld [vmem:[%s559 + $0x24] sm:$0x1]
  %v732 = vld [vmem:[%s559 + $0x28] sm:$0xf]
  %v733 = vld [vmem:[%s559 + $0x2c] sm:$0x1]
  %v734 = vld [vmem:[%s559 + $0x30] sm:$0xf]
  %v735 = vld [vmem:[%s559 + $0x34] sm:$0x1]
  %v736 = vld [vmem:[%s559 + $0x38] sm:$0xf]
  %v737 = vld [vmem:[%s559 + $0x3c] sm:$0x1]
  %v738 = vld [vmem:[%s559 + $0x48] sm:$0xf]
  %v739 = vld [vmem:[%s559 + $0x4c] sm:$0x1]
  %v740 = vld [vmem:[%s559 + $0x50] sm:$0xf]
  %v741 = vld [vmem:[%s559 + $0x54] sm:$0x1]
  %v742 = vld [vmem:[%s559 + $0x58] sm:$0xf]
  %v743 = vld [vmem:[%s559 + $0x5c] sm:$0x1]
  %v744 = vld [vmem:[%s559 + $0x60] sm:$0xf]
  %v745 = vld [vmem:[%s559 + $0x64] sm:$0x1]
  %v746 = vld [vmem:[%s559 + $0x68] sm:$0xf]
  %v747 = vld [vmem:[%s559 + $0x6c] sm:$0x1]
  %v748 = vld [vmem:[%s559 + $0x70] sm:$0xf]
  %v749 = vld [vmem:[%s559 + $0x74] sm:$0x1]
  %v750 = vld [vmem:[%s559 + $0x78] sm:$0xf]
  %v751 = vld [vmem:[%s559 + $0x7c] sm:$0x1]
  %v752 = vld [vmem:[%s559 + $0x80] sm:$0xf]
  %v753 = vld [vmem:[%s559 + $0x84] sm:$0x1]
  %v755 = vshrl.u32 %v722, 16
  %v757 = vrot.slane %v755, 4
  %v758 = vshll.u32 %v722, 16
  %v760 = vrot.slane %v758, 5
  %v761 = vor.u32 %v757, %v760
  %v762 = vrot.slane %v761, 4
  %v764 = vshll.u32 %v723, 16
  %v766 = vrot.slane %v764, 5
  %v767 = vsel %vm94, %v762, %v766
  %v769 = vshrl.u32 %v724, 16
  %v771 = vrot.slane %v769, 4
  %v772 = vshll.u32 %v724, 16
  %v774 = vrot.slane %v772, 5
  %v775 = vor.u32 %v771, %v774
  %v776 = vrot.slane %v775, 4
  %v778 = vshll.u32 %v725, 16
  %v780 = vrot.slane %v778, 5
  %v781 = vsel %vm94, %v776, %v780
  %v783 = vshrl.u32 %v726, 16
  %v785 = vrot.slane %v783, 4
  %v786 = vshll.u32 %v726, 16
  %v788 = vrot.slane %v786, 5
  %v789 = vor.u32 %v785, %v788
  %v790 = vrot.slane %v789, 4
  %v792 = vshll.u32 %v727, 16
  %v794 = vrot.slane %v792, 5
  %v795 = vsel %vm94, %v790, %v794
  %v797 = vshrl.u32 %v728, 16
  %v799 = vrot.slane %v797, 4
  %v800 = vshll.u32 %v728, 16
  %v802 = vrot.slane %v800, 5
  %v803 = vor.u32 %v799, %v802
  %v804 = vrot.slane %v803, 4
  %v806 = vshll.u32 %v729, 16
  %v808 = vrot.slane %v806, 5
  %v809 = vsel %vm94, %v804, %v808
  %v811 = vshrl.u32 %v730, 16
  %v813 = vrot.slane %v811, 4
  %v814 = vshll.u32 %v730, 16
  %v816 = vrot.slane %v814, 5
  %v817 = vor.u32 %v813, %v816
  %v818 = vrot.slane %v817, 4
  %v820 = vshll.u32 %v731, 16
  %v822 = vrot.slane %v820, 5
  %v823 = vsel %vm94, %v818, %v822
  %v825 = vshrl.u32 %v732, 16
  %v827 = vrot.slane %v825, 4
  %v828 = vshll.u32 %v732, 16
  %v830 = vrot.slane %v828, 5
  %v831 = vor.u32 %v827, %v830
  %v832 = vrot.slane %v831, 4
  %v834 = vshll.u32 %v733, 16
  %v836 = vrot.slane %v834, 5
  %v837 = vsel %vm94, %v832, %v836
  %v839 = vshrl.u32 %v734, 16
  %v841 = vrot.slane %v839, 4
  %v842 = vshll.u32 %v734, 16
  %v844 = vrot.slane %v842, 5
  %v845 = vor.u32 %v841, %v844
  %v846 = vrot.slane %v845, 4
  %v848 = vshll.u32 %v735, 16
  %v850 = vrot.slane %v848, 5
  %v851 = vsel %vm94, %v846, %v850
  %v853 = vshrl.u32 %v736, 16
  %v855 = vrot.slane %v853, 4
  %v856 = vshll.u32 %v736, 16
  %v858 = vrot.slane %v856, 5
  %v859 = vor.u32 %v855, %v858
  %v860 = vrot.slane %v859, 4
  %v862 = vshll.u32 %v737, 16
  %v864 = vrot.slane %v862, 5
  %v865 = vsel %vm94, %v860, %v864
  %v867 = vshrl.u32 %v738, 16
  %v869 = vrot.slane %v867, 4
  %v870 = vshll.u32 %v738, 16
  %v872 = vrot.slane %v870, 5
  %v873 = vor.u32 %v869, %v872
  %v874 = vrot.slane %v873, 4
  %v876 = vshll.u32 %v739, 16
  %v878 = vrot.slane %v876, 5
  %v879 = vsel %vm94, %v874, %v878
  %v881 = vshrl.u32 %v740, 16
  %v883 = vrot.slane %v881, 4
  %v884 = vshll.u32 %v740, 16
  %v886 = vrot.slane %v884, 5
  %v887 = vor.u32 %v883, %v886
  %v888 = vrot.slane %v887, 4
  %v890 = vshll.u32 %v741, 16
  %v892 = vrot.slane %v890, 5
  %v893 = vsel %vm94, %v888, %v892
  %v895 = vshrl.u32 %v742, 16
  %v897 = vrot.slane %v895, 4
  %v898 = vshll.u32 %v742, 16
  %v900 = vrot.slane %v898, 5
  %v901 = vor.u32 %v897, %v900
  %v902 = vrot.slane %v901, 4
  %v904 = vshll.u32 %v743, 16
  %v906 = vrot.slane %v904, 5
  %v907 = vsel %vm94, %v902, %v906
  %v909 = vshrl.u32 %v744, 16
  %v911 = vrot.slane %v909, 4
  %v912 = vshll.u32 %v744, 16
  %v914 = vrot.slane %v912, 5
  %v915 = vor.u32 %v911, %v914
  %v916 = vrot.slane %v915, 4
  %v918 = vshll.u32 %v745, 16
  %v920 = vrot.slane %v918, 5
  %v921 = vsel %vm94, %v916, %v920
  %v923 = vshrl.u32 %v746, 16
  %v925 = vrot.slane %v923, 4
  %v926 = vshll.u32 %v746, 16
  %v928 = vrot.slane %v926, 5
  %v929 = vor.u32 %v925, %v928
  %v930 = vrot.slane %v929, 4
  %v932 = vshll.u32 %v747, 16
  %v934 = vrot.slane %v932, 5
  %v935 = vsel %vm94, %v930, %v934
  %v937 = vshrl.u32 %v748, 16
  %v939 = vrot.slane %v937, 4
  %v940 = vshll.u32 %v748, 16
  %v942 = vrot.slane %v940, 5
  %v943 = vor.u32 %v939, %v942
  %v944 = vrot.slane %v943, 4
  %v946 = vshll.u32 %v749, 16
  %v948 = vrot.slane %v946, 5
  %v949 = vsel %vm94, %v944, %v948
  %v951 = vshrl.u32 %v750, 16
  %v953 = vrot.slane %v951, 4
  %v954 = vshll.u32 %v750, 16
  %v956 = vrot.slane %v954, 5
  %v957 = vor.u32 %v953, %v956
  %v958 = vrot.slane %v957, 4
  %v960 = vshll.u32 %v751, 16
  %v962 = vrot.slane %v960, 5
  %v963 = vsel %vm94, %v958, %v962
  %v965 = vshrl.u32 %v752, 16
  %v967 = vrot.slane %v965, 4
  %v968 = vshll.u32 %v752, 16
  %v970 = vrot.slane %v968, 5
  %v971 = vor.u32 %v967, %v970
  %v972 = vrot.slane %v971, 4
  %v974 = vshll.u32 %v753, 16
  %v976 = vrot.slane %v974, 5
  %v977 = vsel %vm94, %v972, %v976
  %s978 = scalar_lea.vmem %s1, 48
  %v979 = vld [vmem:[%s978] sm:$0xf]
  %v980 = vld [vmem:[%s978 + $0x4] sm:$0xf]
  %v981 = vld [vmem:[%s978 + $0x8] sm:$0xf]
  %v982 = vld [vmem:[%s978 + $0xc] sm:$0xf]
  %v983 = vunpack.c.l.b16 %v767
  %v984 = vunpack.c.l.b16 %v781
  %v985 = vunpack.c.l.b16 %v795
  %v986 = vunpack.c.l.b16 %v809
  %v987 = vunpack.c.l.b16 %v823
  %v988 = vunpack.c.l.b16 %v837
  %v989 = vunpack.c.l.b16 %v851
  %v990 = vunpack.c.l.b16 %v865
  %v991 = vunpack.c.l.b16 %v879
  %v992 = vunpack.c.l.b16 %v893
  %v993 = vunpack.c.l.b16 %v907
  %v994 = vunpack.c.l.b16 %v921
  %v995 = vunpack.c.l.b16 %v935
  %v996 = vunpack.c.l.b16 %v949
  %v997 = vunpack.c.l.b16 %v963
  %v998 = vunpack.c.l.b16 %v977
  %v999 = vpack.c.b16 %v984, %v983
  %v1000 = vpack.c.b16 %v986, %v985
  %v1001 = vpack.c.b16 %v988, %v987
  %v1002 = vpack.c.b16 %v990, %v989
  %v1003 = vpack.c.b16 %v992, %v991
  %v1004 = vpack.c.b16 %v994, %v993
  %v1005 = vpack.c.b16 %v996, %v995
  %v1006 = vpack.c.b16 %v998, %v997
  %v1011 = vunpack.c.l.b16 %v979
  %v1012 = vunpack.c.l.b16 %v980
  %v1013 = vunpack.c.l.b16 %v981
  %v1014 = vunpack.c.l.b16 %v982
  %v1015 = vpack.c.b16 %v1012, %v1011
  %v1016 = vpack.c.b16 %v1014, %v1013
  %v1020 = vsel %vm360, %v999, 0
  %v1023 = vsel %vm360, %v1000, 0
  %v1026 = vsel %vm360, %v1001, 0
  %v1029 = vsel %vm360, %v1002, 0
  %v1032 = vsel %vm360, %v1003, 0
  %v1035 = vsel %vm360, %v1004, 0
  %v1038 = vsel %vm360, %v1005, 0
  %v1041 = vsel %vm360, %v1006, 0
  %1043 = vmatpush.bf16.msra.mxu0 0
  %1044 = vmatpush.bf16.msra.mxu0 0
  %1045 = vmatpush.bf16.msra.mxu0 0
  %1046 = vmatpush.bf16.msra.mxu0 0
  %1047 = vmatpush.bf16.msra.mxu0 0
  %1048 = vmatpush.bf16.msra.mxu0 0
  %1049 = vmatpush.bf16.msra.mxu0 %v1016
  %1050 = vmatpush.bf16.msra.mxu0 %v1015
  %1051 = vmatmul.bf16.gmra.mxu0 %v1020
  %v1052 = vpop.f32.mrf.mxu0
  %v1053 = vadd.f32 0.0, %v1052
  %v1054 = vpop.f32.mrf.mxu0
  %v1055 = vadd.f32 0.0, %v1054
  %1056 = vmatmul.bf16.gmra.mxu0 %v1023
  %v1057 = vpop.f32.mrf.mxu0
  %v1058 = vadd.f32 0.0, %v1057
  %v1059 = vpop.f32.mrf.mxu0
  %v1060 = vadd.f32 0.0, %v1059
  %1061 = vmatmul.bf16.gmra.mxu0 %v1026
  %v1062 = vpop.f32.mrf.mxu0
  %v1063 = vadd.f32 0.0, %v1062
  %v1064 = vpop.f32.mrf.mxu0
  %v1065 = vadd.f32 0.0, %v1064
  %1066 = vmatmul.bf16.gmra.mxu0 %v1029
  %v1067 = vpop.f32.mrf.mxu0
  %v1068 = vadd.f32 0.0, %v1067
  %v1069 = vpop.f32.mrf.mxu0
  %v1070 = vadd.f32 0.0, %v1069
  %1071 = vmatmul.bf16.gmra.mxu0 %v1032
  %v1072 = vpop.f32.mrf.mxu0
  %v1073 = vadd.f32 0.0, %v1072
  %v1074 = vpop.f32.mrf.mxu0
  %v1075 = vadd.f32 0.0, %v1074
  %1076 = vmatmul.bf16.gmra.mxu0 %v1035
  %v1077 = vpop.f32.mrf.mxu0
  %v1078 = vadd.f32 0.0, %v1077
  %v1079 = vpop.f32.mrf.mxu0
  %v1080 = vadd.f32 0.0, %v1079
  %1081 = vmatmul.bf16.gmra.mxu0 %v1038
  %v1082 = vpop.f32.mrf.mxu0
  %v1083 = vadd.f32 0.0, %v1082
  %v1084 = vpop.f32.mrf.mxu0
  %v1085 = vadd.f32 0.0, %v1084
  %1086 = vmatmul.bf16.gmra.mxu0 %v1041
  %v1087 = vpop.f32.mrf.mxu0
  %v1088 = vadd.f32 0.0, %v1087
  %v1089 = vpop.f32.mrf.mxu0
  %v1090 = vadd.f32 0.0, %v1089
  %1091 = vdwg.mxu0
  %v1092 = vadd.f32 %v706, %v1053
  %v1093 = vadd.f32 %v707, %v1055
  %v1094 = vadd.f32 %v708, %v1058
  %v1095 = vadd.f32 %v709, %v1060
  %v1096 = vadd.f32 %v710, %v1063
  %v1097 = vadd.f32 %v711, %v1065
  %v1098 = vadd.f32 %v712, %v1068
  %v1099 = vadd.f32 %v713, %v1070
  %v1100 = vadd.f32 %v714, %v1073
  %v1101 = vadd.f32 %v715, %v1075
  %v1102 = vadd.f32 %v716, %v1078
  %v1103 = vadd.f32 %v717, %v1080
  %v1104 = vadd.f32 %v718, %v1083
  %v1105 = vadd.f32 %v719, %v1085
  %v1106 = vadd.f32 %v720, %v1088
  %v1107 = vadd.f32 %v721, %v1090
  %v1108 = vpack.c.bf16 %v1092, %v1092
  %v1109 = vpack.c.bf16 %v1093, %v1093
  %v1110 = vpack.c.bf16 %v1094, %v1094
  %v1111 = vpack.c.bf16 %v1095, %v1095
  %v1112 = vpack.c.bf16 %v1096, %v1096
  %v1113 = vpack.c.bf16 %v1097, %v1097
  %v1114 = vpack.c.bf16 %v1098, %v1098
  %v1115 = vpack.c.bf16 %v1099, %v1099
  %v1116 = vpack.c.bf16 %v1100, %v1100
  %v1117 = vpack.c.bf16 %v1101, %v1101
  %v1118 = vpack.c.bf16 %v1102, %v1102
  %v1119 = vpack.c.bf16 %v1103, %v1103
  %v1120 = vpack.c.bf16 %v1104, %v1104
  %v1121 = vpack.c.bf16 %v1105, %v1105
  %v1122 = vpack.c.bf16 %v1106, %v1106
  %v1123 = vpack.c.bf16 %v1107, %v1107
  %1124 = vst [vmem:[%s52] sm:$0xf] %v1108
  %1125 = vst [vmem:[%s52 + $0x4] sm:$0xf] %v1109
  %1126 = vst [vmem:[%s52 + $0x8] sm:$0xf] %v1110
  %1127 = vst [vmem:[%s52 + $0xc] sm:$0xf] %v1111
  %1128 = vst [vmem:[%s52 + $0x10] sm:$0xf] %v1112
  %1129 = vst [vmem:[%s52 + $0x14] sm:$0xf] %v1113
  %1130 = vst [vmem:[%s52 + $0x18] sm:$0xf] %v1114
  %1131 = vst [vmem:[%s52 + $0x1c] sm:$0xf] %v1115
  %1132 = vst [vmem:[%s52 + $0x20] sm:$0xf] %v1116
  %1133 = vst [vmem:[%s52 + $0x24] sm:$0xf] %v1117
  %1134 = vst [vmem:[%s52 + $0x28] sm:$0xf] %v1118
  %1135 = vst [vmem:[%s52 + $0x2c] sm:$0xf] %v1119
  %1136 = vst [vmem:[%s52 + $0x30] sm:$0xf] %v1120
  %1137 = vst [vmem:[%s52 + $0x34] sm:$0xf] %v1121
  %1138 = vst [vmem:[%s52 + $0x38] sm:$0xf] %v1122
  %1139 = vst [vmem:[%s52 + $0x3c] sm:$0xf] %v1123
  %p1140 = scmp.eq.s32.totalorder 0, 0
  // Predicated region
  $region10: #{dc_discriminator_forward.8} parent=0 // pred_check
    %p1141 = pneg %p1140
  $region11: #{dc_discriminator_forward.8} parent=0 // pred_check_branch
    %1143 = sbr.rel (%p1141) target = $region13
  $region12: #{dc_discriminator_forward.8} parent=0 // pred_region
    %1144 = vst [vmem:[%s3] sm:$0x1] 0.0
    %1145 = vst [vmem:[%s4] sm:$0x1] 0.0
  $region13: #{dc_discriminator_forward.8} parent=0 // pred_fallthru
    _
  %v1146 = vld [vmem:[%s3] sm:$0x1]
  %v1147 = vadd.f32 %v1092, %v1093
  %v1148 = vadd.f32 %v1147, %v1094
  %v1149 = vadd.f32 %v1148, %v1095
  %v1150 = vadd.f32 %v1149, %v1096
  %v1151 = vadd.f32 %v1150, %v1097
  %v1152 = vadd.f32 %v1151, %v1098
  %v1153 = vadd.f32 %v1152, %v1099
  %v1154 = vadd.f32 %v1153, %v1100
  %v1155 = vadd.f32 %v1154, %v1101
  %v1156 = vadd.f32 %v1155, %v1102
  %v1157 = vadd.f32 %v1156, %v1103
  %v1158 = vadd.f32 %v1157, %v1104
  %v1159 = vadd.f32 %v1158, %v1105
  %v1160 = vadd.f32 %v1159, %v1106
  %v1161 = vadd.f32 %v1160, %v1107
  %v1162 = vrot.slane %v1161, 4
  %v1163 = vadd.f32 %v1161, %v1162
  %v1164 = vrot.slane %v1163, 2
  %v1165 = vadd.f32 %v1163, %v1164
  %v1166 = vrot.slane %v1165, 1
  %v1167 = vadd.f32 %v1165, %v1166
  %v1168 = vadd.f32 %v1146, %v1167
  %1169 = vst [vmem:[%s3] sm:$0x1] %v1168
  %v1170 = vld [vmem:[%s4] sm:$0x1]
  %v1171 = vmul.f32 %v1092, %v1092
  %v1172 = vmul.f32 %v1093, %v1093
  %v1173 = vmul.f32 %v1094, %v1094
  %v1174 = vmul.f32 %v1095, %v1095
  %v1175 = vmul.f32 %v1096, %v1096
  %v1176 = vmul.f32 %v1097, %v1097
  %v1177 = vmul.f32 %v1098, %v1098
  %v1178 = vmul.f32 %v1099, %v1099
  %v1179 = vmul.f32 %v1100, %v1100
  %v1180 = vmul.f32 %v1101, %v1101
  %v1181 = vmul.f32 %v1102, %v1102
  %v1182 = vmul.f32 %v1103, %v1103
  %v1183 = vmul.f32 %v1104, %v1104
  %v1184 = vmul.f32 %v1105, %v1105
  %v1185 = vmul.f32 %v1106, %v1106
  %v1186 = vmul.f32 %v1107, %v1107
  %v1187 = vadd.f32 %v1171, %v1172
  %v1188 = vadd.f32 %v1187, %v1173
  %v1189 = vadd.f32 %v1188, %v1174
  %v1190 = vadd.f32 %v1189, %v1175
  %v1191 = vadd.f32 %v1190, %v1176
  %v1192 = vadd.f32 %v1191, %v1177
  %v1193 = vadd.f32 %v1192, %v1178
  %v1194 = vadd.f32 %v1193, %v1179
  %v1195 = vadd.f32 %v1194, %v1180
  %v1196 = vadd.f32 %v1195, %v1181
  %v1197 = vadd.f32 %v1196, %v1182
  %v1198 = vadd.f32 %v1197, %v1183
  %v1199 = vadd.f32 %v1198, %v1184
  %v1200 = vadd.f32 %v1199, %v1185
  %v1201 = vadd.f32 %v1200, %v1186
  %v1202 = vrot.slane %v1201, 4
  %v1203 = vadd.f32 %v1201, %v1202
  %v1204 = vrot.slane %v1203, 2
  %v1205 = vadd.f32 %v1203, %v1204
  %v1206 = vrot.slane %v1205, 1
  %v1207 = vadd.f32 %v1205, %v1206
  %v1208 = vadd.f32 %v1170, %v1207
  %1209 = vst [vmem:[%s4] sm:$0x1] %v1208
  %s1210 = sadd.s32 0, 0
  %s1211 = smul.u32 2, %s1210
  %p1212 = scmp.lt.s32.totalorder %s1211, 1
  %s1213 = scalar_select %p1212, %s1211, 1
  %s1214 = smul.addr %s1213, 8
  %s1215 = smul.addr %s1214, 4
  %s1216 = scalar_lea.vmem %s2, %s1215
  // Predicated region
  $region14: #{dc_discriminator_forward.8} parent=0 // pred_check
    _
  $region15: #{dc_discriminator_forward.8} parent=0 // pred_check_branch
    %1218 = sbr.rel (0) target = $region17
  $region16: #{dc_discriminator_forward.8} parent=0 // pred_region
    %s1219 = sadd.s32 0, 0
    %s1220 = smul.u32 2, %s1219
  $region17: #{dc_discriminator_forward.8} parent=0 // pred_fallthru
    _
  // Predicated region
  $region18: #{dc_discriminator_forward.8} parent=0 // pred_check
    _
  $region19: #{dc_discriminator_forward.8} parent=0 // pred_check_branch
    %1222 = sbr.rel (0) target = $region21
  $region20: #{dc_discriminator_forward.8} parent=0 // pred_region
    _
  $region21: #{dc_discriminator_forward.8} parent=0 // pred_fallthru
    _
  // Predicated region
  $region22: #{dc_discriminator_forward.8} parent=0 // pred_check
    _
  $region23: #{dc_discriminator_forward.8} parent=0 // pred_check_branch
    %1224 = sbr.rel (0) target = $region25
  $region24: #{dc_discriminator_forward.8} parent=0 // pred_region
    _
  $region25: #{dc_discriminator_forward.8} parent=0 // pred_fallthru
    _
  // Predicated region
  $region26: #{dc_discriminator_forward.8} parent=0 // pred_check
    _
  $region27: #{dc_discriminator_forward.8} parent=0 // pred_check_branch
    %1226 = sbr.rel (0) target = $region29
  $region28: #{dc_discriminator_forward.8} parent=0 // pred_region
    %s1227 = sadd.s32 0, 0
    %s1228 = smul.u32 2, %s1227
    %p1229 = scmp.lt.s32.totalorder %s1228, 1
    %s1230 = scalar_select %p1229, %s1228, 1
    %s1231 = smul.addr %s1230, 8
    %s1232 = smul.addr %s1231, 4
    %s1233 = scalar_lea.vmem %s2, %s1232
  $region29: #{dc_discriminator_forward.8} parent=0 // pred_fallthru
    _
  // Predicated region
  $region30: #{dc_discriminator_forward.8} parent=0 // pred_check
    _
  $region31: #{dc_discriminator_forward.8} parent=0 // pred_check_branch
    %1235 = sbr.rel (0) target = $region33
  $region32: #{dc_discriminator_forward.8} parent=0 // pred_region
    _
  $region33: #{dc_discriminator_forward.8} parent=0 // pred_fallthru
    _
  // Predicated region
  $region34: #{dc_discriminator_forward.8} parent=0 // pred_check
    _
  $region35: #{dc_discriminator_forward.8} parent=0 // pred_check_branch
    %1237 = sbr.rel (0) target = $region37
  $region36: #{dc_discriminator_forward.8} parent=0 // pred_region
    _
  $region37: #{dc_discriminator_forward.8} parent=0 // pred_fallthru
    _

// kernel: dc_discriminator_forward.7
$region0: #{dc_discriminator_forward.7}
  #allocation0 [shape = 'u32[]', space=smem, size = 0x4, offset = 0x4, fixed_abs, tag = 'smem constant byte address 0x4 - core index']
  #allocation1 [shape = 'u32[72,128]{1,0:T(1,128)}', space=vmem, size = 0x9000, scoped, tag = 'internal scratch']
  %s0 = inlined_call_operand.vmem [shape: bf16[2,17,17,12], index: 0, kind: input, shape index: {}]
  %s1 = inlined_call_operand.vmem [shape: bf16[4,12,128], index: 1, kind: input, shape index: {}]
  %s2 = inlined_call_operand.vmem [shape: bf16[2,16,16,128], index: 2, kind: output, shape index: {}]
  %s3 = sld [smem:[#allocation0]]
  $region18: #{dc_discriminator_forward.7} parent=0
    _
  %s5 = ssub.s32 1, %s3
  %s6 = scalar_select 0, %s5, %s3
  // Predicated region
  $region2: #{dc_discriminator_forward.7} parent=0 // pred_check
    _
  $region3: #{dc_discriminator_forward.7} parent=0 // pred_check_branch
    %8 = sbr.rel (0) target = $region5
  $region4: #{dc_discriminator_forward.7} parent=0 // pred_region
    _
  $region5: #{dc_discriminator_forward.7} parent=0 // pred_fallthru
    _
  // Predicated region
  $region6: #{dc_discriminator_forward.7} parent=0 // pred_check
    _
  $region7: #{dc_discriminator_forward.7} parent=0 // pred_check_branch
    %10 = sbr.rel (0) target = $region9
  $region8: #{dc_discriminator_forward.7} parent=0 // pred_region
    _
  $region9: #{dc_discriminator_forward.7} parent=0 // pred_fallthru
    _
  %v12 = vld [vmem:[%s0] sm:$0xf]
  %v13 = vld [vmem:[%s0 + $0x4] sm:$0xf]
  %v14 = vld [vmem:[%s0 + $0xc] sm:$0xf]
  %v15 = vld [vmem:[%s0 + $0x10] sm:$0xf]
  %v16 = vld [vmem:[%s0 + $0x18] sm:$0xf]
  %v17 = vld [vmem:[%s0 + $0x1c] sm:$0xf]
  %v18 = vld [vmem:[%s0 + $0x24] sm:$0xf]
  %v19 = vld [vmem:[%s0 + $0x28] sm:$0xf]
  %v20 = vld [vmem:[%s0 + $0x30] sm:$0xf]
  %v21 = vld [vmem:[%s0 + $0x34] sm:$0xf]
  %v22 = vld [vmem:[%s0 + $0x3c] sm:$0xf]
  %v23 = vld [vmem:[%s0 + $0x40] sm:$0xf]
  %v24 = vld [vmem:[%s0 + $0x48] sm:$0xf]
  %v25 = vld [vmem:[%s0 + $0x4c] sm:$0xf]
  %v26 = vld [vmem:[%s0 + $0x54] sm:$0xf]
  %v27 = vld [vmem:[%s0 + $0x58] sm:$0xf]
  %v28 = vld [vmem:[%s0 + $0x60] sm:$0xf]
  %v29 = vld [vmem:[%s0 + $0x64] sm:$0xf]
  %v30 = vld [vmem:[%s0 + $0x6c] sm:$0xf]
  %v31 = vld [vmem:[%s0 + $0x70] sm:$0xf]
  %v32 = vld [vmem:[%s0 + $0x78] sm:$0xf]
  %v33 = vld [vmem:[%s0 + $0x7c] sm:$0xf]
  %v34 = vld [vmem:[%s0 + $0x84] sm:$0xf]
  %v35 = vld [vmem:[%s0 + $0x88] sm:$0xf]
  %v36 = vld [vmem:[%s0 + $0x90] sm:$0xf]
  %v37 = vld [vmem:[%s0 + $0x94] sm:$0xf]
  %v38 = vld [vmem:[%s0 + $0x9c] sm:$0xf]
  %v39 = vld [vmem:[%s0 + $0xa0] sm:$0xf]
  %v40 = vld [vmem:[%s0 + $0xa8] sm:$0xf]
  %v41 = vld [vmem:[%s0 + $0xac] sm:$0xf]
  %v42 = vld [vmem:[%s0 + $0xb4] sm:$0xf]
  %v43 = vld [vmem:[%s0 + $0xb8] sm:$0xf]
  %v44 = vld [vmem:[%s0 + $0xcc] sm:$0xf]
  %v45 = vld [vmem:[%s0 + $0xd0] sm:$0xf]
  %v46 = vld [vmem:[%s0 + $0xd8] sm:$0xf]
  %v47 = vld [vmem:[%s0 + $0xdc] sm:$0xf]
  %v48 = vld [vmem:[%s0 + $0xe4] sm:$0xf]
  %v49 = vld [vmem:[%s0 + $0xe8] sm:$0xf]
  %v50 = vld [vmem:[%s0 + $0xf0] sm:$0xf]
  %v51 = vld [vmem:[%s0 + $0xf4] sm:$0xf]
  %v52 = vld [vmem:[%s0 + $0xfc] sm:$0xf]
  %v53 = vld [vmem:[%s0 + $0x100] sm:$0xf]
  %v54 = vld [vmem:[%s0 + $0x108] sm:$0xf]
  %v55 = vld [vmem:[%s0 + $0x10c] sm:$0xf]
  %v56 = vld [vmem:[%s0 + $0x114] sm:$0xf]
  %v57 = vld [vmem:[%s0 + $0x118] sm:$0xf]
  %v58 = vld [vmem:[%s0 + $0x120] sm:$0xf]
  %v59 = vld [vmem:[%s0 + $0x124] sm:$0xf]
  %v60 = vld [vmem:[%s0 + $0x12c] sm:$0xf]
  %v61 = vld [vmem:[%s0 + $0x130] sm:$0xf]
  %v62 = vld [vmem:[%s0 + $0x138] sm:$0xf]
  %v63 = vld [vmem:[%s0 + $0x13c] sm:$0xf]
  %v64 = vld [vmem:[%s0 + $0x144] sm:$0xf]
  %v65 = vld [vmem:[%s0 + $0x148] sm:$0xf]
  %v66 = vld [vmem:[%s0 + $0x150] sm:$0xf]
  %v67 = vld [vmem:[%s0 + $0x154] sm:$0xf]
  %v68 = vld [vmem:[%s0 + $0x15c] sm:$0xf]
  %v69 = vld [vmem:[%s0 + $0x160] sm:$0xf]
  %v70 = vld [vmem:[%s0 + $0x168] sm:$0xf]
  %v71 = vld [vmem:[%s0 + $0x16c] sm:$0xf]
  %v72 = vld [vmem:[%s0 + $0x174] sm:$0xf]
  %v73 = vld [vmem:[%s0 + $0x178] sm:$0xf]
  %v74 = vld [vmem:[%s0 + $0x180] sm:$0xf]
  %v75 = vld [vmem:[%s0 + $0x184] sm:$0xf]
  %v76 = vld [vmem:[%s1] sm:$0xf]
  %v77 = vld [vmem:[%s1 + $0x4] sm:$0x3]
  %v78 = vld [vmem:[%s0 + $0x8] sm:$0x1]
  %v79 = vld [vmem:[%s0 + $0x14] sm:$0x1]
  %v80 = vld [vmem:[%s0 + $0x20] sm:$0x1]
  %v81 = vld [vmem:[%s0 + $0x2c] sm:$0x1]
  %v82 = vld [vmem:[%s0 + $0x38] sm:$0x1]
  %v83 = vld [vmem:[%s0 + $0x44] sm:$0x1]
  %v84 = vld [vmem:[%s0 + $0x50] sm:$0x1]
  %v85 = vld [vmem:[%s0 + $0x5c] sm:$0x1]
  %v86 = vld [vmem:[%s0 + $0x68] sm:$0x1]
  %v87 = vld [vmem:[%s0 + $0x74] sm:$0x1]
  %v88 = vld [vmem:[%s0 + $0x80] sm:$0x1]
  %v89 = vld [vmem:[%s0 + $0x8c] sm:$0x1]
  %v90 = vld [vmem:[%s0 + $0x98] sm:$0x1]
  %v91 = vld [vmem:[%s0 + $0xa4] sm:$0x1]
  %v92 = vld [vmem:[%s0 + $0xb0] sm:$0x1]
  %v93 = vld [vmem:[%s0 + $0xbc] sm:$0x1]
  %v94 = vld [vmem:[%s0 + $0xd4] sm:$0x1]
  %v95 = vld [vmem:[%s0 + $0xe0] sm:$0x1]
  %v96 = vld [vmem:[%s0 + $0xec] sm:$0x1]
  %v97 = vld [vmem:[%s0 + $0xf8] sm:$0x1]
  %v98 = vld [vmem:[%s0 + $0x104] sm:$0x1]
  %v99 = vld [vmem:[%s0 + $0x110] sm:$0x1]
  %v100 = vld [vmem:[%s0 + $0x11c] sm:$0x1]
  %v101 = vld [vmem:[%s0 + $0x128] sm:$0x1]
  %v102 = vld [vmem:[%s0 + $0x134] sm:$0x1]
  %v103 = vld [vmem:[%s0 + $0x140] sm:$0x1]
  %v104 = vld [vmem:[%s0 + $0x14c] sm:$0x1]
  %v105 = vld [vmem:[%s0 + $0x158] sm:$0x1]
  %v106 = vld [vmem:[%s0 + $0x164] sm:$0x1]
  %v107 = vld [vmem:[%s0 + $0x170] sm:$0x1]
  %v108 = vld [vmem:[%s0 + $0x17c] sm:$0x1]
  %v109 = vld [vmem:[%s0 + $0x188] sm:$0x1]
  %vm110 = vsmask.f32 3328
  %vm111 = vsmask.f32 7440
  %vm112 = vmor %vm110, %vm111
  %v114 = vshrl.u32 %v12, 16
  %v116 = vrot.slane %v114, 4
  %v117 = vshll.u32 %v12, 16
  %v119 = vrot.slane %v117, 5
  %v120 = vor.u32 %v116, %v119
  %v121 = vrot.slane %v120, 4
  %v123 = vshll.u32 %v13, 16
  %v125 = vrot.slane %v123, 5
  %v126 = vsel %vm112, %v121, %v125
  %v127 = vshrl.u32 %v13, 16
  %v129 = vrot.slane %v127, 4
  %v130 = vor.u32 %v129, %v125
  %v131 = vrot.slane %v130, 4
  %v133 = vshll.u32 %v78, 16
  %v135 = vrot.slane %v133, 5
  %v136 = vsel %vm112, %v131, %v135
  %v138 = vshrl.u32 %v14, 16
  %v140 = vrot.slane %v138, 4
  %v141 = vshll.u32 %v14, 16
  %v143 = vrot.slane %v141, 5
  %v144 = vor.u32 %v140, %v143
  %v145 = vrot.slane %v144, 4
  %v147 = vshll.u32 %v15, 16
  %v149 = vrot.slane %v147, 5
  %v150 = vsel %vm112, %v145, %v149
  %v151 = vshrl.u32 %v15, 16
  %v153 = vrot.slane %v151, 4
  %v154 = vor.u32 %v153, %v149
  %v155 = vrot.slane %v154, 4
  %v157 = vshll.u32 %v79, 16
  %v159 = vrot.slane %v157, 5
  %v160 = vsel %vm112, %v155, %v159
  %v162 = vshrl.u32 %v16, 16
  %v164 = vrot.slane %v162, 4
  %v165 = vshll.u32 %v16, 16
  %v167 = vrot.slane %v165, 5
  %v168 = vor.u32 %v164, %v167
  %v169 = vrot.slane %v168, 4
  %v171 = vshll.u32 %v17, 16
  %v173 = vrot.slane %v171, 5
  %v174 = vsel %vm112, %v169, %v173
  %v175 = vshrl.u32 %v17, 16
  %v177 = vrot.slane %v175, 4
  %v178 = vor.u32 %v177, %v173
  %v179 = vrot.slane %v178, 4
  %v181 = vshll.u32 %v80, 16
  %v183 = vrot.slane %v181, 5
  %v184 = vsel %vm112, %v179, %v183
  %v186 = vshrl.u32 %v18, 16
  %v188 = vrot.slane %v186, 4
  %v189 = vshll.u32 %v18, 16
  %v191 = vrot.slane %v189, 5
  %v192 = vor.u32 %v188, %v191
  %v193 = vrot.slane %v192, 4
  %v195 = vshll.u32 %v19, 16
  %v197 = vrot.slane %v195, 5
  %v198 = vsel %vm112, %v193, %v197
  %v199 = vshrl.u32 %v19, 16
  %v201 = vrot.slane %v199, 4
  %v202 = vor.u32 %v201, %v197
  %v203 = vrot.slane %v202, 4
  %v205 = vshll.u32 %v81, 16
  %v207 = vrot.slane %v205, 5
  %v208 = vsel %vm112, %v203, %v207
  %v210 = vshrl.u32 %v20, 16
  %v212 = vrot.slane %v210, 4
  %v213 = vshll.u32 %v20, 16
  %v215 = vrot.slane %v213, 5
  %v216 = vor.u32 %v212, %v215
  %v217 = vrot.slane %v216, 4
  %v219 = vshll.u32 %v21, 16
  %v221 = vrot.slane %v219, 5
  %v222 = vsel %vm112, %v217, %v221
  %v223 = vshrl.u32 %v21, 16
  %v225 = vrot.slane %v223, 4
  %v226 = vor.u32 %v225, %v221
  %v227 = vrot.slane %v226, 4
  %v229 = vshll.u32 %v82, 16
  %v231 = vrot.slane %v229, 5
  %v232 = vsel %vm112, %v227, %v231
  %v234 = vshrl.u32 %v22, 16
  %v236 = vrot.slane %v234, 4
  %v237 = vshll.u32 %v22, 16
  %v239 = vrot.slane %v237, 5
  %v240 = vor.u32 %v236, %v239
  %v241 = vrot.slane %v240, 4
  %v243 = vshll.u32 %v23, 16
  %v245 = vrot.slane %v243, 5
  %v246 = vsel %vm112, %v241, %v245
  %v247 = vshrl.u32 %v23, 16
  %v249 = vrot.slane %v247, 4
  %v250 = vor.u32 %v249, %v245
  %v251 = vrot.slane %v250, 4
  %v253 = vshll.u32 %v83, 16
  %v255 = vrot.slane %v253, 5
  %v256 = vsel %vm112, %v251, %v255
  %v258 = vshrl.u32 %v24, 16
  %v260 = vrot.slane %v258, 4
  %v261 = vshll.u32 %v24, 16
  %v263 = vrot.slane %v261, 5
  %v264 = vor.u32 %v260, %v263
  %v265 = vrot.slane %v264, 4
  %v267 = vshll.u32 %v25, 16
  %v269 = vrot.slane %v267, 5
  %v270 = vsel %vm112, %v265, %v269
  %v271 = vshrl.u32 %v25, 16
  %v273 = vrot.slane %v271, 4
  %v274 = vor.u32 %v273, %v269
  %v275 = vrot.slane %v274, 4
  %v277 = vshll.u32 %v84, 16
  %v279 = vrot.slane %v277, 5
  %v280 = vsel %vm112, %v275, %v279
  %v282 = vshrl.u32 %v26, 16
  %v284 = vrot.slane %v282, 4
  %v285 = vshll.u32 %v26, 16
  %v287 = vrot.slane %v285, 5
  %v288 = vor.u32 %v284, %v287
  %v289 = vrot.slane %v288, 4
  %v291 = vshll.u32 %v27, 16
  %v293 = vrot.slane %v291, 5
  %v294 = vsel %vm112, %v289, %v293
  %v295 = vshrl.u32 %v27, 16
  %v297 = vrot.slane %v295, 4
  %v298 = vor.u32 %v297, %v293
  %v299 = vrot.slane %v298, 4
  %v301 = vshll.u32 %v85, 16
  %v303 = vrot.slane %v301, 5
  %v304 = vsel %vm112, %v299, %v303
  %v306 = vshrl.u32 %v28, 16
  %v308 = vrot.slane %v306, 4
  %v309 = vshll.u32 %v28, 16
  %v311 = vrot.slane %v309, 5
  %v312 = vor.u32 %v308, %v311
  %v313 = vrot.slane %v312, 4
  %v315 = vshll.u32 %v29, 16
  %v317 = vrot.slane %v315, 5
  %v318 = vsel %vm112, %v313, %v317
  %v319 = vshrl.u32 %v29, 16
  %v321 = vrot.slane %v319, 4
  %v322 = vor.u32 %v321, %v317
  %v323 = vrot.slane %v322, 4
  %v325 = vshll.u32 %v86, 16
  %v327 = vrot.slane %v325, 5
  %v328 = vsel %vm112, %v323, %v327
  %v330 = vshrl.u32 %v30, 16
  %v332 = vrot.slane %v330, 4
  %v333 = vshll.u32 %v30, 16
  %v335 = vrot.slane %v333, 5
  %v336 = vor.u32 %v332, %v335
  %v337 = vrot.slane %v336, 4
  %v339 = vshll.u32 %v31, 16
  %v341 = vrot.slane %v339, 5
  %v342 = vsel %vm112, %v337, %v341
  %v343 = vshrl.u32 %v31, 16
  %v345 = vrot.slane %v343, 4
  %v346 = vor.u32 %v345, %v341
  %v347 = vrot.slane %v346, 4
  %v349 = vshll.u32 %v87, 16
  %v351 = vrot.slane %v349, 5
  %v352 = vsel %vm112, %v347, %v351
  %v354 = vshrl.u32 %v32, 16
  %v356 = vrot.slane %v354, 4
  %v357 = vshll.u32 %v32, 16
  %v359 = vrot.slane %v357, 5
  %v360 = vor.u32 %v356, %v359
  %v361 = vrot.slane %v360, 4
  %v363 = vshll.u32 %v33, 16
  %v365 = vrot.slane %v363, 5
  %v366 = vsel %vm112, %v361, %v365
  %v367 = vshrl.u32 %v33, 16
  %v369 = vrot.slane %v367, 4
  %v370 = vor.u32 %v369, %v365
  %v371 = vrot.slane %v370, 4
  %v373 = vshll.u32 %v88, 16
  %v375 = vrot.slane %v373, 5
  %v376 = vsel %vm112, %v371, %v375
  %v378 = vshrl.u32 %v34, 16
  %v380 = vrot.slane %v378, 4
  %v381 = vshll.u32 %v34, 16
  %v383 = vrot.slane %v381, 5
  %v384 = vor.u32 %v380, %v383
  %v385 = vrot.slane %v384, 4
  %v387 = vshll.u32 %v35, 16
  %v389 = vrot.slane %v387, 5
  %v390 = vsel %vm112, %v385, %v389
  %v391 = vshrl.u32 %v35, 16
  %v393 = vrot.slane %v391, 4
  %v394 = vor.u32 %v393, %v389
  %v395 = vrot.slane %v394, 4
  %v397 = vshll.u32 %v89, 16
  %v399 = vrot.slane %v397, 5
  %v400 = vsel %vm112, %v395, %v399
  %v402 = vshrl.u32 %v36, 16
  %v404 = vrot.slane %v402, 4
  %v405 = vshll.u32 %v36, 16
  %v407 = vrot.slane %v405, 5
  %v408 = vor.u32 %v404, %v407
  %v409 = vrot.slane %v408, 4
  %v411 = vshll.u32 %v37, 16
  %v413 = vrot.slane %v411, 5
  %v414 = vsel %vm112, %v409, %v413
  %v415 = vshrl.u32 %v37, 16
  %v417 = vrot.slane %v415, 4
  %v418 = vor.u32 %v417, %v413
  %v419 = vrot.slane %v418, 4
  %v421 = vshll.u32 %v90, 16
  %v423 = vrot.slane %v421, 5
  %v424 = vsel %vm112, %v419, %v423
  %v426 = vshrl.u32 %v38, 16
  %v428 = vrot.slane %v426, 4
  %v429 = vshll.u32 %v38, 16
  %v431 = vrot.slane %v429, 5
  %v432 = vor.u32 %v428, %v431
  %v433 = vrot.slane %v432, 4
  %v435 = vshll.u32 %v39, 16
  %v437 = vrot.slane %v435, 5
  %v438 = vsel %vm112, %v433, %v437
  %v439 = vshrl.u32 %v39, 16
  %v441 = vrot.slane %v439, 4
  %v442 = vor.u32 %v441, %v437
  %v443 = vrot.slane %v442, 4
  %v445 = vshll.u32 %v91, 16
  %v447 = vrot.slane %v445, 5
  %v448 = vsel %vm112, %v443, %v447
  %v450 = vshrl.u32 %v40, 16
  %v452 = vrot.slane %v450, 4
  %v453 = vshll.u32 %v40, 16
  %v455 = vrot.slane %v453, 5
  %v456 = vor.u32 %v452, %v455
  %v457 = vrot.slane %v456, 4
  %v459 = vshll.u32 %v41, 16
  %v461 = vrot.slane %v459, 5
  %v462 = vsel %vm112, %v457, %v461
  %v463 = vshrl.u32 %v41, 16
  %v465 = vrot.slane %v463, 4
  %v466 = vor.u32 %v465, %v461
  %v467 = vrot.slane %v466, 4
  %v469 = vshll.u32 %v92, 16
  %v471 = vrot.slane %v469, 5
  %v472 = vsel %vm112, %v467, %v471
  %v474 = vshrl.u32 %v42, 16
  %v476 = vrot.slane %v474, 4
  %v477 = vshll.u32 %v42, 16
  %v479 = vrot.slane %v477, 5
  %v480 = vor.u32 %v476, %v479
  %v481 = vrot.slane %v480, 4
  %v483 = vshll.u32 %v43, 16
  %v485 = vrot.slane %v483, 5
  %v486 = vsel %vm112, %v481, %v485
  %v487 = vshrl.u32 %v43, 16
  %v489 = vrot.slane %v487, 4
  %v490 = vor.u32 %v489, %v485
  %v491 = vrot.slane %v490, 4
  %v493 = vshll.u32 %v93, 16
  %v495 = vrot.slane %v493, 5
  %v496 = vsel %vm112, %v491, %v495
  %v498 = vshrl.u32 %v44, 16
  %v500 = vrot.slane %v498, 4
  %v501 = vshll.u32 %v44, 16
  %v503 = vrot.slane %v501, 5
  %v504 = vor.u32 %v500, %v503
  %v505 = vrot.slane %v504, 4
  %v507 = vshll.u32 %v45, 16
  %v509 = vrot.slane %v507, 5
  %v510 = vsel %vm112, %v505, %v509
  %v511 = vshrl.u32 %v45, 16
  %v513 = vrot.slane %v511, 4
  %v514 = vor.u32 %v513, %v509
  %v515 = vrot.slane %v514, 4
  %v517 = vshll.u32 %v94, 16
  %v519 = vrot.slane %v517, 5
  %v520 = vsel %vm112, %v515, %v519
  %v522 = vshrl.u32 %v46, 16
  %v524 = vrot.slane %v522, 4
  %v525 = vshll.u32 %v46, 16
  %v527 = vrot.slane %v525, 5
  %v528 = vor.u32 %v524, %v527
  %v529 = vrot.slane %v528, 4
  %v531 = vshll.u32 %v47, 16
  %v533 = vrot.slane %v531, 5
  %v534 = vsel %vm112, %v529, %v533
  %v535 = vshrl.u32 %v47, 16
  %v537 = vrot.slane %v535, 4
  %v538 = vor.u32 %v537, %v533
  %v539 = vrot.slane %v538, 4
  %v541 = vshll.u32 %v95, 16
  %v543 = vrot.slane %v541, 5
  %v544 = vsel %vm112, %v539, %v543
  %v546 = vshrl.u32 %v48, 16
  %v548 = vrot.slane %v546, 4
  %v549 = vshll.u32 %v48, 16
  %v551 = vrot.slane %v549, 5
  %v552 = vor.u32 %v548, %v551
  %v553 = vrot.slane %v552, 4
  %v555 = vshll.u32 %v49, 16
  %v557 = vrot.slane %v555, 5
  %v558 = vsel %vm112, %v553, %v557
  %v559 = vshrl.u32 %v49, 16
  %v561 = vrot.slane %v559, 4
  %v562 = vor.u32 %v561, %v557
  %v563 = vrot.slane %v562, 4
  %v565 = vshll.u32 %v96, 16
  %v567 = vrot.slane %v565, 5
  %v568 = vsel %vm112, %v563, %v567
  %v570 = vshrl.u32 %v50, 16
  %v572 = vrot.slane %v570, 4
  %v573 = vshll.u32 %v50, 16
  %v575 = vrot.slane %v573, 5
  %v576 = vor.u32 %v572, %v575
  %v577 = vrot.slane %v576, 4
  %v579 = vshll.u32 %v51, 16
  %v581 = vrot.slane %v579, 5
  %v582 = vsel %vm112, %v577, %v581
  %v583 = vshrl.u32 %v51, 16
  %v585 = vrot.slane %v583, 4
  %v586 = vor.u32 %v585, %v581
  %v587 = vrot.slane %v586, 4
  %v589 = vshll.u32 %v97, 16
  %v591 = vrot.slane %v589, 5
  %v592 = vsel %vm112, %v587, %v591
  %v594 = vshrl.u32 %v52, 16
  %v596 = vrot.slane %v594, 4
  %v597 = vshll.u32 %v52, 16
  %v599 = vrot.slane %v597, 5
  %v600 = vor.u32 %v596, %v599
  %v601 = vrot.slane %v600, 4
  %v603 = vshll.u32 %v53, 16
  %v605 = vrot.slane %v603, 5
  %v606 = vsel %vm112, %v601, %v605
  %v607 = vshrl.u32 %v53, 16
  %v609 = vrot.slane %v607, 4
  %v610 = vor.u32 %v609, %v605
  %v611 = vrot.slane %v610, 4
  %v613 = vshll.u32 %v98, 16
  %v615 = vrot.slane %v613, 5
  %v616 = vsel %vm112, %v611, %v615
  %v618 = vshrl.u32 %v54, 16
  %v620 = vrot.slane %v618, 4
  %v621 = vshll.u32 %v54, 16
  %v623 = vrot.slane %v621, 5
  %v624 = vor.u32 %v620, %v623
  %v625 = vrot.slane %v624, 4
  %v627 = vshll.u32 %v55, 16
  %v629 = vrot.slane %v627, 5
  %v630 = vsel %vm112, %v625, %v629
  %v631 = vshrl.u32 %v55, 16
  %v633 = vrot.slane %v631, 4
  %v634 = vor.u32 %v633, %v629
  %v635 = vrot.slane %v634, 4
  %v637 = vshll.u32 %v99, 16
  %v639 = vrot.slane %v637, 5
  %v640 = vsel %vm112, %v635, %v639
  %v642 = vshrl.u32 %v56, 16
  %v644 = vrot.slane %v642, 4
  %v645 = vshll.u32 %v56, 16
  %v647 = vrot.slane %v645, 5
  %v648 = vor.u32 %v644, %v647
  %v649 = vrot.slane %v648, 4
  %v651 = vshll.u32 %v57, 16
  %v653 = vrot.slane %v651, 5
  %v654 = vsel %vm112, %v649, %v653
  %v655 = vshrl.u32 %v57, 16
  %v657 = vrot.slane %v655, 4
  %v658 = vor.u32 %v657, %v653
  %v659 = vrot.slane %v658, 4
  %v661 = vshll.u32 %v100, 16
  %v663 = vrot.slane %v661, 5
  %v664 = vsel %vm112, %v659, %v663
  %v666 = vshrl.u32 %v58, 16
  %v668 = vrot.slane %v666, 4
  %v669 = vshll.u32 %v58, 16
  %v671 = vrot.slane %v669, 5
  %v672 = vor.u32 %v668, %v671
  %v673 = vrot.slane %v672, 4
  %v675 = vshll.u32 %v59, 16
  %v677 = vrot.slane %v675, 5
  %v678 = vsel %vm112, %v673, %v677
  %v679 = vshrl.u32 %v59, 16
  %v681 = vrot.slane %v679, 4
  %v682 = vor.u32 %v681, %v677
  %v683 = vrot.slane %v682, 4
  %v685 = vshll.u32 %v101, 16
  %v687 = vrot.slane %v685, 5
  %v688 = vsel %vm112, %v683, %v687
  %v690 = vshrl.u32 %v60, 16
  %v692 = vrot.slane %v690, 4
  %v693 = vshll.u32 %v60, 16
  %v695 = vrot.slane %v693, 5
  %v696 = vor.u32 %v692, %v695
  %v697 = vrot.slane %v696, 4
  %v699 = vshll.u32 %v61, 16
  %v701 = vrot.slane %v699, 5
  %v702 = vsel %vm112, %v697, %v701
  %v703 = vshrl.u32 %v61, 16
  %v705 = vrot.slane %v703, 4
  %v706 = vor.u32 %v705, %v701
  %v707 = vrot.slane %v706, 4
  %v709 = vshll.u32 %v102, 16
  %v711 = vrot.slane %v709, 5
  %v712 = vsel %vm112, %v707, %v711
  %v714 = vshrl.u32 %v62, 16
  %v716 = vrot.slane %v714, 4
  %v717 = vshll.u32 %v62, 16
  %v719 = vrot.slane %v717, 5
  %v720 = vor.u32 %v716, %v719
  %v721 = vrot.slane %v720, 4
  %v723 = vshll.u32 %v63, 16
  %v725 = vrot.slane %v723, 5
  %v726 = vsel %vm112, %v721, %v725
  %v727 = vshrl.u32 %v63, 16
  %v729 = vrot.slane %v727, 4
  %v730 = vor.u32 %v729, %v725
  %v731 = vrot.slane %v730, 4
  %v733 = vshll.u32 %v103, 16
  %v735 = vrot.slane %v733, 5
  %v736 = vsel %vm112, %v731, %v735
  %v738 = vshrl.u32 %v64, 16
  %v740 = vrot.slane %v738, 4
  %v741 = vshll.u32 %v64, 16
  %v743 = vrot.slane %v741, 5
  %v744 = vor.u32 %v740, %v743
  %v745 = vrot.slane %v744, 4
  %v747 = vshll.u32 %v65, 16
  %v749 = vrot.slane %v747, 5
  %v750 = vsel %vm112, %v745, %v749
  %v751 = vshrl.u32 %v65, 16
  %v753 = vrot.slane %v751, 4
  %v754 = vor.u32 %v753, %v749
  %v755 = vrot.slane %v754, 4
  %v757 = vshll.u32 %v104, 16
  %v759 = vrot.slane %v757, 5
  %v760 = vsel %vm112, %v755, %v759
  %v762 = vshrl.u32 %v66, 16
  %v764 = vrot.slane %v762, 4
  %v765 = vshll.u32 %v66, 16
  %v767 = vrot.slane %v765, 5
  %v768 = vor.u32 %v764, %v767
  %v769 = vrot.slane %v768, 4
  %v771 = vshll.u32 %v67, 16
  %v773 = vrot.slane %v771, 5
  %v774 = vsel %vm112, %v769, %v773
  %v775 = vshrl.u32 %v67, 16
  %v777 = vrot.slane %v775, 4
  %v778 = vor.u32 %v777, %v773
  %v779 = vrot.slane %v778, 4
  %v781 = vshll.u32 %v105, 16
  %v783 = vrot.slane %v781, 5
  %v784 = vsel %vm112, %v779, %v783
  %v786 = vshrl.u32 %v68, 16
  %v788 = vrot.slane %v786, 4
  %v789 = vshll.u32 %v68, 16
  %v791 = vrot.slane %v789, 5
  %v792 = vor.u32 %v788, %v791
  %v793 = vrot.slane %v792, 4
  %v795 = vshll.u32 %v69, 16
  %v797 = vrot.slane %v795, 5
  %v798 = vsel %vm112, %v793, %v797
  %v799 = vshrl.u32 %v69, 16
  %v801 = vrot.slane %v799, 4
  %v802 = vor.u32 %v801, %v797
  %v803 = vrot.slane %v802, 4
  %v805 = vshll.u32 %v106, 16
  %v807 = vrot.slane %v805, 5
  %v808 = vsel %vm112, %v803, %v807
  %v810 = vshrl.u32 %v70, 16
  %v812 = vrot.slane %v810, 4
  %v813 = vshll.u32 %v70, 16
  %v815 = vrot.slane %v813, 5
  %v816 = vor.u32 %v812, %v815
  %v817 = vrot.slane %v816, 4
  %v819 = vshll.u32 %v71, 16
  %v821 = vrot.slane %v819, 5
  %v822 = vsel %vm112, %v817, %v821
  %v823 = vshrl.u32 %v71, 16
  %v825 = vrot.slane %v823, 4
  %v826 = vor.u32 %v825, %v821
  %v827 = vrot.slane %v826, 4
  %v829 = vshll.u32 %v107, 16
  %v831 = vrot.slane %v829, 5
  %v832 = vsel %vm112, %v827, %v831
  %v834 = vshrl.u32 %v72, 16
  %v836 = vrot.slane %v834, 4
  %v837 = vshll.u32 %v72, 16
  %v839 = vrot.slane %v837, 5
  %v840 = vor.u32 %v836, %v839
  %v841 = vrot.slane %v840, 4
  %v843 = vshll.u32 %v73, 16
  %v845 = vrot.slane %v843, 5
  %v846 = vsel %vm112, %v841, %v845
  %v847 = vshrl.u32 %v73, 16
  %v849 = vrot.slane %v847, 4
  %v850 = vor.u32 %v849, %v845
  %v851 = vrot.slane %v850, 4
  %v853 = vshll.u32 %v108, 16
  %v855 = vrot.slane %v853, 5
  %v856 = vsel %vm112, %v851, %v855
  %v858 = vshrl.u32 %v74, 16
  %v860 = vrot.slane %v858, 4
  %v861 = vshll.u32 %v74, 16
  %v863 = vrot.slane %v861, 5
  %v864 = vor.u32 %v860, %v863
  %v865 = vrot.slane %v864, 4
  %v867 = vshll.u32 %v75, 16
  %v869 = vrot.slane %v867, 5
  %v870 = vsel %vm112, %v865, %v869
  %v871 = vshrl.u32 %v75, 16
  %v873 = vrot.slane %v871, 4
  %v874 = vor.u32 %v873, %v869
  %v875 = vrot.slane %v874, 4
  %v877 = vshll.u32 %v109, 16
  %v879 = vrot.slane %v877, 5
  %v880 = vsel %vm112, %v875, %v879
  %s881 = scalar_lea.vmem %s1, 8
  %v882 = vld [vmem:[%s881] sm:$0xf]
  %v883 = vld [vmem:[%s881 + $0x4] sm:$0x3]
  %v884 = vunpack.c.l.b16 %v126
  %v885 = vunpack.c.l.b16 %v136
  %v886 = vunpack.c.l.b16 %v150
  %v887 = vunpack.c.l.b16 %v160
  %v888 = vunpack.c.l.b16 %v174
  %v889 = vunpack.c.l.b16 %v184
  %v890 = vunpack.c.l.b16 %v198
  %v891 = vunpack.c.l.b16 %v208
  %v892 = vunpack.c.l.b16 %v222
  %v893 = vunpack.c.l.b16 %v232
  %v894 = vunpack.c.l.b16 %v246
  %v895 = vunpack.c.l.b16 %v256
  %v896 = vunpack.c.l.b16 %v270
  %v897 = vunpack.c.l.b16 %v280
  %v898 = vunpack.c.l.b16 %v294
  %v899 = vunpack.c.l.b16 %v304
  %v900 = vunpack.c.l.b16 %v318
  %v901 = vunpack.c.l.b16 %v328
  %v902 = vunpack.c.l.b16 %v342
  %v903 = vunpack.c.l.b16 %v352
  %v904 = vunpack.c.l.b16 %v366
  %v905 = vunpack.c.l.b16 %v376
  %v906 = vunpack.c.l.b16 %v390
  %v907 = vunpack.c.l.b16 %v400
  %v908 = vunpack.c.l.b16 %v414
  %v909 = vunpack.c.l.b16 %v424
  %v910 = vunpack.c.l.b16 %v438
  %v911 = vunpack.c.l.b16 %v448
  %v912 = vunpack.c.l.b16 %v462
  %v913 = vunpack.c.l.b16 %v472
  %v914 = vunpack.c.l.b16 %v486
  %v915 = vunpack.c.l.b16 %v496
  %v916 = vunpack.c.l.b16 %v510
  %v917 = vunpack.c.l.b16 %v520
  %v918 = vunpack.c.l.b16 %v534
  %v919 = vunpack.c.l.b16 %v544
  %v920 = vunpack.c.l.b16 %v558
  %v921 = vunpack.c.l.b16 %v568
  %v922 = vunpack.c.l.b16 %v582
  %v923 = vunpack.c.l.b16 %v592
  %v924 = vunpack.c.l.b16 %v606
  %v925 = vunpack.c.l.b16 %v616
  %v926 = vunpack.c.l.b16 %v630
  %v927 = vunpack.c.l.b16 %v640
  %v928 = vunpack.c.l.b16 %v654
  %v929 = vunpack.c.l.b16 %v664
  %v930 = vunpack.c.l.b16 %v678
  %v931 = vunpack.c.l.b16 %v688
  %v932 = vunpack.c.l.b16 %v702
  %v933 = vunpack.c.l.b16 %v712
  %v934 = vunpack.c.l.b16 %v726
  %v935 = vunpack.c.l.b16 %v736
  %v936 = vunpack.c.l.b16 %v750
  %v937 = vunpack.c.l.b16 %v760
  %v938 = vunpack.c.l.b16 %v774
  %v939 = vunpack.c.l.b16 %v784
  %v940 = vunpack.c.l.b16 %v798
  %v941 = vunpack.c.l.b16 %v808
  %v942 = vunpack.c.l.b16 %v822
  %v943 = vunpack.c.l.b16 %v832
  %v944 = vunpack.c.l.b16 %v846
  %v945 = vunpack.c.l.b16 %v856
  %v946 = vunpack.c.l.b16 %v870
  %v947 = vunpack.c.l.b16 %v880
  %v948 = vpack.c.b16 %v885, %v884
  %v949 = vpack.c.b16 %v887, %v886
  %v950 = vpack.c.b16 %v889, %v888
  %v951 = vpack.c.b16 %v891, %v890
  %v952 = vpack.c.b16 %v893, %v892
  %v953 = vpack.c.b16 %v895, %v894
  %v954 = vpack.c.b16 %v897, %v896
  %v955 = vpack.c.b16 %v899, %v898
  %v956 = vpack.c.b16 %v901, %v900
  %v957 = vpack.c.b16 %v903, %v902
  %v958 = vpack.c.b16 %v905, %v904
  %v959 = vpack.c.b16 %v907, %v906
  %v960 = vpack.c.b16 %v909, %v908
  %v961 = vpack.c.b16 %v911, %v910
  %v962 = vpack.c.b16 %v913, %v912
  %v963 = vpack.c.b16 %v915, %v914
  %v964 = vpack.c.b16 %v917, %v916
  %v965 = vpack.c.b16 %v919, %v918
  %v966 = vpack.c.b16 %v921, %v920
  %v967 = vpack.c.b16 %v923, %v922
  %v968 = vpack.c.b16 %v925, %v924
  %v969 = vpack.c.b16 %v927, %v926
  %v970 = vpack.c.b16 %v929, %v928
  %v971 = vpack.c.b16 %v931, %v930
  %v972 = vpack.c.b16 %v933, %v932
  %v973 = vpack.c.b16 %v935, %v934
  %v974 = vpack.c.b16 %v937, %v936
  %v975 = vpack.c.b16 %v939, %v938
  %v976 = vpack.c.b16 %v941, %v940
  %v977 = vpack.c.b16 %v943, %v942
  %v978 = vpack.c.b16 %v945, %v944
  %v979 = vpack.c.b16 %v947, %v946
  %v982 = vunpack.c.l.b16 %v882
  %v983 = vunpack.c.l.b16 %v883
  %v984 = vpack.c.b16 %v983, %v982
  %vm985 = vcmask 97280
  %v987 = vsel %vm985, %v948, 0
  %v990 = vsel %vm985, %v949, 0
  %v993 = vsel %vm985, %v950, 0
  %v996 = vsel %vm985, %v951, 0
  %v999 = vsel %vm985, %v952, 0
  %v1002 = vsel %vm985, %v953, 0
  %v1005 = vsel %vm985, %v954, 0
  %v1008 = vsel %vm985, %v955, 0
  %v1011 = vsel %vm985, %v956, 0
  %v1014 = vsel %vm985, %v957, 0
  %v1017 = vsel %vm985, %v958, 0
  %v1020 = vsel %vm985, %v959, 0
  %v1023 = vsel %vm985, %v960, 0
  %v1026 = vsel %vm985, %v961, 0
  %v1029 = vsel %vm985, %v962, 0
  %v1032 = vsel %vm985, %v963, 0
  %v1035 = vsel %vm985, %v964, 0
  %v1038 = vsel %vm985, %v965, 0
  %v1041 = vsel %vm985, %v966, 0
  %v1044 = vsel %vm985, %v967, 0
  %v1047 = vsel %vm985, %v968, 0
  %v1050 = vsel %vm985, %v969, 0
  %v1053 = vsel %vm985, %v970, 0
  %v1056 = vsel %vm985, %v971, 0
  %v1059 = vsel %vm985, %v972, 0
  %v1062 = vsel %vm985, %v973, 0
  %v1065 = vsel %vm985, %v974, 0
  %v1068 = vsel %vm985, %v975, 0
  %v1071 = vsel %vm985, %v976, 0
  %v1074 = vsel %vm985, %v977, 0
  %v1077 = vsel %vm985, %v978, 0
  %v1080 = vsel %vm985, %v979, 0
  %vm1082 = vcmask 1045504
  %v1084 = vsel %vm1082, %v984, 0
  %1086 = vmatpush.bf16.msra.mxu0 0
  %1087 = vmatpush.bf16.msra.mxu0 0
  %1088 = vmatpush.bf16.msra.mxu0 0
  %1089 = vmatpush.bf16.msra.mxu0 0
  %1090 = vmatpush.bf16.msra.mxu0 0
  %1091 = vmatpush.bf16.msra.mxu0 0
  %1092 = vmatpush.bf16.msra.mxu0 0
  %1093 = vmatpush.bf16.msra.mxu0 %v1084
  %1094 = vmatmul.bf16.gmra.mxu0 %v987
  %v1095 = vpop.f32.mrf.mxu0
  %v1096 = vadd.f32 0.0, %v1095
  %v1097 = vpop.f32.mrf.mxu0
  %v1098 = vadd.f32 0.0, %v1097
  %1099 = vmatmul.bf16.gmra.mxu0 %v990
  %v1100 = vpop.f32.mrf.mxu0
  %v1101 = vadd.f32 0.0, %v1100
  %v1102 = vpop.f32.mrf.mxu0
  %v1103 = vadd.f32 0.0, %v1102
  %1104 = vmatmul.bf16.gmra.mxu0 %v993
  %v1105 = vpop.f32.mrf.mxu0
  %v1106 = vadd.f32 0.0, %v1105
  %v1107 = vpop.f32.mrf.mxu0
  %v1108 = vadd.f32 0.0, %v1107
  %1109 = vmatmul.bf16.gmra.mxu0 %v996
  %v1110 = vpop.f32.mrf.mxu0
  %v1111 = vadd.f32 0.0, %v1110
  %v1112 = vpop.f32.mrf.mxu0
  %v1113 = vadd.f32 0.0, %v1112
  %1114 = vmatmul.bf16.gmra.mxu0 %v999
  %v1115 = vpop.f32.mrf.mxu0
  %v1116 = vadd.f32 0.0, %v1115
  %v1117 = vpop.f32.mrf.mxu0
  %v1118 = vadd.f32 0.0, %v1117
  %1119 = vmatmul.bf16.gmra.mxu0 %v1002
  %v1120 = vpop.f32.mrf.mxu0
  %v1121 = vadd.f32 0.0, %v1120
  %v1122 = vpop.f32.mrf.mxu0
  %v1123 = vadd.f32 0.0, %v1122
  %1124 = vmatmul.bf16.gmra.mxu0 %v1005
  %v1125 = vpop.f32.mrf.mxu0
  %v1126 = vadd.f32 0.0, %v1125
  %v1127 = vpop.f32.mrf.mxu0
  %v1128 = vadd.f32 0.0, %v1127
  %1129 = vmatmul.bf16.gmra.mxu0 %v1008
  %v1130 = vpop.f32.mrf.mxu0
  %v1131 = vadd.f32 0.0, %v1130
  %v1132 = vpop.f32.mrf.mxu0
  %v1133 = vadd.f32 0.0, %v1132
  %1134 = vmatmul.bf16.gmra.mxu0 %v1011
  %v1135 = vpop.f32.mrf.mxu0
  %v1136 = vadd.f32 0.0, %v1135
  %v1137 = vpop.f32.mrf.mxu0
  %v1138 = vadd.f32 0.0, %v1137
  %1139 = vmatmul.bf16.gmra.mxu0 %v1014
  %v1140 = vpop.f32.mrf.mxu0
  %v1141 = vadd.f32 0.0, %v1140
  %v1142 = vpop.f32.mrf.mxu0
  %v1143 = vadd.f32 0.0, %v1142
  %1144 = vmatmul.bf16.gmra.mxu0 %v1017
  %v1145 = vpop.f32.mrf.mxu0
  %v1146 = vadd.f32 0.0, %v1145
  %v1147 = vpop.f32.mrf.mxu0
  %v1148 = vadd.f32 0.0, %v1147
  %1149 = vmatmul.bf16.gmra.mxu0 %v1020
  %v1150 = vpop.f32.mrf.mxu0
  %v1151 = vadd.f32 0.0, %v1150
  %v1152 = vpop.f32.mrf.mxu0
  %v1153 = vadd.f32 0.0, %v1152
  %1154 = vmatmul.bf16.gmra.mxu0 %v1023
  %v1155 = vpop.f32.mrf.mxu0
  %v1156 = vadd.f32 0.0, %v1155
  %v1157 = vpop.f32.mrf.mxu0
  %v1158 = vadd.f32 0.0, %v1157
  %1159 = vmatmul.bf16.gmra.mxu0 %v1026
  %v1160 = vpop.f32.mrf.mxu0
  %v1161 = vadd.f32 0.0, %v1160
  %v1162 = vpop.f32.mrf.mxu0
  %v1163 = vadd.f32 0.0, %v1162
  %1164 = vmatmul.bf16.gmra.mxu0 %v1029
  %v1165 = vpop.f32.mrf.mxu0
  %v1166 = vadd.f32 0.0, %v1165
  %v1167 = vpop.f32.mrf.mxu0
  %v1168 = vadd.f32 0.0, %v1167
  %1169 = vmatmul.bf16.gmra.mxu0 %v1032
  %v1170 = vpop.f32.mrf.mxu0
  %v1171 = vadd.f32 0.0, %v1170
  %v1172 = vpop.f32.mrf.mxu0
  %v1173 = vadd.f32 0.0, %v1172
  %1174 = vmatmul.bf16.gmra.mxu0 %v1035
  %v1175 = vpop.f32.mrf.mxu0
  %v1176 = vadd.f32 0.0, %v1175
  %v1177 = vpop.f32.mrf.mxu0
  %v1178 = vadd.f32 0.0, %v1177
  %1179 = vmatmul.bf16.gmra.mxu0 %v1038
  %v1180 = vpop.f32.mrf.mxu0
  %v1181 = vadd.f32 0.0, %v1180
  %v1182 = vpop.f32.mrf.mxu0
  %v1183 = vadd.f32 0.0, %v1182
  %1184 = vmatmul.bf16.gmra.mxu0 %v1041
  %v1185 = vpop.f32.mrf.mxu0
  %v1186 = vadd.f32 0.0, %v1185
  %v1187 = vpop.f32.mrf.mxu0
  %v1188 = vadd.f32 0.0, %v1187
  %1189 = vmatmul.bf16.gmra.mxu0 %v1044
  %v1190 = vpop.f32.mrf.mxu0
  %v1191 = vadd.f32 0.0, %v1190
  %v1192 = vpop.f32.mrf.mxu0
  %v1193 = vadd.f32 0.0, %v1192
  %1194 = vmatmul.bf16.gmra.mxu0 %v1047
  %v1195 = vpop.f32.mrf.mxu0
  %v1196 = vadd.f32 0.0, %v1195
  %v1197 = vpop.f32.mrf.mxu0
  %v1198 = vadd.f32 0.0, %v1197
  %1199 = vmatmul.bf16.gmra.mxu0 %v1050
  %v1200 = vpop.f32.mrf.mxu0
  %v1201 = vadd.f32 0.0, %v1200
  %v1202 = vpop.f32.mrf.mxu0
  %v1203 = vadd.f32 0.0, %v1202
  %1204 = vmatmul.bf16.gmra.mxu0 %v1053
  %v1205 = vpop.f32.mrf.mxu0
  %v1206 = vadd.f32 0.0, %v1205
  %v1207 = vpop.f32.mrf.mxu0
  %v1208 = vadd.f32 0.0, %v1207
  %1209 = vmatmul.bf16.gmra.mxu0 %v1056
  %v1210 = vpop.f32.mrf.mxu0
  %v1211 = vadd.f32 0.0, %v1210
  %v1212 = vpop.f32.mrf.mxu0
  %v1213 = vadd.f32 0.0, %v1212
  %1214 = vmatmul.bf16.gmra.mxu0 %v1059
  %v1215 = vpop.f32.mrf.mxu0
  %v1216 = vadd.f32 0.0, %v1215
  %v1217 = vpop.f32.mrf.mxu0
  %v1218 = vadd.f32 0.0, %v1217
  %1219 = vmatmul.bf16.gmra.mxu0 %v1062
  %v1220 = vpop.f32.mrf.mxu0
  %v1221 = vadd.f32 0.0, %v1220
  %v1222 = vpop.f32.mrf.mxu0
  %v1223 = vadd.f32 0.0, %v1222
  %1224 = vmatmul.bf16.gmra.mxu0 %v1065
  %v1225 = vpop.f32.mrf.mxu0
  %v1226 = vadd.f32 0.0, %v1225
  %v1227 = vpop.f32.mrf.mxu0
  %v1228 = vadd.f32 0.0, %v1227
  %1229 = vmatmul.bf16.gmra.mxu0 %v1068
  %v1230 = vpop.f32.mrf.mxu0
  %v1231 = vadd.f32 0.0, %v1230
  %v1232 = vpop.f32.mrf.mxu0
  %v1233 = vadd.f32 0.0, %v1232
  %1234 = vmatmul.bf16.gmra.mxu0 %v1071
  %v1235 = vpop.f32.mrf.mxu0
  %v1236 = vadd.f32 0.0, %v1235
  %v1237 = vpop.f32.mrf.mxu0
  %v1238 = vadd.f32 0.0, %v1237
  %1239 = vmatmul.bf16.gmra.mxu0 %v1074
  %v1240 = vpop.f32.mrf.mxu0
  %v1241 = vadd.f32 0.0, %v1240
  %v1242 = vpop.f32.mrf.mxu0
  %v1243 = vadd.f32 0.0, %v1242
  %1244 = vmatmul.bf16.gmra.mxu0 %v1077
  %v1245 = vpop.f32.mrf.mxu0
  %v1246 = vadd.f32 0.0, %v1245
  %v1247 = vpop.f32.mrf.mxu0
  %v1248 = vadd.f32 0.0, %v1247
  %1249 = vmatmul.bf16.gmra.mxu0 %v1080
  %v1250 = vpop.f32.mrf.mxu0
  %v1251 = vadd.f32 0.0, %v1250
  %v1252 = vpop.f32.mrf.mxu0
  %v1253 = vadd.f32 0.0, %v1252
  %1254 = vdwg.mxu0
  %v1319 = vunpack.c.l.b16 %v12
  %v1320 = vunpack.c.l.b16 %v13
  %v1321 = vunpack.c.l.b16 %v14
  %v1322 = vunpack.c.l.b16 %v15
  %v1323 = vunpack.c.l.b16 %v16
  %v1324 = vunpack.c.l.b16 %v17
  %v1325 = vunpack.c.l.b16 %v18
  %v1326 = vunpack.c.l.b16 %v19
  %v1327 = vunpack.c.l.b16 %v20
  %v1328 = vunpack.c.l.b16 %v21
  %v1329 = vunpack.c.l.b16 %v22
  %v1330 = vunpack.c.l.b16 %v23
  %v1331 = vunpack.c.l.b16 %v24
  %v1332 = vunpack.c.l.b16 %v25
  %v1333 = vunpack.c.l.b16 %v26
  %v1334 = vunpack.c.l.b16 %v27
  %v1335 = vunpack.c.l.b16 %v28
  %v1336 = vunpack.c.l.b16 %v29
  %v1337 = vunpack.c.l.b16 %v30
  %v1338 = vunpack.c.l.b16 %v31
  %v1339 = vunpack.c.l.b16 %v32
  %v1340 = vunpack.c.l.b16 %v33
  %v1341 = vunpack.c.l.b16 %v34
  %v1342 = vunpack.c.l.b16 %v35
  %v1343 = vunpack.c.l.b16 %v36
  %v1344 = vunpack.c.l.b16 %v37
  %v1345 = vunpack.c.l.b16 %v38
  %v1346 = vunpack.c.l.b16 %v39
  %v1347 = vunpack.c.l.b16 %v40
  %v1348 = vunpack.c.l.b16 %v41
  %v1349 = vunpack.c.l.b16 %v42
  %v1350 = vunpack.c.l.b16 %v43
  %v1351 = vunpack.c.l.b16 %v44
  %v1352 = vunpack.c.l.b16 %v45
  %v1353 = vunpack.c.l.b16 %v46
  %v1354 = vunpack.c.l.b16 %v47
  %v1355 = vunpack.c.l.b16 %v48
  %v1356 = vunpack.c.l.b16 %v49
  %v1357 = vunpack.c.l.b16 %v50
  %v1358 = vunpack.c.l.b16 %v51
  %v1359 = vunpack.c.l.b16 %v52
  %v1360 = vunpack.c.l.b16 %v53
  %v1361 = vunpack.c.l.b16 %v54
  %v1362 = vunpack.c.l.b16 %v55
  %v1363 = vunpack.c.l.b16 %v56
  %v1364 = vunpack.c.l.b16 %v57
  %v1365 = vunpack.c.l.b16 %v58
  %v1366 = vunpack.c.l.b16 %v59
  %v1367 = vunpack.c.l.b16 %v60
  %v1368 = vunpack.c.l.b16 %v61
  %v1369 = vunpack.c.l.b16 %v62
  %v1370 = vunpack.c.l.b16 %v63
  %v1371 = vunpack.c.l.b16 %v64
  %v1372 = vunpack.c.l.b16 %v65
  %v1373 = vunpack.c.l.b16 %v66
  %v1374 = vunpack.c.l.b16 %v67
  %v1375 = vunpack.c.l.b16 %v68
  %v1376 = vunpack.c.l.b16 %v69
  %v1377 = vunpack.c.l.b16 %v70
  %v1378 = vunpack.c.l.b16 %v71
  %v1379 = vunpack.c.l.b16 %v72
  %v1380 = vunpack.c.l.b16 %v73
  %v1381 = vunpack.c.l.b16 %v74
  %v1382 = vunpack.c.l.b16 %v75
  %v1383 = vpack.c.b16 %v1320, %v1319
  %v1384 = vpack.c.b16 %v1322, %v1321
  %v1385 = vpack.c.b16 %v1324, %v1323
  %v1386 = vpack.c.b16 %v1326, %v1325
  %v1387 = vpack.c.b16 %v1328, %v1327
  %v1388 = vpack.c.b16 %v1330, %v1329
  %v1389 = vpack.c.b16 %v1332, %v1331
  %v1390 = vpack.c.b16 %v1334, %v1333
  %v1391 = vpack.c.b16 %v1336, %v1335
  %v1392 = vpack.c.b16 %v1338, %v1337
  %v1393 = vpack.c.b16 %v1340, %v1339
  %v1394 = vpack.c.b16 %v1342, %v1341
  %v1395 = vpack.c.b16 %v1344, %v1343
  %v1396 = vpack.c.b16 %v1346, %v1345
  %v1397 = vpack.c.b16 %v1348, %v1347
  %v1398 = vpack.c.b16 %v1350, %v1349
  %v1399 = vpack.c.b16 %v1352, %v1351
  %v1400 = vpack.c.b16 %v1354, %v1353
  %v1401 = vpack.c.b16 %v1356, %v1355
  %v1402 = vpack.c.b16 %v1358, %v1357
  %v1403 = vpack.c.b16 %v1360, %v1359
  %v1404 = vpack.c.b16 %v1362, %v1361
  %v1405 = vpack.c.b16 %v1364, %v1363
  %v1406 = vpack.c.b16 %v1366, %v1365
  %v1407 = vpack.c.b16 %v1368, %v1367
  %v1408 = vpack.c.b16 %v1370, %v1369
  %v1409 = vpack.c.b16 %v1372, %v1371
  %v1410 = vpack.c.b16 %v1374, %v1373
  %v1411 = vpack.c.b16 %v1376, %v1375
  %v1412 = vpack.c.b16 %v1378, %v1377
  %v1413 = vpack.c.b16 %v1380, %v1379
  %v1414 = vpack.c.b16 %v1382, %v1381
  %v1417 = vunpack.c.l.b16 %v76
  %v1418 = vunpack.c.l.b16 %v77
  %v1419 = vpack.c.b16 %v1418, %v1417
  %v1421 = vsel %vm985, %v1383, 0
  %v1424 = vsel %vm985, %v1384, 0
  %v1427 = vsel %vm985, %v1385, 0
  %v1430 = vsel %vm985, %v1386, 0
  %v1433 = vsel %vm985, %v1387, 0
  %v1436 = vsel %vm985, %v1388, 0
  %v1439 = vsel %vm985, %v1389, 0
  %v1442 = vsel %vm985, %v1390, 0
  %v1445 = vsel %vm985, %v1391, 0
  %v1448 = vsel %vm985, %v1392, 0
  %v1451 = vsel %vm985, %v1393, 0
  %v1454 = vsel %vm985, %v1394, 0
  %v1457 = vsel %vm985, %v1395, 0
  %v1460 = vsel %vm985, %v1396, 0
  %v1463 = vsel %vm985, %v1397, 0
  %v1466 = vsel %vm985, %v1398, 0
  %v1469 = vsel %vm985, %v1399, 0
  %v1472 = vsel %vm985, %v1400, 0
  %v1475 = vsel %vm985, %v1401, 0
  %v1478 = vsel %vm985, %v1402, 0
  %v1481 = vsel %vm985, %v1403, 0
  %v1484 = vsel %vm985, %v1404, 0
  %v1487 = vsel %vm985, %v1405, 0
  %v1490 = vsel %vm985, %v1406, 0
  %v1493 = vsel %vm985, %v1407, 0
  %v1496 = vsel %vm985, %v1408, 0
  %v1499 = vsel %vm985, %v1409, 0
  %v1502 = vsel %vm985, %v1410, 0
  %v1505 = vsel %vm985, %v1411, 0
  %v1508 = vsel %vm985, %v1412, 0
  %v1511 = vsel %vm985, %v1413, 0
  %v1514 = vsel %vm985, %v1414, 0
  %v1517 = vsel %vm1082, %v1419, 0
  %1519 = vmatpush.bf16.msra.mxu0 0
  %1520 = vmatpush.bf16.msra.mxu0 0
  %1521 = vmatpush.bf16.msra.mxu0 0
  %1522 = vmatpush.bf16.msra.mxu0 0
  %1523 = vmatpush.bf16.msra.mxu0 0
  %1524 = vmatpush.bf16.msra.mxu0 0
  %1525 = vmatpush.bf16.msra.mxu0 0
  %1526 = vmatpush.bf16.msra.mxu0 %v1517
  %1527 = vmatmul.bf16.gmra.mxu0 %v1421
  %v1528 = vpop.f32.mrf.mxu0
  %v1529 = vadd.f32 %v1096, %v1528
  %v1530 = vpop.f32.mrf.mxu0
  %v1531 = vadd.f32 %v1098, %v1530
  %1532 = vmatmul.bf16.gmra.mxu0 %v1424
  %v1533 = vpop.f32.mrf.mxu0
  %v1534 = vadd.f32 %v1101, %v1533
  %v1535 = vpop.f32.mrf.mxu0
  %v1536 = vadd.f32 %v1103, %v1535
  %1537 = vmatmul.bf16.gmra.mxu0 %v1427
  %v1538 = vpop.f32.mrf.mxu0
  %v1539 = vadd.f32 %v1106, %v1538
  %v1540 = vpop.f32.mrf.mxu0
  %v1541 = vadd.f32 %v1108, %v1540
  %1542 = vmatmul.bf16.gmra.mxu0 %v1430
  %v1543 = vpop.f32.mrf.mxu0
  %v1544 = vadd.f32 %v1111, %v1543
  %v1545 = vpop.f32.mrf.mxu0
  %v1546 = vadd.f32 %v1113, %v1545
  %1547 = vmatmul.bf16.gmra.mxu0 %v1433
  %v1548 = vpop.f32.mrf.mxu0
  %v1549 = vadd.f32 %v1116, %v1548
  %v1550 = vpop.f32.mrf.mxu0
  %v1551 = vadd.f32 %v1118, %v1550
  %1552 = vmatmul.bf16.gmra.mxu0 %v1436
  %v1553 = vpop.f32.mrf.mxu0
  %v1554 = vadd.f32 %v1121, %v1553
  %v1555 = vpop.f32.mrf.mxu0
  %v1556 = vadd.f32 %v1123, %v1555
  %1557 = vmatmul.bf16.gmra.mxu0 %v1439
  %v1558 = vpop.f32.mrf.mxu0
  %v1559 = vadd.f32 %v1126, %v1558
  %v1560 = vpop.f32.mrf.mxu0
  %v1561 = vadd.f32 %v1128, %v1560
  %1562 = vmatmul.bf16.gmra.mxu0 %v1442
  %v1563 = vpop.f32.mrf.mxu0
  %v1564 = vadd.f32 %v1131, %v1563
  %v1565 = vpop.f32.mrf.mxu0
  %v1566 = vadd.f32 %v1133, %v1565
  %1567 = vmatmul.bf16.gmra.mxu0 %v1445
  %v1568 = vpop.f32.mrf.mxu0
  %v1569 = vadd.f32 %v1136, %v1568
  %v1570 = vpop.f32.mrf.mxu0
  %v1571 = vadd.f32 %v1138, %v1570
  %1572 = vmatmul.bf16.gmra.mxu0 %v1448
  %v1573 = vpop.f32.mrf.mxu0
  %v1574 = vadd.f32 %v1141, %v1573
  %v1575 = vpop.f32.mrf.mxu0
  %v1576 = vadd.f32 %v1143, %v1575
  %1577 = vmatmul.bf16.gmra.mxu0 %v1451
  %v1578 = vpop.f32.mrf.mxu0
  %v1579 = vadd.f32 %v1146, %v1578
  %v1580 = vpop.f32.mrf.mxu0
  %v1581 = vadd.f32 %v1148, %v1580
  %1582 = vmatmul.bf16.gmra.mxu0 %v1454
  %v1583 = vpop.f32.mrf.mxu0
  %v1584 = vadd.f32 %v1151, %v1583
  %v1585 = vpop.f32.mrf.mxu0
  %v1586 = vadd.f32 %v1153, %v1585
  %1587 = vmatmul.bf16.gmra.mxu0 %v1457
  %v1588 = vpop.f32.mrf.mxu0
  %v1589 = vadd.f32 %v1156, %v1588
  %v1590 = vpop.f32.mrf.mxu0
  %v1591 = vadd.f32 %v1158, %v1590
  %1592 = vmatmul.bf16.gmra.mxu0 %v1460
  %v1593 = vpop.f32.mrf.mxu0
  %v1594 = vadd.f32 %v1161, %v1593
  %v1595 = vpop.f32.mrf.mxu0
  %v1596 = vadd.f32 %v1163, %v1595
  %1597 = vmatmul.bf16.gmra.mxu0 %v1463
  %v1598 = vpop.f32.mrf.mxu0
  %v1599 = vadd.f32 %v1166, %v1598
  %v1600 = vpop.f32.mrf.mxu0
  %v1601 = vadd.f32 %v1168, %v1600
  %1602 = vmatmul.bf16.gmra.mxu0 %v1466
  %v1603 = vpop.f32.mrf.mxu0
  %v1604 = vadd.f32 %v1171, %v1603
  %v1605 = vpop.f32.mrf.mxu0
  %v1606 = vadd.f32 %v1173, %v1605
  %1607 = vmatmul.bf16.gmra.mxu0 %v1469
  %v1608 = vpop.f32.mrf.mxu0
  %v1609 = vadd.f32 %v1176, %v1608
  %v1610 = vpop.f32.mrf.mxu0
  %v1611 = vadd.f32 %v1178, %v1610
  %1612 = vmatmul.bf16.gmra.mxu0 %v1472
  %v1613 = vpop.f32.mrf.mxu0
  %v1614 = vadd.f32 %v1181, %v1613
  %v1615 = vpop.f32.mrf.mxu0
  %v1616 = vadd.f32 %v1183, %v1615
  %1617 = vmatmul.bf16.gmra.mxu0 %v1475
  %v1618 = vpop.f32.mrf.mxu0
  %v1619 = vadd.f32 %v1186, %v1618
  %v1620 = vpop.f32.mrf.mxu0
  %v1621 = vadd.f32 %v1188, %v1620
  %1622 = vmatmul.bf16.gmra.mxu0 %v1478
  %v1623 = vpop.f32.mrf.mxu0
  %v1624 = vadd.f32 %v1191, %v1623
  %v1625 = vpop.f32.mrf.mxu0
  %v1626 = vadd.f32 %v1193, %v1625
  %1627 = vmatmul.bf16.gmra.mxu0 %v1481
  %v1628 = vpop.f32.mrf.mxu0
  %v1629 = vadd.f32 %v1196, %v1628
  %v1630 = vpop.f32.mrf.mxu0
  %v1631 = vadd.f32 %v1198, %v1630
  %1632 = vmatmul.bf16.gmra.mxu0 %v1484
  %v1633 = vpop.f32.mrf.mxu0
  %v1634 = vadd.f32 %v1201, %v1633
  %v1635 = vpop.f32.mrf.mxu0
  %v1636 = vadd.f32 %v1203, %v1635
  %1637 = vmatmul.bf16.gmra.mxu0 %v1487
  %v1638 = vpop.f32.mrf.mxu0
  %v1639 = vadd.f32 %v1206, %v1638
  %v1640 = vpop.f32.mrf.mxu0
  %v1641 = vadd.f32 %v1208, %v1640
  %1642 = vmatmul.bf16.gmra.mxu0 %v1490
  %v1643 = vpop.f32.mrf.mxu0
  %v1644 = vadd.f32 %v1211, %v1643
  %v1645 = vpop.f32.mrf.mxu0
  %v1646 = vadd.f32 %v1213, %v1645
  %1647 = vmatmul.bf16.gmra.mxu0 %v1493
  %v1648 = vpop.f32.mrf.mxu0
  %v1649 = vadd.f32 %v1216, %v1648
  %v1650 = vpop.f32.mrf.mxu0
  %v1651 = vadd.f32 %v1218, %v1650
  %1652 = vmatmul.bf16.gmra.mxu0 %v1496
  %v1653 = vpop.f32.mrf.mxu0
  %v1654 = vadd.f32 %v1221, %v1653
  %v1655 = vpop.f32.mrf.mxu0
  %v1656 = vadd.f32 %v1223, %v1655
  %1657 = vmatmul.bf16.gmra.mxu0 %v1499
  %v1658 = vpop.f32.mrf.mxu0
  %v1659 = vadd.f32 %v1226, %v1658
  %v1660 = vpop.f32.mrf.mxu0
  %v1661 = vadd.f32 %v1228, %v1660
  %1662 = vmatmul.bf16.gmra.mxu0 %v1502
  %v1663 = vpop.f32.mrf.mxu0
  %v1664 = vadd.f32 %v1231, %v1663
  %v1665 = vpop.f32.mrf.mxu0
  %v1666 = vadd.f32 %v1233, %v1665
  %1667 = vmatmul.bf16.gmra.mxu0 %v1505
  %v1668 = vpop.f32.mrf.mxu0
  %v1669 = vadd.f32 %v1236, %v1668
  %v1670 = vpop.f32.mrf.mxu0
  %v1671 = vadd.f32 %v1238, %v1670
  %1672 = vmatmul.bf16.gmra.mxu0 %v1508
  %v1673 = vpop.f32.mrf.mxu0
  %v1674 = vadd.f32 %v1241, %v1673
  %v1675 = vpop.f32.mrf.mxu0
  %v1676 = vadd.f32 %v1243, %v1675
  %1677 = vmatmul.bf16.gmra.mxu0 %v1511
  %v1678 = vpop.f32.mrf.mxu0
  %v1679 = vadd.f32 %v1246, %v1678
  %v1680 = vpop.f32.mrf.mxu0
  %v1681 = vadd.f32 %v1248, %v1680
  %1682 = vmatmul.bf16.gmra.mxu0 %v1514
  %v1683 = vpop.f32.mrf.mxu0
  %v1684 = vadd.f32 %v1251, %v1683
  %v1685 = vpop.f32.mrf.mxu0
  %v1686 = vadd.f32 %v1253, %v1685
  %1687 = vdwg.mxu0
  %s1688 = scalar_lea.vmem %s0, 12
  %v1689 = vld [vmem:[%s1688] sm:$0xf]
  %v1690 = vld [vmem:[%s1688 + $0x4] sm:$0xf]
  %v1691 = vld [vmem:[%s1688 + $0xc] sm:$0xf]
  %v1692 = vld [vmem:[%s1688 + $0x10] sm:$0xf]
  %v1693 = vld [vmem:[%s1688 + $0x18] sm:$0xf]
  %v1694 = vld [vmem:[%s1688 + $0x1c] sm:$0xf]
  %v1695 = vld [vmem:[%s1688 + $0x24] sm:$0xf]
  %v1696 = vld [vmem:[%s1688 + $0x28] sm:$0xf]
  %v1697 = vld [vmem:[%s1688 + $0x30] sm:$0xf]
  %v1698 = vld [vmem:[%s1688 + $0x34] sm:$0xf]
  %v1699 = vld [vmem:[%s1688 + $0x3c] sm:$0xf]
  %v1700 = vld [vmem:[%s1688 + $0x40] sm:$0xf]
  %v1701 = vld [vmem:[%s1688 + $0x48] sm:$0xf]
  %v1702 = vld [vmem:[%s1688 + $0x4c] sm:$0xf]
  %v1703 = vld [vmem:[%s1688 + $0x54] sm:$0xf]
  %v1704 = vld [vmem:[%s1688 + $0x58] sm:$0xf]
  %v1705 = vld [vmem:[%s1688 + $0x60] sm:$0xf]
  %v1706 = vld [vmem:[%s1688 + $0x64] sm:$0xf]
  %v1707 = vld [vmem:[%s1688 + $0x6c] sm:$0xf]
  %v1708 = vld [vmem:[%s1688 + $0x70] sm:$0xf]
  %v1709 = vld [vmem:[%s1688 + $0x78] sm:$0xf]
  %v1710 = vld [vmem:[%s1688 + $0x7c] sm:$0xf]
  %v1711 = vld [vmem:[%s1688 + $0x84] sm:$0xf]
  %v1712 = vld [vmem:[%s1688 + $0x88] sm:$0xf]
  %v1713 = vld [vmem:[%s1688 + $0x90] sm:$0xf]
  %v1714 = vld [vmem:[%s1688 + $0x94] sm:$0xf]
  %v1715 = vld [vmem:[%s1688 + $0x9c] sm:$0xf]
  %v1716 = vld [vmem:[%s1688 + $0xa0] sm:$0xf]
  %v1717 = vld [vmem:[%s1688 + $0xa8] sm:$0xf]
  %v1718 = vld [vmem:[%s1688 + $0xac] sm:$0xf]
  %v1719 = vld [vmem:[%s1688 + $0xb4] sm:$0xf]
  %v1720 = vld [vmem:[%s1688 + $0xb8] sm:$0xf]
  %v1721 = vld [vmem:[%s1688 + $0xcc] sm:$0xf]
  %v1722 = vld [vmem:[%s1688 + $0xd0] sm:$0xf]
  %v1723 = vld [vmem:[%s1688 + $0xd8] sm:$0xf]
  %v1724 = vld [vmem:[%s1688 + $0xdc] sm:$0xf]
  %v1725 = vld [vmem:[%s1688 + $0xe4] sm:$0xf]
  %v1726 = vld [vmem:[%s1688 + $0xe8] sm:$0xf]
  %v1727 = vld [vmem:[%s1688 + $0xf0] sm:$0xf]
  %v1728 = vld [vmem:[%s1688 + $0xf4] sm:$0xf]
  %v1729 = vld [vmem:[%s1688 + $0xfc] sm:$0xf]
  %v1730 = vld [vmem:[%s1688 + $0x100] sm:$0xf]
  %v1731 = vld [vmem:[%s1688 + $0x108] sm:$0xf]
  %v1732 = vld [vmem:[%s1688 + $0x10c] sm:$0xf]
  %v1733 = vld [vmem:[%s1688 + $0x114] sm:$0xf]
  %v1734 = vld [vmem:[%s1688 + $0x118] sm:$0xf]
  %v1735 = vld [vmem:[%s1688 + $0x120] sm:$0xf]
  %v1736 = vld [vmem:[%s1688 + $0x124] sm:$0xf]
  %v1737 = vld [vmem:[%s1688 + $0x12c] sm:$0xf]
  %v1738 = vld [vmem:[%s1688 + $0x130] sm:$0xf]
  %v1739 = vld [vmem:[%s1688 + $0x138] sm:$0xf]
  %v1740 = vld [vmem:[%s1688 + $0x13c] sm:$0xf]
  %v1741 = vld [vmem:[%s1688 + $0x144] sm:$0xf]
  %v1742 = vld [vmem:[%s1688 + $0x148] sm:$0xf]
  %v1743 = vld [vmem:[%s1688 + $0x150] sm:$0xf]
  %v1744 = vld [vmem:[%s1688 + $0x154] sm:$0xf]
  %v1745 = vld [vmem:[%s1688 + $0x15c] sm:$0xf]
  %v1746 = vld [vmem:[%s1688 + $0x160] sm:$0xf]
  %v1747 = vld [vmem:[%s1688 + $0x168] sm:$0xf]
  %v1748 = vld [vmem:[%s1688 + $0x16c] sm:$0xf]
  %v1749 = vld [vmem:[%s1688 + $0x174] sm:$0xf]
  %v1750 = vld [vmem:[%s1688 + $0x178] sm:$0xf]
  %v1751 = vld [vmem:[%s1688 + $0x180] sm:$0xf]
  %v1752 = vld [vmem:[%s1688 + $0x184] sm:$0xf]
  %s1753 = scalar_lea.vmem %s1, 16
  %v1754 = vld [vmem:[%s1753] sm:$0xf]
  %v1755 = vld [vmem:[%s1753 + $0x4] sm:$0x3]
  %v1820 = vunpack.c.l.b16 %v1689
  %v1821 = vunpack.c.l.b16 %v1690
  %v1822 = vunpack.c.l.b16 %v1691
  %v1823 = vunpack.c.l.b16 %v1692
  %v1824 = vunpack.c.l.b16 %v1693
  %v1825 = vunpack.c.l.b16 %v1694
  %v1826 = vunpack.c.l.b16 %v1695
  %v1827 = vunpack.c.l.b16 %v1696
  %v1828 = vunpack.c.l.b16 %v1697
  %v1829 = vunpack.c.l.b16 %v1698
  %v1830 = vunpack.c.l.b16 %v1699
  %v1831 = vunpack.c.l.b16 %v1700
  %v1832 = vunpack.c.l.b16 %v1701
  %v1833 = vunpack.c.l.b16 %v1702
  %v1834 = vunpack.c.l.b16 %v1703
  %v1835 = vunpack.c.l.b16 %v1704
  %v1836 = vunpack.c.l.b16 %v1705
  %v1837 = vunpack.c.l.b16 %v1706
  %v1838 = vunpack.c.l.b16 %v1707
  %v1839 = vunpack.c.l.b16 %v1708
  %v1840 = vunpack.c.l.b16 %v1709
  %v1841 = vunpack.c.l.b16 %v1710
  %v1842 = vunpack.c.l.b16 %v1711
  %v1843 = vunpack.c.l.b16 %v1712
  %v1844 = vunpack.c.l.b16 %v1713
  %v1845 = vunpack.c.l.b16 %v1714
  %v1846 = vunpack.c.l.b16 %v1715
  %v1847 = vunpack.c.l.b16 %v1716
  %v1848 = vunpack.c.l.b16 %v1717
  %v1849 = vunpack.c.l.b16 %v1718
  %v1850 = vunpack.c.l.b16 %v1719
  %v1851 = vunpack.c.l.b16 %v1720
  %v1852 = vunpack.c.l.b16 %v1721
  %v1853 = vunpack.c.l.b16 %v1722
  %v1854 = vunpack.c.l.b16 %v1723
  %v1855 = vunpack.c.l.b16 %v1724
  %v1856 = vunpack.c.l.b16 %v1725
  %v1857 = vunpack.c.l.b16 %v1726
  %v1858 = vunpack.c.l.b16 %v1727
  %v1859 = vunpack.c.l.b16 %v1728
  %v1860 = vunpack.c.l.b16 %v1729
  %v1861 = vunpack.c.l.b16 %v1730
  %v1862 = vunpack.c.l.b16 %v1731
  %v1863 = vunpack.c.l.b16 %v1732
  %v1864 = vunpack.c.l.b16 %v1733
  %v1865 = vunpack.c.l.b16 %v1734
  %v1866 = vunpack.c.l.b16 %v1735
  %v1867 = vunpack.c.l.b16 %v1736
  %v1868 = vunpack.c.l.b16 %v1737
  %v1869 = vunpack.c.l.b16 %v1738
  %v1870 = vunpack.c.l.b16 %v1739
  %v1871 = vunpack.c.l.b16 %v1740
  %v1872 = vunpack.c.l.b16 %v1741
  %v1873 = vunpack.c.l.b16 %v1742
  %v1874 = vunpack.c.l.b16 %v1743
  %v1875 = vunpack.c.l.b16 %v1744
  %v1876 = vunpack.c.l.b16 %v1745
  %v1877 = vunpack.c.l.b16 %v1746
  %v1878 = vunpack.c.l.b16 %v1747
  %v1879 = vunpack.c.l.b16 %v1748
  %v1880 = vunpack.c.l.b16 %v1749
  %v1881 = vunpack.c.l.b16 %v1750
  %v1882 = vunpack.c.l.b16 %v1751
  %v1883 = vunpack.c.l.b16 %v1752
  %v1884 = vpack.c.b16 %v1821, %v1820
  %v1885 = vpack.c.b16 %v1823, %v1822
  %v1886 = vpack.c.b16 %v1825, %v1824
  %v1887 = vpack.c.b16 %v1827, %v1826
  %v1888 = vpack.c.b16 %v1829, %v1828
  %v1889 = vpack.c.b16 %v1831, %v1830
  %v1890 = vpack.c.b16 %v1833, %v1832
  %v1891 = vpack.c.b16 %v1835, %v1834
  %v1892 = vpack.c.b16 %v1837, %v1836
  %v1893 = vpack.c.b16 %v1839, %v1838
  %v1894 = vpack.c.b16 %v1841, %v1840
  %v1895 = vpack.c.b16 %v1843, %v1842
  %v1896 = vpack.c.b16 %v1845, %v1844
  %v1897 = vpack.c.b16 %v1847, %v1846
  %v1898 = vpack.c.b16 %v1849, %v1848
  %v1899 = vpack.c.b16 %v1851, %v1850
  %v1900 = vpack.c.b16 %v1853, %v1852
  %v1901 = vpack.c.b16 %v1855, %v1854
  %v1902 = vpack.c.b16 %v1857, %v1856
  %v1903 = vpack.c.b16 %v1859, %v1858
  %v1904 = vpack.c.b16 %v1861, %v1860
  %v1905 = vpack.c.b16 %v1863, %v1862
  %v1906 = vpack.c.b16 %v1865, %v1864
  %v1907 = vpack.c.b16 %v1867, %v1866
  %v1908 = vpack.c.b16 %v1869, %v1868
  %v1909 = vpack.c.b16 %v1871, %v1870
  %v1910 = vpack.c.b16 %v1873, %v1872
  %v1911 = vpack.c.b16 %v1875, %v1874
  %v1912 = vpack.c.b16 %v1877, %v1876
  %v1913 = vpack.c.b16 %v1879, %v1878
  %v1914 = vpack.c.b16 %v1881, %v1880
  %v1915 = vpack.c.b16 %v1883, %v1882
  %v1918 = vunpack.c.l.b16 %v1754
  %v1919 = vunpack.c.l.b16 %v1755
  %v1920 = vpack.c.b16 %v1919, %v1918
  %v1922 = vsel %vm985, %v1884, 0
  %v1925 = vsel %vm985, %v1885, 0
  %v1928 = vsel %vm985, %v1886, 0
  %v1931 = vsel %vm985, %v1887, 0
  %v1934 = vsel %vm985, %v1888, 0
  %v1937 = vsel %vm985, %v1889, 0
  %v1940 = vsel %vm985, %v1890, 0
  %v1943 = vsel %vm985, %v1891, 0
  %v1946 = vsel %vm985, %v1892, 0
  %v1949 = vsel %vm985, %v1893, 0
  %v1952 = vsel %vm985, %v1894, 0
  %v1955 = vsel %vm985, %v1895, 0
  %v1958 = vsel %vm985, %v1896, 0
  %v1961 = vsel %vm985, %v1897, 0
  %v1964 = vsel %vm985, %v1898, 0
  %v1967 = vsel %vm985, %v1899, 0
  %v1970 = vsel %vm985, %v1900, 0
  %v1973 = vsel %vm985, %v1901, 0
  %v1976 = vsel %vm985, %v1902, 0
  %v1979 = vsel %vm985, %v1903, 0
  %v1982 = vsel %vm985, %v1904, 0
  %v1985 = vsel %vm985, %v1905, 0
  %v1988 = vsel %vm985, %v1906, 0
  %v1991 = vsel %vm985, %v1907, 0
  %v1994 = vsel %vm985, %v1908, 0
  %v1997 = vsel %vm985, %v1909, 0
  %v2000 = vsel %vm985, %v1910, 0
  %v2003 = vsel %vm985, %v1911, 0
  %v2006 = vsel %vm985, %v1912, 0
  %v2009 = vsel %vm985, %v1913, 0
  %v2012 = vsel %vm985, %v1914, 0
  %v2015 = vsel %vm985, %v1915, 0
  %v2018 = vsel %vm1082, %v1920, 0
  %2020 = vmatpush.bf16.msra.mxu0 0
  %2021 = vmatpush.bf16.msra.mxu0 0
  %2022 = vmatpush.bf16.msra.mxu0 0
  %2023 = vmatpush.bf16.msra.mxu0 0
  %2024 = vmatpush.bf16.msra.mxu0 0
  %2025 = vmatpush.bf16.msra.mxu0 0
  %2026 = vmatpush.bf16.msra.mxu0 0
  %2027 = vmatpush.bf16.msra.mxu0 %v2018
  %2028 = vmatmul.bf16.gmra.mxu0 %v1922
  %v2029 = vpop.f32.mrf.mxu0
  %v2030 = vadd.f32 0.0, %v2029
  %v2031 = vpop.f32.mrf.mxu0
  %v2032 = vadd.f32 0.0, %v2031
  %2033 = vmatmul.bf16.gmra.mxu0 %v1925
  %v2034 = vpop.f32.mrf.mxu0
  %v2035 = vadd.f32 0.0, %v2034
  %v2036 = vpop.f32.mrf.mxu0
  %v2037 = vadd.f32 0.0, %v2036
  %2038 = vmatmul.bf16.gmra.mxu0 %v1928
  %v2039 = vpop.f32.mrf.mxu0
  %v2040 = vadd.f32 0.0, %v2039
  %v2041 = vpop.f32.mrf.mxu0
  %v2042 = vadd.f32 0.0, %v2041
  %2043 = vmatmul.bf16.gmra.mxu0 %v1931
  %v2044 = vpop.f32.mrf.mxu0
  %v2045 = vadd.f32 0.0, %v2044
  %v2046 = vpop.f32.mrf.mxu0
  %v2047 = vadd.f32 0.0, %v2046
  %2048 = vmatmul.bf16.gmra.mxu0 %v1934
  %v2049 = vpop.f32.mrf.mxu0
  %v2050 = vadd.f32 0.0, %v2049
  %v2051 = vpop.f32.mrf.mxu0
  %v2052 = vadd.f32 0.0, %v2051
  %2053 = vmatmul.bf16.gmra.mxu0 %v1937
  %v2054 = vpop.f32.mrf.mxu0
  %v2055 = vadd.f32 0.0, %v2054
  %v2056 = vpop.f32.mrf.mxu0
  %v2057 = vadd.f32 0.0, %v2056
  %2058 = vmatmul.bf16.gmra.mxu0 %v1940
  %v2059 = vpop.f32.mrf.mxu0
  %v2060 = vadd.f32 0.0, %v2059
  %v2061 = vpop.f32.mrf.mxu0
  %v2062 = vadd.f32 0.0, %v2061
  %2063 = vmatmul.bf16.gmra.mxu0 %v1943
  %v2064 = vpop.f32.mrf.mxu0
  %v2065 = vadd.f32 0.0, %v2064
  %v2066 = vpop.f32.mrf.mxu0
  %v2067 = vadd.f32 0.0, %v2066
  %2068 = vmatmul.bf16.gmra.mxu0 %v1946
  %v2069 = vpop.f32.mrf.mxu0
  %v2070 = vadd.f32 0.0, %v2069
  %v2071 = vpop.f32.mrf.mxu0
  %v2072 = vadd.f32 0.0, %v2071
  %2073 = vmatmul.bf16.gmra.mxu0 %v1949
  %v2074 = vpop.f32.mrf.mxu0
  %v2075 = vadd.f32 0.0, %v2074
  %v2076 = vpop.f32.mrf.mxu0
  %v2077 = vadd.f32 0.0, %v2076
  %2078 = vmatmul.bf16.gmra.mxu0 %v1952
  %v2079 = vpop.f32.mrf.mxu0
  %v2080 = vadd.f32 0.0, %v2079
  %v2081 = vpop.f32.mrf.mxu0
  %v2082 = vadd.f32 0.0, %v2081
  %2083 = vmatmul.bf16.gmra.mxu0 %v1955
  %v2084 = vpop.f32.mrf.mxu0
  %v2085 = vadd.f32 0.0, %v2084
  %v2086 = vpop.f32.mrf.mxu0
  %v2087 = vadd.f32 0.0, %v2086
  %2088 = vmatmul.bf16.gmra.mxu0 %v1958
  %v2089 = vpop.f32.mrf.mxu0
  %v2090 = vadd.f32 0.0, %v2089
  %v2091 = vpop.f32.mrf.mxu0
  %v2092 = vadd.f32 0.0, %v2091
  %2093 = vmatmul.bf16.gmra.mxu0 %v1961
  %v2094 = vpop.f32.mrf.mxu0
  %v2095 = vadd.f32 0.0, %v2094
  %v2096 = vpop.f32.mrf.mxu0
  %v2097 = vadd.f32 0.0, %v2096
  %2098 = vmatmul.bf16.gmra.mxu0 %v1964
  %v2099 = vpop.f32.mrf.mxu0
  %v2100 = vadd.f32 0.0, %v2099
  %v2101 = vpop.f32.mrf.mxu0
  %v2102 = vadd.f32 0.0, %v2101
  %2103 = vmatmul.bf16.gmra.mxu0 %v1967
  %v2104 = vpop.f32.mrf.mxu0
  %v2105 = vadd.f32 0.0, %v2104
  %v2106 = vpop.f32.mrf.mxu0
  %v2107 = vadd.f32 0.0, %v2106
  %2108 = vmatmul.bf16.gmra.mxu0 %v1970
  %v2109 = vpop.f32.mrf.mxu0
  %v2110 = vadd.f32 0.0, %v2109
  %v2111 = vpop.f32.mrf.mxu0
  %v2112 = vadd.f32 0.0, %v2111
  %2113 = vmatmul.bf16.gmra.mxu0 %v1973
  %v2114 = vpop.f32.mrf.mxu0
  %v2115 = vadd.f32 0.0, %v2114
  %v2116 = vpop.f32.mrf.mxu0
  %v2117 = vadd.f32 0.0, %v2116
  %2118 = vmatmul.bf16.gmra.mxu0 %v1976
  %v2119 = vpop.f32.mrf.mxu0
  %v2120 = vadd.f32 0.0, %v2119
  %v2121 = vpop.f32.mrf.mxu0
  %v2122 = vadd.f32 0.0, %v2121
  %2123 = vmatmul.bf16.gmra.mxu0 %v1979
  %v2124 = vpop.f32.mrf.mxu0
  %v2125 = vadd.f32 0.0, %v2124
  %v2126 = vpop.f32.mrf.mxu0
  %v2127 = vadd.f32 0.0, %v2126
  %2128 = vmatmul.bf16.gmra.mxu0 %v1982
  %v2129 = vpop.f32.mrf.mxu0
  %v2130 = vadd.f32 0.0, %v2129
  %v2131 = vpop.f32.mrf.mxu0
  %v2132 = vadd.f32 0.0, %v2131
  %2133 = vmatmul.bf16.gmra.mxu0 %v1985
  %v2134 = vpop.f32.mrf.mxu0
  %v2135 = vadd.f32 0.0, %v2134
  %v2136 = vpop.f32.mrf.mxu0
  %v2137 = vadd.f32 0.0, %v2136
  %2138 = vmatmul.bf16.gmra.mxu0 %v1988
  %v2139 = vpop.f32.mrf.mxu0
  %v2140 = vadd.f32 0.0, %v2139
  %v2141 = vpop.f32.mrf.mxu0
  %v2142 = vadd.f32 0.0, %v2141
  %2143 = vmatmul.bf16.gmra.mxu0 %v1991
  %v2144 = vpop.f32.mrf.mxu0
  %v2145 = vadd.f32 0.0, %v2144
  %v2146 = vpop.f32.mrf.mxu0
  %v2147 = vadd.f32 0.0, %v2146
  %2148 = vmatmul.bf16.gmra.mxu0 %v1994
  %v2149 = vpop.f32.mrf.mxu0
  %v2150 = vadd.f32 0.0, %v2149
  %v2151 = vpop.f32.mrf.mxu0
  %v2152 = vadd.f32 0.0, %v2151
  %2153 = vmatmul.bf16.gmra.mxu0 %v1997
  %v2154 = vpop.f32.mrf.mxu0
  %v2155 = vadd.f32 0.0, %v2154
  %v2156 = vpop.f32.mrf.mxu0
  %v2157 = vadd.f32 0.0, %v2156
  %2158 = vmatmul.bf16.gmra.mxu0 %v2000
  %v2159 = vpop.f32.mrf.mxu0
  %v2160 = vadd.f32 0.0, %v2159
  %v2161 = vpop.f32.mrf.mxu0
  %v2162 = vadd.f32 0.0, %v2161
  %2163 = vmatmul.bf16.gmra.mxu0 %v2003
  %v2164 = vpop.f32.mrf.mxu0
  %v2165 = vadd.f32 0.0, %v2164
  %v2166 = vpop.f32.mrf.mxu0
  %v2167 = vadd.f32 0.0, %v2166
  %2168 = vmatmul.bf16.gmra.mxu0 %v2006
  %v2169 = vpop.f32.mrf.mxu0
  %v2170 = vadd.f32 0.0, %v2169
  %v2171 = vpop.f32.mrf.mxu0
  %v2172 = vadd.f32 0.0, %v2171
  %2173 = vmatmul.bf16.gmra.mxu0 %v2009
  %v2174 = vpop.f32.mrf.mxu0
  %v2175 = vadd.f32 0.0, %v2174
  %v2176 = vpop.f32.mrf.mxu0
  %v2177 = vadd.f32 0.0, %v2176
  %2178 = vmatmul.bf16.gmra.mxu0 %v2012
  %v2179 = vpop.f32.mrf.mxu0
  %v2180 = vadd.f32 0.0, %v2179
  %v2181 = vpop.f32.mrf.mxu0
  %v2182 = vadd.f32 0.0, %v2181
  %2183 = vmatmul.bf16.gmra.mxu0 %v2015
  %v2184 = vpop.f32.mrf.mxu0
  %v2185 = vadd.f32 0.0, %v2184
  %v2186 = vpop.f32.mrf.mxu0
  %v2187 = vadd.f32 0.0, %v2186
  %2188 = vdwg.mxu0
  %v2189 = vadd.f32 %v1529, %v2030
  %v2190 = vadd.f32 %v1531, %v2032
  %v2191 = vadd.f32 %v1534, %v2035
  %v2192 = vadd.f32 %v1536, %v2037
  %v2193 = vadd.f32 %v1539, %v2040
  %v2194 = vadd.f32 %v1541, %v2042
  %v2195 = vadd.f32 %v1544, %v2045
  %v2196 = vadd.f32 %v1546, %v2047
  %v2197 = vadd.f32 %v1549, %v2050
  %v2198 = vadd.f32 %v1551, %v2052
  %v2199 = vadd.f32 %v1554, %v2055
  %v2200 = vadd.f32 %v1556, %v2057
  %v2201 = vadd.f32 %v1559, %v2060
  %v2202 = vadd.f32 %v1561, %v2062
  %v2203 = vadd.f32 %v1564, %v2065
  %v2204 = vadd.f32 %v1566, %v2067
  %v2205 = vadd.f32 %v1569, %v2070
  %v2206 = vadd.f32 %v1571, %v2072
  %v2207 = vadd.f32 %v1574, %v2075
  %v2208 = vadd.f32 %v1576, %v2077
  %v2209 = vadd.f32 %v1579, %v2080
  %v2210 = vadd.f32 %v1581, %v2082
  %v2211 = vadd.f32 %v1584, %v2085
  %v2212 = vadd.f32 %v1586, %v2087
  %v2213 = vadd.f32 %v1589, %v2090
  %v2214 = vadd.f32 %v1591, %v2092
  %v2215 = vadd.f32 %v1594, %v2095
  %v2216 = vadd.f32 %v1596, %v2097
  %v2217 = vadd.f32 %v1599, %v2100
  %v2218 = vadd.f32 %v1601, %v2102
  %v2219 = vadd.f32 %v1604, %v2105
  %v2220 = vadd.f32 %v1606, %v2107
  %v2221 = vadd.f32 %v1609, %v2110
  %v2222 = vadd.f32 %v1611, %v2112
  %v2223 = vadd.f32 %v1614, %v2115
  %v2224 = vadd.f32 %v1616, %v2117
  %v2225 = vadd.f32 %v1619, %v2120
  %v2226 = vadd.f32 %v1621, %v2122
  %v2227 = vadd.f32 %v1624, %v2125
  %v2228 = vadd.f32 %v1626, %v2127
  %v2229 = vadd.f32 %v1629, %v2130
  %v2230 = vadd.f32 %v1631, %v2132
  %v2231 = vadd.f32 %v1634, %v2135
  %v2232 = vadd.f32 %v1636, %v2137
  %v2233 = vadd.f32 %v1639, %v2140
  %v2234 = vadd.f32 %v1641, %v2142
  %v2235 = vadd.f32 %v1644, %v2145
  %v2236 = vadd.f32 %v1646, %v2147
  %v2237 = vadd.f32 %v1649, %v2150
  %v2238 = vadd.f32 %v1651, %v2152
  %v2239 = vadd.f32 %v1654, %v2155
  %v2240 = vadd.f32 %v1656, %v2157
  %v2241 = vadd.f32 %v1659, %v2160
  %v2242 = vadd.f32 %v1661, %v2162
  %v2243 = vadd.f32 %v1664, %v2165
  %v2244 = vadd.f32 %v1666, %v2167
  %v2245 = vadd.f32 %v1669, %v2170
  %v2246 = vadd.f32 %v1671, %v2172
  %v2247 = vadd.f32 %v1674, %v2175
  %v2248 = vadd.f32 %v1676, %v2177
  %v2249 = vadd.f32 %v1679, %v2180
  %v2250 = vadd.f32 %v1681, %v2182
  %v2251 = vadd.f32 %v1684, %v2185
  %v2252 = vadd.f32 %v1686, %v2187
  %v2253 = vld [vmem:[%s1688] sm:$0xf]
  %v2254 = vld [vmem:[%s1688 + $0x4] sm:$0xf]
  %v2255 = vld [vmem:[%s1688 + $0x8] sm:$0x1]
  %v2256 = vld [vmem:[%s1688 + $0xc] sm:$0xf]
  %v2257 = vld [vmem:[%s1688 + $0x10] sm:$0xf]
  %v2258 = vld [vmem:[%s1688 + $0x14] sm:$0x1]
  %v2259 = vld [vmem:[%s1688 + $0x18] sm:$0xf]
  %v2260 = vld [vmem:[%s1688 + $0x1c] sm:$0xf]
  %v2261 = vld [vmem:[%s1688 + $0x20] sm:$0x1]
  %v2262 = vld [vmem:[%s1688 + $0x24] sm:$0xf]
  %v2263 = vld [vmem:[%s1688 + $0x28] sm:$0xf]
  %v2264 = vld [vmem:[%s1688 + $0x2c] sm:$0x1]
  %v2265 = vld [vmem:[%s1688 + $0x30] sm:$0xf]
  %v2266 = vld [vmem:[%s1688 + $0x34] sm:$0xf]
  %v2267 = vld [vmem:[%s1688 + $0x38] sm:$0x1]
  %v2268 = vld [vmem:[%s1688 + $0x3c] sm:$0xf]
  %v2269 = vld [vmem:[%s1688 + $0x40] sm:$0xf]
  %v2270 = vld [vmem:[%s1688 + $0x44] sm:$0x1]
  %v2271 = vld [vmem:[%s1688 + $0x48] sm:$0xf]
  %v2272 = vld [vmem:[%s1688 + $0x4c] sm:$0xf]
  %v2273 = vld [vmem:[%s1688 + $0x50] sm:$0x1]
  %v2274 = vld [vmem:[%s1688 + $0x54] sm:$0xf]
  %v2275 = vld [vmem:[%s1688 + $0x58] sm:$0xf]
  %v2276 = vld [vmem:[%s1688 + $0x5c] sm:$0x1]
  %v2277 = vld [vmem:[%s1688 + $0x60] sm:$0xf]
  %v2278 = vld [vmem:[%s1688 + $0x64] sm:$0xf]
  %v2279 = vld [vmem:[%s1688 + $0x68] sm:$0x1]
  %v2280 = vld [vmem:[%s1688 + $0x6c] sm:$0xf]
  %v2281 = vld [vmem:[%s1688 + $0x70] sm:$0xf]
  %v2282 = vld [vmem:[%s1688 + $0x74] sm:$0x1]
  %v2283 = vld [vmem:[%s1688 + $0x78] sm:$0xf]
  %v2284 = vld [vmem:[%s1688 + $0x7c] sm:$0xf]
  %v2285 = vld [vmem:[%s1688 + $0x80] sm:$0x1]
  %v2286 = vld [vmem:[%s1688 + $0x84] sm:$0xf]
  %v2287 = vld [vmem:[%s1688 + $0x88] sm:$0xf]
  %v2288 = vld [vmem:[%s1688 + $0x8c] sm:$0x1]
  %v2289 = vld [vmem:[%s1688 + $0x90] sm:$0xf]
  %v2290 = vld [vmem:[%s1688 + $0x94] sm:$0xf]
  %v2291 = vld [vmem:[%s1688 + $0x98] sm:$0x1]
  %v2292 = vld [vmem:[%s1688 + $0x9c] sm:$0xf]
  %v2293 = vld [vmem:[%s1688 + $0xa0] sm:$0xf]
  %v2294 = vld [vmem:[%s1688 + $0xa4] sm:$0x1]
  %v2295 = vld [vmem:[%s1688 + $0xa8] sm:$0xf]
  %v2296 = vld [vmem:[%s1688 + $0xac] sm:$0xf]
  %v2297 = vld [vmem:[%s1688 + $0xb0] sm:$0x1]
  %v2298 = vld [vmem:[%s1688 + $0xb4] sm:$0xf]
  %v2299 = vld [vmem:[%s1688 + $0xb8] sm:$0xf]
  %v2300 = vld [vmem:[%s1688 + $0xbc] sm:$0x1]
  %v2301 = vld [vmem:[%s1688 + $0xcc] sm:$0xf]
  %v2302 = vld [vmem:[%s1688 + $0xd0] sm:$0xf]
  %v2303 = vld [vmem:[%s1688 + $0xd4] sm:$0x1]
  %v2304 = vld [vmem:[%s1688 + $0xd8] sm:$0xf]
  %v2305 = vld [vmem:[%s1688 + $0xdc] sm:$0xf]
  %v2306 = vld [vmem:[%s1688 + $0xe0] sm:$0x1]
  %v2307 = vld [vmem:[%s1688 + $0xe4] sm:$0xf]
  %v2308 = vld [vmem:[%s1688 + $0xe8] sm:$0xf]
  %v2309 = vld [vmem:[%s1688 + $0xec] sm:$0x1]
  %v2310 = vld [vmem:[%s1688 + $0xf0] sm:$0xf]
  %v2311 = vld [vmem:[%s1688 + $0xf4] sm:$0xf]
  %v2312 = vld [vmem:[%s1688 + $0xf8] sm:$0x1]
  %v2313 = vld [vmem:[%s1688 + $0xfc] sm:$0xf]
  %v2314 = vld [vmem:[%s1688 + $0x100] sm:$0xf]
  %v2315 = vld [vmem:[%s1688 + $0x104] sm:$0x1]
  %v2316 = vld [vmem:[%s1688 + $0x108] sm:$0xf]
  %v2317 = vld [vmem:[%s1688 + $0x10c] sm:$0xf]
  %v2318 = vld [vmem:[%s1688 + $0x110] sm:$0x1]
  %v2319 = vld [vmem:[%s1688 + $0x114] sm:$0xf]
  %v2320 = vld [vmem:[%s1688 + $0x118] sm:$0xf]
  %v2321 = vld [vmem:[%s1688 + $0x11c] sm:$0x1]
  %v2322 = vld [vmem:[%s1688 + $0x120] sm:$0xf]
  %v2323 = vld [vmem:[%s1688 + $0x124] sm:$0xf]
  %v2324 = vld [vmem:[%s1688 + $0x128] sm:$0x1]
  %v2325 = vld [vmem:[%s1688 + $0x12c] sm:$0xf]
  %v2326 = vld [vmem:[%s1688 + $0x130] sm:$0xf]
  %v2327 = vld [vmem:[%s1688 + $0x134] sm:$0x1]
  %v2328 = vld [vmem:[%s1688 + $0x138] sm:$0xf]
  %v2329 = vld [vmem:[%s1688 + $0x13c] sm:$0xf]
  %v2330 = vld [vmem:[%s1688 + $0x140] sm:$0x1]
  %v2331 = vld [vmem:[%s1688 + $0x144] sm:$0xf]
  %v2332 = vld [vmem:[%s1688 + $0x148] sm:$0xf]
  %v2333 = vld [vmem:[%s1688 + $0x14c] sm:$0x1]
  %v2334 = vld [vmem:[%s1688 + $0x150] sm:$0xf]
  %v2335 = vld [vmem:[%s1688 + $0x154] sm:$0xf]
  %v2336 = vld [vmem:[%s1688 + $0x158] sm:$0x1]
  %v2337 = vld [vmem:[%s1688 + $0x15c] sm:$0xf]
  %v2338 = vld [vmem:[%s1688 + $0x160] sm:$0xf]
  %v2339 = vld [vmem:[%s1688 + $0x164] sm:$0x1]
  %v2340 = vld [vmem:[%s1688 + $0x168] sm:$0xf]
  %v2341 = vld [vmem:[%s1688 + $0x16c] sm:$0xf]
  %v2342 = vld [vmem:[%s1688 + $0x170] sm:$0x1]
  %v2343 = vld [vmem:[%s1688 + $0x174] sm:$0xf]
  %v2344 = vld [vmem:[%s1688 + $0x178] sm:$0xf]
  %v2345 = vld [vmem:[%s1688 + $0x17c] sm:$0x1]
  %v2346 = vld [vmem:[%s1688 + $0x180] sm:$0xf]
  %v2347 = vld [vmem:[%s1688 + $0x184] sm:$0xf]
  %v2348 = vld [vmem:[%s1688 + $0x188] sm:$0x1]
  %v2350 = vshrl.u32 %v2253, 16
  %v2352 = vrot.slane %v2350, 4
  %v2353 = vshll.u32 %v2253, 16
  %v2355 = vrot.slane %v2353, 5
  %v2356 = vor.u32 %v2352, %v2355
  %v2357 = vrot.slane %v2356, 4
  %v2359 = vshll.u32 %v2254, 16
  %v2361 = vrot.slane %v2359, 5
  %v2362 = vsel %vm112, %v2357, %v2361
  %v2363 = vshrl.u32 %v2254, 16
  %v2365 = vrot.slane %v2363, 4
  %v2366 = vor.u32 %v2365, %v2361
  %v2367 = vrot.slane %v2366, 4
  %v2369 = vshll.u32 %v2255, 16
  %v2371 = vrot.slane %v2369, 5
  %v2372 = vsel %vm112, %v2367, %v2371
  %v2374 = vshrl.u32 %v2256, 16
  %v2376 = vrot.slane %v2374, 4
  %v2377 = vshll.u32 %v2256, 16
  %v2379 = vrot.slane %v2377, 5
  %v2380 = vor.u32 %v2376, %v2379
  %v2381 = vrot.slane %v2380, 4
  %v2383 = vshll.u32 %v2257, 16
  %v2385 = vrot.slane %v2383, 5
  %v2386 = vsel %vm112, %v2381, %v2385
  %v2387 = vshrl.u32 %v2257, 16
  %v2389 = vrot.slane %v2387, 4
  %v2390 = vor.u32 %v2389, %v2385
  %v2391 = vrot.slane %v2390, 4
  %v2393 = vshll.u32 %v2258, 16
  %v2395 = vrot.slane %v2393, 5
  %v2396 = vsel %vm112, %v2391, %v2395
  %v2398 = vshrl.u32 %v2259, 16
  %v2400 = vrot.slane %v2398, 4
  %v2401 = vshll.u32 %v2259, 16
  %v2403 = vrot.slane %v2401, 5
  %v2404 = vor.u32 %v2400, %v2403
  %v2405 = vrot.slane %v2404, 4
  %v2407 = vshll.u32 %v2260, 16
  %v2409 = vrot.slane %v2407, 5
  %v2410 = vsel %vm112, %v2405, %v2409
  %v2411 = vshrl.u32 %v2260, 16
  %v2413 = vrot.slane %v2411, 4
  %v2414 = vor.u32 %v2413, %v2409
  %v2415 = vrot.slane %v2414, 4
  %v2417 = vshll.u32 %v2261, 16
  %v2419 = vrot.slane %v2417, 5
  %v2420 = vsel %vm112, %v2415, %v2419
  %v2422 = vshrl.u32 %v2262, 16
  %v2424 = vrot.slane %v2422, 4
  %v2425 = vshll.u32 %v2262, 16
  %v2427 = vrot.slane %v2425, 5
  %v2428 = vor.u32 %v2424, %v2427
  %v2429 = vrot.slane %v2428, 4
  %v2431 = vshll.u32 %v2263, 16
  %v2433 = vrot.slane %v2431, 5
  %v2434 = vsel %vm112, %v2429, %v2433
  %v2435 = vshrl.u32 %v2263, 16
  %v2437 = vrot.slane %v2435, 4
  %v2438 = vor.u32 %v2437, %v2433
  %v2439 = vrot.slane %v2438, 4
  %v2441 = vshll.u32 %v2264, 16
  %v2443 = vrot.slane %v2441, 5
  %v2444 = vsel %vm112, %v2439, %v2443
  %v2446 = vshrl.u32 %v2265, 16
  %v2448 = vrot.slane %v2446, 4
  %v2449 = vshll.u32 %v2265, 16
  %v2451 = vrot.slane %v2449, 5
  %v2452 = vor.u32 %v2448, %v2451
  %v2453 = vrot.slane %v2452, 4
  %v2455 = vshll.u32 %v2266, 16
  %v2457 = vrot.slane %v2455, 5
  %v2458 = vsel %vm112, %v2453, %v2457
  %v2459 = vshrl.u32 %v2266, 16
  %v2461 = vrot.slane %v2459, 4
  %v2462 = vor.u32 %v2461, %v2457
  %v2463 = vrot.slane %v2462, 4
  %v2465 = vshll.u32 %v2267, 16
  %v2467 = vrot.slane %v2465, 5
  %v2468 = vsel %vm112, %v2463, %v2467
  %v2470 = vshrl.u32 %v2268, 16
  %v2472 = vrot.slane %v2470, 4
  %v2473 = vshll.u32 %v2268, 16
  %v2475 = vrot.slane %v2473, 5
  %v2476 = vor.u32 %v2472, %v2475
  %v2477 = vrot.slane %v2476, 4
  %v2479 = vshll.u32 %v2269, 16
  %v2481 = vrot.slane %v2479, 5
  %v2482 = vsel %vm112, %v2477, %v2481
  %v2483 = vshrl.u32 %v2269, 16
  %v2485 = vrot.slane %v2483, 4
  %v2486 = vor.u32 %v2485, %v2481
  %v2487 = vrot.slane %v2486, 4
  %v2489 = vshll.u32 %v2270, 16
  %v2491 = vrot.slane %v2489, 5
  %v2492 = vsel %vm112, %v2487, %v2491
  %v2494 = vshrl.u32 %v2271, 16
  %v2496 = vrot.slane %v2494, 4
  %v2497 = vshll.u32 %v2271, 16
  %v2499 = vrot.slane %v2497, 5
  %v2500 = vor.u32 %v2496, %v2499
  %v2501 = vrot.slane %v2500, 4
  %v2503 = vshll.u32 %v2272, 16
  %v2505 = vrot.slane %v2503, 5
  %v2506 = vsel %vm112, %v2501, %v2505
  %v2507 = vshrl.u32 %v2272, 16
  %v2509 = vrot.slane %v2507, 4
  %v2510 = vor.u32 %v2509, %v2505
  %v2511 = vrot.slane %v2510, 4
  %v2513 = vshll.u32 %v2273, 16
  %v2515 = vrot.slane %v2513, 5
  %v2516 = vsel %vm112, %v2511, %v2515
  %v2518 = vshrl.u32 %v2274, 16
  %v2520 = vrot.slane %v2518, 4
  %v2521 = vshll.u32 %v2274, 16
  %v2523 = vrot.slane %v2521, 5
  %v2524 = vor.u32 %v2520, %v2523
  %v2525 = vrot.slane %v2524, 4
  %v2527 = vshll.u32 %v2275, 16
  %v2529 = vrot.slane %v2527, 5
  %v2530 = vsel %vm112, %v2525, %v2529
  %v2531 = vshrl.u32 %v2275, 16
  %v2533 = vrot.slane %v2531, 4
  %v2534 = vor.u32 %v2533, %v2529
  %v2535 = vrot.slane %v2534, 4
  %v2537 = vshll.u32 %v2276, 16
  %v2539 = vrot.slane %v2537, 5
  %v2540 = vsel %vm112, %v2535, %v2539
  %v2542 = vshrl.u32 %v2277, 16
  %v2544 = vrot.slane %v2542, 4
  %v2545 = vshll.u32 %v2277, 16
  %v2547 = vrot.slane %v2545, 5
  %v2548 = vor.u32 %v2544, %v2547
  %v2549 = vrot.slane %v2548, 4
  %v2551 = vshll.u32 %v2278, 16
  %v2553 = vrot.slane %v2551, 5
  %v2554 = vsel %vm112, %v2549, %v2553
  %v2555 = vshrl.u32 %v2278, 16
  %v2557 = vrot.slane %v2555, 4
  %v2558 = vor.u32 %v2557, %v2553
  %v2559 = vrot.slane %v2558, 4
  %v2561 = vshll.u32 %v2279, 16
  %v2563 = vrot.slane %v2561, 5
  %v2564 = vsel %vm112, %v2559, %v2563
  %v2566 = vshrl.u32 %v2280, 16
  %v2568 = vrot.slane %v2566, 4
  %v2569 = vshll.u32 %v2280, 16
  %v2571 = vrot.slane %v2569, 5
  %v2572 = vor.u32 %v2568, %v2571
  %v2573 = vrot.slane %v2572, 4
  %v2575 = vshll.u32 %v2281, 16
  %v2577 = vrot.slane %v2575, 5
  %v2578 = vsel %vm112, %v2573, %v2577
  %v2579 = vshrl.u32 %v2281, 16
  %v2581 = vrot.slane %v2579, 4
  %v2582 = vor.u32 %v2581, %v2577
  %v2583 = vrot.slane %v2582, 4
  %v2585 = vshll.u32 %v2282, 16
  %v2587 = vrot.slane %v2585, 5
  %v2588 = vsel %vm112, %v2583, %v2587
  %v2590 = vshrl.u32 %v2283, 16
  %v2592 = vrot.slane %v2590, 4
  %v2593 = vshll.u32 %v2283, 16
  %v2595 = vrot.slane %v2593, 5
  %v2596 = vor.u32 %v2592, %v2595
  %v2597 = vrot.slane %v2596, 4
  %v2599 = vshll.u32 %v2284, 16
  %v2601 = vrot.slane %v2599, 5
  %v2602 = vsel %vm112, %v2597, %v2601
  %v2603 = vshrl.u32 %v2284, 16
  %v2605 = vrot.slane %v2603, 4
  %v2606 = vor.u32 %v2605, %v2601
  %v2607 = vrot.slane %v2606, 4
  %v2609 = vshll.u32 %v2285, 16
  %v2611 = vrot.slane %v2609, 5
  %v2612 = vsel %vm112, %v2607, %v2611
  %v2614 = vshrl.u32 %v2286, 16
  %v2616 = vrot.slane %v2614, 4
  %v2617 = vshll.u32 %v2286, 16
  %v2619 = vrot.slane %v2617, 5
  %v2620 = vor.u32 %v2616, %v2619
  %v2621 = vrot.slane %v2620, 4
  %v2623 = vshll.u32 %v2287, 16
  %v2625 = vrot.slane %v2623, 5
  %v2626 = vsel %vm112, %v2621, %v2625
  %v2627 = vshrl.u32 %v2287, 16
  %v2629 = vrot.slane %v2627, 4
  %v2630 = vor.u32 %v2629, %v2625
  %v2631 = vrot.slane %v2630, 4
  %v2633 = vshll.u32 %v2288, 16
  %v2635 = vrot.slane %v2633, 5
  %v2636 = vsel %vm112, %v2631, %v2635
  %v2638 = vshrl.u32 %v2289, 16
  %v2640 = vrot.slane %v2638, 4
  %v2641 = vshll.u32 %v2289, 16
  %v2643 = vrot.slane %v2641, 5
  %v2644 = vor.u32 %v2640, %v2643
  %v2645 = vrot.slane %v2644, 4
  %v2647 = vshll.u32 %v2290, 16
  %v2649 = vrot.slane %v2647, 5
  %v2650 = vsel %vm112, %v2645, %v2649
  %v2651 = vshrl.u32 %v2290, 16
  %v2653 = vrot.slane %v2651, 4
  %v2654 = vor.u32 %v2653, %v2649
  %v2655 = vrot.slane %v2654, 4
  %v2657 = vshll.u32 %v2291, 16
  %v2659 = vrot.slane %v2657, 5
  %v2660 = vsel %vm112, %v2655, %v2659
  %v2662 = vshrl.u32 %v2292, 16
  %v2664 = vrot.slane %v2662, 4
  %v2665 = vshll.u32 %v2292, 16
  %v2667 = vrot.slane %v2665, 5
  %v2668 = vor.u32 %v2664, %v2667
  %v2669 = vrot.slane %v2668, 4
  %v2671 = vshll.u32 %v2293, 16
  %v2673 = vrot.slane %v2671, 5
  %v2674 = vsel %vm112, %v2669, %v2673
  %v2675 = vshrl.u32 %v2293, 16
  %v2677 = vrot.slane %v2675, 4
  %v2678 = vor.u32 %v2677, %v2673
  %v2679 = vrot.slane %v2678, 4
  %v2681 = vshll.u32 %v2294, 16
  %v2683 = vrot.slane %v2681, 5
  %v2684 = vsel %vm112, %v2679, %v2683
  %v2686 = vshrl.u32 %v2295, 16
  %v2688 = vrot.slane %v2686, 4
  %v2689 = vshll.u32 %v2295, 16
  %v2691 = vrot.slane %v2689, 5
  %v2692 = vor.u32 %v2688, %v2691
  %v2693 = vrot.slane %v2692, 4
  %v2695 = vshll.u32 %v2296, 16
  %v2697 = vrot.slane %v2695, 5
  %v2698 = vsel %vm112, %v2693, %v2697
  %v2699 = vshrl.u32 %v2296, 16
  %v2701 = vrot.slane %v2699, 4
  %v2702 = vor.u32 %v2701, %v2697
  %v2703 = vrot.slane %v2702, 4
  %v2705 = vshll.u32 %v2297, 16
  %v2707 = vrot.slane %v2705, 5
  %v2708 = vsel %vm112, %v2703, %v2707
  %v2710 = vshrl.u32 %v2298, 16
  %v2712 = vrot.slane %v2710, 4
  %v2713 = vshll.u32 %v2298, 16
  %v2715 = vrot.slane %v2713, 5
  %v2716 = vor.u32 %v2712, %v2715
  %v2717 = vrot.slane %v2716, 4
  %v2719 = vshll.u32 %v2299, 16
  %v2721 = vrot.slane %v2719, 5
  %v2722 = vsel %vm112, %v2717, %v2721
  %v2723 = vshrl.u32 %v2299, 16
  %v2725 = vrot.slane %v2723, 4
  %v2726 = vor.u32 %v2725, %v2721
  %v2727 = vrot.slane %v2726, 4
  %v2729 = vshll.u32 %v2300, 16
  %v2731 = vrot.slane %v2729, 5
  %v2732 = vsel %vm112, %v2727, %v2731
  %v2734 = vshrl.u32 %v2301, 16
  %v2736 = vrot.slane %v2734, 4
  %v2737 = vshll.u32 %v2301, 16
  %v2739 = vrot.slane %v2737, 5
  %v2740 = vor.u32 %v2736, %v2739
  %v2741 = vrot.slane %v2740, 4
  %v2743 = vshll.u32 %v2302, 16
  %v2745 = vrot.slane %v2743, 5
  %v2746 = vsel %vm112, %v2741, %v2745
  %v2747 = vshrl.u32 %v2302, 16
  %v2749 = vrot.slane %v2747, 4
  %v2750 = vor.u32 %v2749, %v2745
  %v2751 = vrot.slane %v2750, 4
  %v2753 = vshll.u32 %v2303, 16
  %v2755 = vrot.slane %v2753, 5
  %v2756 = vsel %vm112, %v2751, %v2755
  %v2758 = vshrl.u32 %v2304, 16
  %v2760 = vrot.slane %v2758, 4
  %v2761 = vshll.u32 %v2304, 16
  %v2763 = vrot.slane %v2761, 5
  %v2764 = vor.u32 %v2760, %v2763
  %v2765 = vrot.slane %v2764, 4
  %v2767 = vshll.u32 %v2305, 16
  %v2769 = vrot.slane %v2767, 5
  %v2770 = vsel %vm112, %v2765, %v2769
  %v2771 = vshrl.u32 %v2305, 16
  %v2773 = vrot.slane %v2771, 4
  %v2774 = vor.u32 %v2773, %v2769
  %v2775 = vrot.slane %v2774, 4
  %v2777 = vshll.u32 %v2306, 16
  %v2779 = vrot.slane %v2777, 5
  %v2780 = vsel %vm112, %v2775, %v2779
  %v2782 = vshrl.u32 %v2307, 16
  %v2784 = vrot.slane %v2782, 4
  %v2785 = vshll.u32 %v2307, 16
  %v2787 = vrot.slane %v2785, 5
  %v2788 = vor.u32 %v2784, %v2787
  %v2789 = vrot.slane %v2788, 4
  %v2791 = vshll.u32 %v2308, 16
  %v2793 = vrot.slane %v2791, 5
  %v2794 = vsel %vm112, %v2789, %v2793
  %v2795 = vshrl.u32 %v2308, 16
  %v2797 = vrot.slane %v2795, 4
  %v2798 = vor.u32 %v2797, %v2793
  %v2799 = vrot.slane %v2798, 4
  %v2801 = vshll.u32 %v2309, 16
  %v2803 = vrot.slane %v2801, 5
  %v2804 = vsel %vm112, %v2799, %v2803
  %v2806 = vshrl.u32 %v2310, 16
  %v2808 = vrot.slane %v2806, 4
  %v2809 = vshll.u32 %v2310, 16
  %v2811 = vrot.slane %v2809, 5
  %v2812 = vor.u32 %v2808, %v2811
  %v2813 = vrot.slane %v2812, 4
  %v2815 = vshll.u32 %v2311, 16
  %v2817 = vrot.slane %v2815, 5
  %v2818 = vsel %vm112, %v2813, %v2817
  %v2819 = vshrl.u32 %v2311, 16
  %v2821 = vrot.slane %v2819, 4
  %v2822 = vor.u32 %v2821, %v2817
  %v2823 = vrot.slane %v2822, 4
  %v2825 = vshll.u32 %v2312, 16
  %v2827 = vrot.slane %v2825, 5
  %v2828 = vsel %vm112, %v2823, %v2827
  %v2830 = vshrl.u32 %v2313, 16
  %v2832 = vrot.slane %v2830, 4
  %v2833 = vshll.u32 %v2313, 16
  %v2835 = vrot.slane %v2833, 5
  %v2836 = vor.u32 %v2832, %v2835
  %v2837 = vrot.slane %v2836, 4
  %v2839 = vshll.u32 %v2314, 16
  %v2841 = vrot.slane %v2839, 5
  %v2842 = vsel %vm112, %v2837, %v2841
  %v2843 = vshrl.u32 %v2314, 16
  %v2845 = vrot.slane %v2843, 4
  %v2846 = vor.u32 %v2845, %v2841
  %v2847 = vrot.slane %v2846, 4
  %v2849 = vshll.u32 %v2315, 16
  %v2851 = vrot.slane %v2849, 5
  %v2852 = vsel %vm112, %v2847, %v2851
  %v2854 = vshrl.u32 %v2316, 16
  %v2856 = vrot.slane %v2854, 4
  %v2857 = vshll.u32 %v2316, 16
  %v2859 = vrot.slane %v2857, 5
  %v2860 = vor.u32 %v2856, %v2859
  %v2861 = vrot.slane %v2860, 4
  %v2863 = vshll.u32 %v2317, 16
  %v2865 = vrot.slane %v2863, 5
  %v2866 = vsel %vm112, %v2861, %v2865
  %v2867 = vshrl.u32 %v2317, 16
  %v2869 = vrot.slane %v2867, 4
  %v2870 = vor.u32 %v2869, %v2865
  %v2871 = vrot.slane %v2870, 4
  %v2873 = vshll.u32 %v2318, 16
  %v2875 = vrot.slane %v2873, 5
  %v2876 = vsel %vm112, %v2871, %v2875
  %v2878 = vshrl.u32 %v2319, 16
  %v2880 = vrot.slane %v2878, 4
  %v2881 = vshll.u32 %v2319, 16
  %v2883 = vrot.slane %v2881, 5
  %v2884 = vor.u32 %v2880, %v2883
  %v2885 = vrot.slane %v2884, 4
  %v2887 = vshll.u32 %v2320, 16
  %v2889 = vrot.slane %v2887, 5
  %v2890 = vsel %vm112, %v2885, %v2889
  %v2891 = vshrl.u32 %v2320, 16
  %v2893 = vrot.slane %v2891, 4
  %v2894 = vor.u32 %v2893, %v2889
  %v2895 = vrot.slane %v2894, 4
  %v2897 = vshll.u32 %v2321, 16
  %v2899 = vrot.slane %v2897, 5
  %v2900 = vsel %vm112, %v2895, %v2899
  %v2902 = vshrl.u32 %v2322, 16
  %v2904 = vrot.slane %v2902, 4
  %v2905 = vshll.u32 %v2322, 16
  %v2907 = vrot.slane %v2905, 5
  %v2908 = vor.u32 %v2904, %v2907
  %v2909 = vrot.slane %v2908, 4
  %v2911 = vshll.u32 %v2323, 16
  %v2913 = vrot.slane %v2911, 5
  %v2914 = vsel %vm112, %v2909, %v2913
  %v2915 = vshrl.u32 %v2323, 16
  %v2917 = vrot.slane %v2915, 4
  %v2918 = vor.u32 %v2917, %v2913
  %v2919 = vrot.slane %v2918, 4
  %v2921 = vshll.u32 %v2324, 16
  %v2923 = vrot.slane %v2921, 5
  %v2924 = vsel %vm112, %v2919, %v2923
  %v2926 = vshrl.u32 %v2325, 16
  %v2928 = vrot.slane %v2926, 4
  %v2929 = vshll.u32 %v2325, 16
  %v2931 = vrot.slane %v2929, 5
  %v2932 = vor.u32 %v2928, %v2931
  %v2933 = vrot.slane %v2932, 4
  %v2935 = vshll.u32 %v2326, 16
  %v2937 = vrot.slane %v2935, 5
  %v2938 = vsel %vm112, %v2933, %v2937
  %v2939 = vshrl.u32 %v2326, 16
  %v2941 = vrot.slane %v2939, 4
  %v2942 = vor.u32 %v2941, %v2937
  %v2943 = vrot.slane %v2942, 4
  %v2945 = vshll.u32 %v2327, 16
  %v2947 = vrot.slane %v2945, 5
  %v2948 = vsel %vm112, %v2943, %v2947
  %v2950 = vshrl.u32 %v2328, 16
  %v2952 = vrot.slane %v2950, 4
  %v2953 = vshll.u32 %v2328, 16
  %v2955 = vrot.slane %v2953, 5
  %v2956 = vor.u32 %v2952, %v2955
  %v2957 = vrot.slane %v2956, 4
  %v2959 = vshll.u32 %v2329, 16
  %v2961 = vrot.slane %v2959, 5
  %v2962 = vsel %vm112, %v2957, %v2961
  %v2963 = vshrl.u32 %v2329, 16
  %v2965 = vrot.slane %v2963, 4
  %v2966 = vor.u32 %v2965, %v2961
  %v2967 = vrot.slane %v2966, 4
  %v2969 = vshll.u32 %v2330, 16
  %v2971 = vrot.slane %v2969, 5
  %v2972 = vsel %vm112, %v2967, %v2971
  %v2974 = vshrl.u32 %v2331, 16
  %v2976 = vrot.slane %v2974, 4
  %v2977 = vshll.u32 %v2331, 16
  %v2979 = vrot.slane %v2977, 5
  %v2980 = vor.u32 %v2976, %v2979
  %v2981 = vrot.slane %v2980, 4
  %v2983 = vshll.u32 %v2332, 16
  %v2985 = vrot.slane %v2983, 5
  %v2986 = vsel %vm112, %v2981, %v2985
  %v2987 = vshrl.u32 %v2332, 16
  %v2989 = vrot.slane %v2987, 4
  %v2990 = vor.u32 %v2989, %v2985
  %v2991 = vrot.slane %v2990, 4
  %v2993 = vshll.u32 %v2333, 16
  %v2995 = vrot.slane %v2993, 5
  %v2996 = vsel %vm112, %v2991, %v2995
  %v2998 = vshrl.u32 %v2334, 16
  %v3000 = vrot.slane %v2998, 4
  %v3001 = vshll.u32 %v2334, 16
  %v3003 = vrot.slane %v3001, 5
  %v3004 = vor.u32 %v3000, %v3003
  %v3005 = vrot.slane %v3004, 4
  %v3007 = vshll.u32 %v2335, 16
  %v3009 = vrot.slane %v3007, 5
  %v3010 = vsel %vm112, %v3005, %v3009
  %v3011 = vshrl.u32 %v2335, 16
  %v3013 = vrot.slane %v3011, 4
  %v3014 = vor.u32 %v3013, %v3009
  %v3015 = vrot.slane %v3014, 4
  %v3017 = vshll.u32 %v2336, 16
  %v3019 = vrot.slane %v3017, 5
  %v3020 = vsel %vm112, %v3015, %v3019
  %v3022 = vshrl.u32 %v2337, 16
  %v3024 = vrot.slane %v3022, 4
  %v3025 = vshll.u32 %v2337, 16
  %v3027 = vrot.slane %v3025, 5
  %v3028 = vor.u32 %v3024, %v3027
  %v3029 = vrot.slane %v3028, 4
  %v3031 = vshll.u32 %v2338, 16
  %v3033 = vrot.slane %v3031, 5
  %v3034 = vsel %vm112, %v3029, %v3033
  %v3035 = vshrl.u32 %v2338, 16
  %v3037 = vrot.slane %v3035, 4
  %v3038 = vor.u32 %v3037, %v3033
  %v3039 = vrot.slane %v3038, 4
  %v3041 = vshll.u32 %v2339, 16
  %v3043 = vrot.slane %v3041, 5
  %v3044 = vsel %vm112, %v3039, %v3043
  %v3046 = vshrl.u32 %v2340, 16
  %v3048 = vrot.slane %v3046, 4
  %v3049 = vshll.u32 %v2340, 16
  %v3051 = vrot.slane %v3049, 5
  %v3052 = vor.u32 %v3048, %v3051
  %v3053 = vrot.slane %v3052, 4
  %v3055 = vshll.u32 %v2341, 16
  %v3057 = vrot.slane %v3055, 5
  %v3058 = vsel %vm112, %v3053, %v3057
  %v3059 = vshrl.u32 %v2341, 16
  %v3061 = vrot.slane %v3059, 4
  %v3062 = vor.u32 %v3061, %v3057
  %v3063 = vrot.slane %v3062, 4
  %v3065 = vshll.u32 %v2342, 16
  %v3067 = vrot.slane %v3065, 5
  %v3068 = vsel %vm112, %v3063, %v3067
  %v3070 = vshrl.u32 %v2343, 16
  %v3072 = vrot.slane %v3070, 4
  %v3073 = vshll.u32 %v2343, 16
  %v3075 = vrot.slane %v3073, 5
  %v3076 = vor.u32 %v3072, %v3075
  %v3077 = vrot.slane %v3076, 4
  %v3079 = vshll.u32 %v2344, 16
  %v3081 = vrot.slane %v3079, 5
  %v3082 = vsel %vm112, %v3077, %v3081
  %v3083 = vshrl.u32 %v2344, 16
  %v3085 = vrot.slane %v3083, 4
  %v3086 = vor.u32 %v3085, %v3081
  %v3087 = vrot.slane %v3086, 4
  %v3089 = vshll.u32 %v2345, 16
  %v3091 = vrot.slane %v3089, 5
  %v3092 = vsel %vm112, %v3087, %v3091
  %v3094 = vshrl.u32 %v2346, 16
  %v3096 = vrot.slane %v3094, 4
  %v3097 = vshll.u32 %v2346, 16
  %v3099 = vrot.slane %v3097, 5
  %v3100 = vor.u32 %v3096, %v3099
  %v3101 = vrot.slane %v3100, 4
  %v3103 = vshll.u32 %v2347, 16
  %v3105 = vrot.slane %v3103, 5
  %v3106 = vsel %vm112, %v3101, %v3105
  %v3107 = vshrl.u32 %v2347, 16
  %v3109 = vrot.slane %v3107, 4
  %v3110 = vor.u32 %v3109, %v3105
  %v3111 = vrot.slane %v3110, 4
  %v3113 = vshll.u32 %v2348, 16
  %v3115 = vrot.slane %v3113, 5
  %v3116 = vsel %vm112, %v3111, %v3115
  %s3117 = scalar_lea.vmem %s1, 24
  %v3118 = vld [vmem:[%s3117] sm:$0xf]
  %v3119 = vld [vmem:[%s3117 + $0x4] sm:$0x3]
  %v3120 = vunpack.c.l.b16 %v2362
  %v3121 = vunpack.c.l.b16 %v2372
  %v3122 = vunpack.c.l.b16 %v2386
  %v3123 = vunpack.c.l.b16 %v2396
  %v3124 = vunpack.c.l.b16 %v2410
  %v3125 = vunpack.c.l.b16 %v2420
  %v3126 = vunpack.c.l.b16 %v2434
  %v3127 = vunpack.c.l.b16 %v2444
  %v3128 = vunpack.c.l.b16 %v2458
  %v3129 = vunpack.c.l.b16 %v2468
  %v3130 = vunpack.c.l.b16 %v2482
  %v3131 = vunpack.c.l.b16 %v2492
  %v3132 = vunpack.c.l.b16 %v2506
  %v3133 = vunpack.c.l.b16 %v2516
  %v3134 = vunpack.c.l.b16 %v2530
  %v3135 = vunpack.c.l.b16 %v2540
  %v3136 = vunpack.c.l.b16 %v2554
  %v3137 = vunpack.c.l.b16 %v2564
  %v3138 = vunpack.c.l.b16 %v2578
  %v3139 = vunpack.c.l.b16 %v2588
  %v3140 = vunpack.c.l.b16 %v2602
  %v3141 = vunpack.c.l.b16 %v2612
  %v3142 = vunpack.c.l.b16 %v2626
  %v3143 = vunpack.c.l.b16 %v2636
  %v3144 = vunpack.c.l.b16 %v2650
  %v3145 = vunpack.c.l.b16 %v2660
  %v3146 = vunpack.c.l.b16 %v2674
  %v3147 = vunpack.c.l.b16 %v2684
  %v3148 = vunpack.c.l.b16 %v2698
  %v3149 = vunpack.c.l.b16 %v2708
  %v3150 = vunpack.c.l.b16 %v2722
  %v3151 = vunpack.c.l.b16 %v2732
  %v3152 = vunpack.c.l.b16 %v2746
  %v3153 = vunpack.c.l.b16 %v2756
  %v3154 = vunpack.c.l.b16 %v2770
  %v3155 = vunpack.c.l.b16 %v2780
  %v3156 = vunpack.c.l.b16 %v2794
  %v3157 = vunpack.c.l.b16 %v2804
  %v3158 = vunpack.c.l.b16 %v2818
  %v3159 = vunpack.c.l.b16 %v2828
  %v3160 = vunpack.c.l.b16 %v2842
  %v3161 = vunpack.c.l.b16 %v2852
  %v3162 = vunpack.c.l.b16 %v2866
  %v3163 = vunpack.c.l.b16 %v2876
  %v3164 = vunpack.c.l.b16 %v2890
  %v3165 = vunpack.c.l.b16 %v2900
  %v3166 = vunpack.c.l.b16 %v2914
  %v3167 = vunpack.c.l.b16 %v2924
  %v3168 = vunpack.c.l.b16 %v2938
  %v3169 = vunpack.c.l.b16 %v2948
  %v3170 = vunpack.c.l.b16 %v2962
  %v3171 = vunpack.c.l.b16 %v2972
  %v3172 = vunpack.c.l.b16 %v2986
  %v3173 = vunpack.c.l.b16 %v2996
  %v3174 = vunpack.c.l.b16 %v3010
  %v3175 = vunpack.c.l.b16 %v3020
  %v3176 = vunpack.c.l.b16 %v3034
  %v3177 = vunpack.c.l.b16 %v3044
  %v3178 = vunpack.c.l.b16 %v3058
  %v3179 = vunpack.c.l.b16 %v3068
  %v3180 = vunpack.c.l.b16 %v3082
  %v3181 = vunpack.c.l.b16 %v3092
  %v3182 = vunpack.c.l.b16 %v3106
  %v3183 = vunpack.c.l.b16 %v3116
  %v3184 = vpack.c.b16 %v3121, %v3120
  %v3185 = vpack.c.b16 %v3123, %v3122
  %v3186 = vpack.c.b16 %v3125, %v3124
  %v3187 = vpack.c.b16 %v3127, %v3126
  %v3188 = vpack.c.b16 %v3129, %v3128
  %v3189 = vpack.c.b16 %v3131, %v3130
  %v3190 = vpack.c.b16 %v3133, %v3132
  %v3191 = vpack.c.b16 %v3135, %v3134
  %v3192 = vpack.c.b16 %v3137, %v3136
  %v3193 = vpack.c.b16 %v3139, %v3138
  %v3194 = vpack.c.b16 %v3141, %v3140
  %v3195 = vpack.c.b16 %v3143, %v3142
  %v3196 = vpack.c.b16 %v3145, %v3144
  %v3197 = vpack.c.b16 %v3147, %v3146
  %v3198 = vpack.c.b16 %v3149, %v3148
  %v3199 = vpack.c.b16 %v3151, %v3150
  %v3200 = vpack.c.b16 %v3153, %v3152
  %v3201 = vpack.c.b16 %v3155, %v3154
  %v3202 = vpack.c.b16 %v3157, %v3156
  %v3203 = vpack.c.b16 %v3159, %v3158
  %v3204 = vpack.c.b16 %v3161, %v3160
  %v3205 = vpack.c.b16 %v3163, %v3162
  %v3206 = vpack.c.b16 %v3165, %v3164
  %v3207 = vpack.c.b16 %v3167, %v3166
  %v3208 = vpack.c.b16 %v3169, %v3168
  %v3209 = vpack.c.b16 %v3171, %v3170
  %v3210 = vpack.c.b16 %v3173, %v3172
  %v3211 = vpack.c.b16 %v3175, %v3174
  %v3212 = vpack.c.b16 %v3177, %v3176
  %v3213 = vpack.c.b16 %v3179, %v3178
  %v3214 = vpack.c.b16 %v3181, %v3180
  %v3215 = vpack.c.b16 %v3183, %v3182
  %v3218 = vunpack.c.l.b16 %v3118
  %v3219 = vunpack.c.l.b16 %v3119
  %v3220 = vpack.c.b16 %v3219, %v3218
  %v3222 = vsel %vm985, %v3184, 0
  %v3225 = vsel %vm985, %v3185, 0
  %v3228 = vsel %vm985, %v3186, 0
  %v3231 = vsel %vm985, %v3187, 0
  %v3234 = vsel %vm985, %v3188, 0
  %v3237 = vsel %vm985, %v3189, 0
  %v3240 = vsel %vm985, %v3190, 0
  %v3243 = vsel %vm985, %v3191, 0
  %v3246 = vsel %vm985, %v3192, 0
  %v3249 = vsel %vm985, %v3193, 0
  %v3252 = vsel %vm985, %v3194, 0
  %v3255 = vsel %vm985, %v3195, 0
  %v3258 = vsel %vm985, %v3196, 0
  %v3261 = vsel %vm985, %v3197, 0
  %v3264 = vsel %vm985, %v3198, 0
  %v3267 = vsel %vm985, %v3199, 0
  %v3270 = vsel %vm985, %v3200, 0
  %v3273 = vsel %vm985, %v3201, 0
  %v3276 = vsel %vm985, %v3202, 0
  %v3279 = vsel %vm985, %v3203, 0
  %v3282 = vsel %vm985, %v3204, 0
  %v3285 = vsel %vm985, %v3205, 0
  %v3288 = vsel %vm985, %v3206, 0
  %v3291 = vsel %vm985, %v3207, 0
  %v3294 = vsel %vm985, %v3208, 0
  %v3297 = vsel %vm985, %v3209, 0
  %v3300 = vsel %vm985, %v3210, 0
  %v3303 = vsel %vm985, %v3211, 0
  %v3306 = vsel %vm985, %v3212, 0
  %v3309 = vsel %vm985, %v3213, 0
  %v3312 = vsel %vm985, %v3214, 0
  %v3315 = vsel %vm985, %v3215, 0
  %v3318 = vsel %vm1082, %v3220, 0
  %3320 = vmatpush.bf16.msra.mxu0 0
  %3321 = vmatpush.bf16.msra.mxu0 0
  %3322 = vmatpush.bf16.msra.mxu0 0
  %3323 = vmatpush.bf16.msra.mxu0 0
  %3324 = vmatpush.bf16.msra.mxu0 0
  %3325 = vmatpush.bf16.msra.mxu0 0
  %3326 = vmatpush.bf16.msra.mxu0 0
  %3327 = vmatpush.bf16.msra.mxu0 %v3318
  %3328 = vmatmul.bf16.gmra.mxu0 %v3222
  %v3329 = vpop.f32.mrf.mxu0
  %v3330 = vadd.f32 0.0, %v3329
  %v3331 = vpop.f32.mrf.mxu0
  %v3332 = vadd.f32 0.0, %v3331
  %3333 = vmatmul.bf16.gmra.mxu0 %v3225
  %v3334 = vpop.f32.mrf.mxu0
  %v3335 = vadd.f32 0.0, %v3334
  %v3336 = vpop.f32.mrf.mxu0
  %v3337 = vadd.f32 0.0, %v3336
  %3338 = vmatmul.bf16.gmra.mxu0 %v3228
  %v3339 = vpop.f32.mrf.mxu0
  %v3340 = vadd.f32 0.0, %v3339
  %v3341 = vpop.f32.mrf.mxu0
  %v3342 = vadd.f32 0.0, %v3341
  %3343 = vmatmul.bf16.gmra.mxu0 %v3231
  %v3344 = vpop.f32.mrf.mxu0
  %v3345 = vadd.f32 0.0, %v3344
  %v3346 = vpop.f32.mrf.mxu0
  %v3347 = vadd.f32 0.0, %v3346
  %3348 = vmatmul.bf16.gmra.mxu0 %v3234
  %v3349 = vpop.f32.mrf.mxu0
  %v3350 = vadd.f32 0.0, %v3349
  %v3351 = vpop.f32.mrf.mxu0
  %v3352 = vadd.f32 0.0, %v3351
  %3353 = vmatmul.bf16.gmra.mxu0 %v3237
  %v3354 = vpop.f32.mrf.mxu0
  %v3355 = vadd.f32 0.0, %v3354
  %v3356 = vpop.f32.mrf.mxu0
  %v3357 = vadd.f32 0.0, %v3356
  %3358 = vmatmul.bf16.gmra.mxu0 %v3240
  %v3359 = vpop.f32.mrf.mxu0
  %v3360 = vadd.f32 0.0, %v3359
  %v3361 = vpop.f32.mrf.mxu0
  %v3362 = vadd.f32 0.0, %v3361
  %3363 = vmatmul.bf16.gmra.mxu0 %v3243
  %v3364 = vpop.f32.mrf.mxu0
  %v3365 = vadd.f32 0.0, %v3364
  %v3366 = vpop.f32.mrf.mxu0
  %v3367 = vadd.f32 0.0, %v3366
  %3368 = vmatmul.bf16.gmra.mxu0 %v3246
  %v3369 = vpop.f32.mrf.mxu0
  %v3370 = vadd.f32 0.0, %v3369
  %v3371 = vpop.f32.mrf.mxu0
  %v3372 = vadd.f32 0.0, %v3371
  %3373 = vmatmul.bf16.gmra.mxu0 %v3249
  %v3374 = vpop.f32.mrf.mxu0
  %v3375 = vadd.f32 0.0, %v3374
  %v3376 = vpop.f32.mrf.mxu0
  %v3377 = vadd.f32 0.0, %v3376
  %3378 = vmatmul.bf16.gmra.mxu0 %v3252
  %v3379 = vpop.f32.mrf.mxu0
  %v3380 = vadd.f32 0.0, %v3379
  %v3381 = vpop.f32.mrf.mxu0
  %v3382 = vadd.f32 0.0, %v3381
  %3383 = vmatmul.bf16.gmra.mxu0 %v3255
  %v3384 = vpop.f32.mrf.mxu0
  %v3385 = vadd.f32 0.0, %v3384
  %v3386 = vpop.f32.mrf.mxu0
  %v3387 = vadd.f32 0.0, %v3386
  %3388 = vmatmul.bf16.gmra.mxu0 %v3258
  %v3389 = vpop.f32.mrf.mxu0
  %v3390 = vadd.f32 0.0, %v3389
  %v3391 = vpop.f32.mrf.mxu0
  %v3392 = vadd.f32 0.0, %v3391
  %3393 = vmatmul.bf16.gmra.mxu0 %v3261
  %v3394 = vpop.f32.mrf.mxu0
  %v3395 = vadd.f32 0.0, %v3394
  %v3396 = vpop.f32.mrf.mxu0
  %v3397 = vadd.f32 0.0, %v3396
  %3398 = vmatmul.bf16.gmra.mxu0 %v3264
  %v3399 = vpop.f32.mrf.mxu0
  %v3400 = vadd.f32 0.0, %v3399
  %v3401 = vpop.f32.mrf.mxu0
  %v3402 = vadd.f32 0.0, %v3401
  %3403 = vmatmul.bf16.gmra.mxu0 %v3267
  %v3404 = vpop.f32.mrf.mxu0
  %v3405 = vadd.f32 0.0, %v3404
  %v3406 = vpop.f32.mrf.mxu0
  %v3407 = vadd.f32 0.0, %v3406
  %3408 = vmatmul.bf16.gmra.mxu0 %v3270
  %v3409 = vpop.f32.mrf.mxu0
  %v3410 = vadd.f32 0.0, %v3409
  %v3411 = vpop.f32.mrf.mxu0
  %v3412 = vadd.f32 0.0, %v3411
  %3413 = vmatmul.bf16.gmra.mxu0 %v3273
  %v3414 = vpop.f32.mrf.mxu0
  %v3415 = vadd.f32 0.0, %v3414
  %v3416 = vpop.f32.mrf.mxu0
  %v3417 = vadd.f32 0.0, %v3416
  %3418 = vmatmul.bf16.gmra.mxu0 %v3276
  %v3419 = vpop.f32.mrf.mxu0
  %v3420 = vadd.f32 0.0, %v3419
  %v3421 = vpop.f32.mrf.mxu0
  %v3422 = vadd.f32 0.0, %v3421
  %3423 = vmatmul.bf16.gmra.mxu0 %v3279
  %v3424 = vpop.f32.mrf.mxu0
  %v3425 = vadd.f32 0.0, %v3424
  %v3426 = vpop.f32.mrf.mxu0
  %v3427 = vadd.f32 0.0, %v3426
  %3428 = vmatmul.bf16.gmra.mxu0 %v3282
  %v3429 = vpop.f32.mrf.mxu0
  %v3430 = vadd.f32 0.0, %v3429
  %v3431 = vpop.f32.mrf.mxu0
  %v3432 = vadd.f32 0.0, %v3431
  %3433 = vmatmul.bf16.gmra.mxu0 %v3285
  %v3434 = vpop.f32.mrf.mxu0
  %v3435 = vadd.f32 0.0, %v3434
  %v3436 = vpop.f32.mrf.mxu0
  %v3437 = vadd.f32 0.0, %v3436
  %3438 = vmatmul.bf16.gmra.mxu0 %v3288
  %v3439 = vpop.f32.mrf.mxu0
  %v3440 = vadd.f32 0.0, %v3439
  %v3441 = vpop.f32.mrf.mxu0
  %v3442 = vadd.f32 0.0, %v3441
  %3443 = vmatmul.bf16.gmra.mxu0 %v3291
  %v3444 = vpop.f32.mrf.mxu0
  %v3445 = vadd.f32 0.0, %v3444
  %v3446 = vpop.f32.mrf.mxu0
  %v3447 = vadd.f32 0.0, %v3446
  %3448 = vmatmul.bf16.gmra.mxu0 %v3294
  %v3449 = vpop.f32.mrf.mxu0
  %v3450 = vadd.f32 0.0, %v3449
  %v3451 = vpop.f32.mrf.mxu0
  %v3452 = vadd.f32 0.0, %v3451
  %3453 = vmatmul.bf16.gmra.mxu0 %v3297
  %v3454 = vpop.f32.mrf.mxu0
  %v3455 = vadd.f32 0.0, %v3454
  %v3456 = vpop.f32.mrf.mxu0
  %v3457 = vadd.f32 0.0, %v3456
  %3458 = vmatmul.bf16.gmra.mxu0 %v3300
  %v3459 = vpop.f32.mrf.mxu0
  %v3460 = vadd.f32 0.0, %v3459
  %v3461 = vpop.f32.mrf.mxu0
  %v3462 = vadd.f32 0.0, %v3461
  %3463 = vmatmul.bf16.gmra.mxu0 %v3303
  %v3464 = vpop.f32.mrf.mxu0
  %v3465 = vadd.f32 0.0, %v3464
  %v3466 = vpop.f32.mrf.mxu0
  %v3467 = vadd.f32 0.0, %v3466
  %3468 = vmatmul.bf16.gmra.mxu0 %v3306
  %v3469 = vpop.f32.mrf.mxu0
  %v3470 = vadd.f32 0.0, %v3469
  %v3471 = vpop.f32.mrf.mxu0
  %v3472 = vadd.f32 0.0, %v3471
  %3473 = vmatmul.bf16.gmra.mxu0 %v3309
  %v3474 = vpop.f32.mrf.mxu0
  %v3475 = vadd.f32 0.0, %v3474
  %v3476 = vpop.f32.mrf.mxu0
  %v3477 = vadd.f32 0.0, %v3476
  %3478 = vmatmul.bf16.gmra.mxu0 %v3312
  %v3479 = vpop.f32.mrf.mxu0
  %v3480 = vadd.f32 0.0, %v3479
  %v3481 = vpop.f32.mrf.mxu0
  %v3482 = vadd.f32 0.0, %v3481
  %3483 = vmatmul.bf16.gmra.mxu0 %v3315
  %v3484 = vpop.f32.mrf.mxu0
  %v3485 = vadd.f32 0.0, %v3484
  %v3486 = vpop.f32.mrf.mxu0
  %v3487 = vadd.f32 0.0, %v3486
  %3488 = vdwg.mxu0
  %v3489 = vadd.f32 %v2189, %v3330
  %v3490 = vadd.f32 %v2190, %v3332
  %v3491 = vadd.f32 %v2191, %v3335
  %v3492 = vadd.f32 %v2192, %v3337
  %v3493 = vadd.f32 %v2193, %v3340
  %v3494 = vadd.f32 %v2194, %v3342
  %v3495 = vadd.f32 %v2195, %v3345
  %v3496 = vadd.f32 %v2196, %v3347
  %v3497 = vadd.f32 %v2197, %v3350
  %v3498 = vadd.f32 %v2198, %v3352
  %v3499 = vadd.f32 %v2199, %v3355
  %v3500 = vadd.f32 %v2200, %v3357
  %v3501 = vadd.f32 %v2201, %v3360
  %v3502 = vadd.f32 %v2202, %v3362
  %v3503 = vadd.f32 %v2203, %v3365
  %v3504 = vadd.f32 %v2204, %v3367
  %v3505 = vadd.f32 %v2205, %v3370
  %v3506 = vadd.f32 %v2206, %v3372
  %v3507 = vadd.f32 %v2207, %v3375
  %v3508 = vadd.f32 %v2208, %v3377
  %v3509 = vadd.f32 %v2209, %v3380
  %v3510 = vadd.f32 %v2210, %v3382
  %v3511 = vadd.f32 %v2211, %v3385
  %v3512 = vadd.f32 %v2212, %v3387
  %v3513 = vadd.f32 %v2213, %v3390
  %v3514 = vadd.f32 %v2214, %v3392
  %v3515 = vadd.f32 %v2215, %v3395
  %v3516 = vadd.f32 %v2216, %v3397
  %v3517 = vadd.f32 %v2217, %v3400
  %v3518 = vadd.f32 %v2218, %v3402
  %v3519 = vadd.f32 %v2219, %v3405
  %v3520 = vadd.f32 %v2220, %v3407
  %v3521 = vadd.f32 %v2221, %v3410
  %v3522 = vadd.f32 %v2222, %v3412
  %v3523 = vadd.f32 %v2223, %v3415
  %v3524 = vadd.f32 %v2224, %v3417
  %v3525 = vadd.f32 %v2225, %v3420
  %v3526 = vadd.f32 %v2226, %v3422
  %v3527 = vadd.f32 %v2227, %v3425
  %v3528 = vadd.f32 %v2228, %v3427
  %v3529 = vadd.f32 %v2229, %v3430
  %v3530 = vadd.f32 %v2230, %v3432
  %v3531 = vadd.f32 %v2231, %v3435
  %v3532 = vadd.f32 %v2232, %v3437
  %v3533 = vadd.f32 %v2233, %v3440
  %v3534 = vadd.f32 %v2234, %v3442
  %v3535 = vadd.f32 %v2235, %v3445
  %v3536 = vadd.f32 %v2236, %v3447
  %v3537 = vadd.f32 %v2237, %v3450
  %v3538 = vadd.f32 %v2238, %v3452
  %v3539 = vadd.f32 %v2239, %v3455
  %v3540 = vadd.f32 %v2240, %v3457
  %v3541 = vadd.f32 %v2241, %v3460
  %v3542 = vadd.f32 %v2242, %v3462
  %v3543 = vadd.f32 %v2243, %v3465
  %v3544 = vadd.f32 %v2244, %v3467
  %v3545 = vadd.f32 %v2245, %v3470
  %v3546 = vadd.f32 %v2246, %v3472
  %v3547 = vadd.f32 %v2247, %v3475
  %v3548 = vadd.f32 %v2248, %v3477
  %v3549 = vadd.f32 %v2249, %v3480
  %v3550 = vadd.f32 %v2250, %v3482
  %v3551 = vadd.f32 %v2251, %v3485
  %v3552 = vadd.f32 %v2252, %v3487
  %v3553 = vmul.f32 %v3489, 0.2
  %v3554 = vmul.f32 %v3490, 0.2
  %v3555 = vmul.f32 %v3491, 0.2
  %v3556 = vmul.f32 %v3492, 0.2
  %v3557 = vmul.f32 %v3493, 0.2
  %v3558 = vmul.f32 %v3494, 0.2
  %v3559 = vmul.f32 %v3495, 0.2
  %v3560 = vmul.f32 %v3496, 0.2
  %v3561 = vmul.f32 %v3497, 0.2
  %v3562 = vmul.f32 %v3498, 0.2
  %v3563 = vmul.f32 %v3499, 0.2
  %v3564 = vmul.f32 %v3500, 0.2
  %v3565 = vmul.f32 %v3501, 0.2
  %v3566 = vmul.f32 %v3502, 0.2
  %v3567 = vmul.f32 %v3503, 0.2
  %v3568 = vmul.f32 %v3504, 0.2
  %v3569 = vmul.f32 %v3505, 0.2
  %v3570 = vmul.f32 %v3506, 0.2
  %v3571 = vmul.f32 %v3507, 0.2
  %v3572 = vmul.f32 %v3508, 0.2
  %v3573 = vmul.f32 %v3509, 0.2
  %v3574 = vmul.f32 %v3510, 0.2
  %v3575 = vmul.f32 %v3511, 0.2
  %v3576 = vmul.f32 %v3512, 0.2
  %v3577 = vmul.f32 %v3513, 0.2
  %v3578 = vmul.f32 %v3514, 0.2
  %v3579 = vmul.f32 %v3515, 0.2
  %v3580 = vmul.f32 %v3516, 0.2
  %v3581 = vmul.f32 %v3517, 0.2
  %v3582 = vmul.f32 %v3518, 0.2
  %v3583 = vmul.f32 %v3519, 0.2
  %v3584 = vmul.f32 %v3520, 0.2
  %v3585 = vmul.f32 %v3521, 0.2
  %v3586 = vmul.f32 %v3522, 0.2
  %v3587 = vmul.f32 %v3523, 0.2
  %v3588 = vmul.f32 %v3524, 0.2
  %v3589 = vmul.f32 %v3525, 0.2
  %v3590 = vmul.f32 %v3526, 0.2
  %v3591 = vmul.f32 %v3527, 0.2
  %v3592 = vmul.f32 %v3528, 0.2
  %v3593 = vmul.f32 %v3529, 0.2
  %v3594 = vmul.f32 %v3530, 0.2
  %v3595 = vmul.f32 %v3531, 0.2
  %v3596 = vmul.f32 %v3532, 0.2
  %v3597 = vmul.f32 %v3533, 0.2
  %v3598 = vmul.f32 %v3534, 0.2
  %v3599 = vmul.f32 %v3535, 0.2
  %v3600 = vmul.f32 %v3536, 0.2
  %v3601 = vmul.f32 %v3537, 0.2
  %v3602 = vmul.f32 %v3538, 0.2
  %v3603 = vmul.f32 %v3539, 0.2
  %v3604 = vmul.f32 %v3540, 0.2
  %v3605 = vmul.f32 %v3541, 0.2
  %v3606 = vmul.f32 %v3542, 0.2
  %v3607 = vmul.f32 %v3543, 0.2
  %v3608 = vmul.f32 %v3544, 0.2
  %v3609 = vmul.f32 %v3545, 0.2
  %v3610 = vmul.f32 %v3546, 0.2
  %v3611 = vmul.f32 %v3547, 0.2
  %v3612 = vmul.f32 %v3548, 0.2
  %v3613 = vmul.f32 %v3549, 0.2
  %v3614 = vmul.f32 %v3550, 0.2
  %v3615 = vmul.f32 %v3551, 0.2
  %v3616 = vmul.f32 %v3552, 0.2
  %v3617 = vmax.f32 %v3489, %v3553
  %v3618 = vmax.f32 %v3490, %v3554
  %v3619 = vmax.f32 %v3491, %v3555
  %v3620 = vmax.f32 %v3492, %v3556
  %v3621 = vmax.f32 %v3493, %v3557
  %v3622 = vmax.f32 %v3494, %v3558
  %v3623 = vmax.f32 %v3495, %v3559
  %v3624 = vmax.f32 %v3496, %v3560
  %v3625 = vmax.f32 %v3497, %v3561
  %v3626 = vmax.f32 %v3498, %v3562
  %v3627 = vmax.f32 %v3499, %v3563
  %v3628 = vmax.f32 %v3500, %v3564
  %v3629 = vmax.f32 %v3501, %v3565
  %v3630 = vmax.f32 %v3502, %v3566
  %v3631 = vmax.f32 %v3503, %v3567
  %v3632 = vmax.f32 %v3504, %v3568
  %v3633 = vmax.f32 %v3505, %v3569
  %v3634 = vmax.f32 %v3506, %v3570
  %v3635 = vmax.f32 %v3507, %v3571
  %v3636 = vmax.f32 %v3508, %v3572
  %v3637 = vmax.f32 %v3509, %v3573
  %v3638 = vmax.f32 %v3510, %v3574
  %v3639 = vmax.f32 %v3511, %v3575
  %v3640 = vmax.f32 %v3512, %v3576
  %v3641 = vmax.f32 %v3513, %v3577
  %v3642 = vmax.f32 %v3514, %v3578
  %v3643 = vmax.f32 %v3515, %v3579
  %v3644 = vmax.f32 %v3516, %v3580
  %v3645 = vmax.f32 %v3517, %v3581
  %v3646 = vmax.f32 %v3518, %v3582
  %v3647 = vmax.f32 %v3519, %v3583
  %v3648 = vmax.f32 %v3520, %v3584
  %v3649 = vmax.f32 %v3521, %v3585
  %v3650 = vmax.f32 %v3522, %v3586
  %v3651 = vmax.f32 %v3523, %v3587
  %v3652 = vmax.f32 %v3524, %v3588
  %v3653 = vmax.f32 %v3525, %v3589
  %v3654 = vmax.f32 %v3526, %v3590
  %v3655 = vmax.f32 %v3527, %v3591
  %v3656 = vmax.f32 %v3528, %v3592
  %v3657 = vmax.f32 %v3529, %v3593
  %v3658 = vmax.f32 %v3530, %v3594
  %v3659 = vmax.f32 %v3531, %v3595
  %v3660 = vmax.f32 %v3532, %v3596
  %v3661 = vmax.f32 %v3533, %v3597
  %v3662 = vmax.f32 %v3534, %v3598
  %v3663 = vmax.f32 %v3535, %v3599
  %v3664 = vmax.f32 %v3536, %v3600
  %v3665 = vmax.f32 %v3537, %v3601
  %v3666 = vmax.f32 %v3538, %v3602
  %v3667 = vmax.f32 %v3539, %v3603
  %v3668 = vmax.f32 %v3540, %v3604
  %v3669 = vmax.f32 %v3541, %v3605
  %v3670 = vmax.f32 %v3542, %v3606
  %v3671 = vmax.f32 %v3543, %v3607
  %v3672 = vmax.f32 %v3544, %v3608
  %v3673 = vmax.f32 %v3545, %v3609
  %v3674 = vmax.f32 %v3546, %v3610
  %v3675 = vmax.f32 %v3547, %v3611
  %v3676 = vmax.f32 %v3548, %v3612
  %v3677 = vmax.f32 %v3549, %v3613
  %v3678 = vmax.f32 %v3550, %v3614
  %v3679 = vmax.f32 %v3551, %v3615
  %v3680 = vmax.f32 %v3552, %v3616
  %v3681 = vpack.c.bf16 %v3617, %v3617
  %v3682 = vpack.c.bf16 %v3618, %v3618
  %v3683 = vpack.c.bf16 %v3619, %v3619
  %v3684 = vpack.c.bf16 %v3620, %v3620
  %v3685 = vpack.c.bf16 %v3621, %v3621
  %v3686 = vpack.c.bf16 %v3622, %v3622
  %v3687 = vpack.c.bf16 %v3623, %v3623
  %v3688 = vpack.c.bf16 %v3624, %v3624
  %v3689 = vpack.c.bf16 %v3625, %v3625
  %v3690 = vpack.c.bf16 %v3626, %v3626
  %v3691 = vpack.c.bf16 %v3627, %v3627
  %v3692 = vpack.c.bf16 %v3628, %v3628
  %v3693 = vpack.c.bf16 %v3629, %v3629
  %v3694 = vpack.c.bf16 %v3630, %v3630
  %v3695 = vpack.c.bf16 %v3631, %v3631
  %v3696 = vpack.c.bf16 %v3632, %v3632
  %v3697 = vpack.c.bf16 %v3633, %v3633
  %v3698 = vpack.c.bf16 %v3634, %v3634
  %v3699 = vpack.c.bf16 %v3635, %v3635
  %v3700 = vpack.c.bf16 %v3636, %v3636
  %v3701 = vpack.c.bf16 %v3637, %v3637
  %v3702 = vpack.c.bf16 %v3638, %v3638
  %v3703 = vpack.c.bf16 %v3639, %v3639
  %v3704 = vpack.c.bf16 %v3640, %v3640
  %v3705 = vpack.c.bf16 %v3641, %v3641
  %v3706 = vpack.c.bf16 %v3642, %v3642
  %v3707 = vpack.c.bf16 %v3643, %v3643
  %v3708 = vpack.c.bf16 %v3644, %v3644
  %v3709 = vpack.c.bf16 %v3645, %v3645
  %v3710 = vpack.c.bf16 %v3646, %v3646
  %v3711 = vpack.c.bf16 %v3647, %v3647
  %v3712 = vpack.c.bf16 %v3648, %v3648
  %v3713 = vpack.c.bf16 %v3649, %v3649
  %v3714 = vpack.c.bf16 %v3650, %v3650
  %v3715 = vpack.c.bf16 %v3651, %v3651
  %v3716 = vpack.c.bf16 %v3652, %v3652
  %v3717 = vpack.c.bf16 %v3653, %v3653
  %v3718 = vpack.c.bf16 %v3654, %v3654
  %v3719 = vpack.c.bf16 %v3655, %v3655
  %v3720 = vpack.c.bf16 %v3656, %v3656
  %v3721 = vpack.c.bf16 %v3657, %v3657
  %v3722 = vpack.c.bf16 %v3658, %v3658
  %v3723 = vpack.c.bf16 %v3659, %v3659
  %v3724 = vpack.c.bf16 %v3660, %v3660
  %v3725 = vpack.c.bf16 %v3661, %v3661
  %v3726 = vpack.c.bf16 %v3662, %v3662
  %v3727 = vpack.c.bf16 %v3663, %v3663
  %v3728 = vpack.c.bf16 %v3664, %v3664
  %v3729 = vpack.c.bf16 %v3665, %v3665
  %v3730 = vpack.c.bf16 %v3666, %v3666
  %v3731 = vpack.c.bf16 %v3667, %v3667
  %v3732 = vpack.c.bf16 %v3668, %v3668
  %v3733 = vpack.c.bf16 %v3669, %v3669
  %v3734 = vpack.c.bf16 %v3670, %v3670
  %v3735 = vpack.c.bf16 %v3671, %v3671
  %v3736 = vpack.c.bf16 %v3672, %v3672
  %v3737 = vpack.c.bf16 %v3673, %v3673
  %v3738 = vpack.c.bf16 %v3674, %v3674
  %v3739 = vpack.c.bf16 %v3675, %v3675
  %v3740 = vpack.c.bf16 %v3676, %v3676
  %v3741 = vpack.c.bf16 %v3677, %v3677
  %v3742 = vpack.c.bf16 %v3678, %v3678
  %v3743 = vpack.c.bf16 %v3679, %v3679
  %v3744 = vpack.c.bf16 %v3680, %v3680
  %3745 = vst [vmem:[%s2] sm:$0xf] %v3681
  %3746 = vst [vmem:[%s2 + $0x4] sm:$0xf] %v3682
  %3747 = vst [vmem:[%s2 + $0x8] sm:$0xf] %v3683
  %3748 = vst [vmem:[%s2 + $0xc] sm:$0xf] %v3684
  %3749 = vst [vmem:[%s2 + $0x10] sm:$0xf] %v3685
  %3750 = vst [vmem:[%s2 + $0x14] sm:$0xf] %v3686
  %3751 = vst [vmem:[%s2 + $0x18] sm:$0xf] %v3687
  %3752 = vst [vmem:[%s2 + $0x1c] sm:$0xf] %v3688
  %3753 = vst [vmem:[%s2 + $0x20] sm:$0xf] %v3689
  %3754 = vst [vmem:[%s2 + $0x24] sm:$0xf] %v3690
  %3755 = vst [vmem:[%s2 + $0x28] sm:$0xf] %v3691
  %3756 = vst [vmem:[%s2 + $0x2c] sm:$0xf] %v3692
  %3757 = vst [vmem:[%s2 + $0x30] sm:$0xf] %v3693
  %3758 = vst [vmem:[%s2 + $0x34] sm:$0xf] %v3694
  %3759 = vst [vmem:[%s2 + $0x38] sm:$0xf] %v3695
  %3760 = vst [vmem:[%s2 + $0x3c] sm:$0xf] %v3696
  %3761 = vst [vmem:[%s2 + $0x40] sm:$0xf] %v3697
  %3762 = vst [vmem:[%s2 + $0x44] sm:$0xf] %v3698
  %3763 = vst [vmem:[%s2 + $0x48] sm:$0xf] %v3699
  %3764 = vst [vmem:[%s2 + $0x4c] sm:$0xf] %v3700
  %3765 = vst [vmem:[%s2 + $0x50] sm:$0xf] %v3701
  %3766 = vst [vmem:[%s2 + $0x54] sm:$0xf] %v3702
  %3767 = vst [vmem:[%s2 + $0x58] sm:$0xf] %v3703
  %3768 = vst [vmem:[%s2 + $0x5c] sm:$0xf] %v3704
  %3769 = vst [vmem:[%s2 + $0x60] sm:$0xf] %v3705
  %3770 = vst [vmem:[%s2 + $0x64] sm:$0xf] %v3706
  %3771 = vst [vmem:[%s2 + $0x68] sm:$0xf] %v3707
  %3772 = vst [vmem:[%s2 + $0x6c] sm:$0xf] %v3708
  %3773 = vst [vmem:[%s2 + $0x70] sm:$0xf] %v3709
  %3774 = vst [vmem:[%s2 + $0x74] sm:$0xf] %v3710
  %3775 = vst [vmem:[%s2 + $0x78] sm:$0xf] %v3711
  %3776 = vst [vmem:[%s2 + $0x7c] sm:$0xf] %v3712
  %3777 = vst [vmem:[%s2 + $0x80] sm:$0xf] %v3713
  %3778 = vst [vmem:[%s2 + $0x84] sm:$0xf] %v3714
  %3779 = vst [vmem:[%s2 + $0x88] sm:$0xf] %v3715
  %3780 = vst [vmem:[%s2 + $0x8c] sm:$0xf] %v3716
  %3781 = vst [vmem:[%s2 + $0x90] sm:$0xf] %v3717
  %3782 = vst [vmem:[%s2 + $0x94] sm:$0xf] %v3718
  %3783 = vst [vmem:[%s2 + $0x98] sm:$0xf] %v3719
  %3784 = vst [vmem:[%s2 + $0x9c] sm:$0xf] %v3720
  %3785 = vst [vmem:[%s2 + $0xa0] sm:$0xf] %v3721
  %3786 = vst [vmem:[%s2 + $0xa4] sm:$0xf] %v3722
  %3787 = vst [vmem:[%s2 + $0xa8] sm:$0xf] %v3723
  %3788 = vst [vmem:[%s2 + $0xac] sm:$0xf] %v3724
  %3789 = vst [vmem:[%s2 + $0xb0] sm:$0xf] %v3725
  %3790 = vst [vmem:[%s2 + $0xb4] sm:$0xf] %v3726
  %3791 = vst [vmem:[%s2 + $0xb8] sm:$0xf] %v3727
  %3792 = vst [vmem:[%s2 + $0xbc] sm:$0xf] %v3728
  %3793 = vst [vmem:[%s2 + $0xc0] sm:$0xf] %v3729
  %3794 = vst [vmem:[%s2 + $0xc4] sm:$0xf] %v3730
  %3795 = vst [vmem:[%s2 + $0xc8] sm:$0xf] %v3731
  %3796 = vst [vmem:[%s2 + $0xcc] sm:$0xf] %v3732
  %3797 = vst [vmem:[%s2 + $0xd0] sm:$0xf] %v3733
  %3798 = vst [vmem:[%s2 + $0xd4] sm:$0xf] %v3734
  %3799 = vst [vmem:[%s2 + $0xd8] sm:$0xf] %v3735
  %3800 = vst [vmem:[%s2 + $0xdc] sm:$0xf] %v3736
  %3801 = vst [vmem:[%s2 + $0xe0] sm:$0xf] %v3737
  %3802 = vst [vmem:[%s2 + $0xe4] sm:$0xf] %v3738
  %3803 = vst [vmem:[%s2 + $0xe8] sm:$0xf] %v3739
  %3804 = vst [vmem:[%s2 + $0xec] sm:$0xf] %v3740
  %3805 = vst [vmem:[%s2 + $0xf0] sm:$0xf] %v3741
  %3806 = vst [vmem:[%s2 + $0xf4] sm:$0xf] %v3742
  %3807 = vst [vmem:[%s2 + $0xf8] sm:$0xf] %v3743
  %3808 = vst [vmem:[%s2 + $0xfc] sm:$0xf] %v3744
  // Predicated region
  $region10: #{dc_discriminator_forward.7} parent=0 // pred_check
    _
  $region11: #{dc_discriminator_forward.7} parent=0 // pred_check_branch
    %3810 = sbr.rel (0) target = $region13
  $region12: #{dc_discriminator_forward.7} parent=0 // pred_region
    _
  $region13: #{dc_discriminator_forward.7} parent=0 // pred_fallthru
    _
  // Predicated region
  $region14: #{dc_discriminator_forward.7} parent=0 // pred_check
    _
  $region15: #{dc_discriminator_forward.7} parent=0 // pred_check_branch
    %3812 = sbr.rel (0) target = $region17
  $region16: #{dc_discriminator_forward.7} parent=0 // pred_region
    _
  $region17: #{dc_discriminator_forward.7} parent=0 // pred_fallthru
    _

// kernel: dc_discriminator_forward.9
$region0: #{dc_discriminator_forward.9}
  #allocation0 [shape = 'u32[]', space=smem, size = 0x4, offset = 0x4, fixed_abs, tag = 'smem constant byte address 0x4 - core index']
  #allocation1 [shape = 'u32[72,128]{1,0:T(1,128)}', space=vmem, size = 0x9000, scoped, tag = 'internal scratch']
  %s0 = inlined_call_operand.vmem [shape: bf16[128,128], index: 0, kind: input, shape index: {}]
  %s1 = inlined_call_operand.vmem [shape: f32[1,1,128], index: 1, kind: input, shape index: {}]
  %s2 = inlined_call_operand.vmem [shape: f32[1,1,128], index: 2, kind: input, shape index: {}]
  %s3 = inlined_call_operand.vmem [shape: f32[1,128], index: 3, kind: input, shape index: {}]
  %s4 = inlined_call_operand.vmem [shape: f32[1,128], index: 4, kind: input, shape index: {}]
  %s5 = inlined_call_operand.vmem [shape: bf16[128,128], index: 5, kind: output, shape index: {}]
  %s6 = sld [smem:[#allocation0]]
  $region30: #{dc_discriminator_forward.9} parent=0
    _
  %s8 = ssub.s32 1, %s6
  %s9 = scalar_select 0, %s8, %s6
  // Predicated region
  $region2: #{dc_discriminator_forward.9} parent=0 // pred_check
    _
  $region3: #{dc_discriminator_forward.9} parent=0 // pred_check_branch
    %11 = sbr.rel (0) target = $region5
  $region4: #{dc_discriminator_forward.9} parent=0 // pred_region
    _
  $region5: #{dc_discriminator_forward.9} parent=0 // pred_fallthru
    _
  // Predicated region
  $region6: #{dc_discriminator_forward.9} parent=0 // pred_check
    _
  $region7: #{dc_discriminator_forward.9} parent=0 // pred_check_branch
    %13 = sbr.rel (0) target = $region9
  $region8: #{dc_discriminator_forward.9} parent=0 // pred_region
    _
  $region9: #{dc_discriminator_forward.9} parent=0 // pred_fallthru
    _
  // Predicated region
  $region10: #{dc_discriminator_forward.9} parent=0 // pred_check
    _
  $region11: #{dc_discriminator_forward.9} parent=0 // pred_check_branch
    %15 = sbr.rel (0) target = $region13
  $region12: #{dc_discriminator_forward.9} parent=0 // pred_region
    _
  $region13: #{dc_discriminator_forward.9} parent=0 // pred_fallthru
    _
  // Predicated region
  $region14: #{dc_discriminator_forward.9} parent=0 // pred_check
    _
  $region15: #{dc_discriminator_forward.9} parent=0 // pred_check_branch
    %17 = sbr.rel (0) target = $region17
  $region16: #{dc_discriminator_forward.9} parent=0 // pred_region
    _
  $region17: #{dc_discriminator_forward.9} parent=0 // pred_fallthru
    _
  // Predicated region
  $region18: #{dc_discriminator_forward.9} parent=0 // pred_check
    _
  $region19: #{dc_discriminator_forward.9} parent=0 // pred_check_branch
    %19 = sbr.rel (0) target = $region21
  $region20: #{dc_discriminator_forward.9} parent=0 // pred_region
    _
  $region21: #{dc_discriminator_forward.9} parent=0 // pred_fallthru
    _
  %v20 = vld [vmem:[%s1] sm:$0x1]
  %v21 = vadd.f32 %v20, 0.0
  %v22 = vmul.f32 %v21, 0.0078125
  %v23 = vld [vmem:[%s2] sm:$0x1]
  %v24 = vadd.f32 %v23, 0.0
  %v25 = vmul.f32 %v24, 0.0078125
  %v26 = vmul.f32 %v22, %v22
  %v27 = vsub.f32 %v25, %v26
  %v28 = vmax.f32 %v27, 0.0
  %v29 = vadd.f32 %v28, 1e-05
  %v30 = vrsqrt.pop %v29
  %v31 = vmul.f32 %v30, %v29
  %v32 = vmul.f32 %v31, %v30
  %v33 = vmul.f32 0.5, %v32
  %v34 = vsub.f32 1.5, %v33
  %v35 = vmul.f32 %v30, %v34
  %vm36 = vweird.f32 %v29
  %vm37 = vweird.f32 %v30
  %vm38 = vmor %vm36, %vm37
  %v39 = vsel %vm38, %v30, %v35
  %v40 = vld [vmem:[%s3] sm:$0x1]
  %v41 = vmul.f32 %v39, %v40
  %v42 = vld [vmem:[%s4] sm:$0x1]
  %v43 = vmul.f32 %v22, %v41
  %v44 = vsub.f32 %v42, %v43
  %v45 = vld [vmem:[%s0] sm:$0xf]
  %v46 = vld [vmem:[%s0 + $0x4] sm:$0xf]
  %v47 = vld [vmem:[%s0 + $0x8] sm:$0xf]
  %v48 = vld [vmem:[%s0 + $0xc] sm:$0xf]
  %v49 = vld [vmem:[%s0 + $0x10] sm:$0xf]
  %v50 = vld [vmem:[%s0 + $0x14] sm:$0xf]
  %v51 = vld [vmem:[%s0 + $0x18] sm:$0xf]
  %v52 = vld [vmem:[%s0 + $0x1c] sm:$0xf]
  %v53 = vld [vmem:[%s0 + $0x20] sm:$0xf]
  %v54 = vld [vmem:[%s0 + $0x24] sm:$0xf]
  %v55 = vld [vmem:[%s0 + $0x28] sm:$0xf]
  %v56 = vld [vmem:[%s0 + $0x2c] sm:$0xf]
  %v57 = vld [vmem:[%s0 + $0x30] sm:$0xf]
  %v58 = vld [vmem:[%s0 + $0x34] sm:$0xf]
  %v59 = vld [vmem:[%s0 + $0x38] sm:$0xf]
  %v60 = vld [vmem:[%s0 + $0x3c] sm:$0xf]
  %v61 = vunpack.c.l.bf16 %v45
  %v62 = vunpack.c.l.bf16 %v46
  %v63 = vunpack.c.l.bf16 %v47
  %v64 = vunpack.c.l.bf16 %v48
  %v65 = vunpack.c.l.bf16 %v49
  %v66 = vunpack.c.l.bf16 %v50
  %v67 = vunpack.c.l.bf16 %v51
  %v68 = vunpack.c.l.bf16 %v52
  %v69 = vunpack.c.l.bf16 %v53
  %v70 = vunpack.c.l.bf16 %v54
  %v71 = vunpack.c.l.bf16 %v55
  %v72 = vunpack.c.l.bf16 %v56
  %v73 = vunpack.c.l.bf16 %v57
  %v74 = vunpack.c.l.bf16 %v58
  %v75 = vunpack.c.l.bf16 %v59
  %v76 = vunpack.c.l.bf16 %v60
  %v78 = vperm.slane %v41, 0
  %v80 = vmul.f32 %v61, %v78
  %v81 = vmul.f32 %v62, %v78
  %v82 = vmul.f32 %v63, %v78
  %v83 = vmul.f32 %v64, %v78
  %v84 = vmul.f32 %v65, %v78
  %v85 = vmul.f32 %v66, %v78
  %v86 = vmul.f32 %v67, %v78
  %v87 = vmul.f32 %v68, %v78
  %v88 = vmul.f32 %v69, %v78
  %v89 = vmul.f32 %v70, %v78
  %v90 = vmul.f32 %v71, %v78
  %v91 = vmul.f32 %v72, %v78
  %v92 = vmul.f32 %v73, %v78
  %v93 = vmul.f32 %v74, %v78
  %v94 = vmul.f32 %v75, %v78
  %v95 = vmul.f32 %v76, %v78
  %v97 = vperm.slane %v44, 0
  %v99 = vadd.f32 %v80, %v97
  %v100 = vadd.f32 %v81, %v97
  %v101 = vadd.f32 %v82, %v97
  %v102 = vadd.f32 %v83, %v97
  %v103 = vadd.f32 %v84, %v97
  %v104 = vadd.f32 %v85, %v97
  %v105 = vadd.f32 %v86, %v97
  %v106 = vadd.f32 %v87, %v97
  %v107 = vadd.f32 %v88, %v97
  %v108 = vadd.f32 %v89, %v97
  %v109 = vadd.f32 %v90, %v97
  %v110 = vadd.f32 %v91, %v97
  %v111 = vadd.f32 %v92, %v97
  %v112 = vadd.f32 %v93, %v97
  %v113 = vadd.f32 %v94, %v97
  %v114 = vadd.f32 %v95, %v97
  %v115 = vmul.f32 %v99, 0.2
  %v116 = vmul.f32 %v100, 0.2
  %v117 = vmul.f32 %v101, 0.2
  %v118 = vmul.f32 %v102, 0.2
  %v119 = vmul.f32 %v103, 0.2
  %v120 = vmul.f32 %v104, 0.2
  %v121 = vmul.f32 %v105, 0.2
  %v122 = vmul.f32 %v106, 0.2
  %v123 = vmul.f32 %v107, 0.2
  %v124 = vmul.f32 %v108, 0.2
  %v125 = vmul.f32 %v109, 0.2
  %v126 = vmul.f32 %v110, 0.2
  %v127 = vmul.f32 %v111, 0.2
  %v128 = vmul.f32 %v112, 0.2
  %v129 = vmul.f32 %v113, 0.2
  %v130 = vmul.f32 %v114, 0.2
  %v131 = vmax.f32 %v99, %v115
  %v132 = vmax.f32 %v100, %v116
  %v133 = vmax.f32 %v101, %v117
  %v134 = vmax.f32 %v102, %v118
  %v135 = vmax.f32 %v103, %v119
  %v136 = vmax.f32 %v104, %v120
  %v137 = vmax.f32 %v105, %v121
  %v138 = vmax.f32 %v106, %v122
  %v139 = vmax.f32 %v107, %v123
  %v140 = vmax.f32 %v108, %v124
  %v141 = vmax.f32 %v109, %v125
  %v142 = vmax.f32 %v110, %v126
  %v143 = vmax.f32 %v111, %v127
  %v144 = vmax.f32 %v112, %v128
  %v145 = vmax.f32 %v113, %v129
  %v146 = vmax.f32 %v114, %v130
  %v147 = vpack.c.bf16 %v131, %v131
  %v148 = vpack.c.bf16 %v132, %v132
  %v149 = vpack.c.bf16 %v133, %v133
  %v150 = vpack.c.bf16 %v134, %v134
  %v151 = vpack.c.bf16 %v135, %v135
  %v152 = vpack.c.bf16 %v136, %v136
  %v153 = vpack.c.bf16 %v137, %v137
  %v154 = vpack.c.bf16 %v138, %v138
  %v155 = vpack.c.bf16 %v139, %v139
  %v156 = vpack.c.bf16 %v140, %v140
  %v157 = vpack.c.bf16 %v141, %v141
  %v158 = vpack.c.bf16 %v142, %v142
  %v159 = vpack.c.bf16 %v143, %v143
  %v160 = vpack.c.bf16 %v144, %v144
  %v161 = vpack.c.bf16 %v145, %v145
  %v162 = vpack.c.bf16 %v146, %v146
  %163 = vst [vmem:[%s5] sm:$0xf] %v147
  %164 = vst [vmem:[%s5 + $0x4] sm:$0xf] %v148
  %165 = vst [vmem:[%s5 + $0x8] sm:$0xf] %v149
  %166 = vst [vmem:[%s5 + $0xc] sm:$0xf] %v150
  %167 = vst [vmem:[%s5 + $0x10] sm:$0xf] %v151
  %168 = vst [vmem:[%s5 + $0x14] sm:$0xf] %v152
  %169 = vst [vmem:[%s5 + $0x18] sm:$0xf] %v153
  %170 = vst [vmem:[%s5 + $0x1c] sm:$0xf] %v154
  %171 = vst [vmem:[%s5 + $0x20] sm:$0xf] %v155
  %172 = vst [vmem:[%s5 + $0x24] sm:$0xf] %v156
  %173 = vst [vmem:[%s5 + $0x28] sm:$0xf] %v157
  %174 = vst [vmem:[%s5 + $0x2c] sm:$0xf] %v158
  %175 = vst [vmem:[%s5 + $0x30] sm:$0xf] %v159
  %176 = vst [vmem:[%s5 + $0x34] sm:$0xf] %v160
  %177 = vst [vmem:[%s5 + $0x38] sm:$0xf] %v161
  %178 = vst [vmem:[%s5 + $0x3c] sm:$0xf] %v162
  // Predicated region
  $region22: #{dc_discriminator_forward.9} parent=0 // pred_check
    _
  $region23: #{dc_discriminator_forward.9} parent=0 // pred_check_branch
    %180 = sbr.rel (0) target = $region25
  $region24: #{dc_discriminator_forward.9} parent=0 // pred_region
    _
  $region25: #{dc_discriminator_forward.9} parent=0 // pred_fallthru
    _
  // Predicated region
  $region26: #{dc_discriminator_forward.9} parent=0 // pred_check
    _
  $region27: #{dc_discriminator_forward.9} parent=0 // pred_check_branch
    %182 = sbr.rel (0) target = $region29
  $region28: #{dc_discriminator_forward.9} parent=0 // pred_region
    _
  $region29: #{dc_discriminator_forward.9} parent=0 // pred_fallthru
    _

// kernel: dc_discriminator_forward.11
$region0: #{dc_discriminator_forward.11}
  #allocation0 [shape = 'u32[]', space=smem, size = 0x4, offset = 0x4, fixed_abs, tag = 'smem constant byte address 0x4 - core index']
  #allocation1 [shape = 'u32[72,128]{1,0:T(1,128)}', space=vmem, size = 0x9000, scoped, tag = 'internal scratch']
  %s0 = inlined_call_operand.vmem [shape: bf16[32,128], index: 0, kind: input, shape index: {}]
  %s1 = inlined_call_operand.vmem [shape: f32[1,1,128], index: 1, kind: input, shape index: {}]
  %s2 = inlined_call_operand.vmem [shape: f32[1,1,128], index: 2, kind: input, shape index: {}]
  %s3 = inlined_call_operand.vmem [shape: f32[1,128], index: 3, kind: input, shape index: {}]
  %s4 = inlined_call_operand.vmem [shape: f32[1,128], index: 4, kind: input, shape index: {}]
  %s5 = inlined_call_operand.vmem [shape: bf16[32,128], index: 5, kind: output, shape index: {}]
  %s6 = sld [smem:[#allocation0]]
  $region30: #{dc_discriminator_forward.11} parent=0
    _
  %s8 = ssub.s32 1, %s6
  %s9 = scalar_select 0, %s8, %s6
  // Predicated region
  $region2: #{dc_discriminator_forward.11} parent=0 // pred_check
    _
  $region3: #{dc_discriminator_forward.11} parent=0 // pred_check_branch
    %11 = sbr.rel (0) target = $region5
  $region4: #{dc_discriminator_forward.11} parent=0 // pred_region
    _
  $region5: #{dc_discriminator_forward.11} parent=0 // pred_fallthru
    _
  // Predicated region
  $region6: #{dc_discriminator_forward.11} parent=0 // pred_check
    _
  $region7: #{dc_discriminator_forward.11} parent=0 // pred_check_branch
    %13 = sbr.rel (0) target = $region9
  $region8: #{dc_discriminator_forward.11} parent=0 // pred_region
    _
  $region9: #{dc_discriminator_forward.11} parent=0 // pred_fallthru
    _
  // Predicated region
  $region10: #{dc_discriminator_forward.11} parent=0 // pred_check
    _
  $region11: #{dc_discriminator_forward.11} parent=0 // pred_check_branch
    %15 = sbr.rel (0) target = $region13
  $region12: #{dc_discriminator_forward.11} parent=0 // pred_region
    _
  $region13: #{dc_discriminator_forward.11} parent=0 // pred_fallthru
    _
  // Predicated region
  $region14: #{dc_discriminator_forward.11} parent=0 // pred_check
    _
  $region15: #{dc_discriminator_forward.11} parent=0 // pred_check_branch
    %17 = sbr.rel (0) target = $region17
  $region16: #{dc_discriminator_forward.11} parent=0 // pred_region
    _
  $region17: #{dc_discriminator_forward.11} parent=0 // pred_fallthru
    _
  // Predicated region
  $region18: #{dc_discriminator_forward.11} parent=0 // pred_check
    _
  $region19: #{dc_discriminator_forward.11} parent=0 // pred_check_branch
    %19 = sbr.rel (0) target = $region21
  $region20: #{dc_discriminator_forward.11} parent=0 // pred_region
    _
  $region21: #{dc_discriminator_forward.11} parent=0 // pred_fallthru
    _
  %v20 = vld [vmem:[%s1] sm:$0x1]
  %v21 = vadd.f32 %v20, 0.0
  %v22 = vmul.f32 %v21, 0.03125
  %v23 = vld [vmem:[%s2] sm:$0x1]
  %v24 = vadd.f32 %v23, 0.0
  %v25 = vmul.f32 %v24, 0.03125
  %v26 = vmul.f32 %v22, %v22
  %v27 = vsub.f32 %v25, %v26
  %v28 = vmax.f32 %v27, 0.0
  %v29 = vadd.f32 %v28, 1e-05
  %v30 = vrsqrt.pop %v29
  %v31 = vmul.f32 %v30, %v29
  %v32 = vmul.f32 %v31, %v30
  %v33 = vmul.f32 0.5, %v32
  %v34 = vsub.f32 1.5, %v33
  %v35 = vmul.f32 %v30, %v34
  %vm36 = vweird.f32 %v29
  %vm37 = vweird.f32 %v30
  %vm38 = vmor %vm36, %vm37
  %v39 = vsel %vm38, %v30, %v35
  %v40 = vld [vmem:[%s3] sm:$0x1]
  %v41 = vmul.f32 %v39, %v40
  %v42 = vld [vmem:[%s4] sm:$0x1]
  %v43 = vmul.f32 %v22, %v41
  %v44 = vsub.f32 %v42, %v43
  %v45 = vld [vmem:[%s0] sm:$0xf]
  %v46 = vld [vmem:[%s0 + $0x4] sm:$0xf]
  %v47 = vld [vmem:[%s0 + $0x8] sm:$0xf]
  %v48 = vld [vmem:[%s0 + $0xc] sm:$0xf]
  %v49 = vunpack.c.l.bf16 %v45
  %v50 = vunpack.c.l.bf16 %v46
  %v51 = vunpack.c.l.bf16 %v47
  %v52 = vunpack.c.l.bf16 %v48
  %v54 = vperm.slane %v41, 0
  %v56 = vmul.f32 %v49, %v54
  %v57 = vmul.f32 %v50, %v54
  %v58 = vmul.f32 %v51, %v54
  %v59 = vmul.f32 %v52, %v54
  %v61 = vperm.slane %v44, 0
  %v63 = vadd.f32 %v56, %v61
  %v64 = vadd.f32 %v57, %v61
  %v65 = vadd.f32 %v58, %v61
  %v66 = vadd.f32 %v59, %v61
  %v67 = vmul.f32 %v63, 0.2
  %v68 = vmul.f32 %v64, 0.2
  %v69 = vmul.f32 %v65, 0.2
  %v70 = vmul.f32 %v66, 0.2
  %v71 = vmax.f32 %v63, %v67
  %v72 = vmax.f32 %v64, %v68
  %v73 = vmax.f32 %v65, %v69
  %v74 = vmax.f32 %v66, %v70
  %v75 = vpack.c.bf16 %v71, %v71
  %v76 = vpack.c.bf16 %v72, %v72
  %v77 = vpack.c.bf16 %v73, %v73
  %v78 = vpack.c.bf16 %v74, %v74
  %79 = vst [vmem:[%s5] sm:$0xf] %v75
  %80 = vst [vmem:[%s5 + $0x4] sm:$0xf] %v76
  %81 = vst [vmem:[%s5 + $0x8] sm:$0xf] %v77
  %82 = vst [vmem:[%s5 + $0xc] sm:$0xf] %v78
  // Predicated region
  $region22: #{dc_discriminator_forward.11} parent=0 // pred_check
    _
  $region23: #{dc_discriminator_forward.11} parent=0 // pred_check_branch
    %84 = sbr.rel (0) target = $region25
  $region24: #{dc_discriminator_forward.11} parent=0 // pred_region
    _
  $region25: #{dc_discriminator_forward.11} parent=0 // pred_fallthru
    _
  // Predicated region
  $region26: #{dc_discriminator_forward.11} parent=0 // pred_check
    _
  $region27: #{dc_discriminator_forward.11} parent=0 // pred_check_branch
    %86 = sbr.rel (0) target = $region29
  $region28: #{dc_discriminator_forward.11} parent=0 // pred_region
    _
  $region29: #{dc_discriminator_forward.11} parent=0 // pred_fallthru
    _

// kernel: dc_discriminator_forward.10
$region0: #{dc_discriminator_forward.10}
  #allocation0 [shape = 'u32[]', space=smem, size = 0x4, offset = 0x4, fixed_abs, tag = 'smem constant byte address 0x4 - core index']
  #allocation1 [shape = 'u32[72,128]{1,0:T(1,128)}', space=vmem, size = 0x9000, scoped, tag = 'internal scratch']
  %s0 = inlined_call_operand.vmem [shape: bf16[2,5,5,64], index: 0, kind: input, shape index: {}]
  %s1 = inlined_call_operand.vmem [shape: bf16[4,64,128], index: 1, kind: input, shape index: {}]
  %s2 = inlined_call_operand.vmem [shape: bf16[2,4,4,128], index: 2, kind: output, shape index: {0}]
  %s3 = inlined_call_operand.vmem [shape: f32[1,1,128], index: 3, kind: output, shape index: {1}]
  %s4 = inlined_call_operand.vmem [shape: f32[1,1,128], index: 4, kind: output, shape index: {2}]
  %5 = xla_tuple %s2, %s3, %s4
  %s6 = sld [smem:[#allocation0]]
  $region38: #{dc_discriminator_forward.10} parent=0
    _
  %s8 = ssub.s32 1, %s6
  %s9 = scalar_select 0, %s8, %s6
  // Predicated region
  $region2: #{dc_discriminator_forward.10} parent=0 // pred_check
    _
  $region3: #{dc_discriminator_forward.10} parent=0 // pred_check_branch
    %11 = sbr.rel (0) target = $region5
  $region4: #{dc_discriminator_forward.10} parent=0 // pred_region
    %s12 = sadd.s32 0, 0
    %s13 = smul.u32 2, %s12
    %p14 = scmp.lt.s32.totalorder %s13, 1
    %s15 = scalar_select %p14, %s13, 1
    %s16 = smul.addr %s15, 5
    %s17 = smul.addr %s16, 4
    %s18 = scalar_lea.vmem %s0, %s17
    %s19 = sadd.s32 0, 0
    %s20 = smul.u32 2, %s19
  $region5: #{dc_discriminator_forward.10} parent=0 // pred_fallthru
    _
  // Predicated region
  $region6: #{dc_discriminator_forward.10} parent=0 // pred_check
    _
  $region7: #{dc_discriminator_forward.10} parent=0 // pred_check_branch
    %22 = sbr.rel (0) target = $region9
  $region8: #{dc_discriminator_forward.10} parent=0 // pred_region
    _
  $region9: #{dc_discriminator_forward.10} parent=0 // pred_fallthru
    _
  %s23 = sadd.s32 0, 0
  %s24 = smul.u32 2, %s23
  %p25 = scmp.lt.s32.totalorder %s24, 1
  %s26 = scalar_select %p25, %s24, 1
  %s27 = smul.addr %s26, 5
  %s28 = smul.addr %s27, 4
  %s29 = scalar_lea.vmem %s0, %s28
  %s30 = sadd.s32 0, 0
  %s31 = smul.u32 2, %s30
  %p32 = scmp.lt.s32.totalorder %s31, 1
  %s33 = scalar_select %p32, %s31, 1
  %s34 = smul.addr %s33, 4
  %s35 = smul.addr %s34, 2
  %s36 = scalar_lea.vmem %s2, %s35
  %s37 = sadd.s32 0, 0
  %s38 = smul.u32 2, %s37
  %p39 = scmp.lt.s32.totalorder %s38, 1
  %s40 = scalar_select %p39, %s38, 1
  %s41 = smul.addr %s40, 5
  %s42 = smul.addr %s41, 4
  %s43 = scalar_lea.vmem %s0, %s42
  %s44 = sadd.s32 0, 0
  %s45 = smul.u32 2, %s44
  %s46 = sadd.s32 0, 0
  %s47 = smul.u32 2, %s46
  %p48 = scmp.lt.s32.totalorder %s47, 1
  %s49 = scalar_select %p48, %s47, 1
  %s50 = smul.addr %s49, 4
  %s51 = smul.addr %s50, 2
  %s52 = scalar_lea.vmem %s2, %s51
  %s53 = sadd.s32 0, 0
  %s54 = smul.u32 2, %s53
  %v56 = vld [vmem:[%s43] sm:$0x3]
  %v57 = vld [vmem:[%s43 + $0x4] sm:$0x3]
  %v58 = vld [vmem:[%s43 + $0x8] sm:$0x3]
  %v59 = vld [vmem:[%s43 + $0xc] sm:$0x3]
  %v60 = vld [vmem:[%s43 + $0x14] sm:$0x3]
  %v61 = vld [vmem:[%s43 + $0x18] sm:$0x3]
  %v62 = vld [vmem:[%s43 + $0x1c] sm:$0x3]
  %v63 = vld [vmem:[%s43 + $0x20] sm:$0x3]
  %v64 = vld [vmem:[%s1] sm:$0xf]
  %v65 = vld [vmem:[%s1 + $0x4] sm:$0xf]
  %v66 = vld [vmem:[%s1 + $0x8] sm:$0xf]
  %v67 = vld [vmem:[%s1 + $0xc] sm:$0xf]
  %v68 = vld [vmem:[%s1 + $0x10] sm:$0xf]
  %v69 = vld [vmem:[%s1 + $0x14] sm:$0xf]
  %v70 = vld [vmem:[%s1 + $0x18] sm:$0xf]
  %v71 = vld [vmem:[%s1 + $0x1c] sm:$0xf]
  %v72 = vld [vmem:[%s43] sm:$0x7]
  %v73 = vld [vmem:[%s43 + $0x4] sm:$0x7]
  %v74 = vld [vmem:[%s43 + $0x8] sm:$0x7]
  %v75 = vld [vmem:[%s43 + $0xc] sm:$0x7]
  %v76 = vld [vmem:[%s43 + $0x14] sm:$0x7]
  %v77 = vld [vmem:[%s43 + $0x18] sm:$0x7]
  %v78 = vld [vmem:[%s43 + $0x1c] sm:$0x7]
  %v79 = vld [vmem:[%s43 + $0x20] sm:$0x7]
  %v88 = vrot.slane %v72, 2
  %v89 = vrot.slane %v73, 2
  %v90 = vrot.slane %v74, 2
  %v91 = vrot.slane %v75, 2
  %v92 = vrot.slane %v76, 2
  %v93 = vrot.slane %v77, 2
  %v94 = vrot.slane %v78, 2
  %v95 = vrot.slane %v79, 2
  %vm96 = vcmask 1041408
  %v99 = vsel %vm96, %v72, %v88
  %vm100 = vcmask 1043458
  %v101 = vsel %vm100, %v72, %v88
  %v103 = vrot.slane %v101, 2
  %v106 = vsel %vm96, %v73, %v89
  %v107 = vsel %vm100, %v73, %v89
  %v109 = vrot.slane %v107, 2
  %v112 = vsel %vm96, %v74, %v90
  %v113 = vsel %vm100, %v74, %v90
  %v115 = vrot.slane %v113, 2
  %v118 = vsel %vm96, %v75, %v91
  %v119 = vsel %vm100, %v75, %v91
  %v121 = vrot.slane %v119, 2
  %v124 = vsel %vm96, %v76, %v92
  %v125 = vsel %vm100, %v76, %v92
  %v127 = vrot.slane %v125, 2
  %v130 = vsel %vm96, %v77, %v93
  %v131 = vsel %vm100, %v77, %v93
  %v133 = vrot.slane %v131, 2
  %v136 = vsel %vm96, %v78, %v94
  %v137 = vsel %vm100, %v78, %v94
  %v139 = vrot.slane %v137, 2
  %v142 = vsel %vm96, %v79, %v95
  %v143 = vsel %vm100, %v79, %v95
  %v145 = vrot.slane %v143, 2
  %vm146 = vsmask.f32 1280
  %vm147 = vsmask.f32 3336
  %vm148 = vmor %vm146, %vm147
  %vm149 = vsmask.f32 5392
  %vm150 = vmor %vm148, %vm149
  %vm151 = vsmask.f32 7448
  %vm152 = vmor %vm150, %vm151
  %v153 = vshrl.u32 %v99, 16
  %v155 = vrot.slane %v153, 6
  %v156 = vshll.u32 %v99, 16
  %v158 = vrot.slane %v156, 7
  %v159 = vor.u32 %v155, %v158
  %v160 = vrot.slane %v159, 2
  %v162 = vshll.u32 %v103, 16
  %v164 = vrot.slane %v162, 7
  %v165 = vsel %vm152, %v160, %v164
  %v166 = vshrl.u32 %v106, 16
  %v168 = vrot.slane %v166, 6
  %v169 = vshll.u32 %v106, 16
  %v171 = vrot.slane %v169, 7
  %v172 = vor.u32 %v168, %v171
  %v173 = vrot.slane %v172, 2
  %v175 = vshll.u32 %v109, 16
  %v177 = vrot.slane %v175, 7
  %v178 = vsel %vm152, %v173, %v177
  %v179 = vshrl.u32 %v112, 16
  %v181 = vrot.slane %v179, 6
  %v182 = vshll.u32 %v112, 16
  %v184 = vrot.slane %v182, 7
  %v185 = vor.u32 %v181, %v184
  %v186 = vrot.slane %v185, 2
  %v188 = vshll.u32 %v115, 16
  %v190 = vrot.slane %v188, 7
  %v191 = vsel %vm152, %v186, %v190
  %v192 = vshrl.u32 %v118, 16
  %v194 = vrot.slane %v192, 6
  %v195 = vshll.u32 %v118, 16
  %v197 = vrot.slane %v195, 7
  %v198 = vor.u32 %v194, %v197
  %v199 = vrot.slane %v198, 2
  %v201 = vshll.u32 %v121, 16
  %v203 = vrot.slane %v201, 7
  %v204 = vsel %vm152, %v199, %v203
  %v205 = vshrl.u32 %v124, 16
  %v207 = vrot.slane %v205, 6
  %v208 = vshll.u32 %v124, 16
  %v210 = vrot.slane %v208, 7
  %v211 = vor.u32 %v207, %v210
  %v212 = vrot.slane %v211, 2
  %v214 = vshll.u32 %v127, 16
  %v216 = vrot.slane %v214, 7
  %v217 = vsel %vm152, %v212, %v216
  %v218 = vshrl.u32 %v130, 16
  %v220 = vrot.slane %v218, 6
  %v221 = vshll.u32 %v130, 16
  %v223 = vrot.slane %v221, 7
  %v224 = vor.u32 %v220, %v223
  %v225 = vrot.slane %v224, 2
  %v227 = vshll.u32 %v133, 16
  %v229 = vrot.slane %v227, 7
  %v230 = vsel %vm152, %v225, %v229
  %v231 = vshrl.u32 %v136, 16
  %v233 = vrot.slane %v231, 6
  %v234 = vshll.u32 %v136, 16
  %v236 = vrot.slane %v234, 7
  %v237 = vor.u32 %v233, %v236
  %v238 = vrot.slane %v237, 2
  %v240 = vshll.u32 %v139, 16
  %v242 = vrot.slane %v240, 7
  %v243 = vsel %vm152, %v238, %v242
  %v244 = vshrl.u32 %v142, 16
  %v246 = vrot.slane %v244, 6
  %v247 = vshll.u32 %v142, 16
  %v249 = vrot.slane %v247, 7
  %v250 = vor.u32 %v246, %v249
  %v251 = vrot.slane %v250, 2
  %v253 = vshll.u32 %v145, 16
  %v255 = vrot.slane %v253, 7
  %v256 = vsel %vm152, %v251, %v255
  %s257 = scalar_lea.vmem %s1, 32
  %v258 = vld [vmem:[%s257] sm:$0xf]
  %v259 = vld [vmem:[%s257 + $0x4] sm:$0xf]
  %v260 = vld [vmem:[%s257 + $0x8] sm:$0xf]
  %v261 = vld [vmem:[%s257 + $0xc] sm:$0xf]
  %v262 = vld [vmem:[%s257 + $0x10] sm:$0xf]
  %v263 = vld [vmem:[%s257 + $0x14] sm:$0xf]
  %v264 = vld [vmem:[%s257 + $0x18] sm:$0xf]
  %v265 = vld [vmem:[%s257 + $0x1c] sm:$0xf]
  %267 = vst [vmem:[#allocation1] ss:$4 sm:$0xff] %v165
  %s269 = scalar_lea.vmem [#allocation1], 1
  %270 = vst [vmem:[%s269] ss:$4 sm:$0xff] %v178
  %s272 = scalar_lea.vmem [#allocation1], 2
  %273 = vst [vmem:[%s272] ss:$4 sm:$0xff] %v191
  %s275 = scalar_lea.vmem [#allocation1], 3
  %276 = vst [vmem:[%s275] ss:$4 sm:$0xff] %v204
  %s278 = scalar_lea.vmem [#allocation1], 32
  %279 = vst [vmem:[%s278] ss:$4 sm:$0xff] %v217
  %s281 = scalar_lea.vmem [#allocation1], 33
  %282 = vst [vmem:[%s281] ss:$4 sm:$0xff] %v230
  %s284 = scalar_lea.vmem [#allocation1], 34
  %285 = vst [vmem:[%s284] ss:$4 sm:$0xff] %v243
  %s287 = scalar_lea.vmem [#allocation1], 35
  %288 = vst [vmem:[%s287] ss:$4 sm:$0xff] %v256
  %v289 = vld.sshfl [vmem:[#allocation1] sm:$0xff pattern:$0x73625140]
  %v290 = vld.sshfl [vmem:[#allocation1 + $0x20] sm:$0xff pattern:$0x73625140]
  %v299 = vunpack.c.l.b16 %v258
  %v300 = vunpack.c.l.b16 %v259
  %v301 = vunpack.c.l.b16 %v260
  %v302 = vunpack.c.l.b16 %v261
  %v303 = vunpack.c.l.b16 %v262
  %v304 = vunpack.c.l.b16 %v263
  %v305 = vunpack.c.l.b16 %v264
  %v306 = vunpack.c.l.b16 %v265
  %v307 = vpack.c.b16 %v300, %v299
  %v308 = vpack.c.b16 %v302, %v301
  %v309 = vpack.c.b16 %v304, %v303
  %v310 = vpack.c.b16 %v306, %v305
  %vm315 = vcmask 523264
  %v316 = vsel %vm315, %v289, 0
  %v318 = vsel %vm315, %v290, 0
  %320 = vmatpush.bf16.msra.mxu0 0
  %321 = vmatpush.bf16.msra.mxu0 0
  %322 = vmatpush.bf16.msra.mxu0 0
  %323 = vmatpush.bf16.msra.mxu0 0
  %324 = vmatpush.bf16.msra.mxu0 %v310
  %325 = vmatpush.bf16.msra.mxu0 %v309
  %326 = vmatpush.bf16.msra.mxu0 %v308
  %327 = vmatpush.bf16.msra.mxu0 %v307
  %328 = vmatmul.bf16.gmra.mxu0 %v316
  %v329 = vpop.f32.mrf.mxu0
  %v330 = vadd.f32 0.0, %v329
  %v331 = vpop.f32.mrf.mxu0
  %v332 = vadd.f32 0.0, %v331
  %333 = vmatmul.bf16.gmra.mxu0 %v318
  %v334 = vpop.f32.mrf.mxu0
  %v335 = vadd.f32 0.0, %v334
  %v336 = vpop.f32.mrf.mxu0
  %v337 = vadd.f32 0.0, %v336
  %338 = vdwg.mxu0
  %340 = vst [vmem:[#allocation1] ss:$4 sm:$0xff] %v56
  %s342 = scalar_lea.vmem [#allocation1], 1
  %343 = vst [vmem:[%s342] ss:$4 sm:$0xff] %v57
  %s345 = scalar_lea.vmem [#allocation1], 2
  %346 = vst [vmem:[%s345] ss:$4 sm:$0xff] %v58
  %s348 = scalar_lea.vmem [#allocation1], 3
  %349 = vst [vmem:[%s348] ss:$4 sm:$0xff] %v59
  %s351 = scalar_lea.vmem [#allocation1], 32
  %352 = vst [vmem:[%s351] ss:$4 sm:$0xff] %v60
  %s354 = scalar_lea.vmem [#allocation1], 33
  %355 = vst [vmem:[%s354] ss:$4 sm:$0xff] %v61
  %s357 = scalar_lea.vmem [#allocation1], 34
  %358 = vst [vmem:[%s357] ss:$4 sm:$0xff] %v62
  %s360 = scalar_lea.vmem [#allocation1], 35
  %361 = vst [vmem:[%s360] ss:$4 sm:$0xff] %v63
  %v362 = vld.sshfl [vmem:[#allocation1] sm:$0xff pattern:$0x73625140]
  %v363 = vld.sshfl [vmem:[#allocation1 + $0x20] sm:$0xff pattern:$0x73625140]
  %v372 = vunpack.c.l.b16 %v64
  %v373 = vunpack.c.l.b16 %v65
  %v374 = vunpack.c.l.b16 %v66
  %v375 = vunpack.c.l.b16 %v67
  %v376 = vunpack.c.l.b16 %v68
  %v377 = vunpack.c.l.b16 %v69
  %v378 = vunpack.c.l.b16 %v70
  %v379 = vunpack.c.l.b16 %v71
  %v380 = vpack.c.b16 %v373, %v372
  %v381 = vpack.c.b16 %v375, %v374
  %v382 = vpack.c.b16 %v377, %v376
  %v383 = vpack.c.b16 %v379, %v378
  %v388 = vsel %vm315, %v362, 0
  %v390 = vsel %vm315, %v363, 0
  %392 = vmatpush.bf16.msra.mxu0 0
  %393 = vmatpush.bf16.msra.mxu0 0
  %394 = vmatpush.bf16.msra.mxu0 0
  %395 = vmatpush.bf16.msra.mxu0 0
  %396 = vmatpush.bf16.msra.mxu0 %v383
  %397 = vmatpush.bf16.msra.mxu0 %v382
  %398 = vmatpush.bf16.msra.mxu0 %v381
  %399 = vmatpush.bf16.msra.mxu0 %v380
  %400 = vmatmul.bf16.gmra.mxu0 %v388
  %v401 = vpop.f32.mrf.mxu0
  %v402 = vadd.f32 %v330, %v401
  %v403 = vpop.f32.mrf.mxu0
  %v404 = vadd.f32 %v332, %v403
  %405 = vmatmul.bf16.gmra.mxu0 %v390
  %v406 = vpop.f32.mrf.mxu0
  %v407 = vadd.f32 %v335, %v406
  %v408 = vpop.f32.mrf.mxu0
  %v409 = vadd.f32 %v337, %v408
  %410 = vdwg.mxu0
  %s411 = scalar_lea.vmem %s43, 4
  %v412 = vld [vmem:[%s411] sm:$0x3]
  %v413 = vld [vmem:[%s411 + $0x4] sm:$0x3]
  %v414 = vld [vmem:[%s411 + $0x8] sm:$0x3]
  %v415 = vld [vmem:[%s411 + $0xc] sm:$0x3]
  %v416 = vld [vmem:[%s411 + $0x14] sm:$0x3]
  %v417 = vld [vmem:[%s411 + $0x18] sm:$0x3]
  %v418 = vld [vmem:[%s411 + $0x1c] sm:$0x3]
  %v419 = vld [vmem:[%s411 + $0x20] sm:$0x3]
  %s420 = scalar_lea.vmem %s1, 64
  %v421 = vld [vmem:[%s420] sm:$0xf]
  %v422 = vld [vmem:[%s420 + $0x4] sm:$0xf]
  %v423 = vld [vmem:[%s420 + $0x8] sm:$0xf]
  %v424 = vld [vmem:[%s420 + $0xc] sm:$0xf]
  %v425 = vld [vmem:[%s420 + $0x10] sm:$0xf]
  %v426 = vld [vmem:[%s420 + $0x14] sm:$0xf]
  %v427 = vld [vmem:[%s420 + $0x18] sm:$0xf]
  %v428 = vld [vmem:[%s420 + $0x1c] sm:$0xf]
  %430 = vst [vmem:[#allocation1] ss:$4 sm:$0xff] %v412
  %s432 = scalar_lea.vmem [#allocation1], 1
  %433 = vst [vmem:[%s432] ss:$4 sm:$0xff] %v413
  %s435 = scalar_lea.vmem [#allocation1], 2
  %436 = vst [vmem:[%s435] ss:$4 sm:$0xff] %v414
  %s438 = scalar_lea.vmem [#allocation1], 3
  %439 = vst [vmem:[%s438] ss:$4 sm:$0xff] %v415
  %s441 = scalar_lea.vmem [#allocation1], 32
  %442 = vst [vmem:[%s441] ss:$4 sm:$0xff] %v416
  %s444 = scalar_lea.vmem [#allocation1], 33
  %445 = vst [vmem:[%s444] ss:$4 sm:$0xff] %v417
  %s447 = scalar_lea.vmem [#allocation1], 34
  %448 = vst [vmem:[%s447] ss:$4 sm:$0xff] %v418
  %s450 = scalar_lea.vmem [#allocation1], 35
  %451 = vst [vmem:[%s450] ss:$4 sm:$0xff] %v419
  %v452 = vld.sshfl [vmem:[#allocation1] sm:$0xff pattern:$0x73625140]
  %v453 = vld.sshfl [vmem:[#allocation1 + $0x20] sm:$0xff pattern:$0x73625140]
  %v462 = vunpack.c.l.b16 %v421
  %v463 = vunpack.c.l.b16 %v422
  %v464 = vunpack.c.l.b16 %v423
  %v465 = vunpack.c.l.b16 %v424
  %v466 = vunpack.c.l.b16 %v425
  %v467 = vunpack.c.l.b16 %v426
  %v468 = vunpack.c.l.b16 %v427
  %v469 = vunpack.c.l.b16 %v428
  %v470 = vpack.c.b16 %v463, %v462
  %v471 = vpack.c.b16 %v465, %v464
  %v472 = vpack.c.b16 %v467, %v466
  %v473 = vpack.c.b16 %v469, %v468
  %v478 = vsel %vm315, %v452, 0
  %v480 = vsel %vm315, %v453, 0
  %482 = vmatpush.bf16.msra.mxu0 0
  %483 = vmatpush.bf16.msra.mxu0 0
  %484 = vmatpush.bf16.msra.mxu0 0
  %485 = vmatpush.bf16.msra.mxu0 0
  %486 = vmatpush.bf16.msra.mxu0 %v473
  %487 = vmatpush.bf16.msra.mxu0 %v472
  %488 = vmatpush.bf16.msra.mxu0 %v471
  %489 = vmatpush.bf16.msra.mxu0 %v470
  %490 = vmatmul.bf16.gmra.mxu0 %v478
  %v491 = vpop.f32.mrf.mxu0
  %v492 = vadd.f32 0.0, %v491
  %v493 = vpop.f32.mrf.mxu0
  %v494 = vadd.f32 0.0, %v493
  %495 = vmatmul.bf16.gmra.mxu0 %v480
  %v496 = vpop.f32.mrf.mxu0
  %v497 = vadd.f32 0.0, %v496
  %v498 = vpop.f32.mrf.mxu0
  %v499 = vadd.f32 0.0, %v498
  %500 = vdwg.mxu0
  %v501 = vadd.f32 %v402, %v492
  %v502 = vadd.f32 %v404, %v494
  %v503 = vadd.f32 %v407, %v497
  %v504 = vadd.f32 %v409, %v499
  %v505 = vld [vmem:[%s411] sm:$0x7]
  %v506 = vld [vmem:[%s411 + $0x4] sm:$0x7]
  %v507 = vld [vmem:[%s411 + $0x8] sm:$0x7]
  %v508 = vld [vmem:[%s411 + $0xc] sm:$0x7]
  %v509 = vld [vmem:[%s411 + $0x14] sm:$0x7]
  %v510 = vld [vmem:[%s411 + $0x18] sm:$0x7]
  %v511 = vld [vmem:[%s411 + $0x1c] sm:$0x7]
  %v512 = vld [vmem:[%s411 + $0x20] sm:$0x7]
  %v521 = vrot.slane %v505, 2
  %v522 = vrot.slane %v506, 2
  %v523 = vrot.slane %v507, 2
  %v524 = vrot.slane %v508, 2
  %v525 = vrot.slane %v509, 2
  %v526 = vrot.slane %v510, 2
  %v527 = vrot.slane %v511, 2
  %v528 = vrot.slane %v512, 2
  %v531 = vsel %vm96, %v505, %v521
  %v532 = vsel %vm100, %v505, %v521
  %v534 = vrot.slane %v532, 2
  %v537 = vsel %vm96, %v506, %v522
  %v538 = vsel %vm100, %v506, %v522
  %v540 = vrot.slane %v538, 2
  %v543 = vsel %vm96, %v507, %v523
  %v544 = vsel %vm100, %v507, %v523
  %v546 = vrot.slane %v544, 2
  %v549 = vsel %vm96, %v508, %v524
  %v550 = vsel %vm100, %v508, %v524
  %v552 = vrot.slane %v550, 2
  %v555 = vsel %vm96, %v509, %v525
  %v556 = vsel %vm100, %v509, %v525
  %v558 = vrot.slane %v556, 2
  %v561 = vsel %vm96, %v510, %v526
  %v562 = vsel %vm100, %v510, %v526
  %v564 = vrot.slane %v562, 2
  %v567 = vsel %vm96, %v511, %v527
  %v568 = vsel %vm100, %v511, %v527
  %v570 = vrot.slane %v568, 2
  %v573 = vsel %vm96, %v512, %v528
  %v574 = vsel %vm100, %v512, %v528
  %v576 = vrot.slane %v574, 2
  %v577 = vshrl.u32 %v531, 16
  %v579 = vrot.slane %v577, 6
  %v580 = vshll.u32 %v531, 16
  %v582 = vrot.slane %v580, 7
  %v583 = vor.u32 %v579, %v582
  %v584 = vrot.slane %v583, 2
  %v586 = vshll.u32 %v534, 16
  %v588 = vrot.slane %v586, 7
  %v589 = vsel %vm152, %v584, %v588
  %v590 = vshrl.u32 %v537, 16
  %v592 = vrot.slane %v590, 6
  %v593 = vshll.u32 %v537, 16
  %v595 = vrot.slane %v593, 7
  %v596 = vor.u32 %v592, %v595
  %v597 = vrot.slane %v596, 2
  %v599 = vshll.u32 %v540, 16
  %v601 = vrot.slane %v599, 7
  %v602 = vsel %vm152, %v597, %v601
  %v603 = vshrl.u32 %v543, 16
  %v605 = vrot.slane %v603, 6
  %v606 = vshll.u32 %v543, 16
  %v608 = vrot.slane %v606, 7
  %v609 = vor.u32 %v605, %v608
  %v610 = vrot.slane %v609, 2
  %v612 = vshll.u32 %v546, 16
  %v614 = vrot.slane %v612, 7
  %v615 = vsel %vm152, %v610, %v614
  %v616 = vshrl.u32 %v549, 16
  %v618 = vrot.slane %v616, 6
  %v619 = vshll.u32 %v549, 16
  %v621 = vrot.slane %v619, 7
  %v622 = vor.u32 %v618, %v621
  %v623 = vrot.slane %v622, 2
  %v625 = vshll.u32 %v552, 16
  %v627 = vrot.slane %v625, 7
  %v628 = vsel %vm152, %v623, %v627
  %v629 = vshrl.u32 %v555, 16
  %v631 = vrot.slane %v629, 6
  %v632 = vshll.u32 %v555, 16
  %v634 = vrot.slane %v632, 7
  %v635 = vor.u32 %v631, %v634
  %v636 = vrot.slane %v635, 2
  %v638 = vshll.u32 %v558, 16
  %v640 = vrot.slane %v638, 7
  %v641 = vsel %vm152, %v636, %v640
  %v642 = vshrl.u32 %v561, 16
  %v644 = vrot.slane %v642, 6
  %v645 = vshll.u32 %v561, 16
  %v647 = vrot.slane %v645, 7
  %v648 = vor.u32 %v644, %v647
  %v649 = vrot.slane %v648, 2
  %v651 = vshll.u32 %v564, 16
  %v653 = vrot.slane %v651, 7
  %v654 = vsel %vm152, %v649, %v653
  %v655 = vshrl.u32 %v567, 16
  %v657 = vrot.slane %v655, 6
  %v658 = vshll.u32 %v567, 16
  %v660 = vrot.slane %v658, 7
  %v661 = vor.u32 %v657, %v660
  %v662 = vrot.slane %v661, 2
  %v664 = vshll.u32 %v570, 16
  %v666 = vrot.slane %v664, 7
  %v667 = vsel %vm152, %v662, %v666
  %v668 = vshrl.u32 %v573, 16
  %v670 = vrot.slane %v668, 6
  %v671 = vshll.u32 %v573, 16
  %v673 = vrot.slane %v671, 7
  %v674 = vor.u32 %v670, %v673
  %v675 = vrot.slane %v674, 2
  %v677 = vshll.u32 %v576, 16
  %v679 = vrot.slane %v677, 7
  %v680 = vsel %vm152, %v675, %v679
  %s681 = scalar_lea.vmem %s1, 96
  %v682 = vld [vmem:[%s681] sm:$0xf]
  %v683 = vld [vmem:[%s681 + $0x4] sm:$0xf]
  %v684 = vld [vmem:[%s681 + $0x8] sm:$0xf]
  %v685 = vld [vmem:[%s681 + $0xc] sm:$0xf]
  %v686 = vld [vmem:[%s681 + $0x10] sm:$0xf]
  %v687 = vld [vmem:[%s681 + $0x14] sm:$0xf]
  %v688 = vld [vmem:[%s681 + $0x18] sm:$0xf]
  %v689 = vld [vmem:[%s681 + $0x1c] sm:$0xf]
  %691 = vst [vmem:[#allocation1] ss:$4 sm:$0xff] %v589
  %s693 = scalar_lea.vmem [#allocation1], 1
  %694 = vst [vmem:[%s693] ss:$4 sm:$0xff] %v602
  %s696 = scalar_lea.vmem [#allocation1], 2
  %697 = vst [vmem:[%s696] ss:$4 sm:$0xff] %v615
  %s699 = scalar_lea.vmem [#allocation1], 3
  %700 = vst [vmem:[%s699] ss:$4 sm:$0xff] %v628
  %s702 = scalar_lea.vmem [#allocation1], 32
  %703 = vst [vmem:[%s702] ss:$4 sm:$0xff] %v641
  %s705 = scalar_lea.vmem [#allocation1], 33
  %706 = vst [vmem:[%s705] ss:$4 sm:$0xff] %v654
  %s708 = scalar_lea.vmem [#allocation1], 34
  %709 = vst [vmem:[%s708] ss:$4 sm:$0xff] %v667
  %s711 = scalar_lea.vmem [#allocation1], 35
  %712 = vst [vmem:[%s711] ss:$4 sm:$0xff] %v680
  %v713 = vld.sshfl [vmem:[#allocation1] sm:$0xff pattern:$0x73625140]
  %v714 = vld.sshfl [vmem:[#allocation1 + $0x20] sm:$0xff pattern:$0x73625140]
  %v723 = vunpack.c.l.b16 %v682
  %v724 = vunpack.c.l.b16 %v683
  %v725 = vunpack.c.l.b16 %v684
  %v726 = vunpack.c.l.b16 %v685
  %v727 = vunpack.c.l.b16 %v686
  %v728 = vunpack.c.l.b16 %v687
  %v729 = vunpack.c.l.b16 %v688
  %v730 = vunpack.c.l.b16 %v689
  %v731 = vpack.c.b16 %v724, %v723
  %v732 = vpack.c.b16 %v726, %v725
  %v733 = vpack.c.b16 %v728, %v727
  %v734 = vpack.c.b16 %v730, %v729
  %v739 = vsel %vm315, %v713, 0
  %v741 = vsel %vm315, %v714, 0
  %743 = vmatpush.bf16.msra.mxu0 0
  %744 = vmatpush.bf16.msra.mxu0 0
  %745 = vmatpush.bf16.msra.mxu0 0
  %746 = vmatpush.bf16.msra.mxu0 0
  %747 = vmatpush.bf16.msra.mxu0 %v734
  %748 = vmatpush.bf16.msra.mxu0 %v733
  %749 = vmatpush.bf16.msra.mxu0 %v732
  %750 = vmatpush.bf16.msra.mxu0 %v731
  %751 = vmatmul.bf16.gmra.mxu0 %v739
  %v752 = vpop.f32.mrf.mxu0
  %v753 = vadd.f32 0.0, %v752
  %v754 = vpop.f32.mrf.mxu0
  %v755 = vadd.f32 0.0, %v754
  %756 = vmatmul.bf16.gmra.mxu0 %v741
  %v757 = vpop.f32.mrf.mxu0
  %v758 = vadd.f32 0.0, %v757
  %v759 = vpop.f32.mrf.mxu0
  %v760 = vadd.f32 0.0, %v759
  %761 = vdwg.mxu0
  %v762 = vadd.f32 %v501, %v753
  %v763 = vadd.f32 %v502, %v755
  %v764 = vadd.f32 %v503, %v758
  %v765 = vadd.f32 %v504, %v760
  %v770 = vrot.slane %v762, 4
  %v771 = vrot.slane %v763, 4
  %v772 = vrot.slane %v764, 4
  %v773 = vrot.slane %v765, 4
  %v778 = vpack.c.bf16 %v762, %v762
  %v779 = vpack.c.bf16 %v770, %v770
  %v780 = vpack.c.bf16 %v763, %v763
  %v781 = vpack.c.bf16 %v771, %v771
  %v782 = vpack.c.bf16 %v764, %v764
  %v783 = vpack.c.bf16 %v772, %v772
  %v784 = vpack.c.bf16 %v765, %v765
  %v785 = vpack.c.bf16 %v773, %v773
  %786 = vst [vmem:[%s52] sm:$0x3] %v778
  %787 = vst [vmem:[%s52 + $0x2] sm:$0x3] %v779
  %788 = vst [vmem:[%s52 + $0x4] sm:$0x3] %v780
  %789 = vst [vmem:[%s52 + $0x6] sm:$0x3] %v781
  %790 = vst [vmem:[%s52 + $0x8] sm:$0x3] %v782
  %791 = vst [vmem:[%s52 + $0xa] sm:$0x3] %v783
  %792 = vst [vmem:[%s52 + $0xc] sm:$0x3] %v784
  %793 = vst [vmem:[%s52 + $0xe] sm:$0x3] %v785
  %p794 = scmp.eq.s32.totalorder 0, 0
  // Predicated region
  $region10: #{dc_discriminator_forward.10} parent=0 // pred_check
    %p795 = pneg %p794
  $region11: #{dc_discriminator_forward.10} parent=0 // pred_check_branch
    %797 = sbr.rel (%p795) target = $region13
  $region12: #{dc_discriminator_forward.10} parent=0 // pred_region
    %798 = vst [vmem:[%s3] sm:$0x1] 0.0
    %799 = vst [vmem:[%s4] sm:$0x1] 0.0
  $region13: #{dc_discriminator_forward.10} parent=0 // pred_fallthru
    _
  %v800 = vld [vmem:[%s3] sm:$0x1]
  %v801 = vadd.f32 %v762, %v763
  %v802 = vadd.f32 %v801, %v764
  %v803 = vadd.f32 %v802, %v765
  %v804 = vrot.slane %v803, 4
  %v805 = vadd.f32 %v803, %v804
  %v806 = vrot.slane %v805, 2
  %v807 = vadd.f32 %v805, %v806
  %v808 = vrot.slane %v807, 1
  %v809 = vadd.f32 %v807, %v808
  %v810 = vadd.f32 %v800, %v809
  %811 = vst [vmem:[%s3] sm:$0x1] %v810
  %v812 = vld [vmem:[%s4] sm:$0x1]
  %v813 = vmul.f32 %v762, %v762
  %v814 = vmul.f32 %v763, %v763
  %v815 = vmul.f32 %v764, %v764
  %v816 = vmul.f32 %v765, %v765
  %v817 = vadd.f32 %v813, %v814
  %v818 = vadd.f32 %v817, %v815
  %v819 = vadd.f32 %v818, %v816
  %v820 = vrot.slane %v819, 4
  %v821 = vadd.f32 %v819, %v820
  %v822 = vrot.slane %v821, 2
  %v823 = vadd.f32 %v821, %v822
  %v824 = vrot.slane %v823, 1
  %v825 = vadd.f32 %v823, %v824
  %v826 = vadd.f32 %v812, %v825
  %827 = vst [vmem:[%s4] sm:$0x1] %v826
  %s828 = sadd.s32 0, 0
  %s829 = smul.u32 2, %s828
  %p830 = scmp.lt.s32.totalorder %s829, 1
  %s831 = scalar_select %p830, %s829, 1
  %s832 = smul.addr %s831, 4
  %s833 = smul.addr %s832, 2
  %s834 = scalar_lea.vmem %s2, %s833
  // Predicated region
  $region14: #{dc_discriminator_forward.10} parent=0 // pred_check
    _
  $region15: #{dc_discriminator_forward.10} parent=0 // pred_check_branch
    %836 = sbr.rel (0) target = $region17
  $region16: #{dc_discriminator_forward.10} parent=0 // pred_region
    %s837 = sadd.s32 0, 0
    %s838 = smul.u32 2, %s837
  $region17: #{dc_discriminator_forward.10} parent=0 // pred_fallthru
    _
  // Predicated region
  $region18: #{dc_discriminator_forward.10} parent=0 // pred_check
    _
  $region19: #{dc_discriminator_forward.10} parent=0 // pred_check_branch
    %840 = sbr.rel (0) target = $region21
  $region20: #{dc_discriminator_forward.10} parent=0 // pred_region
    _
  $region21: #{dc_discriminator_forward.10} parent=0 // pred_fallthru
    _
  // Predicated region
  $region22: #{dc_discriminator_forward.10} parent=0 // pred_check
    _
  $region23: #{dc_discriminator_forward.10} parent=0 // pred_check_branch
    %842 = sbr.rel (0) target = $region25
  $region24: #{dc_discriminator_forward.10} parent=0 // pred_region
    _
  $region25: #{dc_discriminator_forward.10} parent=0 // pred_fallthru
    _
  // Predicated region
  $region26: #{dc_discriminator_forward.10} parent=0 // pred_check
    _
  $region27: #{dc_discriminator_forward.10} parent=0 // pred_check_branch
    %844 = sbr.rel (0) target = $region29
  $region28: #{dc_discriminator_forward.10} parent=0 // pred_region
    %s845 = sadd.s32 0, 0
    %s846 = smul.u32 2, %s845
    %p847 = scmp.lt.s32.totalorder %s846, 1
    %s848 = scalar_select %p847, %s846, 1
    %s849 = smul.addr %s848, 4
    %s850 = smul.addr %s849, 2
    %s851 = scalar_lea.vmem %s2, %s850
  $region29: #{dc_discriminator_forward.10} parent=0 // pred_fallthru
    _
  // Predicated region
  $region30: #{dc_discriminator_forward.10} parent=0 // pred_check
    _
  $region31: #{dc_discriminator_forward.10} parent=0 // pred_check_branch
    %853 = sbr.rel (0) target = $region33
  $region32: #{dc_discriminator_forward.10} parent=0 // pred_region
    _
  $region33: #{dc_discriminator_forward.10} parent=0 // pred_fallthru
    _
  // Predicated region
  $region34: #{dc_discriminator_forward.10} parent=0 // pred_check
    _
  $region35: #{dc_discriminator_forward.10} parent=0 // pred_check_branch
    %855 = sbr.rel (0) target = $region37
  $region36: #{dc_discriminator_forward.10} parent=0 // pred_region
    _
  $region37: #{dc_discriminator_forward.10} parent=0 // pred_fallthru
    _

// kernel: dc_discriminator_forward.13
$region0: #{dc_discriminator_forward.13}
  #allocation0 [shape = 'u32[]', space=smem, size = 0x4, offset = 0x4, fixed_abs, tag = 'smem constant byte address 0x4 - core index']
  #allocation1 [shape = 'u32[72,128]{1,0:T(1,128)}', space=vmem, size = 0x9000, scoped, tag = 'internal scratch']
  %s0 = inlined_call_operand.vmem [shape: bf16[8,128], index: 0, kind: input, shape index: {}]
  %s1 = inlined_call_operand.vmem [shape: f32[1,1,128], index: 1, kind: input, shape index: {}]
  %s2 = inlined_call_operand.vmem [shape: f32[1,1,128], index: 2, kind: input, shape index: {}]
  %s3 = inlined_call_operand.vmem [shape: f32[1,128], index: 3, kind: input, shape index: {}]
  %s4 = inlined_call_operand.vmem [shape: f32[1,128], index: 4, kind: input, shape index: {}]
  %s5 = inlined_call_operand.vmem [shape: f32[1,128], index: 5, kind: input, shape index: {}]
  %s6 = inlined_call_operand.vmem [shape: f32[1,2,128], index: 6, kind: output, shape index: {}]
  %s7 = sld [smem:[#allocation0]]
  $region34: #{dc_discriminator_forward.13} parent=0
    _
  %s9 = ssub.s32 1, %s7
  %s10 = scalar_select 0, %s9, %s7
  // Predicated region
  $region2: #{dc_discriminator_forward.13} parent=0 // pred_check
    _
  $region3: #{dc_discriminator_forward.13} parent=0 // pred_check_branch
    %12 = sbr.rel (0) target = $region5
  $region4: #{dc_discriminator_forward.13} parent=0 // pred_region
    _
  $region5: #{dc_discriminator_forward.13} parent=0 // pred_fallthru
    _
  // Predicated region
  $region6: #{dc_discriminator_forward.13} parent=0 // pred_check
    _
  $region7: #{dc_discriminator_forward.13} parent=0 // pred_check_branch
    %14 = sbr.rel (0) target = $region9
  $region8: #{dc_discriminator_forward.13} parent=0 // pred_region
    _
  $region9: #{dc_discriminator_forward.13} parent=0 // pred_fallthru
    _
  // Predicated region
  $region10: #{dc_discriminator_forward.13} parent=0 // pred_check
    _
  $region11: #{dc_discriminator_forward.13} parent=0 // pred_check_branch
    %16 = sbr.rel (0) target = $region13
  $region12: #{dc_discriminator_forward.13} parent=0 // pred_region
    _
  $region13: #{dc_discriminator_forward.13} parent=0 // pred_fallthru
    _
  // Predicated region
  $region14: #{dc_discriminator_forward.13} parent=0 // pred_check
    _
  $region15: #{dc_discriminator_forward.13} parent=0 // pred_check_branch
    %18 = sbr.rel (0) target = $region17
  $region16: #{dc_discriminator_forward.13} parent=0 // pred_region
    _
  $region17: #{dc_discriminator_forward.13} parent=0 // pred_fallthru
    _
  // Predicated region
  $region18: #{dc_discriminator_forward.13} parent=0 // pred_check
    _
  $region19: #{dc_discriminator_forward.13} parent=0 // pred_check_branch
    %20 = sbr.rel (0) target = $region21
  $region20: #{dc_discriminator_forward.13} parent=0 // pred_region
    _
  $region21: #{dc_discriminator_forward.13} parent=0 // pred_fallthru
    _
  // Predicated region
  $region22: #{dc_discriminator_forward.13} parent=0 // pred_check
    _
  $region23: #{dc_discriminator_forward.13} parent=0 // pred_check_branch
    %22 = sbr.rel (0) target = $region25
  $region24: #{dc_discriminator_forward.13} parent=0 // pred_region
    _
  $region25: #{dc_discriminator_forward.13} parent=0 // pred_fallthru
    _
  %v23 = vld [vmem:[%s1] sm:$0x1]
  %v24 = vadd.f32 %v23, 0.0
  %v25 = vmul.f32 %v24, 0.125
  %v26 = vld [vmem:[%s2] sm:$0x1]
  %v27 = vadd.f32 %v26, 0.0
  %v28 = vmul.f32 %v27, 0.125
  %v29 = vmul.f32 %v25, %v25
  %v30 = vsub.f32 %v28, %v29
  %v31 = vmax.f32 %v30, 0.0
  %v32 = vadd.f32 %v31, 1e-05
  %v33 = vrsqrt.pop %v32
  %v34 = vmul.f32 %v33, %v32
  %v35 = vmul.f32 %v34, %v33
  %v36 = vmul.f32 0.5, %v35
  %v37 = vsub.f32 1.5, %v36
  %v38 = vmul.f32 %v33, %v37
  %vm39 = vweird.f32 %v32
  %vm40 = vweird.f32 %v33
  %vm41 = vmor %vm39, %vm40
  %v42 = vsel %vm41, %v33, %v38
  %v43 = vld [vmem:[%s3] sm:$0x1]
  %v44 = vmul.f32 %v42, %v43
  %v45 = vld [vmem:[%s4] sm:$0x1]
  %v46 = vmul.f32 %v25, %v44
  %v47 = vsub.f32 %v45, %v46
  %v48 = vld [vmem:[%s0] sm:$0xf]
  %v49 = vunpack.c.l.bf16 %v48
  %v51 = vperm.slane %v44, 0
  %v53 = vmul.f32 %v49, %v51
  %v55 = vperm.slane %v47, 0
  %v57 = vadd.f32 %v53, %v55
  %v58 = vmul.f32 %v57, 0.2
  %v59 = vmax.f32 %v57, %v58
  %v61 = vrot.slane %v59, 4
  %vm63 = vcmask 1043456
  %v64 = vsel %vm63, %v59, 0.0
  %v65 = vrot.slane %v64, 4
  %v66 = vadd.f32 %v64, %v65
  %v67 = vrot.slane %v66, 2
  %v68 = vadd.f32 %v66, %v67
  %v69 = vrot.slane %v68, 1
  %v70 = vadd.f32 %v68, %v69
  %v71 = vsel %vm63, %v61, 0.0
  %v72 = vrot.slane %v71, 4
  %v73 = vadd.f32 %v71, %v72
  %v74 = vrot.slane %v73, 2
  %v75 = vadd.f32 %v73, %v74
  %v76 = vrot.slane %v75, 1
  %v77 = vadd.f32 %v75, %v76
  %v78 = vmul.f32 %v70, 0.25
  %v79 = vmul.f32 %v77, 0.25
  %v80 = vld [vmem:[%s5] sm:$0x1]
  %v82 = vperm.slane %v80, 0
  %v84 = vmul.f32 %v78, %v82
  %v85 = vmul.f32 %v79, %v82
  %v88 = vrot.slane %v85, 7
  %vm89 = vcmask 1041409
  %v90 = vsel %vm89, %v88, %v84
  %vm92 = vcmask 1041408
  %v93 = vsel %vm92, %v90, 0.0
  %94 = vadd.xlane.f32.xlu0 %v93
  %v95 = vpop.xlane.xlu0 %94
  %v96 = vsub.f32 0.0, %v95
  %v97 = vmul.f32 %v96, 1.442695
  %v98 = vpow.pop %v97
  %v99 = vadd.f32 %v98, 1.0
  %v100 = vrcp.pop %v99
  %v101 = vmul.f32 %v99, %v100
  %v102 = vsub.f32 1.0, %v101
  %v103 = vmul.f32 %v100, %v102
  %v104 = vadd.f32 %v100, %v103
  %vm105 = vweird.f32 %v99
  %vm106 = vweird.f32 %v100
  %vm107 = vmor %vm105, %vm106
  %v108 = vsel %vm107, %v100, %v104
  %v109 = vand.u32 2147483647, %v99
  %vm110 = vcmp.eq.f32.partialorder %v109, 8.507059e+37
  %v111 = vand.u32 %v99, 2147483648
  %v112 = vor.u32 1.1754944e-38, %v111
  %v113 = vsel %vm110, %v112, %v108
  %v114 = vmul.f32 1.0, %v113
  %115 = vst [vmem:[%s6] sm:$0x3] %v114
  // Predicated region
  $region26: #{dc_discriminator_forward.13} parent=0 // pred_check
    _
  $region27: #{dc_discriminator_forward.13} parent=0 // pred_check_branch
    %117 = sbr.rel (0) target = $region29
  $region28: #{dc_discriminator_forward.13} parent=0 // pred_region
    _
  $region29: #{dc_discriminator_forward.13} parent=0 // pred_fallthru
    _
  // Predicated region
  $region30: #{dc_discriminator_forward.13} parent=0 // pred_check
    _
  $region31: #{dc_discriminator_forward.13} parent=0 // pred_check_branch
    %119 = sbr.rel (0) target = $region33
  $region32: #{dc_discriminator_forward.13} parent=0 // pred_region
    _
  $region33: #{dc_discriminator_forward.13} parent=0 // pred_fallthru
    _

// kernel: dc_discriminator_forward.12
$region0: #{dc_discriminator_forward.12}
  #allocation0 [shape = 'u32[]', space=smem, size = 0x4, offset = 0x4, fixed_abs, tag = 'smem constant byte address 0x4 - core index']
  #allocation1 [shape = 'u32[72,128]{1,0:T(1,128)}', space=vmem, size = 0x9000, scoped, tag = 'internal scratch']
  %s0 = inlined_call_operand.vmem [shape: bf16[2,3,3,128], index: 0, kind: input, shape index: {}]
  %s1 = inlined_call_operand.vmem [shape: bf16[4,128,128], index: 1, kind: input, shape index: {}]
  %s2 = inlined_call_operand.vmem [shape: bf16[2,2,2,128], index: 2, kind: output, shape index: {0}]
  %s3 = inlined_call_operand.vmem [shape: f32[1,1,128], index: 3, kind: output, shape index: {1}]
  %s4 = inlined_call_operand.vmem [shape: f32[1,1,128], index: 4, kind: output, shape index: {2}]
  %5 = xla_tuple %s2, %s3, %s4
  %s6 = sld [smem:[#allocation0]]
  $region38: #{dc_discriminator_forward.12} parent=0
    _
  %s8 = ssub.s32 1, %s6
  %s9 = scalar_select 0, %s8, %s6
  // Predicated region
  $region2: #{dc_discriminator_forward.12} parent=0 // pred_check
    _
  $region3: #{dc_discriminator_forward.12} parent=0 // pred_check_branch
    %11 = sbr.rel (0) target = $region5
  $region4: #{dc_discriminator_forward.12} parent=0 // pred_region
    %s12 = sadd.s32 0, 0
    %s13 = smul.u32 2, %s12
    %p14 = scmp.lt.s32.totalorder %s13, 1
    %s15 = scalar_select %p14, %s13, 1
    %s16 = smul.addr %s15, 3
    %s17 = smul.addr %s16, 2
    %s18 = scalar_lea.vmem %s0, %s17
    %s19 = sadd.s32 0, 0
    %s20 = smul.u32 2, %s19
  $region5: #{dc_discriminator_forward.12} parent=0 // pred_fallthru
    _
  // Predicated region
  $region6: #{dc_discriminator_forward.12} parent=0 // pred_check
    _
  $region7: #{dc_discriminator_forward.12} parent=0 // pred_check_branch
    %22 = sbr.rel (0) target = $region9
  $region8: #{dc_discriminator_forward.12} parent=0 // pred_region
    _
  $region9: #{dc_discriminator_forward.12} parent=0 // pred_fallthru
    _
  %s23 = sadd.s32 0, 0
  %s24 = smul.u32 2, %s23
  %p25 = scmp.lt.s32.totalorder %s24, 1
  %s26 = scalar_select %p25, %s24, 1
  %s27 = smul.addr %s26, 3
  %s28 = smul.addr %s27, 2
  %s29 = scalar_lea.vmem %s0, %s28
  %s30 = sadd.s32 0, 0
  %s31 = smul.u32 2, %s30
  %p32 = scmp.lt.s32.totalorder %s31, 1
  %s33 = scalar_select %p32, %s31, 1
  %s34 = smul.addr %s33, 2
  %s35 = scalar_lea.vmem %s2, %s34
  %s36 = sadd.s32 0, 0
  %s37 = smul.u32 2, %s36
  %p38 = scmp.lt.s32.totalorder %s37, 1
  %s39 = scalar_select %p38, %s37, 1
  %s40 = smul.addr %s39, 3
  %s41 = smul.addr %s40, 2
  %s42 = scalar_lea.vmem %s0, %s41
  %s43 = sadd.s32 0, 0
  %s44 = smul.u32 2, %s43
  %s45 = sadd.s32 0, 0
  %s46 = smul.u32 2, %s45
  %p47 = scmp.lt.s32.totalorder %s46, 1
  %s48 = scalar_select %p47, %s46, 1
  %s49 = smul.addr %s48, 2
  %s50 = scalar_lea.vmem %s2, %s49
  %s51 = sadd.s32 0, 0
  %s52 = smul.u32 2, %s51
  %v53 = vld [vmem:[%s42] sm:$0x1]
  %v54 = vld [vmem:[%s42 + $0x2] sm:$0x1]
  %v55 = vld [vmem:[%s42 + $0x6] sm:$0x1]
  %v56 = vld [vmem:[%s42 + $0x8] sm:$0x1]
  %v57 = vld [vmem:[%s1] sm:$0xf]
  %v58 = vld [vmem:[%s1 + $0x4] sm:$0xf]
  %v59 = vld [vmem:[%s1 + $0x8] sm:$0xf]
  %v60 = vld [vmem:[%s1 + $0xc] sm:$0xf]
  %v61 = vld [vmem:[%s1 + $0x10] sm:$0xf]
  %v62 = vld [vmem:[%s1 + $0x14] sm:$0xf]
  %v63 = vld [vmem:[%s1 + $0x18] sm:$0xf]
  %v64 = vld [vmem:[%s1 + $0x1c] sm:$0xf]
  %v65 = vld [vmem:[%s1 + $0x20] sm:$0xf]
  %v66 = vld [vmem:[%s1 + $0x24] sm:$0xf]
  %v67 = vld [vmem:[%s1 + $0x28] sm:$0xf]
  %v68 = vld [vmem:[%s1 + $0x2c] sm:$0xf]
  %v69 = vld [vmem:[%s1 + $0x30] sm:$0xf]
  %v70 = vld [vmem:[%s1 + $0x34] sm:$0xf]
  %v71 = vld [vmem:[%s1 + $0x38] sm:$0xf]
  %v72 = vld [vmem:[%s1 + $0x3c] sm:$0xf]
  %v73 = vld [vmem:[%s42] sm:$0x3]
  %v74 = vld [vmem:[%s42 + $0x2] sm:$0x3]
  %v75 = vld [vmem:[%s42 + $0x6] sm:$0x3]
  %v76 = vld [vmem:[%s42 + $0x8] sm:$0x3]
  %v81 = vrot.slane %v73, 1
  %v82 = vrot.slane %v73, 2
  %v83 = vrot.slane %v73, 3
  %v84 = vrot.slane %v74, 1
  %v85 = vrot.slane %v74, 2
  %v86 = vrot.slane %v74, 3
  %v87 = vrot.slane %v75, 1
  %v88 = vrot.slane %v75, 2
  %v89 = vrot.slane %v75, 3
  %v90 = vrot.slane %v76, 1
  %v91 = vrot.slane %v76, 2
  %v92 = vrot.slane %v76, 3
  %vm93 = vcmask 1040384
  %v96 = vsel %vm93, %v73, %v81
  %vm97 = vcmask 1042434
  %v100 = vsel %vm97, %v82, %v83
  %vm101 = vcmask 1041408
  %v102 = vsel %vm101, %v96, %v100
  %vm103 = vcmask 1041409
  %v104 = vsel %vm103, %v73, %v81
  %vm105 = vcmask 1043459
  %v106 = vsel %vm105, %v82, %v83
  %vm107 = vcmask 1042433
  %v108 = vsel %vm107, %v104, %v106
  %v110 = vrot.slane %v108, 1
  %v113 = vsel %vm93, %v74, %v84
  %v116 = vsel %vm97, %v85, %v86
  %v117 = vsel %vm101, %v113, %v116
  %v118 = vsel %vm103, %v74, %v84
  %v119 = vsel %vm105, %v85, %v86
  %v120 = vsel %vm107, %v118, %v119
  %v122 = vrot.slane %v120, 1
  %v125 = vsel %vm93, %v75, %v87
  %v128 = vsel %vm97, %v88, %v89
  %v129 = vsel %vm101, %v125, %v128
  %v130 = vsel %vm103, %v75, %v87
  %v131 = vsel %vm105, %v88, %v89
  %v132 = vsel %vm107, %v130, %v131
  %v134 = vrot.slane %v132, 1
  %v137 = vsel %vm93, %v76, %v90
  %v140 = vsel %vm97, %v91, %v92
  %v141 = vsel %vm101, %v137, %v140
  %v142 = vsel %vm103, %v76, %v90
  %v143 = vsel %vm105, %v91, %v92
  %v144 = vsel %vm107, %v142, %v143
  %v146 = vrot.slane %v144, 1
  %vm147 = vsmask.f32 256
  %vm148 = vsmask.f32 1284
  %vm149 = vmor %vm147, %vm148
  %vm150 = vsmask.f32 2312
  %vm151 = vmor %vm149, %vm150
  %vm152 = vsmask.f32 3340
  %vm153 = vmor %vm151, %vm152
  %vm154 = vsmask.f32 4368
  %vm155 = vmor %vm153, %vm154
  %vm156 = vsmask.f32 5396
  %vm157 = vmor %vm155, %vm156
  %vm158 = vsmask.f32 6424
  %vm159 = vmor %vm157, %vm158
  %vm160 = vsmask.f32 7452
  %vm161 = vmor %vm159, %vm160
  %v162 = vshrl.u32 %v102, 16
  %v164 = vrot.slane %v162, 7
  %v165 = vrot.slane %v164, 1
  %v167 = vshll.u32 %v110, 16
  %v169 = vsel %vm161, %v165, %v167
  %v170 = vshrl.u32 %v117, 16
  %v172 = vrot.slane %v170, 7
  %v173 = vrot.slane %v172, 1
  %v175 = vshll.u32 %v122, 16
  %v177 = vsel %vm161, %v173, %v175
  %v178 = vshrl.u32 %v129, 16
  %v180 = vrot.slane %v178, 7
  %v181 = vrot.slane %v180, 1
  %v183 = vshll.u32 %v134, 16
  %v185 = vsel %vm161, %v181, %v183
  %v186 = vshrl.u32 %v141, 16
  %v188 = vrot.slane %v186, 7
  %v189 = vrot.slane %v188, 1
  %v191 = vshll.u32 %v146, 16
  %v193 = vsel %vm161, %v189, %v191
  %s194 = scalar_lea.vmem %s1, 64
  %v195 = vld [vmem:[%s194] sm:$0xf]
  %v196 = vld [vmem:[%s194 + $0x4] sm:$0xf]
  %v197 = vld [vmem:[%s194 + $0x8] sm:$0xf]
  %v198 = vld [vmem:[%s194 + $0xc] sm:$0xf]
  %v199 = vld [vmem:[%s194 + $0x10] sm:$0xf]
  %v200 = vld [vmem:[%s194 + $0x14] sm:$0xf]
  %v201 = vld [vmem:[%s194 + $0x18] sm:$0xf]
  %v202 = vld [vmem:[%s194 + $0x1c] sm:$0xf]
  %v203 = vld [vmem:[%s194 + $0x20] sm:$0xf]
  %v204 = vld [vmem:[%s194 + $0x24] sm:$0xf]
  %v205 = vld [vmem:[%s194 + $0x28] sm:$0xf]
  %v206 = vld [vmem:[%s194 + $0x2c] sm:$0xf]
  %v207 = vld [vmem:[%s194 + $0x30] sm:$0xf]
  %v208 = vld [vmem:[%s194 + $0x34] sm:$0xf]
  %v209 = vld [vmem:[%s194 + $0x38] sm:$0xf]
  %v210 = vld [vmem:[%s194 + $0x3c] sm:$0xf]
  %212 = vst [vmem:[#allocation1] ss:$9 sm:$0xff] %v169
  %s214 = scalar_lea.vmem [#allocation1], 1
  %215 = vst [vmem:[%s214] ss:$9 sm:$0xff] %v177
  %s217 = scalar_lea.vmem [#allocation1], 2
  %218 = vst [vmem:[%s217] ss:$9 sm:$0xff] %v185
  %s220 = scalar_lea.vmem [#allocation1], 3
  %221 = vst [vmem:[%s220] ss:$9 sm:$0xff] %v193
  %v222 = vld [vmem:[#allocation1] sm:$0xff]
  %v240 = vunpack.c.l.b16 %v195
  %v241 = vunpack.c.l.b16 %v196
  %v242 = vunpack.c.l.b16 %v197
  %v243 = vunpack.c.l.b16 %v198
  %v244 = vunpack.c.l.b16 %v199
  %v245 = vunpack.c.l.b16 %v200
  %v246 = vunpack.c.l.b16 %v201
  %v247 = vunpack.c.l.b16 %v202
  %v248 = vunpack.c.l.b16 %v203
  %v249 = vunpack.c.l.b16 %v204
  %v250 = vunpack.c.l.b16 %v205
  %v251 = vunpack.c.l.b16 %v206
  %v252 = vunpack.c.l.b16 %v207
  %v253 = vunpack.c.l.b16 %v208
  %v254 = vunpack.c.l.b16 %v209
  %v255 = vunpack.c.l.b16 %v210
  %v256 = vpack.c.b16 %v241, %v240
  %v257 = vpack.c.b16 %v243, %v242
  %v258 = vpack.c.b16 %v245, %v244
  %v259 = vpack.c.b16 %v247, %v246
  %v260 = vpack.c.b16 %v249, %v248
  %v261 = vpack.c.b16 %v251, %v250
  %v262 = vpack.c.b16 %v253, %v252
  %v263 = vpack.c.b16 %v255, %v254
  %272 = vmatpush.bf16.msra.mxu0 %v263
  %273 = vmatpush.bf16.msra.mxu0 %v262
  %274 = vmatpush.bf16.msra.mxu0 %v261
  %275 = vmatpush.bf16.msra.mxu0 %v260
  %276 = vmatpush.bf16.msra.mxu0 %v259
  %277 = vmatpush.bf16.msra.mxu0 %v258
  %278 = vmatpush.bf16.msra.mxu0 %v257
  %279 = vmatpush.bf16.msra.mxu0 %v256
  %280 = vmatmul.bf16.gmra.mxu0 %v222
  %v281 = vpop.f32.mrf.mxu0
  %v282 = vadd.f32 0.0, %v281
  %v283 = vpop.f32.mrf.mxu0
  %284 = vdwg.mxu0
  %286 = vst [vmem:[#allocation1] ss:$9 sm:$0xff] %v53
  %s288 = scalar_lea.vmem [#allocation1], 1
  %289 = vst [vmem:[%s288] ss:$9 sm:$0xff] %v54
  %s291 = scalar_lea.vmem [#allocation1], 2
  %292 = vst [vmem:[%s291] ss:$9 sm:$0xff] %v55
  %s294 = scalar_lea.vmem [#allocation1], 3
  %295 = vst [vmem:[%s294] ss:$9 sm:$0xff] %v56
  %v296 = vld [vmem:[#allocation1] sm:$0xff]
  %v314 = vunpack.c.l.b16 %v57
  %v315 = vunpack.c.l.b16 %v58
  %v316 = vunpack.c.l.b16 %v59
  %v317 = vunpack.c.l.b16 %v60
  %v318 = vunpack.c.l.b16 %v61
  %v319 = vunpack.c.l.b16 %v62
  %v320 = vunpack.c.l.b16 %v63
  %v321 = vunpack.c.l.b16 %v64
  %v322 = vunpack.c.l.b16 %v65
  %v323 = vunpack.c.l.b16 %v66
  %v324 = vunpack.c.l.b16 %v67
  %v325 = vunpack.c.l.b16 %v68
  %v326 = vunpack.c.l.b16 %v69
  %v327 = vunpack.c.l.b16 %v70
  %v328 = vunpack.c.l.b16 %v71
  %v329 = vunpack.c.l.b16 %v72
  %v330 = vpack.c.b16 %v315, %v314
  %v331 = vpack.c.b16 %v317, %v316
  %v332 = vpack.c.b16 %v319, %v318
  %v333 = vpack.c.b16 %v321, %v320
  %v334 = vpack.c.b16 %v323, %v322
  %v335 = vpack.c.b16 %v325, %v324
  %v336 = vpack.c.b16 %v327, %v326
  %v337 = vpack.c.b16 %v329, %v328
  %346 = vmatpush.bf16.msra.mxu0 %v337
  %347 = vmatpush.bf16.msra.mxu0 %v336
  %348 = vmatpush.bf16.msra.mxu0 %v335
  %349 = vmatpush.bf16.msra.mxu0 %v334
  %350 = vmatpush.bf16.msra.mxu0 %v333
  %351 = vmatpush.bf16.msra.mxu0 %v332
  %352 = vmatpush.bf16.msra.mxu0 %v331
  %353 = vmatpush.bf16.msra.mxu0 %v330
  %354 = vmatmul.bf16.gmra.mxu0 %v296
  %v355 = vpop.f32.mrf.mxu0
  %v356 = vadd.f32 %v282, %v355
  %v357 = vpop.f32.mrf.mxu0
  %358 = vdwg.mxu0
  %s359 = scalar_lea.vmem %s42, 2
  %v360 = vld [vmem:[%s359] sm:$0x1]
  %v361 = vld [vmem:[%s359 + $0x2] sm:$0x1]
  %v362 = vld [vmem:[%s359 + $0x6] sm:$0x1]
  %v363 = vld [vmem:[%s359 + $0x8] sm:$0x1]
  %s364 = scalar_lea.vmem %s1, 128
  %v365 = vld [vmem:[%s364] sm:$0xf]
  %v366 = vld [vmem:[%s364 + $0x4] sm:$0xf]
  %v367 = vld [vmem:[%s364 + $0x8] sm:$0xf]
  %v368 = vld [vmem:[%s364 + $0xc] sm:$0xf]
  %v369 = vld [vmem:[%s364 + $0x10] sm:$0xf]
  %v370 = vld [vmem:[%s364 + $0x14] sm:$0xf]
  %v371 = vld [vmem:[%s364 + $0x18] sm:$0xf]
  %v372 = vld [vmem:[%s364 + $0x1c] sm:$0xf]
  %v373 = vld [vmem:[%s364 + $0x20] sm:$0xf]
  %v374 = vld [vmem:[%s364 + $0x24] sm:$0xf]
  %v375 = vld [vmem:[%s364 + $0x28] sm:$0xf]
  %v376 = vld [vmem:[%s364 + $0x2c] sm:$0xf]
  %v377 = vld [vmem:[%s364 + $0x30] sm:$0xf]
  %v378 = vld [vmem:[%s364 + $0x34] sm:$0xf]
  %v379 = vld [vmem:[%s364 + $0x38] sm:$0xf]
  %v380 = vld [vmem:[%s364 + $0x3c] sm:$0xf]
  %382 = vst [vmem:[#allocation1] ss:$9 sm:$0xff] %v360
  %s384 = scalar_lea.vmem [#allocation1], 1
  %385 = vst [vmem:[%s384] ss:$9 sm:$0xff] %v361
  %s387 = scalar_lea.vmem [#allocation1], 2
  %388 = vst [vmem:[%s387] ss:$9 sm:$0xff] %v362
  %s390 = scalar_lea.vmem [#allocation1], 3
  %391 = vst [vmem:[%s390] ss:$9 sm:$0xff] %v363
  %v392 = vld [vmem:[#allocation1] sm:$0xff]
  %v410 = vunpack.c.l.b16 %v365
  %v411 = vunpack.c.l.b16 %v366
  %v412 = vunpack.c.l.b16 %v367
  %v413 = vunpack.c.l.b16 %v368
  %v414 = vunpack.c.l.b16 %v369
  %v415 = vunpack.c.l.b16 %v370
  %v416 = vunpack.c.l.b16 %v371
  %v417 = vunpack.c.l.b16 %v372
  %v418 = vunpack.c.l.b16 %v373
  %v419 = vunpack.c.l.b16 %v374
  %v420 = vunpack.c.l.b16 %v375
  %v421 = vunpack.c.l.b16 %v376
  %v422 = vunpack.c.l.b16 %v377
  %v423 = vunpack.c.l.b16 %v378
  %v424 = vunpack.c.l.b16 %v379
  %v425 = vunpack.c.l.b16 %v380
  %v426 = vpack.c.b16 %v411, %v410
  %v427 = vpack.c.b16 %v413, %v412
  %v428 = vpack.c.b16 %v415, %v414
  %v429 = vpack.c.b16 %v417, %v416
  %v430 = vpack.c.b16 %v419, %v418
  %v431 = vpack.c.b16 %v421, %v420
  %v432 = vpack.c.b16 %v423, %v422
  %v433 = vpack.c.b16 %v425, %v424
  %442 = vmatpush.bf16.msra.mxu0 %v433
  %443 = vmatpush.bf16.msra.mxu0 %v432
  %444 = vmatpush.bf16.msra.mxu0 %v431
  %445 = vmatpush.bf16.msra.mxu0 %v430
  %446 = vmatpush.bf16.msra.mxu0 %v429
  %447 = vmatpush.bf16.msra.mxu0 %v428
  %448 = vmatpush.bf16.msra.mxu0 %v427
  %449 = vmatpush.bf16.msra.mxu0 %v426
  %450 = vmatmul.bf16.gmra.mxu0 %v392
  %v451 = vpop.f32.mrf.mxu0
  %v452 = vadd.f32 0.0, %v451
  %v453 = vpop.f32.mrf.mxu0
  %454 = vdwg.mxu0
  %v455 = vadd.f32 %v356, %v452
  %v456 = vld [vmem:[%s359] sm:$0x3]
  %v457 = vld [vmem:[%s359 + $0x2] sm:$0x3]
  %v458 = vld [vmem:[%s359 + $0x6] sm:$0x3]
  %v459 = vld [vmem:[%s359 + $0x8] sm:$0x3]
  %v464 = vrot.slane %v456, 1
  %v465 = vrot.slane %v456, 2
  %v466 = vrot.slane %v456, 3
  %v467 = vrot.slane %v457, 1
  %v468 = vrot.slane %v457, 2
  %v469 = vrot.slane %v457, 3
  %v470 = vrot.slane %v458, 1
  %v471 = vrot.slane %v458, 2
  %v472 = vrot.slane %v458, 3
  %v473 = vrot.slane %v459, 1
  %v474 = vrot.slane %v459, 2
  %v475 = vrot.slane %v459, 3
  %v478 = vsel %vm93, %v456, %v464
  %v481 = vsel %vm97, %v465, %v466
  %v482 = vsel %vm101, %v478, %v481
  %v483 = vsel %vm103, %v456, %v464
  %v484 = vsel %vm105, %v465, %v466
  %v485 = vsel %vm107, %v483, %v484
  %v487 = vrot.slane %v485, 1
  %v490 = vsel %vm93, %v457, %v467
  %v493 = vsel %vm97, %v468, %v469
  %v494 = vsel %vm101, %v490, %v493
  %v495 = vsel %vm103, %v457, %v467
  %v496 = vsel %vm105, %v468, %v469
  %v497 = vsel %vm107, %v495, %v496
  %v499 = vrot.slane %v497, 1
  %v502 = vsel %vm93, %v458, %v470
  %v505 = vsel %vm97, %v471, %v472
  %v506 = vsel %vm101, %v502, %v505
  %v507 = vsel %vm103, %v458, %v470
  %v508 = vsel %vm105, %v471, %v472
  %v509 = vsel %vm107, %v507, %v508
  %v511 = vrot.slane %v509, 1
  %v514 = vsel %vm93, %v459, %v473
  %v517 = vsel %vm97, %v474, %v475
  %v518 = vsel %vm101, %v514, %v517
  %v519 = vsel %vm103, %v459, %v473
  %v520 = vsel %vm105, %v474, %v475
  %v521 = vsel %vm107, %v519, %v520
  %v523 = vrot.slane %v521, 1
  %v524 = vshrl.u32 %v482, 16
  %v526 = vrot.slane %v524, 7
  %v527 = vrot.slane %v526, 1
  %v529 = vshll.u32 %v487, 16
  %v531 = vsel %vm161, %v527, %v529
  %v532 = vshrl.u32 %v494, 16
  %v534 = vrot.slane %v532, 7
  %v535 = vrot.slane %v534, 1
  %v537 = vshll.u32 %v499, 16
  %v539 = vsel %vm161, %v535, %v537
  %v540 = vshrl.u32 %v506, 16
  %v542 = vrot.slane %v540, 7
  %v543 = vrot.slane %v542, 1
  %v545 = vshll.u32 %v511, 16
  %v547 = vsel %vm161, %v543, %v545
  %v548 = vshrl.u32 %v518, 16
  %v550 = vrot.slane %v548, 7
  %v551 = vrot.slane %v550, 1
  %v553 = vshll.u32 %v523, 16
  %v555 = vsel %vm161, %v551, %v553
  %s556 = scalar_lea.vmem %s1, 192
  %v557 = vld [vmem:[%s556] sm:$0xf]
  %v558 = vld [vmem:[%s556 + $0x4] sm:$0xf]
  %v559 = vld [vmem:[%s556 + $0x8] sm:$0xf]
  %v560 = vld [vmem:[%s556 + $0xc] sm:$0xf]
  %v561 = vld [vmem:[%s556 + $0x10] sm:$0xf]
  %v562 = vld [vmem:[%s556 + $0x14] sm:$0xf]
  %v563 = vld [vmem:[%s556 + $0x18] sm:$0xf]
  %v564 = vld [vmem:[%s556 + $0x1c] sm:$0xf]
  %v565 = vld [vmem:[%s556 + $0x20] sm:$0xf]
  %v566 = vld [vmem:[%s556 + $0x24] sm:$0xf]
  %v567 = vld [vmem:[%s556 + $0x28] sm:$0xf]
  %v568 = vld [vmem:[%s556 + $0x2c] sm:$0xf]
  %v569 = vld [vmem:[%s556 + $0x30] sm:$0xf]
  %v570 = vld [vmem:[%s556 + $0x34] sm:$0xf]
  %v571 = vld [vmem:[%s556 + $0x38] sm:$0xf]
  %v572 = vld [vmem:[%s556 + $0x3c] sm:$0xf]
  %574 = vst [vmem:[#allocation1] ss:$9 sm:$0xff] %v531
  %s576 = scalar_lea.vmem [#allocation1], 1
  %577 = vst [vmem:[%s576] ss:$9 sm:$0xff] %v539
  %s579 = scalar_lea.vmem [#allocation1], 2
  %580 = vst [vmem:[%s579] ss:$9 sm:$0xff] %v547
  %s582 = scalar_lea.vmem [#allocation1], 3
  %583 = vst [vmem:[%s582] ss:$9 sm:$0xff] %v555
  %v584 = vld [vmem:[#allocation1] sm:$0xff]
  %v602 = vunpack.c.l.b16 %v557
  %v603 = vunpack.c.l.b16 %v558
  %v604 = vunpack.c.l.b16 %v559
  %v605 = vunpack.c.l.b16 %v560
  %v606 = vunpack.c.l.b16 %v561
  %v607 = vunpack.c.l.b16 %v562
  %v608 = vunpack.c.l.b16 %v563
  %v609 = vunpack.c.l.b16 %v564
  %v610 = vunpack.c.l.b16 %v565
  %v611 = vunpack.c.l.b16 %v566
  %v612 = vunpack.c.l.b16 %v567
  %v613 = vunpack.c.l.b16 %v568
  %v614 = vunpack.c.l.b16 %v569
  %v615 = vunpack.c.l.b16 %v570
  %v616 = vunpack.c.l.b16 %v571
  %v617 = vunpack.c.l.b16 %v572
  %v618 = vpack.c.b16 %v603, %v602
  %v619 = vpack.c.b16 %v605, %v604
  %v620 = vpack.c.b16 %v607, %v606
  %v621 = vpack.c.b16 %v609, %v608
  %v622 = vpack.c.b16 %v611, %v610
  %v623 = vpack.c.b16 %v613, %v612
  %v624 = vpack.c.b16 %v615, %v614
  %v625 = vpack.c.b16 %v617, %v616
  %634 = vmatpush.bf16.msra.mxu0 %v625
  %635 = vmatpush.bf16.msra.mxu0 %v624
  %636 = vmatpush.bf16.msra.mxu0 %v623
  %637 = vmatpush.bf16.msra.mxu0 %v622
  %638 = vmatpush.bf16.msra.mxu0 %v621
  %639 = vmatpush.bf16.msra.mxu0 %v620
  %640 = vmatpush.bf16.msra.mxu0 %v619
  %641 = vmatpush.bf16.msra.mxu0 %v618
  %642 = vmatmul.bf16.gmra.mxu0 %v584
  %v643 = vpop.f32.mrf.mxu0
  %v644 = vadd.f32 0.0, %v643
  %v645 = vpop.f32.mrf.mxu0
  %646 = vdwg.mxu0
  %v647 = vadd.f32 %v455, %v644
  %v649 = vrot.slane %v647, 2
  %v650 = vrot.slane %v647, 4
  %v651 = vrot.slane %v647, 6
  %v655 = vpack.c.bf16 %v647, %v647
  %v656 = vpack.c.bf16 %v649, %v649
  %v657 = vpack.c.bf16 %v650, %v650
  %v658 = vpack.c.bf16 %v651, %v651
  %659 = vst [vmem:[%s50] sm:$0x1] %v655
  %660 = vst [vmem:[%s50 + $0x1] sm:$0x1] %v656
  %661 = vst [vmem:[%s50 + $0x2] sm:$0x1] %v657
  %662 = vst [vmem:[%s50 + $0x3] sm:$0x1] %v658
  %p663 = scmp.eq.s32.totalorder 0, 0
  // Predicated region
  $region10: #{dc_discriminator_forward.12} parent=0 // pred_check
    %p664 = pneg %p663
  $region11: #{dc_discriminator_forward.12} parent=0 // pred_check_branch
    %666 = sbr.rel (%p664) target = $region13
  $region12: #{dc_discriminator_forward.12} parent=0 // pred_region
    %667 = vst [vmem:[%s3] sm:$0x1] 0.0
    %668 = vst [vmem:[%s4] sm:$0x1] 0.0
  $region13: #{dc_discriminator_forward.12} parent=0 // pred_fallthru
    _
  %v669 = vld [vmem:[%s3] sm:$0x1]
  %v670 = vrot.slane %v647, 4
  %v671 = vadd.f32 %v647, %v670
  %v672 = vrot.slane %v671, 2
  %v673 = vadd.f32 %v671, %v672
  %v674 = vrot.slane %v673, 1
  %v675 = vadd.f32 %v673, %v674
  %v676 = vadd.f32 %v669, %v675
  %677 = vst [vmem:[%s3] sm:$0x1] %v676
  %v678 = vld [vmem:[%s4] sm:$0x1]
  %v679 = vmul.f32 %v647, %v647
  %v680 = vrot.slane %v679, 4
  %v681 = vadd.f32 %v679, %v680
  %v682 = vrot.slane %v681, 2
  %v683 = vadd.f32 %v681, %v682
  %v684 = vrot.slane %v683, 1
  %v685 = vadd.f32 %v683, %v684
  %v686 = vadd.f32 %v678, %v685
  %687 = vst [vmem:[%s4] sm:$0x1] %v686
  %s688 = sadd.s32 0, 0
  %s689 = smul.u32 2, %s688
  %p690 = scmp.lt.s32.totalorder %s689, 1
  %s691 = scalar_select %p690, %s689, 1
  %s692 = smul.addr %s691, 2
  %s693 = scalar_lea.vmem %s2, %s692
  // Predicated region
  $region14: #{dc_discriminator_forward.12} parent=0 // pred_check
    _
  $region15: #{dc_discriminator_forward.12} parent=0 // pred_check_branch
    %695 = sbr.rel (0) target = $region17
  $region16: #{dc_discriminator_forward.12} parent=0 // pred_region
    %s696 = sadd.s32 0, 0
    %s697 = smul.u32 2, %s696
  $region17: #{dc_discriminator_forward.12} parent=0 // pred_fallthru
    _
  // Predicated region
  $region18: #{dc_discriminator_forward.12} parent=0 // pred_check
    _
  $region19: #{dc_discriminator_forward.12} parent=0 // pred_check_branch
    %699 = sbr.rel (0) target = $region21
  $region20: #{dc_discriminator_forward.12} parent=0 // pred_region
    _
  $region21: #{dc_discriminator_forward.12} parent=0 // pred_fallthru
    _
  // Predicated region
  $region22: #{dc_discriminator_forward.12} parent=0 // pred_check
    _
  $region23: #{dc_discriminator_forward.12} parent=0 // pred_check_branch
    %701 = sbr.rel (0) target = $region25
  $region24: #{dc_discriminator_forward.12} parent=0 // pred_region
    _
  $region25: #{dc_discriminator_forward.12} parent=0 // pred_fallthru
    _
  // Predicated region
  $region26: #{dc_discriminator_forward.12} parent=0 // pred_check
    _
  $region27: #{dc_discriminator_forward.12} parent=0 // pred_check_branch
    %703 = sbr.rel (0) target = $region29
  $region28: #{dc_discriminator_forward.12} parent=0 // pred_region
    %s704 = sadd.s32 0, 0
    %s705 = smul.u32 2, %s704
    %p706 = scmp.lt.s32.totalorder %s705, 1
    %s707 = scalar_select %p706, %s705, 1
    %s708 = smul.addr %s707, 2
    %s709 = scalar_lea.vmem %s2, %s708
  $region29: #{dc_discriminator_forward.12} parent=0 // pred_fallthru
    _
  // Predicated region
  $region30: #{dc_discriminator_forward.12} parent=0 // pred_check
    _
  $region31: #{dc_discriminator_forward.12} parent=0 // pred_check_branch
    %711 = sbr.rel (0) target = $region33
  $region32: #{dc_discriminator_forward.12} parent=0 // pred_region
    _
  $region33: #{dc_discriminator_forward.12} parent=0 // pred_fallthru
    _
  // Predicated region
  $region34: #{dc_discriminator_forward.12} parent=0 // pred_check
    _
  $region35: #{dc_discriminator_forward.12} parent=0 // pred_check_branch
    %713 = sbr.rel (0) target = $region37
  $region36: #{dc_discriminator_forward.12} parent=0 // pred_region
    _
  $region37: #{dc_discriminator_forward.12} parent=0 // pred_fallthru
    _

</llo_original>
